<compile_context>
chip_gen: v7x
topology: tpu7x:2x2x1
jax: 0.10.0
libtpu: 0.0.40
codegen_flags: <defaults>
</compile_context>

<pallas_src>
import functools

import jax
import jax.numpy as jnp
from jax import lax
from jax.experimental import pallas as pl
from jax.experimental.pallas import tpu as pltpu


def _round_up(x, m):
    return (x + m - 1) // m * m


def _pick_tile_sublane(m, cap):
    """Tile for a sublane (second-minor) dim: pad to 8, full-extent if small,
    else an 8-multiple divisor so no padding is wasted."""
    mp = _round_up(m, 8)
    if mp <= cap:
        return mp, mp
    for t in range(cap, 7, -8):
        if mp % t == 0:
            return t, mp
    return 8, mp


def _pick_tile_lane(d, cap):
    """Tile for a lane (minor) dim: always pad to a 128 multiple (unmasked
    stores), full-extent if small, else a 128-multiple divisor."""
    dp = _round_up(d, 128)
    if dp <= cap:
        return dp, dp
    for t in range(cap, 127, -128):
        if dp % t == 0:
            return t, dp
    return 128, dp


# ----------------------------------------------------------------------------
# Kernel 1: tiled matmul, optional fused BN-affine+ReLU prologue on the A
# operand (per-K-column scale/bias) and fused bias epilogue.  Accumulates
# directly into the resident f32 output block.
# ----------------------------------------------------------------------------
def _mm_kernel(*refs, fuse_bn_relu):
    if fuse_bn_relu:
        a_ref, b_ref, s_ref, pb_ref, ob_ref, o_ref = refs
    else:
        a_ref, b_ref, ob_ref, o_ref = refs
    k = pl.program_id(2)

    @pl.when(k == 0)
    def _():
        o_ref[...] = jnp.zeros_like(o_ref)

    a = a_ref[...]
    if fuse_bn_relu:
        # BN + ReLU precedes the conv; affine in f32, bf16 operands to the MXU.
        a = jnp.maximum(a.astype(jnp.float32) * s_ref[...] + pb_ref[...], 0.0)
        a = a.astype(jnp.bfloat16)
    o_ref[...] += jnp.dot(a, b_ref[...], preferred_element_type=jnp.float32)

    @pl.when(k == pl.num_programs(2) - 1)
    def _():
        o_ref[...] += ob_ref[...]


def pallas_matmul(a, b, out_bias=None, bn_scale=None, bn_bias=None):
    """(M,K) @ (K,N) + bias.  If bn_scale/bn_bias given, A is first mapped
    through relu(a*scale + bias) column-wise (fused BN+ReLU prologue)."""
    M, K = a.shape
    K2, N = b.shape
    assert K == K2
    fuse = bn_scale is not None

    tm, Mp = _pick_tile_sublane(M, cap=256)
    tk, Kp = _pick_tile_lane(K, cap=512)
    tn, Np = _pick_tile_lane(N, cap=512)

    a_p = a.astype(jnp.bfloat16)
    b_p = b.astype(jnp.bfloat16)
    if (Mp, Kp) != (M, K):
        a_p = jnp.pad(a_p, ((0, Mp - M), (0, Kp - K)))
    if (Kp, Np) != (K, N):
        b_p = jnp.pad(b_p, ((0, Kp - K), (0, Np - N)))
    if out_bias is None:
        out_bias = jnp.zeros((N,), jnp.float32)
    ob = jnp.pad(out_bias.astype(jnp.float32), (0, Np - N)).reshape(1, Np)

    operands = [a_p, b_p]
    in_specs = [pl.BlockSpec((tm, tk), lambda i, j, k: (i, k)),
                pl.BlockSpec((tk, tn), lambda i, j, k: (k, j))]
    if fuse:
        s = jnp.pad(bn_scale.astype(jnp.float32), (0, Kp - K)).reshape(1, Kp)
        pb = jnp.pad(bn_bias.astype(jnp.float32), (0, Kp - K)).reshape(1, Kp)
        operands += [s, pb]
        in_specs += [pl.BlockSpec((1, tk), lambda i, j, k: (0, k)),
                     pl.BlockSpec((1, tk), lambda i, j, k: (0, k))]
    operands.append(ob)
    in_specs.append(pl.BlockSpec((1, tn), lambda i, j, k: (0, j)))

    out = pl.pallas_call(
        functools.partial(_mm_kernel, fuse_bn_relu=fuse),
        out_shape=jax.ShapeDtypeStruct((Mp, Np), jnp.float32),
        grid_spec=pltpu.PrefetchScalarGridSpec(
            num_scalar_prefetch=0,
            grid=(Mp // tm, Np // tn, Kp // tk),
            in_specs=in_specs,
            out_specs=pl.BlockSpec((tm, tn), lambda i, j, k: (i, j)),
        ),
        compiler_params=pltpu.CompilerParams(
            dimension_semantics=("parallel", "parallel", "arbitrary")),
    )(*operands)
    if (Mp, Np) != (M, N):
        out = out[:M, :N]
    return out


# ----------------------------------------------------------------------------
# Kernel 2: fused BN -> ReLU -> 3x3 conv (stride 1, pad 1) over a WHOLE image
# per grid step, with implicit im2col on a flattened-spatial VMEM scratch and
# fused BN-statistics (sum / sum-of-squares of the output) emission.
# Weights, BN scale/bias and tap-validity masks are resident (constant
# index_map); activations are read/stored as bf16.
# ----------------------------------------------------------------------------
def _dense_conv3_kernel(x_ref, w_ref, s_ref, b_ref, m_ref, o_ref, st_ref,
                        pad_ref, *, width):
    mm = x_ref.shape[1]                       # H*W
    off = _round_up(width + 1, 8)             # sublane-aligned interior offset

    @pl.when(pl.program_id(0) == 0)
    def _():
        pad_ref[...] = jnp.zeros_like(pad_ref)

    # Fused BN affine + ReLU in f32, then bf16 for the MXU.
    a = jnp.maximum(x_ref[0].astype(jnp.float32) * s_ref[...] + b_ref[...], 0.0)
    pad_ref[off:off + mm, :] = a.astype(jnp.bfloat16)

    acc = jnp.zeros((mm, o_ref.shape[2]), jnp.float32)
    for di in range(3):
        for dj in range(3):
            tap = di * 3 + dj
            shift = off + (di - 1) * width + (dj - 1)
            src = pad_ref[shift:shift + mm, :]            # (H*W, C) bf16
            part = jnp.dot(src, w_ref[tap],
                           preferred_element_type=jnp.float32)
            ok = m_ref[tap] > 0.5                         # (H*W, 1) tap validity
            acc = acc + jnp.where(ok, part, 0.0)

    y16 = acc.astype(jnp.bfloat16)
    o_ref[0] = y16
    # BN statistics of this layer's output (per-channel sum / sum-of-squares
    # over H*W for this batch element); reduced over batch in the wrapper.
    y = y16.astype(jnp.float32)
    st_ref[0] = jnp.concatenate(
        [jnp.sum(y, axis=0, keepdims=True),
         jnp.sum(y * y, axis=0, keepdims=True)], axis=0)


def dense_bn_relu_conv3(x_flat, scale, bias, w_oihw, height, width):
    """x_flat: (N, H*W, C) bf16, w: (g, C, 3, 3).
    Returns (out (N, H*W, g) bf16, stats (N, 2, g) f32)."""
    n, m, c = x_flat.shape
    g = w_oihw.shape[0]
    wt = jnp.transpose(w_oihw, (2, 3, 1, 0)).reshape(9, c, g).astype(jnp.bfloat16)

    # Static tap-validity masks (conv zero-padding), computed once in XLA.
    rr = jnp.repeat(jnp.arange(height), width)
    cc = jnp.tile(jnp.arange(width), height)
    masks = []
    for di in range(3):
        for dj in range(3):
            ok = ((rr + (di - 1) >= 0) & (rr + (di - 1) < height) &
                  (cc + (dj - 1) >= 0) & (cc + (dj - 1) < width))
            masks.append(ok)
    valid = jnp.stack(masks).astype(jnp.float32).reshape(9, m, 1)

    off = _round_up(width + 1, 8)
    pad_rows = off + m + width + 1

    # TODO(synk): for large spatial/channel sizes (ImageNet-scale) this
    # whole-image block should be row-banded and vmem_limit_bytes tuned for
    # v5e (16 MiB scoped default) / v7x (64 MiB physical).
    out, stats = pl.pallas_call(
        functools.partial(_dense_conv3_kernel, width=width),
        out_shape=(jax.ShapeDtypeStruct((n, m, g), jnp.bfloat16),
                   jax.ShapeDtypeStruct((n, 2, g), jnp.float32)),
        grid_spec=pltpu.PrefetchScalarGridSpec(
            num_scalar_prefetch=0,
            grid=(n,),
            in_specs=[
                pl.BlockSpec((1, m, c), lambda b: (b, 0, 0)),
                pl.BlockSpec((9, c, g), lambda b: (0, 0, 0)),   # resident weights
                pl.BlockSpec((1, c), lambda b: (0, 0)),         # resident BN scale
                pl.BlockSpec((1, c), lambda b: (0, 0)),         # resident BN bias
                pl.BlockSpec((9, m, 1), lambda b: (0, 0, 0)),   # resident masks
            ],
            out_specs=(pl.BlockSpec((1, m, g), lambda b: (b, 0, 0)),
                       pl.BlockSpec((1, 2, g), lambda b: (b, 0, 0))),
            scratch_shapes=[pltpu.VMEM((pad_rows, c), jnp.bfloat16)],
        ),
        compiler_params=pltpu.CompilerParams(
            dimension_semantics=("parallel",)),
    )(x_flat, wt,
      scale.astype(jnp.float32).reshape(1, c),
      bias.astype(jnp.float32).reshape(1, c),
      valid)
    return out, stats


# ----------------------------------------------------------------------------
# Kernel 3: standalone per-channel affine + ReLU (only used where no conv
# follows the BN: after conv1 and before the final avg-pool).
# ----------------------------------------------------------------------------
def _affine_relu_kernel(x_ref, s_ref, b_ref, o_ref):
    o_ref[...] = jnp.maximum(
        x_ref[...].astype(jnp.float32) * s_ref[...] + b_ref[...], 0.0)


def pallas_affine_relu(x2d, scale, bias):
    M, C = x2d.shape
    tm, Mp = _pick_tile_sublane(M, cap=512)
    x_p = x2d if Mp == M else jnp.pad(x2d, ((0, Mp - M), (0, 0)))
    out = pl.pallas_call(
        _affine_relu_kernel,
        out_shape=jax.ShapeDtypeStruct((Mp, C), jnp.float32),
        grid=(Mp // tm,),
        in_specs=[pl.BlockSpec((tm, C), lambda i: (i, 0)),
                  pl.BlockSpec((1, C), lambda i: (0, 0)),
                  pl.BlockSpec((1, C), lambda i: (0, 0))],
        out_specs=pl.BlockSpec((tm, C), lambda i: (i, 0)),
        compiler_params=pltpu.CompilerParams(
            dimension_semantics=("parallel",)),
    )(x_p, scale.astype(jnp.float32).reshape(1, C),
      bias.astype(jnp.float32).reshape(1, C))
    return out[:M] if Mp != M else out


# ----------------------------------------------------------------------------
# JAX glue: BN statistics assembly, entry-conv im2col, pooling.
# ----------------------------------------------------------------------------
def _scale_bias_from_stats(csum, csumsq, count, gamma, beta, eps=1e-5):
    mean = csum / count
    var = csumsq / count - mean * mean          # biased variance (training BN)
    scale = gamma * lax.rsqrt(var + eps)
    bias = beta - mean * scale
    return scale, bias


def _channel_sums(x):
    """x: (..., C) -> per-channel (sum, sum of squares) in f32."""
    x32 = x.astype(jnp.float32)
    axes = tuple(range(x32.ndim - 1))
    return jnp.sum(x32, axis=axes), jnp.sum(x32 * x32, axis=axes)


def _im2col(x, kh, kw, stride, pad):
    """x: (N,H,W,C) -> patches (N*Ho*Wo, kh*kw*C)."""
    n, h, w, c = x.shape
    xp = jnp.pad(x, ((0, 0), (pad, pad), (pad, pad), (0, 0)))
    ho = (h + 2 * pad - kh) // stride + 1
    wo = (w + 2 * pad - kw) // stride + 1
    cols = []
    for i in range(kh):
        for j in range(kw):
            cols.append(xp[:, i:i + stride * (ho - 1) + 1:stride,
                           j:j + stride * (wo - 1) + 1:stride, :])
    patches = jnp.concatenate(cols, axis=-1)
    return patches.reshape(n * ho * wo, kh * kw * c), (n, ho, wo)


def conv2d_im2col(x_nhwc, w_oihw, bias, stride, pad):
    # Only the single 7x7 entry conv uses explicit im2col (bf16 patches).
    cout, cin, kh, kw = w_oihw.shape
    patches, (n, ho, wo) = _im2col(x_nhwc.astype(jnp.bfloat16), kh, kw, stride, pad)
    wmat = jnp.transpose(w_oihw, (2, 3, 1, 0)).reshape(kh * kw * cin, cout)
    out = pallas_matmul(patches, wmat, out_bias=bias)
    return out.reshape(n, ho, wo, cout)


def maxpool2d(x, k, s, pad):
    # TODO(synk): pooling is a tiny window reduction; kept as lax.reduce_window.
    return lax.reduce_window(
        x, jnp.array(-jnp.inf, x.dtype), lax.max,
        (1, k, k, 1), (1, s, s, 1),
        ((0, 0), (pad, pad), (pad, pad), (0, 0)))


def avgpool2d(x, k, s):
    # TODO(synk): 2x2 / 3x3 avg-pool could be fused into the preceding matmul
    # epilogue; kept as lax.reduce_window (tiny tensors at these points).
    summed = lax.reduce_window(
        x, jnp.array(0.0, x.dtype), lax.add,
        (1, k, k, 1), (1, s, s, 1), "VALID")
    return summed / float(k * k)


# ----------------------------------------------------------------------------
# Parameters (deterministic, mirrors densenet.__init__ shapes).
# ----------------------------------------------------------------------------
def init_densenet_params(key, in_channel, num_classes,
                         growth_rate=32, block_layers=(6, 12, 24, 16)):
    keys = iter(jax.random.split(key, 256))

    def conv_w(cout, cin, kh, kw):
        fan_in = cin * kh * kw
        return (jax.random.normal(next(keys), (cout, cin, kh, kw), jnp.float32)
                / jnp.sqrt(float(fan_in)))

    params = {
        "conv1_w": conv_w(64, in_channel, 7, 7),
        "conv1_b": jax.random.normal(next(keys), (64,), jnp.float32) * 0.01,
        "bn1_g": jnp.ones((64,), jnp.float32),
        "bn1_b": jnp.zeros((64,), jnp.float32),
    }
    stages = []
    channels = 64
    for i, layers in enumerate(block_layers):
        dense_layers = []
        ch = channels
        for _ in range(layers):
            dense_layers.append({
                "bn_g": jnp.ones((ch,), jnp.float32),
                "bn_b": jnp.zeros((ch,), jnp.float32),
                "w": conv_w(growth_rate, ch, 3, 3),        # bias=False
            })
            ch += growth_rate
        stages.append({"layers": dense_layers})
        channels = ch
        if i != len(block_layers) - 1:
            out_ch = channels // 2
            stages.append({
                "bn_g": jnp.ones((channels,), jnp.float32),
                "bn_b": jnp.zeros((channels,), jnp.float32),
                "w": conv_w(out_ch, channels, 1, 1),
                "b": jax.random.normal(next(keys), (out_ch,), jnp.float32) * 0.01,
            })
            channels = out_ch
    params["stages"] = stages
    params["bn2_g"] = jnp.ones((channels,), jnp.float32)
    params["bn2_b"] = jnp.zeros((channels,), jnp.float32)
    params["fc_w"] = (jax.random.normal(next(keys), (num_classes, channels),
                                        jnp.float32) / jnp.sqrt(float(channels)))
    params["fc_b"] = jax.random.normal(next(keys), (num_classes,), jnp.float32) * 0.01
    return params


# ----------------------------------------------------------------------------
# Forward pass (matches densenet.forward; training-mode BatchNorm).
# ----------------------------------------------------------------------------
def densenet_forward(params, x_nchw):
    x = jnp.transpose(x_nchw.astype(jnp.float32), (0, 2, 3, 1))  # -> NHWC

    # block1: Conv(7, s2, p3, bias) -> BN -> ReLU -> MaxPool(3, s2, p1)
    x = conv2d_im2col(x, params["conv1_w"], params["conv1_b"], stride=2, pad=3)
    # TODO(synk): conv1 BN stats could be fused into the matmul epilogue; this
    # is a single pass over a small tensor, kept in XLA.
    csum, csq = _channel_sums(x)
    n, h, w, c = x.shape
    scale, bias = _scale_bias_from_stats(csum, csq, float(n * h * w),
                                         params["bn1_g"], params["bn1_b"])
    x = pallas_affine_relu(x.reshape(n * h * w, c), scale, bias).reshape(n, h, w, c)
    x = maxpool2d(x, 3, 2, 1)

    # Dense blocks: bf16 activations, flattened spatial, segment-wise BN stats.
    x = x.astype(jnp.bfloat16)
    n, h, w, c = x.shape
    x = x.reshape(n, h * w, c)
    csum, csq = _channel_sums(x)
    seg_sums, seg_sqs = [csum], [csq]
    count = float(n * h * w)

    for stage in params["stages"]:
        if "layers" in stage:                              # dense block
            for layer in stage["layers"]:
                gsum = jnp.concatenate(seg_sums)
                gsq = jnp.concatenate(seg_sqs)
                scale, bias = _scale_bias_from_stats(
                    gsum, gsq, count, layer["bn_g"], layer["bn_b"])
                out, st = dense_bn_relu_conv3(x, scale, bias, layer["w"], h, w)
                # Per-channel stats of the new g channels, reused by all later
                # BN layers (values never change) -> no re-read of x for stats.
                seg_sums.insert(0, jnp.sum(st[:, 0, :], axis=0))
                seg_sqs.insert(0, jnp.sum(st[:, 1, :], axis=0))
                # TODO(synk): torch.cat semantics kept; writing layer outputs
                # directly into a preallocated channel slab needs 128-lane
                # aligned slots (growth offsets are not lane aligned).
                x = jnp.concatenate([out, x], axis=-1)
        else:                                              # transition
            gsum = jnp.concatenate(seg_sums)
            gsq = jnp.concatenate(seg_sqs)
            scale, bias = _scale_bias_from_stats(
                gsum, gsq, count, stage["bn_g"], stage["bn_b"])
            cin = x.shape[-1]
            wmat = stage["w"].reshape(stage["w"].shape[0], cin).T   # (C, Cout)
            y = pallas_matmul(x.reshape(n * h * w, cin), wmat,
                              out_bias=stage["b"], bn_scale=scale, bn_bias=bias)
            y = avgpool2d(y.reshape(n, h, w, -1), 2, 2)
            n, h, w, c = y.shape
            x = y.astype(jnp.bfloat16).reshape(n, h * w, c)
            count = float(n * h * w)
            csum, csq = _channel_sums(x)
            seg_sums, seg_sqs = [csum], [csq]

    # final BN -> ReLU -> AvgPool(3) -> flatten -> Linear
    gsum = jnp.concatenate(seg_sums)
    gsq = jnp.concatenate(seg_sqs)
    scale, bias = _scale_bias_from_stats(gsum, gsq, count,
                                         params["bn2_g"], params["bn2_b"])
    c = x.shape[-1]
    xr = pallas_affine_relu(x.reshape(n * h * w, c), scale, bias)
    xr = avgpool2d(xr.reshape(n, h, w, c), 3, 3)
    nb = xr.shape[0]
    feat = jnp.transpose(xr, (0, 3, 1, 2)).reshape(nb, -1)   # x.view(N, -1)
    return pallas_matmul(feat, params["fc_w"].T, out_bias=params["fc_b"])


if __name__ == "__main__":
    # Small instantiation: densenet(in_channel=3, num_classes=10,
    #                               growth_rate=8, block_layers=[2, 2]),
    # input 24x24 so the final AvgPool2d(3) reaches exactly 1x1.
    in_channel, num_classes = 3, 10
    growth_rate, block_layers = 8, (2, 2)

    key = jax.random.PRNGKey(0)
    pkey, xkey = jax.random.split(key)
    params = init_densenet_params(pkey, in_channel, num_classes,
                                  growth_rate, block_layers)
    x = jax.random.normal(xkey, (2, in_channel, 24, 24), jnp.float32)

    fwd = jax.jit(densenet_forward)
    logits = fwd(params, x)
    jax.block_until_ready(logits)
    assert logits.shape == (2, num_classes), logits.shape
    assert logits.dtype == jnp.float32
    print("KERNEL_OK")
</pallas_src>

<mosaic_0001>
module attributes {stable_mosaic.version = 11 : i64} {
  func.func @_mm_kernel(%arg0: i32, %arg1: i32, %arg2: i32, %arg3: memref<144x256xbf16, #tpu.memory_space<vmem>>, %arg4: memref<256x128xbf16, #tpu.memory_space<vmem>>, %arg5: memref<1x128xf32, #tpu.memory_space<vmem>>, %arg6: memref<144x128xf32, #tpu.memory_space<vmem>>) attributes {dimension_semantics = [#tpu.dimension_semantics<parallel>, #tpu.dimension_semantics<parallel>, #tpu.dimension_semantics<arbitrary>], iteration_bounds = array<i64: 2, 1, 1>, scalar_prefetch = 0 : i64, scratch_operands = 0 : i64, tpu.core_type = #tpu.core_type<tc>, window_params = [{transform_indices = @transform_0, window_bounds = array<i64: 144, 256>}, {transform_indices = @transform_1, window_bounds = array<i64: 256, 128>}, {transform_indices = @transform_2, window_bounds = array<i64: 1, 128>}, {transform_indices = @transform_3, window_bounds = array<i64: 144, 128>}]} {
    %c0_i32 = arith.constant 0 : i32
    %0 = arith.cmpi eq, %arg2, %c0_i32 : i32
    %1 = arith.extui %0 : i1 to i32
    %c0_i32_0 = arith.constant 0 : i32
    %2 = arith.cmpi ne, %1, %c0_i32_0 : i32
    scf.if %2 {
      %cst_10 = arith.constant 0.000000e+00 : f32
      %12 = vector.broadcast %cst_10 : f32 to vector<144x128xf32>
      %c0_11 = arith.constant 0 : index
      %c0_12 = arith.constant 0 : index
      %13 = vector.load %arg6[%c0_11, %c0_12] : memref<144x128xf32, #tpu.memory_space<vmem>>, vector<144x128xf32>
      tpu.vector_store %arg6[%c0_11, %c0_12], %12 {strides = array<i32>} : memref<144x128xf32, #tpu.memory_space<vmem>>, vector<144x128xf32>,
    } else {
    }
    %c0 = arith.constant 0 : index
    %c0_1 = arith.constant 0 : index
    %3 = vector.load %arg3[%c0, %c0_1] : memref<144x256xbf16, #tpu.memory_space<vmem>>, vector<144x256xbf16>
    %c0_2 = arith.constant 0 : index
    %c0_3 = arith.constant 0 : index
    %4 = vector.load %arg6[%c0_2, %c0_3] : memref<144x128xf32, #tpu.memory_space<vmem>>, vector<144x128xf32>
    %c0_4 = arith.constant 0 : index
    %c0_5 = arith.constant 0 : index
    %5 = vector.load %arg4[%c0_4, %c0_5] : memref<256x128xbf16, #tpu.memory_space<vmem>>, vector<256x128xbf16>
    %cst = arith.constant dense<0.000000e+00> : vector<144x128xf32>
    %6 = tpu.matmul %3, %5, %cst {dimension_numbers = #tpu.dot_dimension_numbers<[1], [0], [0], [1], [0, 0, 1, 1], [], []>} : vector<144x256xbf16>, vector<256x128xbf16>, vector<144x128xf32> -> vector<144x128xf32>
    %7 = arith.addf %4, %6 : vector<144x128xf32>
    %c0_6 = arith.constant 0 : index
    %c0_7 = arith.constant 0 : index
    %8 = vector.load %arg6[%c0_6, %c0_7] : memref<144x128xf32, #tpu.memory_space<vmem>>, vector<144x128xf32>
    tpu.vector_store %arg6[%c0_6, %c0_7], %7 {strides = array<i32>} : memref<144x128xf32, #tpu.memory_space<vmem>>, vector<144x128xf32>,
    %c0_i32_8 = arith.constant 0 : i32
    %9 = arith.cmpi eq, %arg2, %c0_i32_8 : i32
    %10 = arith.extui %9 : i1 to i32
    %c0_i32_9 = arith.constant 0 : i32
    %11 = arith.cmpi ne, %10, %c0_i32_9 : i32
    scf.if %11 {
      %c0_10 = arith.constant 0 : index
      %c0_11 = arith.constant 0 : index
      %12 = vector.load %arg6[%c0_10, %c0_11] : memref<144x128xf32, #tpu.memory_space<vmem>>, vector<144x128xf32>
      %c0_12 = arith.constant 0 : index
      %c0_13 = arith.constant 0 : index
      %13 = vector.load %arg5[%c0_12, %c0_13] : memref<1x128xf32, #tpu.memory_space<vmem>>, vector<1x128xf32>
      %14 = vector.broadcast %13 : vector<1x128xf32> to vector<144x128xf32>
      %15 = arith.addf %12, %14 : vector<144x128xf32>
      %c0_14 = arith.constant 0 : index
      %c0_15 = arith.constant 0 : index
      %16 = vector.load %arg6[%c0_14, %c0_15] : memref<144x128xf32, #tpu.memory_space<vmem>>, vector<144x128xf32>
      tpu.vector_store %arg6[%c0_14, %c0_15], %15 {strides = array<i32>} : memref<144x128xf32, #tpu.memory_space<vmem>>, vector<144x128xf32>,
    } else {
    }
    return
  }
  func.func @transform_0(%arg0: i32, %arg1: i32, %arg2: i32) -> (i32, i32) {
    %c0_i32 = arith.constant 0 : i32
    return %arg0, %arg2 : i32, i32
  }
  func.func @transform_1(%arg0: i32, %arg1: i32, %arg2: i32) -> (i32, i32) {
    %c0_i32 = arith.constant 0 : i32
    return %arg2, %arg1 : i32, i32
  }
  func.func @transform_2(%arg0: i32, %arg1: i32, %arg2: i32) -> (i32, i32) {
    %c0_i32 = arith.constant 0 : i32
    %c0_i32_0 = arith.constant 0 : i32
    return %c0_i32, %arg1 : i32, i32
  }
  func.func @transform_3(%arg0: i32, %arg1: i32, %arg2: i32) -> (i32, i32) {
    %c0_i32 = arith.constant 0 : i32
    return %arg0, %arg1 : i32, i32
  }
}

module attributes {stable_mosaic.version = 11 : i64} {
  func.func @_affine_relu_kernel(%arg0: i32, %arg1: memref<288x64xf32, #tpu.memory_space<vmem>>, %arg2: memref<1x64xf32, #tpu.memory_space<vmem>>, %arg3: memref<1x64xf32, #tpu.memory_space<vmem>>, %arg4: memref<288x64xf32, #tpu.memory_space<vmem>>) attributes {dimension_semantics = [#tpu.dimension_semantics<parallel>], iteration_bounds = array<i64: 1>, scalar_prefetch = 0 : i64, scratch_operands = 0 : i64, tpu.core_type = #tpu.core_type<tc>, window_params = [{transform_indices = @transform_0, window_bounds = array<i64: 288, 64>}, {pipeline_mode = #tpu.pipeline_mode<synchronous>, transform_indices = @transform_1, window_bounds = array<i64: 1, 64>}, {pipeline_mode = #tpu.pipeline_mode<synchronous>, transform_indices = @transform_2, window_bounds = array<i64: 1, 64>}, {transform_indices = @transform_3, window_bounds = array<i64: 288, 64>}]} {
    %c0 = arith.constant 0 : index
    %c0_0 = arith.constant 0 : index
    %0 = vector.load %arg1[%c0, %c0_0] : memref<288x64xf32, #tpu.memory_space<vmem>>, vector<288x64xf32>
    %c0_1 = arith.constant 0 : index
    %c0_2 = arith.constant 0 : index
    %1 = vector.load %arg2[%c0_1, %c0_2] : memref<1x64xf32, #tpu.memory_space<vmem>>, vector<1x64xf32>
    %2 = vector.broadcast %1 : vector<1x64xf32> to vector<288x64xf32>
    %3 = arith.mulf %0, %2 : vector<288x64xf32>
    %c0_3 = arith.constant 0 : index
    %c0_4 = arith.constant 0 : index
    %4 = vector.load %arg3[%c0_3, %c0_4] : memref<1x64xf32, #tpu.memory_space<vmem>>, vector<1x64xf32>
    %5 = vector.broadcast %4 : vector<1x64xf32> to vector<288x64xf32>
    %6 = arith.addf %3, %5 : vector<288x64xf32>
    %cst = arith.constant 0.000000e+00 : f32
    %7 = vector.broadcast %cst : f32 to vector<288x64xf32>
    %8 = arith.maximumf %6, %7 : vector<288x64xf32>
    %c0_5 = arith.constant 0 : index
    %c0_6 = arith.constant 0 : index
    %9 = vector.load %arg4[%c0_5, %c0_6] : memref<288x64xf32, #tpu.memory_space<vmem>>, vector<288x64xf32>
    tpu.vector_store %arg4[%c0_5, %c0_6], %8 {strides = array<i32>} : memref<288x64xf32, #tpu.memory_space<vmem>>, vector<288x64xf32>,
    return
  }
  func.func @transform_0(%arg0: i32) -> (i32, i32) {
    %c0_i32 = arith.constant 0 : i32
    %c0_i32_0 = arith.constant 0 : i32
    return %arg0, %c0_i32 : i32, i32
  }
  func.func @transform_1(%arg0: i32) -> (i32, i32) {
    %c0_i32 = arith.constant 0 : i32
    %c0_i32_0 = arith.constant 0 : i32
    %c0_i32_1 = arith.constant 0 : i32
    return %c0_i32, %c0_i32_0 : i32, i32
  }
  func.func @transform_2(%arg0: i32) -> (i32, i32) {
    %c0_i32 = arith.constant 0 : i32
    %c0_i32_0 = arith.constant 0 : i32
    %c0_i32_1 = arith.constant 0 : i32
    return %c0_i32, %c0_i32_0 : i32, i32
  }
  func.func @transform_3(%arg0: i32) -> (i32, i32) {
    %c0_i32 = arith.constant 0 : i32
    %c0_i32_0 = arith.constant 0 : i32
    return %arg0, %c0_i32 : i32, i32
  }
}

module attributes {stable_mosaic.version = 11 : i64} {
  func.func @_dense_conv3_kernel(%arg0: i32, %arg1: memref<1x36x64xbf16, #tpu.memory_space<vmem>>, %arg2: memref<9x64x8xbf16, #tpu.memory_space<vmem>>, %arg3: memref<1x64xf32, #tpu.memory_space<vmem>>, %arg4: memref<1x64xf32, #tpu.memory_space<vmem>>, %arg5: memref<9x36x1xf32, #tpu.memory_space<vmem>>, %arg6: memref<1x36x8xbf16, #tpu.memory_space<vmem>>, %arg7: memref<1x2x8xf32, #tpu.memory_space<vmem>>, %arg8: memref<51x64xbf16, #tpu.memory_space<vmem>>) attributes {dimension_semantics = [#tpu.dimension_semantics<parallel>], iteration_bounds = array<i64: 2>, scalar_prefetch = 0 : i64, scratch_operands = 1 : i64, tpu.core_type = #tpu.core_type<tc>, window_params = [{transform_indices = @transform_0, window_bounds = array<i64: 1, 36, 64>}, {pipeline_mode = #tpu.pipeline_mode<synchronous>, transform_indices = @transform_1, window_bounds = array<i64: 9, 64, 8>}, {pipeline_mode = #tpu.pipeline_mode<synchronous>, transform_indices = @transform_2, window_bounds = array<i64: 1, 64>}, {pipeline_mode = #tpu.pipeline_mode<synchronous>, transform_indices = @transform_3, window_bounds = array<i64: 1, 64>}, {pipeline_mode = #tpu.pipeline_mode<synchronous>, transform_indices = @transform_4, window_bounds = array<i64: 9, 36, 1>}, {transform_indices = @transform_5, window_bounds = array<i64: 1, 36, 8>}, {transform_indices = @transform_6, window_bounds = array<i64: 1, 2, 8>}]} {
    %c0_i32 = arith.constant 0 : i32
    %0 = arith.cmpi eq, %arg0, %c0_i32 : i32
    %1 = arith.extui %0 : i1 to i32
    %c0_i32_0 = arith.constant 0 : i32
    %2 = arith.cmpi ne, %1, %c0_i32_0 : i32
    scf.if %2 {
      %cst_105 = arith.constant 0.000000e+00 : bf16
      %148 = vector.broadcast %cst_105 : bf16 to vector<51x64xbf16>
      %c0_106 = arith.constant 0 : index
      %c0_107 = arith.constant 0 : index
      %149 = vector.load %arg8[%c0_106, %c0_107] : memref<51x64xbf16, #tpu.memory_space<vmem>>, vector<51x64xbf16>
      tpu.vector_store %arg8[%c0_106, %c0_107], %148 {strides = array<i32>} : memref<51x64xbf16, #tpu.memory_space<vmem>>, vector<51x64xbf16>,
    } else {
    }
    %c0 = arith.constant 0 : index
    %c0_1 = arith.constant 0 : index
    %c0_2 = arith.constant 0 : index
    %3 = vector.load %arg1[%c0, %c0_1, %c0_2] : memref<1x36x64xbf16, #tpu.memory_space<vmem>>, vector<1x36x64xbf16>
    %4 = vector.shape_cast %3 : vector<1x36x64xbf16> to vector<36x64xbf16>
    %5 = arith.extf %4 : vector<36x64xbf16> to vector<36x64xf32>
    %c0_3 = arith.constant 0 : index
    %c0_4 = arith.constant 0 : index
    %6 = vector.load %arg3[%c0_3, %c0_4] : memref<1x64xf32, #tpu.memory_space<vmem>>, vector<1x64xf32>
    %7 = vector.broadcast %6 : vector<1x64xf32> to vector<36x64xf32>
    %8 = arith.mulf %5, %7 : vector<36x64xf32>
    %c0_5 = arith.constant 0 : index
    %c0_6 = arith.constant 0 : index
    %9 = vector.load %arg4[%c0_5, %c0_6] : memref<1x64xf32, #tpu.memory_space<vmem>>, vector<1x64xf32>
    %10 = vector.broadcast %9 : vector<1x64xf32> to vector<36x64xf32>
    %11 = arith.addf %8, %10 : vector<36x64xf32>
    %cst = arith.constant 0.000000e+00 : f32
    %12 = vector.broadcast %cst : f32 to vector<36x64xf32>
    %13 = arith.maximumf %11, %12 : vector<36x64xf32>
    %14 = arith.truncf %13 : vector<36x64xf32> to vector<36x64xbf16>
    %c8 = arith.constant 8 : index
    %c0_7 = arith.constant 0 : index
    %15 = vector.load %arg8[%c8, %c0_7] : memref<51x64xbf16, #tpu.memory_space<vmem>>, vector<36x64xbf16>
    tpu.vector_store %arg8[%c8, %c0_7], %14 {strides = array<i32>} : memref<51x64xbf16, #tpu.memory_space<vmem>>, vector<36x64xbf16>,
    %cst_8 = arith.constant 0.000000e+00 : f32
    %16 = vector.broadcast %cst_8 : f32 to vector<36x8xf32>
    %c1 = arith.constant 1 : index
    %c0_9 = arith.constant 0 : index
    %17 = vector.load %arg8[%c1, %c0_9] : memref<51x64xbf16, #tpu.memory_space<vmem>>, vector<36x64xbf16>
    %c0_10 = arith.constant 0 : index
    %c0_11 = arith.constant 0 : index
    %c0_12 = arith.constant 0 : index
    %18 = vector.load %arg2[%c0_10, %c0_11, %c0_12] : memref<9x64x8xbf16, #tpu.memory_space<vmem>>, vector<1x64x8xbf16>
    %19 = vector.shape_cast %18 : vector<1x64x8xbf16> to vector<64x8xbf16>
    %cst_13 = arith.constant dense<0.000000e+00> : vector<36x8xf32>
    %20 = tpu.matmul %17, %19, %cst_13 {dimension_numbers = #tpu.dot_dimension_numbers<[1], [0], [0], [1], [0, 0, 1, 1], [], []>} : vector<36x64xbf16>, vector<64x8xbf16>, vector<36x8xf32> -> vector<36x8xf32>
    %c0_14 = arith.constant 0 : index
    %c0_15 = arith.constant 0 : index
    %c0_16 = arith.constant 0 : index
    %21 = vector.load %arg5[%c0_14, %c0_15, %c0_16] : memref<9x36x1xf32, #tpu.memory_space<vmem>>, vector<1x36x1xf32>
    %22 = vector.shape_cast %21 : vector<1x36x1xf32> to vector<36x1xf32>
    %cst_17 = arith.constant 5.000000e-01 : f32
    %23 = vector.broadcast %cst_17 : f32 to vector<36x1xf32>
    %24 = arith.cmpf ogt, %22, %23 : vector<36x1xf32>
    %cst_18 = arith.constant 0.000000e+00 : f32
    %25 = vector.shape_cast %24 : vector<36x1xi1> to vector<36x1xi1>
    %26 = vector.broadcast %25 : vector<36x1xi1> to vector<36x8xi1>
    %27 = vector.broadcast %cst_18 : f32 to vector<36x8xf32>
    %28 = arith.select %26, %20, %27 : vector<36x8xi1>, vector<36x8xf32>
    %29 = arith.addf %16, %28 : vector<36x8xf32>
    %c2 = arith.constant 2 : index
    %c0_19 = arith.constant 0 : index
    %30 = vector.load %arg8[%c2, %c0_19] : memref<51x64xbf16, #tpu.memory_space<vmem>>, vector<36x64xbf16>
    %c1_20 = arith.constant 1 : index
    %c0_21 = arith.constant 0 : index
    %c0_22 = arith.constant 0 : index
    %31 = vector.load %arg2[%c1_20, %c0_21, %c0_22] : memref<9x64x8xbf16, #tpu.memory_space<vmem>>, vector<1x64x8xbf16>
    %32 = vector.shape_cast %31 : vector<1x64x8xbf16> to vector<64x8xbf16>
    %cst_23 = arith.constant dense<0.000000e+00> : vector<36x8xf32>
    %33 = tpu.matmul %30, %32, %cst_23 {dimension_numbers = #tpu.dot_dimension_numbers<[1], [0], [0], [1], [0, 0, 1, 1], [], []>} : vector<36x64xbf16>, vector<64x8xbf16>, vector<36x8xf32> -> vector<36x8xf32>
    %c1_24 = arith.constant 1 : index
    %c0_25 = arith.constant 0 : index
    %c0_26 = arith.constant 0 : index
    %34 = vector.load %arg5[%c1_24, %c0_25, %c0_26] : memref<9x36x1xf32, #tpu.memory_space<vmem>>, vector<1x36x1xf32>
    %35 = vector.shape_cast %34 : vector<1x36x1xf32> to vector<36x1xf32>
    %cst_27 = arith.constant 5.000000e-01 : f32
    %36 = vector.broadcast %cst_27 : f32 to vector<36x1xf32>
    %37 = arith.cmpf ogt, %35, %36 : vector<36x1xf32>
    %cst_28 = arith.constant 0.000000e+00 : f32
    %38 = vector.shape_cast %37 : vector<36x1xi1> to vector<36x1xi1>
    %39 = vector.broadcast %38 : vector<36x1xi1> to vector<36x8xi1>
    %40 = vector.broadcast %cst_28 : f32 to vector<36x8xf32>
    %41 = arith.select %39, %33, %40 : vector<36x8xi1>, vector<36x8xf32>
    %42 = arith.addf %29, %41 : vector<36x8xf32>
    %c3 = arith.constant 3 : index
    %c0_29 = arith.constant 0 : index
    %43 = vector.load %arg8[%c3, %c0_29] : memref<51x64xbf16, #tpu.memory_space<vmem>>, vector<36x64xbf16>
    %c2_30 = arith.constant 2 : index
    %c0_31 = arith.constant 0 : index
    %c0_32 = arith.constant 0 : index
    %44 = vector.load %arg2[%c2_30, %c0_31, %c0_32] : memref<9x64x8xbf16, #tpu.memory_space<vmem>>, vector<1x64x8xbf16>
    %45 = vector.shape_cast %44 : vector<1x64x8xbf16> to vector<64x8xbf16>
    %cst_33 = arith.constant dense<0.000000e+00> : vector<36x8xf32>
    %46 = tpu.matmul %43, %45, %cst_33 {dimension_numbers = #tpu.dot_dimension_numbers<[1], [0], [0], [1], [0, 0, 1, 1], [], []>} : vector<36x64xbf16>, vector<64x8xbf16>, vector<36x8xf32> -> vector<36x8xf32>
    %c2_34 = arith.constant 2 : index
    %c0_35 = arith.constant 0 : index
    %c0_36 = arith.constant 0 : index
    %47 = vector.load %arg5[%c2_34, %c0_35, %c0_36] : memref<9x36x1xf32, #tpu.memory_space<vmem>>, vector<1x36x1xf32>
    %48 = vector.shape_cast %47 : vector<1x36x1xf32> to vector<36x1xf32>
    %cst_37 = arith.constant 5.000000e-01 : f32
    %49 = vector.broadcast %cst_37 : f32 to vector<36x1xf32>
    %50 = arith.cmpf ogt, %48, %49 : vector<36x1xf32>
    %cst_38 = arith.constant 0.000000e+00 : f32
    %51 = vector.shape_cast %50 : vector<36x1xi1> to vector<36x1xi1>
    %52 = vector.broadcast %51 : vector<36x1xi1> to vector<36x8xi1>
    %53 = vector.broadcast %cst_38 : f32 to vector<36x8xf32>
    %54 = arith.select %52, %46, %53 : vector<36x8xi1>, vector<36x8xf32>
    %55 = arith.addf %42, %54 : vector<36x8xf32>
    %c7 = arith.constant 7 : index
    %c0_39 = arith.constant 0 : index
    %56 = vector.load %arg8[%c7, %c0_39] : memref<51x64xbf16, #tpu.memory_space<vmem>>, vector<36x64xbf16>
    %c3_40 = arith.constant 3 : index
    %c0_41 = arith.constant 0 : index
    %c0_42 = arith.constant 0 : index
    %57 = vector.load %arg2[%c3_40, %c0_41, %c0_42] : memref<9x64x8xbf16, #tpu.memory_space<vmem>>, vector<1x64x8xbf16>
    %58 = vector.shape_cast %57 : vector<1x64x8xbf16> to vector<64x8xbf16>
    %cst_43 = arith.constant dense<0.000000e+00> : vector<36x8xf32>
    %59 = tpu.matmul %56, %58, %cst_43 {dimension_numbers = #tpu.dot_dimension_numbers<[1], [0], [0], [1], [0, 0, 1, 1], [], []>} : vector<36x64xbf16>, vector<64x8xbf16>, vector<36x8xf32> -> vector<36x8xf32>
    %c3_44 = arith.constant 3 : index
    %c0_45 = arith.constant 0 : index
    %c0_46 = arith.constant 0 : index
    %60 = vector.load %arg5[%c3_44, %c0_45, %c0_46] : memref<9x36x1xf32, #tpu.memory_space<vmem>>, vector<1x36x1xf32>
    %61 = vector.shape_cast %60 : vector<1x36x1xf32> to vector<36x1xf32>
    %cst_47 = arith.constant 5.000000e-01 : f32
    %62 = vector.broadcast %cst_47 : f32 to vector<36x1xf32>
    %63 = arith.cmpf ogt, %61, %62 : vector<36x1xf32>
    %cst_48 = arith.constant 0.000000e+00 : f32
    %64 = vector.shape_cast %63 : vector<36x1xi1> to vector<36x1xi1>
    %65 = vector.broadcast %64 : vector<36x1xi1> to vector<36x8xi1>
    %66 = vector.broadcast %cst_48 : f32 to vector<36x8xf32>
    %67 = arith.select %65, %59, %66 : vector<36x8xi1>, vector<36x8xf32>
    %68 = arith.addf %55, %67 : vector<36x8xf32>
    %c8_49 = arith.constant 8 : index
    %c0_50 = arith.constant 0 : index
    %69 = vector.load %arg8[%c8_49, %c0_50] : memref<51x64xbf16, #tpu.memory_space<vmem>>, vector<36x64xbf16>
    %c4 = arith.constant 4 : index
    %c0_51 = arith.constant 0 : index
    %c0_52 = arith.constant 0 : index
    %70 = vector.load %arg2[%c4, %c0_51, %c0_52] : memref<9x64x8xbf16, #tpu.memory_space<vmem>>, vector<1x64x8xbf16>
    %71 = vector.shape_cast %70 : vector<1x64x8xbf16> to vector<64x8xbf16>
    %cst_53 = arith.constant dense<0.000000e+00> : vector<36x8xf32>
    %72 = tpu.matmul %69, %71, %cst_53 {dimension_numbers = #tpu.dot_dimension_numbers<[1], [0], [0], [1], [0, 0, 1, 1], [], []>} : vector<36x64xbf16>, vector<64x8xbf16>, vector<36x8xf32> -> vector<36x8xf32>
    %c4_54 = arith.constant 4 : index
    %c0_55 = arith.constant 0 : index
    %c0_56 = arith.constant 0 : index
    %73 = vector.load %arg5[%c4_54, %c0_55, %c0_56] : memref<9x36x1xf32, #tpu.memory_space<vmem>>, vector<1x36x1xf32>
    %74 = vector.shape_cast %73 : vector<1x36x1xf32> to vector<36x1xf32>
    %cst_57 = arith.constant 5.000000e-01 : f32
    %75 = vector.broadcast %cst_57 : f32 to vector<36x1xf32>
    %76 = arith.cmpf ogt, %74, %75 : vector<36x1xf32>
    %cst_58 = arith.constant 0.000000e+00 : f32
    %77 = vector.shape_cast %76 : vector<36x1xi1> to vector<36x1xi1>
    %78 = vector.broadcast %77 : vector<36x1xi1> to vector<36x8xi1>
    %79 = vector.broadcast %cst_58 : f32 to vector<36x8xf32>
    %80 = arith.select %78, %72, %79 : vector<36x8xi1>, vector<36x8xf32>
    %81 = arith.addf %68, %80 : vector<36x8xf32>
    %c9 = arith.constant 9 : index
    %c0_59 = arith.constant 0 : index
    %82 = vector.load %arg8[%c9, %c0_59] : memref<51x64xbf16, #tpu.memory_space<vmem>>, vector<36x64xbf16>
    %c5 = arith.constant 5 : index
    %c0_60 = arith.constant 0 : index
    %c0_61 = arith.constant 0 : index
    %83 = vector.load %arg2[%c5, %c0_60, %c0_61] : memref<9x64x8xbf16, #tpu.memory_space<vmem>>, vector<1x64x8xbf16>
    %84 = vector.shape_cast %83 : vector<1x64x8xbf16> to vector<64x8xbf16>
    %cst_62 = arith.constant dense<0.000000e+00> : vector<36x8xf32>
    %85 = tpu.matmul %82, %84, %cst_62 {dimension_numbers = #tpu.dot_dimension_numbers<[1], [0], [0], [1], [0, 0, 1, 1], [], []>} : vector<36x64xbf16>, vector<64x8xbf16>, vector<36x8xf32> -> vector<36x8xf32>
    %c5_63 = arith.constant 5 : index
    %c0_64 = arith.constant 0 : index
    %c0_65 = arith.constant 0 : index
    %86 = vector.load %arg5[%c5_63, %c0_64, %c0_65] : memref<9x36x1xf32, #tpu.memory_space<vmem>>, vector<1x36x1xf32>
    %87 = vector.shape_cast %86 : vector<1x36x1xf32> to vector<36x1xf32>
    %cst_66 = arith.constant 5.000000e-01 : f32
    %88 = vector.broadcast %cst_66 : f32 to vector<36x1xf32>
    %89 = arith.cmpf ogt, %87, %88 : vector<36x1xf32>
    %cst_67 = arith.constant 0.000000e+00 : f32
    %90 = vector.shape_cast %89 : vector<36x1xi1> to vector<36x1xi1>
    %91 = vector.broadcast %90 : vector<36x1xi1> to vector<36x8xi1>
    %92 = vector.broadcast %cst_67 : f32 to vector<36x8xf32>
    %93 = arith.select %91, %85, %92 : vector<36x8xi1>, vector<36x8xf32>
    %94 = arith.addf %81, %93 : vector<36x8xf32>
    %c13 = arith.constant 13 : index
    %c0_68 = arith.constant 0 : index
    %95 = vector.load %arg8[%c13, %c0_68] : memref<51x64xbf16, #tpu.memory_space<vmem>>, vector<36x64xbf16>
    %c6 = arith.constant 6 : index
    %c0_69 = arith.constant 0 : index
    %c0_70 = arith.constant 0 : index
    %96 = vector.load %arg2[%c6, %c0_69, %c0_70] : memref<9x64x8xbf16, #tpu.memory_space<vmem>>, vector<1x64x8xbf16>
    %97 = vector.shape_cast %96 : vector<1x64x8xbf16> to vector<64x8xbf16>
    %cst_71 = arith.constant dense<0.000000e+00> : vector<36x8xf32>
    %98 = tpu.matmul %95, %97, %cst_71 {dimension_numbers = #tpu.dot_dimension_numbers<[1], [0], [0], [1], [0, 0, 1, 1], [], []>} : vector<36x64xbf16>, vector<64x8xbf16>, vector<36x8xf32> -> vector<36x8xf32>
    %c6_72 = arith.constant 6 : index
    %c0_73 = arith.constant 0 : index
    %c0_74 = arith.constant 0 : index
    %99 = vector.load %arg5[%c6_72, %c0_73, %c0_74] : memref<9x36x1xf32, #tpu.memory_space<vmem>>, vector<1x36x1xf32>
    %100 = vector.shape_cast %99 : vector<1x36x1xf32> to vector<36x1xf32>
    %cst_75 = arith.constant 5.000000e-01 : f32
    %101 = vector.broadcast %cst_75 : f32 to vector<36x1xf32>
    %102 = arith.cmpf ogt, %100, %101 : vector<36x1xf32>
    %cst_76 = arith.constant 0.000000e+00 : f32
    %103 = vector.shape_cast %102 : vector<36x1xi1> to vector<36x1xi1>
    %104 = vector.broadcast %103 : vector<36x1xi1> to vector<36x8xi1>
    %105 = vector.broadcast %cst_76 : f32 to vector<36x8xf32>
    %106 = arith.select %104, %98, %105 : vector<36x8xi1>, vector<36x8xf32>
    %107 = arith.addf %94, %106 : vector<36x8xf32>
    %c14 = arith.constant 14 : index
    %c0_77 = arith.constant 0 : index
    %108 = vector.load %arg8[%c14, %c0_77] : memref<51x64xbf16, #tpu.memory_space<vmem>>, vector<36x64xbf16>
    %c7_78 = arith.constant 7 : index
    %c0_79 = arith.constant 0 : index
    %c0_80 = arith.constant 0 : index
    %109 = vector.load %arg2[%c7_78, %c0_79, %c0_80] : memref<9x64x8xbf16, #tpu.memory_space<vmem>>, vector<1x64x8xbf16>
    %110 = vector.shape_cast %109 : vector<1x64x8xbf16> to vector<64x8xbf16>
    %cst_81 = arith.constant dense<0.000000e+00> : vector<36x8xf32>
    %111 = tpu.matmul %108, %110, %cst_81 {dimension_numbers = #tpu.dot_dimension_numbers<[1], [0], [0], [1], [0, 0, 1, 1], [], []>} : vector<36x64xbf16>, vector<64x8xbf16>, vector<36x8xf32> -> vector<36x8xf32>
    %c7_82 = arith.constant 7 : index
    %c0_83 = arith.constant 0 : index
    %c0_84 = arith.constant 0 : index
    %112 = vector.load %arg5[%c7_82, %c0_83, %c0_84] : memref<9x36x1xf32, #tpu.memory_space<vmem>>, vector<1x36x1xf32>
    %113 = vector.shape_cast %112 : vector<1x36x1xf32> to vector<36x1xf32>
    %cst_85 = arith.constant 5.000000e-01 : f32
    %114 = vector.broadcast %cst_85 : f32 to vector<36x1xf32>
    %115 = arith.cmpf ogt, %113, %114 : vector<36x1xf32>
    %cst_86 = arith.constant 0.000000e+00 : f32
    %116 = vector.shape_cast %115 : vector<36x1xi1> to vector<36x1xi1>
    %117 = vector.broadcast %116 : vector<36x1xi1> to vector<36x8xi1>
    %118 = vector.broadcast %cst_86 : f32 to vector<36x8xf32>
    %119 = arith.select %117, %111, %118 : vector<36x8xi1>, vector<36x8xf32>
    %120 = arith.addf %107, %119 : vector<36x8xf32>
    %c15 = arith.constant 15 : index
    %c0_87 = arith.constant 0 : index
    %121 = vector.load %arg8[%c15, %c0_87] : memref<51x64xbf16, #tpu.memory_space<vmem>>, vector<36x64xbf16>
    %c8_88 = arith.constant 8 : index
    %c0_89 = arith.constant 0 : index
    %c0_90 = arith.constant 0 : index
    %122 = vector.load %arg2[%c8_88, %c0_89, %c0_90] : memref<9x64x8xbf16, #tpu.memory_space<vmem>>, vector<1x64x8xbf16>
    %123 = vector.shape_cast %122 : vector<1x64x8xbf16> to vector<64x8xbf16>
    %cst_91 = arith.constant dense<0.000000e+00> : vector<36x8xf32>
    %124 = tpu.matmul %121, %123, %cst_91 {dimension_numbers = #tpu.dot_dimension_numbers<[1], [0], [0], [1], [0, 0, 1, 1], [], []>} : vector<36x64xbf16>, vector<64x8xbf16>, vector<36x8xf32> -> vector<36x8xf32>
    %c8_92 = arith.constant 8 : index
    %c0_93 = arith.constant 0 : index
    %c0_94 = arith.constant 0 : index
    %125 = vector.load %arg5[%c8_92, %c0_93, %c0_94] : memref<9x36x1xf32, #tpu.memory_space<vmem>>, vector<1x36x1xf32>
    %126 = vector.shape_cast %125 : vector<1x36x1xf32> to vector<36x1xf32>
    %cst_95 = arith.constant 5.000000e-01 : f32
    %127 = vector.broadcast %cst_95 : f32 to vector<36x1xf32>
    %128 = arith.cmpf ogt, %126, %127 : vector<36x1xf32>
    %cst_96 = arith.constant 0.000000e+00 : f32
    %129 = vector.shape_cast %128 : vector<36x1xi1> to vector<36x1xi1>
    %130 = vector.broadcast %129 : vector<36x1xi1> to vector<36x8xi1>
    %131 = vector.broadcast %cst_96 : f32 to vector<36x8xf32>
    %132 = arith.select %130, %124, %131 : vector<36x8xi1>, vector<36x8xf32>
    %133 = arith.addf %120, %132 : vector<36x8xf32>
    %134 = arith.truncf %133 : vector<36x8xf32> to vector<36x8xbf16>
    %c0_97 = arith.constant 0 : index
    %c0_98 = arith.constant 0 : index
    %c0_99 = arith.constant 0 : index
    %135 = vector.load %arg6[%c0_97, %c0_98, %c0_99] : memref<1x36x8xbf16, #tpu.memory_space<vmem>>, vector<1x36x8xbf16>
    %136 = vector.shape_cast %135 : vector<1x36x8xbf16> to vector<36x8xbf16>
    %137 = vector.shape_cast %134 : vector<36x8xbf16> to vector<1x36x8xbf16>
    tpu.vector_store %arg6[%c0_97, %c0_98, %c0_99], %137 {strides = array<i32>} : memref<1x36x8xbf16, #tpu.memory_space<vmem>>, vector<1x36x8xbf16>,
    %138 = arith.extf %134 : vector<36x8xbf16> to vector<36x8xf32>
    %cst_100 = arith.constant dense<0.000000e+00> : vector<8xf32>
    %139 = vector.multi_reduction <add>, %138, %cst_100 [0] : vector<36x8xf32> to vector<8xf32>
    %140 = vector.shape_cast %139 : vector<8xf32> to vector<1x8xf32>
    %141 = arith.mulf %138, %138 : vector<36x8xf32>
    %cst_101 = arith.constant dense<0.000000e+00> : vector<8xf32>
    %142 = vector.multi_reduction <add>, %141, %cst_101 [0] : vector<36x8xf32> to vector<8xf32>
    %143 = vector.shape_cast %142 : vector<8xf32> to vector<1x8xf32>
    %144 = tpu.concatenate %140, %143 in 0 : vector<1x8xf32>, vector<1x8xf32> -> vector<2x8xf32>
    %c0_102 = arith.constant 0 : index
    %c0_103 = arith.constant 0 : index
    %c0_104 = arith.constant 0 : index
    %145 = vector.load %arg7[%c0_102, %c0_103, %c0_104] : memref<1x2x8xf32, #tpu.memory_space<vmem>>, vector<1x2x8xf32>
    %146 = vector.shape_cast %145 : vector<1x2x8xf32> to vector<2x8xf32>
    %147 = vector.shape_cast %144 : vector<2x8xf32> to vector<1x2x8xf32>
    tpu.vector_store %arg7[%c0_102, %c0_103, %c0_104], %147 {strides = array<i32>} : memref<1x2x8xf32, #tpu.memory_space<vmem>>, vector<1x2x8xf32>,
    return
  }
  func.func @transform_0(%arg0: i32) -> (i32, i32, i32) {
    %c0_i32 = arith.constant 0 : i32
    %c0_i32_0 = arith.constant 0 : i32
    %c0_i32_1 = arith.constant 0 : i32
    return %arg0, %c0_i32, %c0_i32_0 : i32, i32, i32
  }
  func.func @transform_1(%arg0: i32) -> (i32, i32, i32) {
    %c0_i32 = arith.constant 0 : i32
    %c0_i32_0 = arith.constant 0 : i32
    %c0_i32_1 = arith.constant 0 : i32
    %c0_i32_2 = arith.constant 0 : i32
    return %c0_i32, %c0_i32_0, %c0_i32_1 : i32, i32, i32
  }
  func.func @transform_2(%arg0: i32) -> (i32, i32) {
    %c0_i32 = arith.constant 0 : i32
    %c0_i32_0 = arith.constant 0 : i32
    %c0_i32_1 = arith.constant 0 : i32
    return %c0_i32, %c0_i32_0 : i32, i32
  }
  func.func @transform_3(%arg0: i32) -> (i32, i32) {
    %c0_i32 = arith.constant 0 : i32
    %c0_i32_0 = arith.constant 0 : i32
    %c0_i32_1 = arith.constant 0 : i32
    return %c0_i32, %c0_i32_0 : i32, i32
  }
  func.func @transform_4(%arg0: i32) -> (i32, i32, i32) {
    %c0_i32 = arith.constant 0 : i32
    %c0_i32_0 = arith.constant 0 : i32
    %c0_i32_1 = arith.constant 0 : i32
    %c0_i32_2 = arith.constant 0 : i32
    return %c0_i32, %c0_i32_0, %c0_i32_1 : i32, i32, i32
  }
  func.func @transform_5(%arg0: i32) -> (i32, i32, i32) {
    %c0_i32 = arith.constant 0 : i32
    %c0_i32_0 = arith.constant 0 : i32
    %c0_i32_1 = arith.constant 0 : i32
    return %arg0, %c0_i32, %c0_i32_0 : i32, i32, i32
  }
  func.func @transform_6(%arg0: i32) -> (i32, i32, i32) {
    %c0_i32 = arith.constant 0 : i32
    %c0_i32_0 = arith.constant 0 : i32
    %c0_i32_1 = arith.constant 0 : i32
    return %arg0, %c0_i32, %c0_i32_0 : i32, i32, i32
  }
}

module attributes {stable_mosaic.version = 11 : i64} {
  func.func @_dense_conv3_kernel(%arg0: i32, %arg1: memref<1x36x72xbf16, #tpu.memory_space<vmem>>, %arg2: memref<9x72x8xbf16, #tpu.memory_space<vmem>>, %arg3: memref<1x72xf32, #tpu.memory_space<vmem>>, %arg4: memref<1x72xf32, #tpu.memory_space<vmem>>, %arg5: memref<9x36x1xf32, #tpu.memory_space<vmem>>, %arg6: memref<1x36x8xbf16, #tpu.memory_space<vmem>>, %arg7: memref<1x2x8xf32, #tpu.memory_space<vmem>>, %arg8: memref<51x72xbf16, #tpu.memory_space<vmem>>) attributes {dimension_semantics = [#tpu.dimension_semantics<parallel>], iteration_bounds = array<i64: 2>, scalar_prefetch = 0 : i64, scratch_operands = 1 : i64, tpu.core_type = #tpu.core_type<tc>, window_params = [{transform_indices = @transform_0, window_bounds = array<i64: 1, 36, 72>}, {pipeline_mode = #tpu.pipeline_mode<synchronous>, transform_indices = @transform_1, window_bounds = array<i64: 9, 72, 8>}, {pipeline_mode = #tpu.pipeline_mode<synchronous>, transform_indices = @transform_2, window_bounds = array<i64: 1, 72>}, {pipeline_mode = #tpu.pipeline_mode<synchronous>, transform_indices = @transform_3, window_bounds = array<i64: 1, 72>}, {pipeline_mode = #tpu.pipeline_mode<synchronous>, transform_indices = @transform_4, window_bounds = array<i64: 9, 36, 1>}, {transform_indices = @transform_5, window_bounds = array<i64: 1, 36, 8>}, {transform_indices = @transform_6, window_bounds = array<i64: 1, 2, 8>}]} {
    %c0_i32 = arith.constant 0 : i32
    %0 = arith.cmpi eq, %arg0, %c0_i32 : i32
    %1 = arith.extui %0 : i1 to i32
    %c0_i32_0 = arith.constant 0 : i32
    %2 = arith.cmpi ne, %1, %c0_i32_0 : i32
    scf.if %2 {
      %cst_105 = arith.constant 0.000000e+00 : bf16
      %148 = vector.broadcast %cst_105 : bf16 to vector<51x72xbf16>
      %c0_106 = arith.constant 0 : index
      %c0_107 = arith.constant 0 : index
      %149 = vector.load %arg8[%c0_106, %c0_107] : memref<51x72xbf16, #tpu.memory_space<vmem>>, vector<51x72xbf16>
      tpu.vector_store %arg8[%c0_106, %c0_107], %148 {strides = array<i32>} : memref<51x72xbf16, #tpu.memory_space<vmem>>, vector<51x72xbf16>,
    } else {
    }
    %c0 = arith.constant 0 : index
    %c0_1 = arith.constant 0 : index
    %c0_2 = arith.constant 0 : index
    %3 = vector.load %arg1[%c0, %c0_1, %c0_2] : memref<1x36x72xbf16, #tpu.memory_space<vmem>>, vector<1x36x72xbf16>
    %4 = vector.shape_cast %3 : vector<1x36x72xbf16> to vector<36x72xbf16>
    %5 = arith.extf %4 : vector<36x72xbf16> to vector<36x72xf32>
    %c0_3 = arith.constant 0 : index
    %c0_4 = arith.constant 0 : index
    %6 = vector.load %arg3[%c0_3, %c0_4] : memref<1x72xf32, #tpu.memory_space<vmem>>, vector<1x72xf32>
    %7 = vector.broadcast %6 : vector<1x72xf32> to vector<36x72xf32>
    %8 = arith.mulf %5, %7 : vector<36x72xf32>
    %c0_5 = arith.constant 0 : index
    %c0_6 = arith.constant 0 : index
    %9 = vector.load %arg4[%c0_5, %c0_6] : memref<1x72xf32, #tpu.memory_space<vmem>>, vector<1x72xf32>
    %10 = vector.broadcast %9 : vector<1x72xf32> to vector<36x72xf32>
    %11 = arith.addf %8, %10 : vector<36x72xf32>
    %cst = arith.constant 0.000000e+00 : f32
    %12 = vector.broadcast %cst : f32 to vector<36x72xf32>
    %13 = arith.maximumf %11, %12 : vector<36x72xf32>
    %14 = arith.truncf %13 : vector<36x72xf32> to vector<36x72xbf16>
    %c8 = arith.constant 8 : index
    %c0_7 = arith.constant 0 : index
    %15 = vector.load %arg8[%c8, %c0_7] : memref<51x72xbf16, #tpu.memory_space<vmem>>, vector<36x72xbf16>
    tpu.vector_store %arg8[%c8, %c0_7], %14 {strides = array<i32>} : memref<51x72xbf16, #tpu.memory_space<vmem>>, vector<36x72xbf16>,
    %cst_8 = arith.constant 0.000000e+00 : f32
    %16 = vector.broadcast %cst_8 : f32 to vector<36x8xf32>
    %c1 = arith.constant 1 : index
    %c0_9 = arith.constant 0 : index
    %17 = vector.load %arg8[%c1, %c0_9] : memref<51x72xbf16, #tpu.memory_space<vmem>>, vector<36x72xbf16>
    %c0_10 = arith.constant 0 : index
    %c0_11 = arith.constant 0 : index
    %c0_12 = arith.constant 0 : index
    %18 = vector.load %arg2[%c0_10, %c0_11, %c0_12] : memref<9x72x8xbf16, #tpu.memory_space<vmem>>, vector<1x72x8xbf16>
    %19 = vector.shape_cast %18 : vector<1x72x8xbf16> to vector<72x8xbf16>
    %cst_13 = arith.constant dense<0.000000e+00> : vector<36x8xf32>
    %20 = tpu.matmul %17, %19, %cst_13 {dimension_numbers = #tpu.dot_dimension_numbers<[1], [0], [0], [1], [0, 0, 1, 1], [], []>} : vector<36x72xbf16>, vector<72x8xbf16>, vector<36x8xf32> -> vector<36x8xf32>
    %c0_14 = arith.constant 0 : index
    %c0_15 = arith.constant 0 : index
    %c0_16 = arith.constant 0 : index
    %21 = vector.load %arg5[%c0_14, %c0_15, %c0_16] : memref<9x36x1xf32, #tpu.memory_space<vmem>>, vector<1x36x1xf32>
    %22 = vector.shape_cast %21 : vector<1x36x1xf32> to vector<36x1xf32>
    %cst_17 = arith.constant 5.000000e-01 : f32
    %23 = vector.broadcast %cst_17 : f32 to vector<36x1xf32>
    %24 = arith.cmpf ogt, %22, %23 : vector<36x1xf32>
    %cst_18 = arith.constant 0.000000e+00 : f32
    %25 = vector.shape_cast %24 : vector<36x1xi1> to vector<36x1xi1>
    %26 = vector.broadcast %25 : vector<36x1xi1> to vector<36x8xi1>
    %27 = vector.broadcast %cst_18 : f32 to vector<36x8xf32>
    %28 = arith.select %26, %20, %27 : vector<36x8xi1>, vector<36x8xf32>
    %29 = arith.addf %16, %28 : vector<36x8xf32>
    %c2 = arith.constant 2 : index
    %c0_19 = arith.constant 0 : index
    %30 = vector.load %arg8[%c2, %c0_19] : memref<51x72xbf16, #tpu.memory_space<vmem>>, vector<36x72xbf16>
    %c1_20 = arith.constant 1 : index
    %c0_21 = arith.constant 0 : index
    %c0_22 = arith.constant 0 : index
    %31 = vector.load %arg2[%c1_20, %c0_21, %c0_22] : memref<9x72x8xbf16, #tpu.memory_space<vmem>>, vector<1x72x8xbf16>
    %32 = vector.shape_cast %31 : vector<1x72x8xbf16> to vector<72x8xbf16>
    %cst_23 = arith.constant dense<0.000000e+00> : vector<36x8xf32>
    %33 = tpu.matmul %30, %32, %cst_23 {dimension_numbers = #tpu.dot_dimension_numbers<[1], [0], [0], [1], [0, 0, 1, 1], [], []>} : vector<36x72xbf16>, vector<72x8xbf16>, vector<36x8xf32> -> vector<36x8xf32>
    %c1_24 = arith.constant 1 : index
    %c0_25 = arith.constant 0 : index
    %c0_26 = arith.constant 0 : index
    %34 = vector.load %arg5[%c1_24, %c0_25, %c0_26] : memref<9x36x1xf32, #tpu.memory_space<vmem>>, vector<1x36x1xf32>
    %35 = vector.shape_cast %34 : vector<1x36x1xf32> to vector<36x1xf32>
    %cst_27 = arith.constant 5.000000e-01 : f32
    %36 = vector.broadcast %cst_27 : f32 to vector<36x1xf32>
    %37 = arith.cmpf ogt, %35, %36 : vector<36x1xf32>
    %cst_28 = arith.constant 0.000000e+00 : f32
    %38 = vector.shape_cast %37 : vector<36x1xi1> to vector<36x1xi1>
    %39 = vector.broadcast %38 : vector<36x1xi1> to vector<36x8xi1>
    %40 = vector.broadcast %cst_28 : f32 to vector<36x8xf32>
    %41 = arith.select %39, %33, %40 : vector<36x8xi1>, vector<36x8xf32>
    %42 = arith.addf %29, %41 : vector<36x8xf32>
    %c3 = arith.constant 3 : index
    %c0_29 = arith.constant 0 : index
    %43 = vector.load %arg8[%c3, %c0_29] : memref<51x72xbf16, #tpu.memory_space<vmem>>, vector<36x72xbf16>
    %c2_30 = arith.constant 2 : index
    %c0_31 = arith.constant 0 : index
    %c0_32 = arith.constant 0 : index
    %44 = vector.load %arg2[%c2_30, %c0_31, %c0_32] : memref<9x72x8xbf16, #tpu.memory_space<vmem>>, vector<1x72x8xbf16>
    %45 = vector.shape_cast %44 : vector<1x72x8xbf16> to vector<72x8xbf16>
    %cst_33 = arith.constant dense<0.000000e+00> : vector<36x8xf32>
    %46 = tpu.matmul %43, %45, %cst_33 {dimension_numbers = #tpu.dot_dimension_numbers<[1], [0], [0], [1], [0, 0, 1, 1], [], []>} : vector<36x72xbf16>, vector<72x8xbf16>, vector<36x8xf32> -> vector<36x8xf32>
    %c2_34 = arith.constant 2 : index
    %c0_35 = arith.constant 0 : index
    %c0_36 = arith.constant 0 : index
    %47 = vector.load %arg5[%c2_34, %c0_35, %c0_36] : memref<9x36x1xf32, #tpu.memory_space<vmem>>, vector<1x36x1xf32>
    %48 = vector.shape_cast %47 : vector<1x36x1xf32> to vector<36x1xf32>
    %cst_37 = arith.constant 5.000000e-01 : f32
    %49 = vector.broadcast %cst_37 : f32 to vector<36x1xf32>
    %50 = arith.cmpf ogt, %48, %49 : vector<36x1xf32>
    %cst_38 = arith.constant 0.000000e+00 : f32
    %51 = vector.shape_cast %50 : vector<36x1xi1> to vector<36x1xi1>
    %52 = vector.broadcast %51 : vector<36x1xi1> to vector<36x8xi1>
    %53 = vector.broadcast %cst_38 : f32 to vector<36x8xf32>
    %54 = arith.select %52, %46, %53 : vector<36x8xi1>, vector<36x8xf32>
    %55 = arith.addf %42, %54 : vector<36x8xf32>
    %c7 = arith.constant 7 : index
    %c0_39 = arith.constant 0 : index
    %56 = vector.load %arg8[%c7, %c0_39] : memref<51x72xbf16, #tpu.memory_space<vmem>>, vector<36x72xbf16>
    %c3_40 = arith.constant 3 : index
    %c0_41 = arith.constant 0 : index
    %c0_42 = arith.constant 0 : index
    %57 = vector.load %arg2[%c3_40, %c0_41, %c0_42] : memref<9x72x8xbf16, #tpu.memory_space<vmem>>, vector<1x72x8xbf16>
    %58 = vector.shape_cast %57 : vector<1x72x8xbf16> to vector<72x8xbf16>
    %cst_43 = arith.constant dense<0.000000e+00> : vector<36x8xf32>
    %59 = tpu.matmul %56, %58, %cst_43 {dimension_numbers = #tpu.dot_dimension_numbers<[1], [0], [0], [1], [0, 0, 1, 1], [], []>} : vector<36x72xbf16>, vector<72x8xbf16>, vector<36x8xf32> -> vector<36x8xf32>
    %c3_44 = arith.constant 3 : index
    %c0_45 = arith.constant 0 : index
    %c0_46 = arith.constant 0 : index
    %60 = vector.load %arg5[%c3_44, %c0_45, %c0_46] : memref<9x36x1xf32, #tpu.memory_space<vmem>>, vector<1x36x1xf32>
    %61 = vector.shape_cast %60 : vector<1x36x1xf32> to vector<36x1xf32>
    %cst_47 = arith.constant 5.000000e-01 : f32
    %62 = vector.broadcast %cst_47 : f32 to vector<36x1xf32>
    %63 = arith.cmpf ogt, %61, %62 : vector<36x1xf32>
    %cst_48 = arith.constant 0.000000e+00 : f32
    %64 = vector.shape_cast %63 : vector<36x1xi1> to vector<36x1xi1>
    %65 = vector.broadcast %64 : vector<36x1xi1> to vector<36x8xi1>
    %66 = vector.broadcast %cst_48 : f32 to vector<36x8xf32>
    %67 = arith.select %65, %59, %66 : vector<36x8xi1>, vector<36x8xf32>
    %68 = arith.addf %55, %67 : vector<36x8xf32>
    %c8_49 = arith.constant 8 : index
    %c0_50 = arith.constant 0 : index
    %69 = vector.load %arg8[%c8_49, %c0_50] : memref<51x72xbf16, #tpu.memory_space<vmem>>, vector<36x72xbf16>
    %c4 = arith.constant 4 : index
    %c0_51 = arith.constant 0 : index
    %c0_52 = arith.constant 0 : index
    %70 = vector.load %arg2[%c4, %c0_51, %c0_52] : memref<9x72x8xbf16, #tpu.memory_space<vmem>>, vector<1x72x8xbf16>
    %71 = vector.shape_cast %70 : vector<1x72x8xbf16> to vector<72x8xbf16>
    %cst_53 = arith.constant dense<0.000000e+00> : vector<36x8xf32>
    %72 = tpu.matmul %69, %71, %cst_53 {dimension_numbers = #tpu.dot_dimension_numbers<[1], [0], [0], [1], [0, 0, 1, 1], [], []>} : vector<36x72xbf16>, vector<72x8xbf16>, vector<36x8xf32> -> vector<36x8xf32>
    %c4_54 = arith.constant 4 : index
    %c0_55 = arith.constant 0 : index
    %c0_56 = arith.constant 0 : index
    %73 = vector.load %arg5[%c4_54, %c0_55, %c0_56] : memref<9x36x1xf32, #tpu.memory_space<vmem>>, vector<1x36x1xf32>
    %74 = vector.shape_cast %73 : vector<1x36x1xf32> to vector<36x1xf32>
    %cst_57 = arith.constant 5.000000e-01 : f32
    %75 = vector.broadcast %cst_57 : f32 to vector<36x1xf32>
    %76 = arith.cmpf ogt, %74, %75 : vector<36x1xf32>
    %cst_58 = arith.constant 0.000000e+00 : f32
    %77 = vector.shape_cast %76 : vector<36x1xi1> to vector<36x1xi1>
    %78 = vector.broadcast %77 : vector<36x1xi1> to vector<36x8xi1>
    %79 = vector.broadcast %cst_58 : f32 to vector<36x8xf32>
    %80 = arith.select %78, %72, %79 : vector<36x8xi1>, vector<36x8xf32>
    %81 = arith.addf %68, %80 : vector<36x8xf32>
    %c9 = arith.constant 9 : index
    %c0_59 = arith.constant 0 : index
    %82 = vector.load %arg8[%c9, %c0_59] : memref<51x72xbf16, #tpu.memory_space<vmem>>, vector<36x72xbf16>
    %c5 = arith.constant 5 : index
    %c0_60 = arith.constant 0 : index
    %c0_61 = arith.constant 0 : index
    %83 = vector.load %arg2[%c5, %c0_60, %c0_61] : memref<9x72x8xbf16, #tpu.memory_space<vmem>>, vector<1x72x8xbf16>
    %84 = vector.shape_cast %83 : vector<1x72x8xbf16> to vector<72x8xbf16>
    %cst_62 = arith.constant dense<0.000000e+00> : vector<36x8xf32>
    %85 = tpu.matmul %82, %84, %cst_62 {dimension_numbers = #tpu.dot_dimension_numbers<[1], [0], [0], [1], [0, 0, 1, 1], [], []>} : vector<36x72xbf16>, vector<72x8xbf16>, vector<36x8xf32> -> vector<36x8xf32>
    %c5_63 = arith.constant 5 : index
    %c0_64 = arith.constant 0 : index
    %c0_65 = arith.constant 0 : index
    %86 = vector.load %arg5[%c5_63, %c0_64, %c0_65] : memref<9x36x1xf32, #tpu.memory_space<vmem>>, vector<1x36x1xf32>
    %87 = vector.shape_cast %86 : vector<1x36x1xf32> to vector<36x1xf32>
    %cst_66 = arith.constant 5.000000e-01 : f32
    %88 = vector.broadcast %cst_66 : f32 to vector<36x1xf32>
    %89 = arith.cmpf ogt, %87, %88 : vector<36x1xf32>
    %cst_67 = arith.constant 0.000000e+00 : f32
    %90 = vector.shape_cast %89 : vector<36x1xi1> to vector<36x1xi1>
    %91 = vector.broadcast %90 : vector<36x1xi1> to vector<36x8xi1>
    %92 = vector.broadcast %cst_67 : f32 to vector<36x8xf32>
    %93 = arith.select %91, %85, %92 : vector<36x8xi1>, vector<36x8xf32>
    %94 = arith.addf %81, %93 : vector<36x8xf32>
    %c13 = arith.constant 13 : index
    %c0_68 = arith.constant 0 : index
    %95 = vector.load %arg8[%c13, %c0_68] : memref<51x72xbf16, #tpu.memory_space<vmem>>, vector<36x72xbf16>
    %c6 = arith.constant 6 : index
    %c0_69 = arith.constant 0 : index
    %c0_70 = arith.constant 0 : index
    %96 = vector.load %arg2[%c6, %c0_69, %c0_70] : memref<9x72x8xbf16, #tpu.memory_space<vmem>>, vector<1x72x8xbf16>
    %97 = vector.shape_cast %96 : vector<1x72x8xbf16> to vector<72x8xbf16>
    %cst_71 = arith.constant dense<0.000000e+00> : vector<36x8xf32>
    %98 = tpu.matmul %95, %97, %cst_71 {dimension_numbers = #tpu.dot_dimension_numbers<[1], [0], [0], [1], [0, 0, 1, 1], [], []>} : vector<36x72xbf16>, vector<72x8xbf16>, vector<36x8xf32> -> vector<36x8xf32>
    %c6_72 = arith.constant 6 : index
    %c0_73 = arith.constant 0 : index
    %c0_74 = arith.constant 0 : index
    %99 = vector.load %arg5[%c6_72, %c0_73, %c0_74] : memref<9x36x1xf32, #tpu.memory_space<vmem>>, vector<1x36x1xf32>
    %100 = vector.shape_cast %99 : vector<1x36x1xf32> to vector<36x1xf32>
    %cst_75 = arith.constant 5.000000e-01 : f32
    %101 = vector.broadcast %cst_75 : f32 to vector<36x1xf32>
    %102 = arith.cmpf ogt, %100, %101 : vector<36x1xf32>
    %cst_76 = arith.constant 0.000000e+00 : f32
    %103 = vector.shape_cast %102 : vector<36x1xi1> to vector<36x1xi1>
    %104 = vector.broadcast %103 : vector<36x1xi1> to vector<36x8xi1>
    %105 = vector.broadcast %cst_76 : f32 to vector<36x8xf32>
    %106 = arith.select %104, %98, %105 : vector<36x8xi1>, vector<36x8xf32>
    %107 = arith.addf %94, %106 : vector<36x8xf32>
    %c14 = arith.constant 14 : index
    %c0_77 = arith.constant 0 : index
    %108 = vector.load %arg8[%c14, %c0_77] : memref<51x72xbf16, #tpu.memory_space<vmem>>, vector<36x72xbf16>
    %c7_78 = arith.constant 7 : index
    %c0_79 = arith.constant 0 : index
    %c0_80 = arith.constant 0 : index
    %109 = vector.load %arg2[%c7_78, %c0_79, %c0_80] : memref<9x72x8xbf16, #tpu.memory_space<vmem>>, vector<1x72x8xbf16>
    %110 = vector.shape_cast %109 : vector<1x72x8xbf16> to vector<72x8xbf16>
    %cst_81 = arith.constant dense<0.000000e+00> : vector<36x8xf32>
    %111 = tpu.matmul %108, %110, %cst_81 {dimension_numbers = #tpu.dot_dimension_numbers<[1], [0], [0], [1], [0, 0, 1, 1], [], []>} : vector<36x72xbf16>, vector<72x8xbf16>, vector<36x8xf32> -> vector<36x8xf32>
    %c7_82 = arith.constant 7 : index
    %c0_83 = arith.constant 0 : index
    %c0_84 = arith.constant 0 : index
    %112 = vector.load %arg5[%c7_82, %c0_83, %c0_84] : memref<9x36x1xf32, #tpu.memory_space<vmem>>, vector<1x36x1xf32>
    %113 = vector.shape_cast %112 : vector<1x36x1xf32> to vector<36x1xf32>
    %cst_85 = arith.constant 5.000000e-01 : f32
    %114 = vector.broadcast %cst_85 : f32 to vector<36x1xf32>
    %115 = arith.cmpf ogt, %113, %114 : vector<36x1xf32>
    %cst_86 = arith.constant 0.000000e+00 : f32
    %116 = vector.shape_cast %115 : vector<36x1xi1> to vector<36x1xi1>
    %117 = vector.broadcast %116 : vector<36x1xi1> to vector<36x8xi1>
    %118 = vector.broadcast %cst_86 : f32 to vector<36x8xf32>
    %119 = arith.select %117, %111, %118 : vector<36x8xi1>, vector<36x8xf32>
    %120 = arith.addf %107, %119 : vector<36x8xf32>
    %c15 = arith.constant 15 : index
    %c0_87 = arith.constant 0 : index
    %121 = vector.load %arg8[%c15, %c0_87] : memref<51x72xbf16, #tpu.memory_space<vmem>>, vector<36x72xbf16>
    %c8_88 = arith.constant 8 : index
    %c0_89 = arith.constant 0 : index
    %c0_90 = arith.constant 0 : index
    %122 = vector.load %arg2[%c8_88, %c0_89, %c0_90] : memref<9x72x8xbf16, #tpu.memory_space<vmem>>, vector<1x72x8xbf16>
    %123 = vector.shape_cast %122 : vector<1x72x8xbf16> to vector<72x8xbf16>
    %cst_91 = arith.constant dense<0.000000e+00> : vector<36x8xf32>
    %124 = tpu.matmul %121, %123, %cst_91 {dimension_numbers = #tpu.dot_dimension_numbers<[1], [0], [0], [1], [0, 0, 1, 1], [], []>} : vector<36x72xbf16>, vector<72x8xbf16>, vector<36x8xf32> -> vector<36x8xf32>
    %c8_92 = arith.constant 8 : index
    %c0_93 = arith.constant 0 : index
    %c0_94 = arith.constant 0 : index
    %125 = vector.load %arg5[%c8_92, %c0_93, %c0_94] : memref<9x36x1xf32, #tpu.memory_space<vmem>>, vector<1x36x1xf32>
    %126 = vector.shape_cast %125 : vector<1x36x1xf32> to vector<36x1xf32>
    %cst_95 = arith.constant 5.000000e-01 : f32
    %127 = vector.broadcast %cst_95 : f32 to vector<36x1xf32>
    %128 = arith.cmpf ogt, %126, %127 : vector<36x1xf32>
    %cst_96 = arith.constant 0.000000e+00 : f32
    %129 = vector.shape_cast %128 : vector<36x1xi1> to vector<36x1xi1>
    %130 = vector.broadcast %129 : vector<36x1xi1> to vector<36x8xi1>
    %131 = vector.broadcast %cst_96 : f32 to vector<36x8xf32>
    %132 = arith.select %130, %124, %131 : vector<36x8xi1>, vector<36x8xf32>
    %133 = arith.addf %120, %132 : vector<36x8xf32>
    %134 = arith.truncf %133 : vector<36x8xf32> to vector<36x8xbf16>
    %c0_97 = arith.constant 0 : index
    %c0_98 = arith.constant 0 : index
    %c0_99 = arith.constant 0 : index
    %135 = vector.load %arg6[%c0_97, %c0_98, %c0_99] : memref<1x36x8xbf16, #tpu.memory_space<vmem>>, vector<1x36x8xbf16>
    %136 = vector.shape_cast %135 : vector<1x36x8xbf16> to vector<36x8xbf16>
    %137 = vector.shape_cast %134 : vector<36x8xbf16> to vector<1x36x8xbf16>
    tpu.vector_store %arg6[%c0_97, %c0_98, %c0_99], %137 {strides = array<i32>} : memref<1x36x8xbf16, #tpu.memory_space<vmem>>, vector<1x36x8xbf16>,
    %138 = arith.extf %134 : vector<36x8xbf16> to vector<36x8xf32>
    %cst_100 = arith.constant dense<0.000000e+00> : vector<8xf32>
    %139 = vector.multi_reduction <add>, %138, %cst_100 [0] : vector<36x8xf32> to vector<8xf32>
    %140 = vector.shape_cast %139 : vector<8xf32> to vector<1x8xf32>
    %141 = arith.mulf %138, %138 : vector<36x8xf32>
    %cst_101 = arith.constant dense<0.000000e+00> : vector<8xf32>
    %142 = vector.multi_reduction <add>, %141, %cst_101 [0] : vector<36x8xf32> to vector<8xf32>
    %143 = vector.shape_cast %142 : vector<8xf32> to vector<1x8xf32>
    %144 = tpu.concatenate %140, %143 in 0 : vector<1x8xf32>, vector<1x8xf32> -> vector<2x8xf32>
    %c0_102 = arith.constant 0 : index
    %c0_103 = arith.constant 0 : index
    %c0_104 = arith.constant 0 : index
    %145 = vector.load %arg7[%c0_102, %c0_103, %c0_104] : memref<1x2x8xf32, #tpu.memory_space<vmem>>, vector<1x2x8xf32>
    %146 = vector.shape_cast %145 : vector<1x2x8xf32> to vector<2x8xf32>
    %147 = vector.shape_cast %144 : vector<2x8xf32> to vector<1x2x8xf32>
    tpu.vector_store %arg7[%c0_102, %c0_103, %c0_104], %147 {strides = array<i32>} : memref<1x2x8xf32, #tpu.memory_space<vmem>>, vector<1x2x8xf32>,
    return
  }
  func.func @transform_0(%arg0: i32) -> (i32, i32, i32) {
    %c0_i32 = arith.constant 0 : i32
    %c0_i32_0 = arith.constant 0 : i32
    %c0_i32_1 = arith.constant 0 : i32
    return %arg0, %c0_i32, %c0_i32_0 : i32, i32, i32
  }
  func.func @transform_1(%arg0: i32) -> (i32, i32, i32) {
    %c0_i32 = arith.constant 0 : i32
    %c0_i32_0 = arith.constant 0 : i32
    %c0_i32_1 = arith.constant 0 : i32
    %c0_i32_2 = arith.constant 0 : i32
    return %c0_i32, %c0_i32_0, %c0_i32_1 : i32, i32, i32
  }
  func.func @transform_2(%arg0: i32) -> (i32, i32) {
    %c0_i32 = arith.constant 0 : i32
    %c0_i32_0 = arith.constant 0 : i32
    %c0_i32_1 = arith.constant 0 : i32
    return %c0_i32, %c0_i32_0 : i32, i32
  }
  func.func @transform_3(%arg0: i32) -> (i32, i32) {
    %c0_i32 = arith.constant 0 : i32
    %c0_i32_0 = arith.constant 0 : i32
    %c0_i32_1 = arith.constant 0 : i32
    return %c0_i32, %c0_i32_0 : i32, i32
  }
  func.func @transform_4(%arg0: i32) -> (i32, i32, i32) {
    %c0_i32 = arith.constant 0 : i32
    %c0_i32_0 = arith.constant 0 : i32
    %c0_i32_1 = arith.constant 0 : i32
    %c0_i32_2 = arith.constant 0 : i32
    return %c0_i32, %c0_i32_0, %c0_i32_1 : i32, i32, i32
  }
  func.func @transform_5(%arg0: i32) -> (i32, i32, i32) {
    %c0_i32 = arith.constant 0 : i32
    %c0_i32_0 = arith.constant 0 : i32
    %c0_i32_1 = arith.constant 0 : i32
    return %arg0, %c0_i32, %c0_i32_0 : i32, i32, i32
  }
  func.func @transform_6(%arg0: i32) -> (i32, i32, i32) {
    %c0_i32 = arith.constant 0 : i32
    %c0_i32_0 = arith.constant 0 : i32
    %c0_i32_1 = arith.constant 0 : i32
    return %arg0, %c0_i32, %c0_i32_0 : i32, i32, i32
  }
}

module attributes {stable_mosaic.version = 11 : i64} {
  func.func @_mm_kernel(%arg0: i32, %arg1: i32, %arg2: i32, %arg3: memref<72x128xbf16, #tpu.memory_space<vmem>>, %arg4: memref<128x128xbf16, #tpu.memory_space<vmem>>, %arg5: memref<1x128xf32, #tpu.memory_space<vmem>>, %arg6: memref<1x128xf32, #tpu.memory_space<vmem>>, %arg7: memref<1x128xf32, #tpu.memory_space<vmem>>, %arg8: memref<72x128xf32, #tpu.memory_space<vmem>>) attributes {dimension_semantics = [#tpu.dimension_semantics<parallel>, #tpu.dimension_semantics<parallel>, #tpu.dimension_semantics<arbitrary>], iteration_bounds = array<i64: 1, 1, 1>, scalar_prefetch = 0 : i64, scratch_operands = 0 : i64, tpu.core_type = #tpu.core_type<tc>, window_params = [{transform_indices = @transform_0, window_bounds = array<i64: 72, 128>}, {transform_indices = @transform_1, window_bounds = array<i64: 128, 128>}, {transform_indices = @transform_2, window_bounds = array<i64: 1, 128>}, {transform_indices = @transform_3, window_bounds = array<i64: 1, 128>}, {transform_indices = @transform_4, window_bounds = array<i64: 1, 128>}, {transform_indices = @transform_5, window_bounds = array<i64: 72, 128>}]} {
    %c0_i32 = arith.constant 0 : i32
    %0 = arith.cmpi eq, %arg2, %c0_i32 : i32
    %1 = arith.extui %0 : i1 to i32
    %c0_i32_0 = arith.constant 0 : i32
    %2 = arith.cmpi ne, %1, %c0_i32_0 : i32
    scf.if %2 {
      %cst_15 = arith.constant 0.000000e+00 : f32
      %22 = vector.broadcast %cst_15 : f32 to vector<72x128xf32>
      %c0_16 = arith.constant 0 : index
      %c0_17 = arith.constant 0 : index
      %23 = vector.load %arg8[%c0_16, %c0_17] : memref<72x128xf32, #tpu.memory_space<vmem>>, vector<72x128xf32>
      tpu.vector_store %arg8[%c0_16, %c0_17], %22 {strides = array<i32>} : memref<72x128xf32, #tpu.memory_space<vmem>>, vector<72x128xf32>,
    } else {
    }
    %c0 = arith.constant 0 : index
    %c0_1 = arith.constant 0 : index
    %3 = vector.load %arg3[%c0, %c0_1] : memref<72x128xbf16, #tpu.memory_space<vmem>>, vector<72x128xbf16>
    %4 = arith.extf %3 : vector<72x128xbf16> to vector<72x128xf32>
    %c0_2 = arith.constant 0 : index
    %c0_3 = arith.constant 0 : index
    %5 = vector.load %arg5[%c0_2, %c0_3] : memref<1x128xf32, #tpu.memory_space<vmem>>, vector<1x128xf32>
    %6 = vector.broadcast %5 : vector<1x128xf32> to vector<72x128xf32>
    %7 = arith.mulf %4, %6 : vector<72x128xf32>
    %c0_4 = arith.constant 0 : index
    %c0_5 = arith.constant 0 : index
    %8 = vector.load %arg6[%c0_4, %c0_5] : memref<1x128xf32, #tpu.memory_space<vmem>>, vector<1x128xf32>
    %9 = vector.broadcast %8 : vector<1x128xf32> to vector<72x128xf32>
    %10 = arith.addf %7, %9 : vector<72x128xf32>
    %cst = arith.constant 0.000000e+00 : f32
    %11 = vector.broadcast %cst : f32 to vector<72x128xf32>
    %12 = arith.maximumf %10, %11 : vector<72x128xf32>
    %13 = arith.truncf %12 : vector<72x128xf32> to vector<72x128xbf16>
    %c0_6 = arith.constant 0 : index
    %c0_7 = arith.constant 0 : index
    %14 = vector.load %arg8[%c0_6, %c0_7] : memref<72x128xf32, #tpu.memory_space<vmem>>, vector<72x128xf32>
    %c0_8 = arith.constant 0 : index
    %c0_9 = arith.constant 0 : index
    %15 = vector.load %arg4[%c0_8, %c0_9] : memref<128x128xbf16, #tpu.memory_space<vmem>>, vector<128x128xbf16>
    %cst_10 = arith.constant dense<0.000000e+00> : vector<72x128xf32>
    %16 = tpu.matmul %13, %15, %cst_10 {dimension_numbers = #tpu.dot_dimension_numbers<[1], [0], [0], [1], [0, 0, 1, 1], [], []>} : vector<72x128xbf16>, vector<128x128xbf16>, vector<72x128xf32> -> vector<72x128xf32>
    %17 = arith.addf %14, %16 : vector<72x128xf32>
    %c0_11 = arith.constant 0 : index
    %c0_12 = arith.constant 0 : index
    %18 = vector.load %arg8[%c0_11, %c0_12] : memref<72x128xf32, #tpu.memory_space<vmem>>, vector<72x128xf32>
    tpu.vector_store %arg8[%c0_11, %c0_12], %17 {strides = array<i32>} : memref<72x128xf32, #tpu.memory_space<vmem>>, vector<72x128xf32>,
    %c0_i32_13 = arith.constant 0 : i32
    %19 = arith.cmpi eq, %arg2, %c0_i32_13 : i32
    %20 = arith.extui %19 : i1 to i32
    %c0_i32_14 = arith.constant 0 : i32
    %21 = arith.cmpi ne, %20, %c0_i32_14 : i32
    scf.if %21 {
      %c0_15 = arith.constant 0 : index
      %c0_16 = arith.constant 0 : index
      %22 = vector.load %arg8[%c0_15, %c0_16] : memref<72x128xf32, #tpu.memory_space<vmem>>, vector<72x128xf32>
      %c0_17 = arith.constant 0 : index
      %c0_18 = arith.constant 0 : index
      %23 = vector.load %arg7[%c0_17, %c0_18] : memref<1x128xf32, #tpu.memory_space<vmem>>, vector<1x128xf32>
      %24 = vector.broadcast %23 : vector<1x128xf32> to vector<72x128xf32>
      %25 = arith.addf %22, %24 : vector<72x128xf32>
      %c0_19 = arith.constant 0 : index
      %c0_20 = arith.constant 0 : index
      %26 = vector.load %arg8[%c0_19, %c0_20] : memref<72x128xf32, #tpu.memory_space<vmem>>, vector<72x128xf32>
      tpu.vector_store %arg8[%c0_19, %c0_20], %25 {strides = array<i32>} : memref<72x128xf32, #tpu.memory_space<vmem>>, vector<72x128xf32>,
    } else {
    }
    return
  }
  func.func @transform_0(%arg0: i32, %arg1: i32, %arg2: i32) -> (i32, i32) {
    %c0_i32 = arith.constant 0 : i32
    return %arg0, %arg2 : i32, i32
  }
  func.func @transform_1(%arg0: i32, %arg1: i32, %arg2: i32) -> (i32, i32) {
    %c0_i32 = arith.constant 0 : i32
    return %arg2, %arg1 : i32, i32
  }
  func.func @transform_2(%arg0: i32, %arg1: i32, %arg2: i32) -> (i32, i32) {
    %c0_i32 = arith.constant 0 : i32
    %c0_i32_0 = arith.constant 0 : i32
    return %c0_i32, %arg2 : i32, i32
  }
  func.func @transform_3(%arg0: i32, %arg1: i32, %arg2: i32) -> (i32, i32) {
    %c0_i32 = arith.constant 0 : i32
    %c0_i32_0 = arith.constant 0 : i32
    return %c0_i32, %arg2 : i32, i32
  }
  func.func @transform_4(%arg0: i32, %arg1: i32, %arg2: i32) -> (i32, i32) {
    %c0_i32 = arith.constant 0 : i32
    %c0_i32_0 = arith.constant 0 : i32
    return %c0_i32, %arg1 : i32, i32
  }
  func.func @transform_5(%arg0: i32, %arg1: i32, %arg2: i32) -> (i32, i32) {
    %c0_i32 = arith.constant 0 : i32
    return %arg0, %arg1 : i32, i32
  }
}

module attributes {stable_mosaic.version = 11 : i64} {
  func.func @_dense_conv3_kernel(%arg0: i32, %arg1: memref<1x9x40xbf16, #tpu.memory_space<vmem>>, %arg2: memref<9x40x8xbf16, #tpu.memory_space<vmem>>, %arg3: memref<1x40xf32, #tpu.memory_space<vmem>>, %arg4: memref<1x40xf32, #tpu.memory_space<vmem>>, %arg5: memref<9x9x1xf32, #tpu.memory_space<vmem>>, %arg6: memref<1x9x8xbf16, #tpu.memory_space<vmem>>, %arg7: memref<1x2x8xf32, #tpu.memory_space<vmem>>, %arg8: memref<21x40xbf16, #tpu.memory_space<vmem>>) attributes {dimension_semantics = [#tpu.dimension_semantics<parallel>], iteration_bounds = array<i64: 2>, scalar_prefetch = 0 : i64, scratch_operands = 1 : i64, tpu.core_type = #tpu.core_type<tc>, window_params = [{transform_indices = @transform_0, window_bounds = array<i64: 1, 9, 40>}, {pipeline_mode = #tpu.pipeline_mode<synchronous>, transform_indices = @transform_1, window_bounds = array<i64: 9, 40, 8>}, {pipeline_mode = #tpu.pipeline_mode<synchronous>, transform_indices = @transform_2, window_bounds = array<i64: 1, 40>}, {pipeline_mode = #tpu.pipeline_mode<synchronous>, transform_indices = @transform_3, window_bounds = array<i64: 1, 40>}, {pipeline_mode = #tpu.pipeline_mode<synchronous>, transform_indices = @transform_4, window_bounds = array<i64: 9, 9, 1>}, {transform_indices = @transform_5, window_bounds = array<i64: 1, 9, 8>}, {transform_indices = @transform_6, window_bounds = array<i64: 1, 2, 8>}]} {
    %c0_i32 = arith.constant 0 : i32
    %0 = arith.cmpi eq, %arg0, %c0_i32 : i32
    %1 = arith.extui %0 : i1 to i32
    %c0_i32_0 = arith.constant 0 : i32
    %2 = arith.cmpi ne, %1, %c0_i32_0 : i32
    scf.if %2 {
      %cst_105 = arith.constant 0.000000e+00 : bf16
      %148 = vector.broadcast %cst_105 : bf16 to vector<21x40xbf16>
      %c0_106 = arith.constant 0 : index
      %c0_107 = arith.constant 0 : index
      %149 = vector.load %arg8[%c0_106, %c0_107] : memref<21x40xbf16, #tpu.memory_space<vmem>>, vector<21x40xbf16>
      tpu.vector_store %arg8[%c0_106, %c0_107], %148 {strides = array<i32>} : memref<21x40xbf16, #tpu.memory_space<vmem>>, vector<21x40xbf16>,
    } else {
    }
    %c0 = arith.constant 0 : index
    %c0_1 = arith.constant 0 : index
    %c0_2 = arith.constant 0 : index
    %3 = vector.load %arg1[%c0, %c0_1, %c0_2] : memref<1x9x40xbf16, #tpu.memory_space<vmem>>, vector<1x9x40xbf16>
    %4 = vector.shape_cast %3 : vector<1x9x40xbf16> to vector<9x40xbf16>
    %5 = arith.extf %4 : vector<9x40xbf16> to vector<9x40xf32>
    %c0_3 = arith.constant 0 : index
    %c0_4 = arith.constant 0 : index
    %6 = vector.load %arg3[%c0_3, %c0_4] : memref<1x40xf32, #tpu.memory_space<vmem>>, vector<1x40xf32>
    %7 = vector.broadcast %6 : vector<1x40xf32> to vector<9x40xf32>
    %8 = arith.mulf %5, %7 : vector<9x40xf32>
    %c0_5 = arith.constant 0 : index
    %c0_6 = arith.constant 0 : index
    %9 = vector.load %arg4[%c0_5, %c0_6] : memref<1x40xf32, #tpu.memory_space<vmem>>, vector<1x40xf32>
    %10 = vector.broadcast %9 : vector<1x40xf32> to vector<9x40xf32>
    %11 = arith.addf %8, %10 : vector<9x40xf32>
    %cst = arith.constant 0.000000e+00 : f32
    %12 = vector.broadcast %cst : f32 to vector<9x40xf32>
    %13 = arith.maximumf %11, %12 : vector<9x40xf32>
    %14 = arith.truncf %13 : vector<9x40xf32> to vector<9x40xbf16>
    %c8 = arith.constant 8 : index
    %c0_7 = arith.constant 0 : index
    %15 = vector.load %arg8[%c8, %c0_7] : memref<21x40xbf16, #tpu.memory_space<vmem>>, vector<9x40xbf16>
    tpu.vector_store %arg8[%c8, %c0_7], %14 {strides = array<i32>} : memref<21x40xbf16, #tpu.memory_space<vmem>>, vector<9x40xbf16>,
    %cst_8 = arith.constant 0.000000e+00 : f32
    %16 = vector.broadcast %cst_8 : f32 to vector<9x8xf32>
    %c4 = arith.constant 4 : index
    %c0_9 = arith.constant 0 : index
    %17 = vector.load %arg8[%c4, %c0_9] : memref<21x40xbf16, #tpu.memory_space<vmem>>, vector<9x40xbf16>
    %c0_10 = arith.constant 0 : index
    %c0_11 = arith.constant 0 : index
    %c0_12 = arith.constant 0 : index
    %18 = vector.load %arg2[%c0_10, %c0_11, %c0_12] : memref<9x40x8xbf16, #tpu.memory_space<vmem>>, vector<1x40x8xbf16>
    %19 = vector.shape_cast %18 : vector<1x40x8xbf16> to vector<40x8xbf16>
    %cst_13 = arith.constant dense<0.000000e+00> : vector<9x8xf32>
    %20 = tpu.matmul %17, %19, %cst_13 {dimension_numbers = #tpu.dot_dimension_numbers<[1], [0], [0], [1], [0, 0, 1, 1], [], []>} : vector<9x40xbf16>, vector<40x8xbf16>, vector<9x8xf32> -> vector<9x8xf32>
    %c0_14 = arith.constant 0 : index
    %c0_15 = arith.constant 0 : index
    %c0_16 = arith.constant 0 : index
    %21 = vector.load %arg5[%c0_14, %c0_15, %c0_16] : memref<9x9x1xf32, #tpu.memory_space<vmem>>, vector<1x9x1xf32>
    %22 = vector.shape_cast %21 : vector<1x9x1xf32> to vector<9x1xf32>
    %cst_17 = arith.constant 5.000000e-01 : f32
    %23 = vector.broadcast %cst_17 : f32 to vector<9x1xf32>
    %24 = arith.cmpf ogt, %22, %23 : vector<9x1xf32>
    %cst_18 = arith.constant 0.000000e+00 : f32
    %25 = vector.shape_cast %24 : vector<9x1xi1> to vector<9x1xi1>
    %26 = vector.broadcast %25 : vector<9x1xi1> to vector<9x8xi1>
    %27 = vector.broadcast %cst_18 : f32 to vector<9x8xf32>
    %28 = arith.select %26, %20, %27 : vector<9x8xi1>, vector<9x8xf32>
    %29 = arith.addf %16, %28 : vector<9x8xf32>
    %c5 = arith.constant 5 : index
    %c0_19 = arith.constant 0 : index
    %30 = vector.load %arg8[%c5, %c0_19] : memref<21x40xbf16, #tpu.memory_space<vmem>>, vector<9x40xbf16>
    %c1 = arith.constant 1 : index
    %c0_20 = arith.constant 0 : index
    %c0_21 = arith.constant 0 : index
    %31 = vector.load %arg2[%c1, %c0_20, %c0_21] : memref<9x40x8xbf16, #tpu.memory_space<vmem>>, vector<1x40x8xbf16>
    %32 = vector.shape_cast %31 : vector<1x40x8xbf16> to vector<40x8xbf16>
    %cst_22 = arith.constant dense<0.000000e+00> : vector<9x8xf32>
    %33 = tpu.matmul %30, %32, %cst_22 {dimension_numbers = #tpu.dot_dimension_numbers<[1], [0], [0], [1], [0, 0, 1, 1], [], []>} : vector<9x40xbf16>, vector<40x8xbf16>, vector<9x8xf32> -> vector<9x8xf32>
    %c1_23 = arith.constant 1 : index
    %c0_24 = arith.constant 0 : index
    %c0_25 = arith.constant 0 : index
    %34 = vector.load %arg5[%c1_23, %c0_24, %c0_25] : memref<9x9x1xf32, #tpu.memory_space<vmem>>, vector<1x9x1xf32>
    %35 = vector.shape_cast %34 : vector<1x9x1xf32> to vector<9x1xf32>
    %cst_26 = arith.constant 5.000000e-01 : f32
    %36 = vector.broadcast %cst_26 : f32 to vector<9x1xf32>
    %37 = arith.cmpf ogt, %35, %36 : vector<9x1xf32>
    %cst_27 = arith.constant 0.000000e+00 : f32
    %38 = vector.shape_cast %37 : vector<9x1xi1> to vector<9x1xi1>
    %39 = vector.broadcast %38 : vector<9x1xi1> to vector<9x8xi1>
    %40 = vector.broadcast %cst_27 : f32 to vector<9x8xf32>
    %41 = arith.select %39, %33, %40 : vector<9x8xi1>, vector<9x8xf32>
    %42 = arith.addf %29, %41 : vector<9x8xf32>
    %c6 = arith.constant 6 : index
    %c0_28 = arith.constant 0 : index
    %43 = vector.load %arg8[%c6, %c0_28] : memref<21x40xbf16, #tpu.memory_space<vmem>>, vector<9x40xbf16>
    %c2 = arith.constant 2 : index
    %c0_29 = arith.constant 0 : index
    %c0_30 = arith.constant 0 : index
    %44 = vector.load %arg2[%c2, %c0_29, %c0_30] : memref<9x40x8xbf16, #tpu.memory_space<vmem>>, vector<1x40x8xbf16>
    %45 = vector.shape_cast %44 : vector<1x40x8xbf16> to vector<40x8xbf16>
    %cst_31 = arith.constant dense<0.000000e+00> : vector<9x8xf32>
    %46 = tpu.matmul %43, %45, %cst_31 {dimension_numbers = #tpu.dot_dimension_numbers<[1], [0], [0], [1], [0, 0, 1, 1], [], []>} : vector<9x40xbf16>, vector<40x8xbf16>, vector<9x8xf32> -> vector<9x8xf32>
    %c2_32 = arith.constant 2 : index
    %c0_33 = arith.constant 0 : index
    %c0_34 = arith.constant 0 : index
    %47 = vector.load %arg5[%c2_32, %c0_33, %c0_34] : memref<9x9x1xf32, #tpu.memory_space<vmem>>, vector<1x9x1xf32>
    %48 = vector.shape_cast %47 : vector<1x9x1xf32> to vector<9x1xf32>
    %cst_35 = arith.constant 5.000000e-01 : f32
    %49 = vector.broadcast %cst_35 : f32 to vector<9x1xf32>
    %50 = arith.cmpf ogt, %48, %49 : vector<9x1xf32>
    %cst_36 = arith.constant 0.000000e+00 : f32
    %51 = vector.shape_cast %50 : vector<9x1xi1> to vector<9x1xi1>
    %52 = vector.broadcast %51 : vector<9x1xi1> to vector<9x8xi1>
    %53 = vector.broadcast %cst_36 : f32 to vector<9x8xf32>
    %54 = arith.select %52, %46, %53 : vector<9x8xi1>, vector<9x8xf32>
    %55 = arith.addf %42, %54 : vector<9x8xf32>
    %c7 = arith.constant 7 : index
    %c0_37 = arith.constant 0 : index
    %56 = vector.load %arg8[%c7, %c0_37] : memref<21x40xbf16, #tpu.memory_space<vmem>>, vector<9x40xbf16>
    %c3 = arith.constant 3 : index
    %c0_38 = arith.constant 0 : index
    %c0_39 = arith.constant 0 : index
    %57 = vector.load %arg2[%c3, %c0_38, %c0_39] : memref<9x40x8xbf16, #tpu.memory_space<vmem>>, vector<1x40x8xbf16>
    %58 = vector.shape_cast %57 : vector<1x40x8xbf16> to vector<40x8xbf16>
    %cst_40 = arith.constant dense<0.000000e+00> : vector<9x8xf32>
    %59 = tpu.matmul %56, %58, %cst_40 {dimension_numbers = #tpu.dot_dimension_numbers<[1], [0], [0], [1], [0, 0, 1, 1], [], []>} : vector<9x40xbf16>, vector<40x8xbf16>, vector<9x8xf32> -> vector<9x8xf32>
    %c3_41 = arith.constant 3 : index
    %c0_42 = arith.constant 0 : index
    %c0_43 = arith.constant 0 : index
    %60 = vector.load %arg5[%c3_41, %c0_42, %c0_43] : memref<9x9x1xf32, #tpu.memory_space<vmem>>, vector<1x9x1xf32>
    %61 = vector.shape_cast %60 : vector<1x9x1xf32> to vector<9x1xf32>
    %cst_44 = arith.constant 5.000000e-01 : f32
    %62 = vector.broadcast %cst_44 : f32 to vector<9x1xf32>
    %63 = arith.cmpf ogt, %61, %62 : vector<9x1xf32>
    %cst_45 = arith.constant 0.000000e+00 : f32
    %64 = vector.shape_cast %63 : vector<9x1xi1> to vector<9x1xi1>
    %65 = vector.broadcast %64 : vector<9x1xi1> to vector<9x8xi1>
    %66 = vector.broadcast %cst_45 : f32 to vector<9x8xf32>
    %67 = arith.select %65, %59, %66 : vector<9x8xi1>, vector<9x8xf32>
    %68 = arith.addf %55, %67 : vector<9x8xf32>
    %c8_46 = arith.constant 8 : index
    %c0_47 = arith.constant 0 : index
    %69 = vector.load %arg8[%c8_46, %c0_47] : memref<21x40xbf16, #tpu.memory_space<vmem>>, vector<9x40xbf16>
    %c4_48 = arith.constant 4 : index
    %c0_49 = arith.constant 0 : index
    %c0_50 = arith.constant 0 : index
    %70 = vector.load %arg2[%c4_48, %c0_49, %c0_50] : memref<9x40x8xbf16, #tpu.memory_space<vmem>>, vector<1x40x8xbf16>
    %71 = vector.shape_cast %70 : vector<1x40x8xbf16> to vector<40x8xbf16>
    %cst_51 = arith.constant dense<0.000000e+00> : vector<9x8xf32>
    %72 = tpu.matmul %69, %71, %cst_51 {dimension_numbers = #tpu.dot_dimension_numbers<[1], [0], [0], [1], [0, 0, 1, 1], [], []>} : vector<9x40xbf16>, vector<40x8xbf16>, vector<9x8xf32> -> vector<9x8xf32>
    %c4_52 = arith.constant 4 : index
    %c0_53 = arith.constant 0 : index
    %c0_54 = arith.constant 0 : index
    %73 = vector.load %arg5[%c4_52, %c0_53, %c0_54] : memref<9x9x1xf32, #tpu.memory_space<vmem>>, vector<1x9x1xf32>
    %74 = vector.shape_cast %73 : vector<1x9x1xf32> to vector<9x1xf32>
    %cst_55 = arith.constant 5.000000e-01 : f32
    %75 = vector.broadcast %cst_55 : f32 to vector<9x1xf32>
    %76 = arith.cmpf ogt, %74, %75 : vector<9x1xf32>
    %cst_56 = arith.constant 0.000000e+00 : f32
    %77 = vector.shape_cast %76 : vector<9x1xi1> to vector<9x1xi1>
    %78 = vector.broadcast %77 : vector<9x1xi1> to vector<9x8xi1>
    %79 = vector.broadcast %cst_56 : f32 to vector<9x8xf32>
    %80 = arith.select %78, %72, %79 : vector<9x8xi1>, vector<9x8xf32>
    %81 = arith.addf %68, %80 : vector<9x8xf32>
    %c9 = arith.constant 9 : index
    %c0_57 = arith.constant 0 : index
    %82 = vector.load %arg8[%c9, %c0_57] : memref<21x40xbf16, #tpu.memory_space<vmem>>, vector<9x40xbf16>
    %c5_58 = arith.constant 5 : index
    %c0_59 = arith.constant 0 : index
    %c0_60 = arith.constant 0 : index
    %83 = vector.load %arg2[%c5_58, %c0_59, %c0_60] : memref<9x40x8xbf16, #tpu.memory_space<vmem>>, vector<1x40x8xbf16>
    %84 = vector.shape_cast %83 : vector<1x40x8xbf16> to vector<40x8xbf16>
    %cst_61 = arith.constant dense<0.000000e+00> : vector<9x8xf32>
    %85 = tpu.matmul %82, %84, %cst_61 {dimension_numbers = #tpu.dot_dimension_numbers<[1], [0], [0], [1], [0, 0, 1, 1], [], []>} : vector<9x40xbf16>, vector<40x8xbf16>, vector<9x8xf32> -> vector<9x8xf32>
    %c5_62 = arith.constant 5 : index
    %c0_63 = arith.constant 0 : index
    %c0_64 = arith.constant 0 : index
    %86 = vector.load %arg5[%c5_62, %c0_63, %c0_64] : memref<9x9x1xf32, #tpu.memory_space<vmem>>, vector<1x9x1xf32>
    %87 = vector.shape_cast %86 : vector<1x9x1xf32> to vector<9x1xf32>
    %cst_65 = arith.constant 5.000000e-01 : f32
    %88 = vector.broadcast %cst_65 : f32 to vector<9x1xf32>
    %89 = arith.cmpf ogt, %87, %88 : vector<9x1xf32>
    %cst_66 = arith.constant 0.000000e+00 : f32
    %90 = vector.shape_cast %89 : vector<9x1xi1> to vector<9x1xi1>
    %91 = vector.broadcast %90 : vector<9x1xi1> to vector<9x8xi1>
    %92 = vector.broadcast %cst_66 : f32 to vector<9x8xf32>
    %93 = arith.select %91, %85, %92 : vector<9x8xi1>, vector<9x8xf32>
    %94 = arith.addf %81, %93 : vector<9x8xf32>
    %c10 = arith.constant 10 : index
    %c0_67 = arith.constant 0 : index
    %95 = vector.load %arg8[%c10, %c0_67] : memref<21x40xbf16, #tpu.memory_space<vmem>>, vector<9x40xbf16>
    %c6_68 = arith.constant 6 : index
    %c0_69 = arith.constant 0 : index
    %c0_70 = arith.constant 0 : index
    %96 = vector.load %arg2[%c6_68, %c0_69, %c0_70] : memref<9x40x8xbf16, #tpu.memory_space<vmem>>, vector<1x40x8xbf16>
    %97 = vector.shape_cast %96 : vector<1x40x8xbf16> to vector<40x8xbf16>
    %cst_71 = arith.constant dense<0.000000e+00> : vector<9x8xf32>
    %98 = tpu.matmul %95, %97, %cst_71 {dimension_numbers = #tpu.dot_dimension_numbers<[1], [0], [0], [1], [0, 0, 1, 1], [], []>} : vector<9x40xbf16>, vector<40x8xbf16>, vector<9x8xf32> -> vector<9x8xf32>
    %c6_72 = arith.constant 6 : index
    %c0_73 = arith.constant 0 : index
    %c0_74 = arith.constant 0 : index
    %99 = vector.load %arg5[%c6_72, %c0_73, %c0_74] : memref<9x9x1xf32, #tpu.memory_space<vmem>>, vector<1x9x1xf32>
    %100 = vector.shape_cast %99 : vector<1x9x1xf32> to vector<9x1xf32>
    %cst_75 = arith.constant 5.000000e-01 : f32
    %101 = vector.broadcast %cst_75 : f32 to vector<9x1xf32>
    %102 = arith.cmpf ogt, %100, %101 : vector<9x1xf32>
    %cst_76 = arith.constant 0.000000e+00 : f32
    %103 = vector.shape_cast %102 : vector<9x1xi1> to vector<9x1xi1>
    %104 = vector.broadcast %103 : vector<9x1xi1> to vector<9x8xi1>
    %105 = vector.broadcast %cst_76 : f32 to vector<9x8xf32>
    %106 = arith.select %104, %98, %105 : vector<9x8xi1>, vector<9x8xf32>
    %107 = arith.addf %94, %106 : vector<9x8xf32>
    %c11 = arith.constant 11 : index
    %c0_77 = arith.constant 0 : index
    %108 = vector.load %arg8[%c11, %c0_77] : memref<21x40xbf16, #tpu.memory_space<vmem>>, vector<9x40xbf16>
    %c7_78 = arith.constant 7 : index
    %c0_79 = arith.constant 0 : index
    %c0_80 = arith.constant 0 : index
    %109 = vector.load %arg2[%c7_78, %c0_79, %c0_80] : memref<9x40x8xbf16, #tpu.memory_space<vmem>>, vector<1x40x8xbf16>
    %110 = vector.shape_cast %109 : vector<1x40x8xbf16> to vector<40x8xbf16>
    %cst_81 = arith.constant dense<0.000000e+00> : vector<9x8xf32>
    %111 = tpu.matmul %108, %110, %cst_81 {dimension_numbers = #tpu.dot_dimension_numbers<[1], [0], [0], [1], [0, 0, 1, 1], [], []>} : vector<9x40xbf16>, vector<40x8xbf16>, vector<9x8xf32> -> vector<9x8xf32>
    %c7_82 = arith.constant 7 : index
    %c0_83 = arith.constant 0 : index
    %c0_84 = arith.constant 0 : index
    %112 = vector.load %arg5[%c7_82, %c0_83, %c0_84] : memref<9x9x1xf32, #tpu.memory_space<vmem>>, vector<1x9x1xf32>
    %113 = vector.shape_cast %112 : vector<1x9x1xf32> to vector<9x1xf32>
    %cst_85 = arith.constant 5.000000e-01 : f32
    %114 = vector.broadcast %cst_85 : f32 to vector<9x1xf32>
    %115 = arith.cmpf ogt, %113, %114 : vector<9x1xf32>
    %cst_86 = arith.constant 0.000000e+00 : f32
    %116 = vector.shape_cast %115 : vector<9x1xi1> to vector<9x1xi1>
    %117 = vector.broadcast %116 : vector<9x1xi1> to vector<9x8xi1>
    %118 = vector.broadcast %cst_86 : f32 to vector<9x8xf32>
    %119 = arith.select %117, %111, %118 : vector<9x8xi1>, vector<9x8xf32>
    %120 = arith.addf %107, %119 : vector<9x8xf32>
    %c12 = arith.constant 12 : index
    %c0_87 = arith.constant 0 : index
    %121 = vector.load %arg8[%c12, %c0_87] : memref<21x40xbf16, #tpu.memory_space<vmem>>, vector<9x40xbf16>
    %c8_88 = arith.constant 8 : index
    %c0_89 = arith.constant 0 : index
    %c0_90 = arith.constant 0 : index
    %122 = vector.load %arg2[%c8_88, %c0_89, %c0_90] : memref<9x40x8xbf16, #tpu.memory_space<vmem>>, vector<1x40x8xbf16>
    %123 = vector.shape_cast %122 : vector<1x40x8xbf16> to vector<40x8xbf16>
    %cst_91 = arith.constant dense<0.000000e+00> : vector<9x8xf32>
    %124 = tpu.matmul %121, %123, %cst_91 {dimension_numbers = #tpu.dot_dimension_numbers<[1], [0], [0], [1], [0, 0, 1, 1], [], []>} : vector<9x40xbf16>, vector<40x8xbf16>, vector<9x8xf32> -> vector<9x8xf32>
    %c8_92 = arith.constant 8 : index
    %c0_93 = arith.constant 0 : index
    %c0_94 = arith.constant 0 : index
    %125 = vector.load %arg5[%c8_92, %c0_93, %c0_94] : memref<9x9x1xf32, #tpu.memory_space<vmem>>, vector<1x9x1xf32>
    %126 = vector.shape_cast %125 : vector<1x9x1xf32> to vector<9x1xf32>
    %cst_95 = arith.constant 5.000000e-01 : f32
    %127 = vector.broadcast %cst_95 : f32 to vector<9x1xf32>
    %128 = arith.cmpf ogt, %126, %127 : vector<9x1xf32>
    %cst_96 = arith.constant 0.000000e+00 : f32
    %129 = vector.shape_cast %128 : vector<9x1xi1> to vector<9x1xi1>
    %130 = vector.broadcast %129 : vector<9x1xi1> to vector<9x8xi1>
    %131 = vector.broadcast %cst_96 : f32 to vector<9x8xf32>
    %132 = arith.select %130, %124, %131 : vector<9x8xi1>, vector<9x8xf32>
    %133 = arith.addf %120, %132 : vector<9x8xf32>
    %134 = arith.truncf %133 : vector<9x8xf32> to vector<9x8xbf16>
    %c0_97 = arith.constant 0 : index
    %c0_98 = arith.constant 0 : index
    %c0_99 = arith.constant 0 : index
    %135 = vector.load %arg6[%c0_97, %c0_98, %c0_99] : memref<1x9x8xbf16, #tpu.memory_space<vmem>>, vector<1x9x8xbf16>
    %136 = vector.shape_cast %135 : vector<1x9x8xbf16> to vector<9x8xbf16>
    %137 = vector.shape_cast %134 : vector<9x8xbf16> to vector<1x9x8xbf16>
    tpu.vector_store %arg6[%c0_97, %c0_98, %c0_99], %137 {strides = array<i32>} : memref<1x9x8xbf16, #tpu.memory_space<vmem>>, vector<1x9x8xbf16>,
    %138 = arith.extf %134 : vector<9x8xbf16> to vector<9x8xf32>
    %cst_100 = arith.constant dense<0.000000e+00> : vector<8xf32>
    %139 = vector.multi_reduction <add>, %138, %cst_100 [0] : vector<9x8xf32> to vector<8xf32>
    %140 = vector.shape_cast %139 : vector<8xf32> to vector<1x8xf32>
    %141 = arith.mulf %138, %138 : vector<9x8xf32>
    %cst_101 = arith.constant dense<0.000000e+00> : vector<8xf32>
    %142 = vector.multi_reduction <add>, %141, %cst_101 [0] : vector<9x8xf32> to vector<8xf32>
    %143 = vector.shape_cast %142 : vector<8xf32> to vector<1x8xf32>
    %144 = tpu.concatenate %140, %143 in 0 : vector<1x8xf32>, vector<1x8xf32> -> vector<2x8xf32>
    %c0_102 = arith.constant 0 : index
    %c0_103 = arith.constant 0 : index
    %c0_104 = arith.constant 0 : index
    %145 = vector.load %arg7[%c0_102, %c0_103, %c0_104] : memref<1x2x8xf32, #tpu.memory_space<vmem>>, vector<1x2x8xf32>
    %146 = vector.shape_cast %145 : vector<1x2x8xf32> to vector<2x8xf32>
    %147 = vector.shape_cast %144 : vector<2x8xf32> to vector<1x2x8xf32>
    tpu.vector_store %arg7[%c0_102, %c0_103, %c0_104], %147 {strides = array<i32>} : memref<1x2x8xf32, #tpu.memory_space<vmem>>, vector<1x2x8xf32>,
    return
  }
  func.func @transform_0(%arg0: i32) -> (i32, i32, i32) {
    %c0_i32 = arith.constant 0 : i32
    %c0_i32_0 = arith.constant 0 : i32
    %c0_i32_1 = arith.constant 0 : i32
    return %arg0, %c0_i32, %c0_i32_0 : i32, i32, i32
  }
  func.func @transform_1(%arg0: i32) -> (i32, i32, i32) {
    %c0_i32 = arith.constant 0 : i32
    %c0_i32_0 = arith.constant 0 : i32
    %c0_i32_1 = arith.constant 0 : i32
    %c0_i32_2 = arith.constant 0 : i32
    return %c0_i32, %c0_i32_0, %c0_i32_1 : i32, i32, i32
  }
  func.func @transform_2(%arg0: i32) -> (i32, i32) {
    %c0_i32 = arith.constant 0 : i32
    %c0_i32_0 = arith.constant 0 : i32
    %c0_i32_1 = arith.constant 0 : i32
    return %c0_i32, %c0_i32_0 : i32, i32
  }
  func.func @transform_3(%arg0: i32) -> (i32, i32) {
    %c0_i32 = arith.constant 0 : i32
    %c0_i32_0 = arith.constant 0 : i32
    %c0_i32_1 = arith.constant 0 : i32
    return %c0_i32, %c0_i32_0 : i32, i32
  }
  func.func @transform_4(%arg0: i32) -> (i32, i32, i32) {
    %c0_i32 = arith.constant 0 : i32
    %c0_i32_0 = arith.constant 0 : i32
    %c0_i32_1 = arith.constant 0 : i32
    %c0_i32_2 = arith.constant 0 : i32
    return %c0_i32, %c0_i32_0, %c0_i32_1 : i32, i32, i32
  }
  func.func @transform_5(%arg0: i32) -> (i32, i32, i32) {
    %c0_i32 = arith.constant 0 : i32
    %c0_i32_0 = arith.constant 0 : i32
    %c0_i32_1 = arith.constant 0 : i32
    return %arg0, %c0_i32, %c0_i32_0 : i32, i32, i32
  }
  func.func @transform_6(%arg0: i32) -> (i32, i32, i32) {
    %c0_i32 = arith.constant 0 : i32
    %c0_i32_0 = arith.constant 0 : i32
    %c0_i32_1 = arith.constant 0 : i32
    return %arg0, %c0_i32, %c0_i32_0 : i32, i32, i32
  }
}

module attributes {stable_mosaic.version = 11 : i64} {
  func.func @_dense_conv3_kernel(%arg0: i32, %arg1: memref<1x9x48xbf16, #tpu.memory_space<vmem>>, %arg2: memref<9x48x8xbf16, #tpu.memory_space<vmem>>, %arg3: memref<1x48xf32, #tpu.memory_space<vmem>>, %arg4: memref<1x48xf32, #tpu.memory_space<vmem>>, %arg5: memref<9x9x1xf32, #tpu.memory_space<vmem>>, %arg6: memref<1x9x8xbf16, #tpu.memory_space<vmem>>, %arg7: memref<1x2x8xf32, #tpu.memory_space<vmem>>, %arg8: memref<21x48xbf16, #tpu.memory_space<vmem>>) attributes {dimension_semantics = [#tpu.dimension_semantics<parallel>], iteration_bounds = array<i64: 2>, scalar_prefetch = 0 : i64, scratch_operands = 1 : i64, tpu.core_type = #tpu.core_type<tc>, window_params = [{transform_indices = @transform_0, window_bounds = array<i64: 1, 9, 48>}, {pipeline_mode = #tpu.pipeline_mode<synchronous>, transform_indices = @transform_1, window_bounds = array<i64: 9, 48, 8>}, {pipeline_mode = #tpu.pipeline_mode<synchronous>, transform_indices = @transform_2, window_bounds = array<i64: 1, 48>}, {pipeline_mode = #tpu.pipeline_mode<synchronous>, transform_indices = @transform_3, window_bounds = array<i64: 1, 48>}, {pipeline_mode = #tpu.pipeline_mode<synchronous>, transform_indices = @transform_4, window_bounds = array<i64: 9, 9, 1>}, {transform_indices = @transform_5, window_bounds = array<i64: 1, 9, 8>}, {transform_indices = @transform_6, window_bounds = array<i64: 1, 2, 8>}]} {
    %c0_i32 = arith.constant 0 : i32
    %0 = arith.cmpi eq, %arg0, %c0_i32 : i32
    %1 = arith.extui %0 : i1 to i32
    %c0_i32_0 = arith.constant 0 : i32
    %2 = arith.cmpi ne, %1, %c0_i32_0 : i32
    scf.if %2 {
      %cst_105 = arith.constant 0.000000e+00 : bf16
      %148 = vector.broadcast %cst_105 : bf16 to vector<21x48xbf16>
      %c0_106 = arith.constant 0 : index
      %c0_107 = arith.constant 0 : index
      %149 = vector.load %arg8[%c0_106, %c0_107] : memref<21x48xbf16, #tpu.memory_space<vmem>>, vector<21x48xbf16>
      tpu.vector_store %arg8[%c0_106, %c0_107], %148 {strides = array<i32>} : memref<21x48xbf16, #tpu.memory_space<vmem>>, vector<21x48xbf16>,
    } else {
    }
    %c0 = arith.constant 0 : index
    %c0_1 = arith.constant 0 : index
    %c0_2 = arith.constant 0 : index
    %3 = vector.load %arg1[%c0, %c0_1, %c0_2] : memref<1x9x48xbf16, #tpu.memory_space<vmem>>, vector<1x9x48xbf16>
    %4 = vector.shape_cast %3 : vector<1x9x48xbf16> to vector<9x48xbf16>
    %5 = arith.extf %4 : vector<9x48xbf16> to vector<9x48xf32>
    %c0_3 = arith.constant 0 : index
    %c0_4 = arith.constant 0 : index
    %6 = vector.load %arg3[%c0_3, %c0_4] : memref<1x48xf32, #tpu.memory_space<vmem>>, vector<1x48xf32>
    %7 = vector.broadcast %6 : vector<1x48xf32> to vector<9x48xf32>
    %8 = arith.mulf %5, %7 : vector<9x48xf32>
    %c0_5 = arith.constant 0 : index
    %c0_6 = arith.constant 0 : index
    %9 = vector.load %arg4[%c0_5, %c0_6] : memref<1x48xf32, #tpu.memory_space<vmem>>, vector<1x48xf32>
    %10 = vector.broadcast %9 : vector<1x48xf32> to vector<9x48xf32>
    %11 = arith.addf %8, %10 : vector<9x48xf32>
    %cst = arith.constant 0.000000e+00 : f32
    %12 = vector.broadcast %cst : f32 to vector<9x48xf32>
    %13 = arith.maximumf %11, %12 : vector<9x48xf32>
    %14 = arith.truncf %13 : vector<9x48xf32> to vector<9x48xbf16>
    %c8 = arith.constant 8 : index
    %c0_7 = arith.constant 0 : index
    %15 = vector.load %arg8[%c8, %c0_7] : memref<21x48xbf16, #tpu.memory_space<vmem>>, vector<9x48xbf16>
    tpu.vector_store %arg8[%c8, %c0_7], %14 {strides = array<i32>} : memref<21x48xbf16, #tpu.memory_space<vmem>>, vector<9x48xbf16>,
    %cst_8 = arith.constant 0.000000e+00 : f32
    %16 = vector.broadcast %cst_8 : f32 to vector<9x8xf32>
    %c4 = arith.constant 4 : index
    %c0_9 = arith.constant 0 : index
    %17 = vector.load %arg8[%c4, %c0_9] : memref<21x48xbf16, #tpu.memory_space<vmem>>, vector<9x48xbf16>
    %c0_10 = arith.constant 0 : index
    %c0_11 = arith.constant 0 : index
    %c0_12 = arith.constant 0 : index
    %18 = vector.load %arg2[%c0_10, %c0_11, %c0_12] : memref<9x48x8xbf16, #tpu.memory_space<vmem>>, vector<1x48x8xbf16>
    %19 = vector.shape_cast %18 : vector<1x48x8xbf16> to vector<48x8xbf16>
    %cst_13 = arith.constant dense<0.000000e+00> : vector<9x8xf32>
    %20 = tpu.matmul %17, %19, %cst_13 {dimension_numbers = #tpu.dot_dimension_numbers<[1], [0], [0], [1], [0, 0, 1, 1], [], []>} : vector<9x48xbf16>, vector<48x8xbf16>, vector<9x8xf32> -> vector<9x8xf32>
    %c0_14 = arith.constant 0 : index
    %c0_15 = arith.constant 0 : index
    %c0_16 = arith.constant 0 : index
    %21 = vector.load %arg5[%c0_14, %c0_15, %c0_16] : memref<9x9x1xf32, #tpu.memory_space<vmem>>, vector<1x9x1xf32>
    %22 = vector.shape_cast %21 : vector<1x9x1xf32> to vector<9x1xf32>
    %cst_17 = arith.constant 5.000000e-01 : f32
    %23 = vector.broadcast %cst_17 : f32 to vector<9x1xf32>
    %24 = arith.cmpf ogt, %22, %23 : vector<9x1xf32>
    %cst_18 = arith.constant 0.000000e+00 : f32
    %25 = vector.shape_cast %24 : vector<9x1xi1> to vector<9x1xi1>
    %26 = vector.broadcast %25 : vector<9x1xi1> to vector<9x8xi1>
    %27 = vector.broadcast %cst_18 : f32 to vector<9x8xf32>
    %28 = arith.select %26, %20, %27 : vector<9x8xi1>, vector<9x8xf32>
    %29 = arith.addf %16, %28 : vector<9x8xf32>
    %c5 = arith.constant 5 : index
    %c0_19 = arith.constant 0 : index
    %30 = vector.load %arg8[%c5, %c0_19] : memref<21x48xbf16, #tpu.memory_space<vmem>>, vector<9x48xbf16>
    %c1 = arith.constant 1 : index
    %c0_20 = arith.constant 0 : index
    %c0_21 = arith.constant 0 : index
    %31 = vector.load %arg2[%c1, %c0_20, %c0_21] : memref<9x48x8xbf16, #tpu.memory_space<vmem>>, vector<1x48x8xbf16>
    %32 = vector.shape_cast %31 : vector<1x48x8xbf16> to vector<48x8xbf16>
    %cst_22 = arith.constant dense<0.000000e+00> : vector<9x8xf32>
    %33 = tpu.matmul %30, %32, %cst_22 {dimension_numbers = #tpu.dot_dimension_numbers<[1], [0], [0], [1], [0, 0, 1, 1], [], []>} : vector<9x48xbf16>, vector<48x8xbf16>, vector<9x8xf32> -> vector<9x8xf32>
    %c1_23 = arith.constant 1 : index
    %c0_24 = arith.constant 0 : index
    %c0_25 = arith.constant 0 : index
    %34 = vector.load %arg5[%c1_23, %c0_24, %c0_25] : memref<9x9x1xf32, #tpu.memory_space<vmem>>, vector<1x9x1xf32>
    %35 = vector.shape_cast %34 : vector<1x9x1xf32> to vector<9x1xf32>
    %cst_26 = arith.constant 5.000000e-01 : f32
    %36 = vector.broadcast %cst_26 : f32 to vector<9x1xf32>
    %37 = arith.cmpf ogt, %35, %36 : vector<9x1xf32>
    %cst_27 = arith.constant 0.000000e+00 : f32
    %38 = vector.shape_cast %37 : vector<9x1xi1> to vector<9x1xi1>
    %39 = vector.broadcast %38 : vector<9x1xi1> to vector<9x8xi1>
    %40 = vector.broadcast %cst_27 : f32 to vector<9x8xf32>
    %41 = arith.select %39, %33, %40 : vector<9x8xi1>, vector<9x8xf32>
    %42 = arith.addf %29, %41 : vector<9x8xf32>
    %c6 = arith.constant 6 : index
    %c0_28 = arith.constant 0 : index
    %43 = vector.load %arg8[%c6, %c0_28] : memref<21x48xbf16, #tpu.memory_space<vmem>>, vector<9x48xbf16>
    %c2 = arith.constant 2 : index
    %c0_29 = arith.constant 0 : index
    %c0_30 = arith.constant 0 : index
    %44 = vector.load %arg2[%c2, %c0_29, %c0_30] : memref<9x48x8xbf16, #tpu.memory_space<vmem>>, vector<1x48x8xbf16>
    %45 = vector.shape_cast %44 : vector<1x48x8xbf16> to vector<48x8xbf16>
    %cst_31 = arith.constant dense<0.000000e+00> : vector<9x8xf32>
    %46 = tpu.matmul %43, %45, %cst_31 {dimension_numbers = #tpu.dot_dimension_numbers<[1], [0], [0], [1], [0, 0, 1, 1], [], []>} : vector<9x48xbf16>, vector<48x8xbf16>, vector<9x8xf32> -> vector<9x8xf32>
    %c2_32 = arith.constant 2 : index
    %c0_33 = arith.constant 0 : index
    %c0_34 = arith.constant 0 : index
    %47 = vector.load %arg5[%c2_32, %c0_33, %c0_34] : memref<9x9x1xf32, #tpu.memory_space<vmem>>, vector<1x9x1xf32>
    %48 = vector.shape_cast %47 : vector<1x9x1xf32> to vector<9x1xf32>
    %cst_35 = arith.constant 5.000000e-01 : f32
    %49 = vector.broadcast %cst_35 : f32 to vector<9x1xf32>
    %50 = arith.cmpf ogt, %48, %49 : vector<9x1xf32>
    %cst_36 = arith.constant 0.000000e+00 : f32
    %51 = vector.shape_cast %50 : vector<9x1xi1> to vector<9x1xi1>
    %52 = vector.broadcast %51 : vector<9x1xi1> to vector<9x8xi1>
    %53 = vector.broadcast %cst_36 : f32 to vector<9x8xf32>
    %54 = arith.select %52, %46, %53 : vector<9x8xi1>, vector<9x8xf32>
    %55 = arith.addf %42, %54 : vector<9x8xf32>
    %c7 = arith.constant 7 : index
    %c0_37 = arith.constant 0 : index
    %56 = vector.load %arg8[%c7, %c0_37] : memref<21x48xbf16, #tpu.memory_space<vmem>>, vector<9x48xbf16>
    %c3 = arith.constant 3 : index
    %c0_38 = arith.constant 0 : index
    %c0_39 = arith.constant 0 : index
    %57 = vector.load %arg2[%c3, %c0_38, %c0_39] : memref<9x48x8xbf16, #tpu.memory_space<vmem>>, vector<1x48x8xbf16>
    %58 = vector.shape_cast %57 : vector<1x48x8xbf16> to vector<48x8xbf16>
    %cst_40 = arith.constant dense<0.000000e+00> : vector<9x8xf32>
    %59 = tpu.matmul %56, %58, %cst_40 {dimension_numbers = #tpu.dot_dimension_numbers<[1], [0], [0], [1], [0, 0, 1, 1], [], []>} : vector<9x48xbf16>, vector<48x8xbf16>, vector<9x8xf32> -> vector<9x8xf32>
    %c3_41 = arith.constant 3 : index
    %c0_42 = arith.constant 0 : index
    %c0_43 = arith.constant 0 : index
    %60 = vector.load %arg5[%c3_41, %c0_42, %c0_43] : memref<9x9x1xf32, #tpu.memory_space<vmem>>, vector<1x9x1xf32>
    %61 = vector.shape_cast %60 : vector<1x9x1xf32> to vector<9x1xf32>
    %cst_44 = arith.constant 5.000000e-01 : f32
    %62 = vector.broadcast %cst_44 : f32 to vector<9x1xf32>
    %63 = arith.cmpf ogt, %61, %62 : vector<9x1xf32>
    %cst_45 = arith.constant 0.000000e+00 : f32
    %64 = vector.shape_cast %63 : vector<9x1xi1> to vector<9x1xi1>
    %65 = vector.broadcast %64 : vector<9x1xi1> to vector<9x8xi1>
    %66 = vector.broadcast %cst_45 : f32 to vector<9x8xf32>
    %67 = arith.select %65, %59, %66 : vector<9x8xi1>, vector<9x8xf32>
    %68 = arith.addf %55, %67 : vector<9x8xf32>
    %c8_46 = arith.constant 8 : index
    %c0_47 = arith.constant 0 : index
    %69 = vector.load %arg8[%c8_46, %c0_47] : memref<21x48xbf16, #tpu.memory_space<vmem>>, vector<9x48xbf16>
    %c4_48 = arith.constant 4 : index
    %c0_49 = arith.constant 0 : index
    %c0_50 = arith.constant 0 : index
    %70 = vector.load %arg2[%c4_48, %c0_49, %c0_50] : memref<9x48x8xbf16, #tpu.memory_space<vmem>>, vector<1x48x8xbf16>
    %71 = vector.shape_cast %70 : vector<1x48x8xbf16> to vector<48x8xbf16>
    %cst_51 = arith.constant dense<0.000000e+00> : vector<9x8xf32>
    %72 = tpu.matmul %69, %71, %cst_51 {dimension_numbers = #tpu.dot_dimension_numbers<[1], [0], [0], [1], [0, 0, 1, 1], [], []>} : vector<9x48xbf16>, vector<48x8xbf16>, vector<9x8xf32> -> vector<9x8xf32>
    %c4_52 = arith.constant 4 : index
    %c0_53 = arith.constant 0 : index
    %c0_54 = arith.constant 0 : index
    %73 = vector.load %arg5[%c4_52, %c0_53, %c0_54] : memref<9x9x1xf32, #tpu.memory_space<vmem>>, vector<1x9x1xf32>
    %74 = vector.shape_cast %73 : vector<1x9x1xf32> to vector<9x1xf32>
    %cst_55 = arith.constant 5.000000e-01 : f32
    %75 = vector.broadcast %cst_55 : f32 to vector<9x1xf32>
    %76 = arith.cmpf ogt, %74, %75 : vector<9x1xf32>
    %cst_56 = arith.constant 0.000000e+00 : f32
    %77 = vector.shape_cast %76 : vector<9x1xi1> to vector<9x1xi1>
    %78 = vector.broadcast %77 : vector<9x1xi1> to vector<9x8xi1>
    %79 = vector.broadcast %cst_56 : f32 to vector<9x8xf32>
    %80 = arith.select %78, %72, %79 : vector<9x8xi1>, vector<9x8xf32>
    %81 = arith.addf %68, %80 : vector<9x8xf32>
    %c9 = arith.constant 9 : index
    %c0_57 = arith.constant 0 : index
    %82 = vector.load %arg8[%c9, %c0_57] : memref<21x48xbf16, #tpu.memory_space<vmem>>, vector<9x48xbf16>
    %c5_58 = arith.constant 5 : index
    %c0_59 = arith.constant 0 : index
    %c0_60 = arith.constant 0 : index
    %83 = vector.load %arg2[%c5_58, %c0_59, %c0_60] : memref<9x48x8xbf16, #tpu.memory_space<vmem>>, vector<1x48x8xbf16>
    %84 = vector.shape_cast %83 : vector<1x48x8xbf16> to vector<48x8xbf16>
    %cst_61 = arith.constant dense<0.000000e+00> : vector<9x8xf32>
    %85 = tpu.matmul %82, %84, %cst_61 {dimension_numbers = #tpu.dot_dimension_numbers<[1], [0], [0], [1], [0, 0, 1, 1], [], []>} : vector<9x48xbf16>, vector<48x8xbf16>, vector<9x8xf32> -> vector<9x8xf32>
    %c5_62 = arith.constant 5 : index
    %c0_63 = arith.constant 0 : index
    %c0_64 = arith.constant 0 : index
    %86 = vector.load %arg5[%c5_62, %c0_63, %c0_64] : memref<9x9x1xf32, #tpu.memory_space<vmem>>, vector<1x9x1xf32>
    %87 = vector.shape_cast %86 : vector<1x9x1xf32> to vector<9x1xf32>
    %cst_65 = arith.constant 5.000000e-01 : f32
    %88 = vector.broadcast %cst_65 : f32 to vector<9x1xf32>
    %89 = arith.cmpf ogt, %87, %88 : vector<9x1xf32>
    %cst_66 = arith.constant 0.000000e+00 : f32
    %90 = vector.shape_cast %89 : vector<9x1xi1> to vector<9x1xi1>
    %91 = vector.broadcast %90 : vector<9x1xi1> to vector<9x8xi1>
    %92 = vector.broadcast %cst_66 : f32 to vector<9x8xf32>
    %93 = arith.select %91, %85, %92 : vector<9x8xi1>, vector<9x8xf32>
    %94 = arith.addf %81, %93 : vector<9x8xf32>
    %c10 = arith.constant 10 : index
    %c0_67 = arith.constant 0 : index
    %95 = vector.load %arg8[%c10, %c0_67] : memref<21x48xbf16, #tpu.memory_space<vmem>>, vector<9x48xbf16>
    %c6_68 = arith.constant 6 : index
    %c0_69 = arith.constant 0 : index
    %c0_70 = arith.constant 0 : index
    %96 = vector.load %arg2[%c6_68, %c0_69, %c0_70] : memref<9x48x8xbf16, #tpu.memory_space<vmem>>, vector<1x48x8xbf16>
    %97 = vector.shape_cast %96 : vector<1x48x8xbf16> to vector<48x8xbf16>
    %cst_71 = arith.constant dense<0.000000e+00> : vector<9x8xf32>
    %98 = tpu.matmul %95, %97, %cst_71 {dimension_numbers = #tpu.dot_dimension_numbers<[1], [0], [0], [1], [0, 0, 1, 1], [], []>} : vector<9x48xbf16>, vector<48x8xbf16>, vector<9x8xf32> -> vector<9x8xf32>
    %c6_72 = arith.constant 6 : index
    %c0_73 = arith.constant 0 : index
    %c0_74 = arith.constant 0 : index
    %99 = vector.load %arg5[%c6_72, %c0_73, %c0_74] : memref<9x9x1xf32, #tpu.memory_space<vmem>>, vector<1x9x1xf32>
    %100 = vector.shape_cast %99 : vector<1x9x1xf32> to vector<9x1xf32>
    %cst_75 = arith.constant 5.000000e-01 : f32
    %101 = vector.broadcast %cst_75 : f32 to vector<9x1xf32>
    %102 = arith.cmpf ogt, %100, %101 : vector<9x1xf32>
    %cst_76 = arith.constant 0.000000e+00 : f32
    %103 = vector.shape_cast %102 : vector<9x1xi1> to vector<9x1xi1>
    %104 = vector.broadcast %103 : vector<9x1xi1> to vector<9x8xi1>
    %105 = vector.broadcast %cst_76 : f32 to vector<9x8xf32>
    %106 = arith.select %104, %98, %105 : vector<9x8xi1>, vector<9x8xf32>
    %107 = arith.addf %94, %106 : vector<9x8xf32>
    %c11 = arith.constant 11 : index
    %c0_77 = arith.constant 0 : index
    %108 = vector.load %arg8[%c11, %c0_77] : memref<21x48xbf16, #tpu.memory_space<vmem>>, vector<9x48xbf16>
    %c7_78 = arith.constant 7 : index
    %c0_79 = arith.constant 0 : index
    %c0_80 = arith.constant 0 : index
    %109 = vector.load %arg2[%c7_78, %c0_79, %c0_80] : memref<9x48x8xbf16, #tpu.memory_space<vmem>>, vector<1x48x8xbf16>
    %110 = vector.shape_cast %109 : vector<1x48x8xbf16> to vector<48x8xbf16>
    %cst_81 = arith.constant dense<0.000000e+00> : vector<9x8xf32>
    %111 = tpu.matmul %108, %110, %cst_81 {dimension_numbers = #tpu.dot_dimension_numbers<[1], [0], [0], [1], [0, 0, 1, 1], [], []>} : vector<9x48xbf16>, vector<48x8xbf16>, vector<9x8xf32> -> vector<9x8xf32>
    %c7_82 = arith.constant 7 : index
    %c0_83 = arith.constant 0 : index
    %c0_84 = arith.constant 0 : index
    %112 = vector.load %arg5[%c7_82, %c0_83, %c0_84] : memref<9x9x1xf32, #tpu.memory_space<vmem>>, vector<1x9x1xf32>
    %113 = vector.shape_cast %112 : vector<1x9x1xf32> to vector<9x1xf32>
    %cst_85 = arith.constant 5.000000e-01 : f32
    %114 = vector.broadcast %cst_85 : f32 to vector<9x1xf32>
    %115 = arith.cmpf ogt, %113, %114 : vector<9x1xf32>
    %cst_86 = arith.constant 0.000000e+00 : f32
    %116 = vector.shape_cast %115 : vector<9x1xi1> to vector<9x1xi1>
    %117 = vector.broadcast %116 : vector<9x1xi1> to vector<9x8xi1>
    %118 = vector.broadcast %cst_86 : f32 to vector<9x8xf32>
    %119 = arith.select %117, %111, %118 : vector<9x8xi1>, vector<9x8xf32>
    %120 = arith.addf %107, %119 : vector<9x8xf32>
    %c12 = arith.constant 12 : index
    %c0_87 = arith.constant 0 : index
    %121 = vector.load %arg8[%c12, %c0_87] : memref<21x48xbf16, #tpu.memory_space<vmem>>, vector<9x48xbf16>
    %c8_88 = arith.constant 8 : index
    %c0_89 = arith.constant 0 : index
    %c0_90 = arith.constant 0 : index
    %122 = vector.load %arg2[%c8_88, %c0_89, %c0_90] : memref<9x48x8xbf16, #tpu.memory_space<vmem>>, vector<1x48x8xbf16>
    %123 = vector.shape_cast %122 : vector<1x48x8xbf16> to vector<48x8xbf16>
    %cst_91 = arith.constant dense<0.000000e+00> : vector<9x8xf32>
    %124 = tpu.matmul %121, %123, %cst_91 {dimension_numbers = #tpu.dot_dimension_numbers<[1], [0], [0], [1], [0, 0, 1, 1], [], []>} : vector<9x48xbf16>, vector<48x8xbf16>, vector<9x8xf32> -> vector<9x8xf32>
    %c8_92 = arith.constant 8 : index
    %c0_93 = arith.constant 0 : index
    %c0_94 = arith.constant 0 : index
    %125 = vector.load %arg5[%c8_92, %c0_93, %c0_94] : memref<9x9x1xf32, #tpu.memory_space<vmem>>, vector<1x9x1xf32>
    %126 = vector.shape_cast %125 : vector<1x9x1xf32> to vector<9x1xf32>
    %cst_95 = arith.constant 5.000000e-01 : f32
    %127 = vector.broadcast %cst_95 : f32 to vector<9x1xf32>
    %128 = arith.cmpf ogt, %126, %127 : vector<9x1xf32>
    %cst_96 = arith.constant 0.000000e+00 : f32
    %129 = vector.shape_cast %128 : vector<9x1xi1> to vector<9x1xi1>
    %130 = vector.broadcast %129 : vector<9x1xi1> to vector<9x8xi1>
    %131 = vector.broadcast %cst_96 : f32 to vector<9x8xf32>
    %132 = arith.select %130, %124, %131 : vector<9x8xi1>, vector<9x8xf32>
    %133 = arith.addf %120, %132 : vector<9x8xf32>
    %134 = arith.truncf %133 : vector<9x8xf32> to vector<9x8xbf16>
    %c0_97 = arith.constant 0 : index
    %c0_98 = arith.constant 0 : index
    %c0_99 = arith.constant 0 : index
    %135 = vector.load %arg6[%c0_97, %c0_98, %c0_99] : memref<1x9x8xbf16, #tpu.memory_space<vmem>>, vector<1x9x8xbf16>
    %136 = vector.shape_cast %135 : vector<1x9x8xbf16> to vector<9x8xbf16>
    %137 = vector.shape_cast %134 : vector<9x8xbf16> to vector<1x9x8xbf16>
    tpu.vector_store %arg6[%c0_97, %c0_98, %c0_99], %137 {strides = array<i32>} : memref<1x9x8xbf16, #tpu.memory_space<vmem>>, vector<1x9x8xbf16>,
    %138 = arith.extf %134 : vector<9x8xbf16> to vector<9x8xf32>
    %cst_100 = arith.constant dense<0.000000e+00> : vector<8xf32>
    %139 = vector.multi_reduction <add>, %138, %cst_100 [0] : vector<9x8xf32> to vector<8xf32>
    %140 = vector.shape_cast %139 : vector<8xf32> to vector<1x8xf32>
    %141 = arith.mulf %138, %138 : vector<9x8xf32>
    %cst_101 = arith.constant dense<0.000000e+00> : vector<8xf32>
    %142 = vector.multi_reduction <add>, %141, %cst_101 [0] : vector<9x8xf32> to vector<8xf32>
    %143 = vector.shape_cast %142 : vector<8xf32> to vector<1x8xf32>
    %144 = tpu.concatenate %140, %143 in 0 : vector<1x8xf32>, vector<1x8xf32> -> vector<2x8xf32>
    %c0_102 = arith.constant 0 : index
    %c0_103 = arith.constant 0 : index
    %c0_104 = arith.constant 0 : index
    %145 = vector.load %arg7[%c0_102, %c0_103, %c0_104] : memref<1x2x8xf32, #tpu.memory_space<vmem>>, vector<1x2x8xf32>
    %146 = vector.shape_cast %145 : vector<1x2x8xf32> to vector<2x8xf32>
    %147 = vector.shape_cast %144 : vector<2x8xf32> to vector<1x2x8xf32>
    tpu.vector_store %arg7[%c0_102, %c0_103, %c0_104], %147 {strides = array<i32>} : memref<1x2x8xf32, #tpu.memory_space<vmem>>, vector<1x2x8xf32>,
    return
  }
  func.func @transform_0(%arg0: i32) -> (i32, i32, i32) {
    %c0_i32 = arith.constant 0 : i32
    %c0_i32_0 = arith.constant 0 : i32
    %c0_i32_1 = arith.constant 0 : i32
    return %arg0, %c0_i32, %c0_i32_0 : i32, i32, i32
  }
  func.func @transform_1(%arg0: i32) -> (i32, i32, i32) {
    %c0_i32 = arith.constant 0 : i32
    %c0_i32_0 = arith.constant 0 : i32
    %c0_i32_1 = arith.constant 0 : i32
    %c0_i32_2 = arith.constant 0 : i32
    return %c0_i32, %c0_i32_0, %c0_i32_1 : i32, i32, i32
  }
  func.func @transform_2(%arg0: i32) -> (i32, i32) {
    %c0_i32 = arith.constant 0 : i32
    %c0_i32_0 = arith.constant 0 : i32
    %c0_i32_1 = arith.constant 0 : i32
    return %c0_i32, %c0_i32_0 : i32, i32
  }
  func.func @transform_3(%arg0: i32) -> (i32, i32) {
    %c0_i32 = arith.constant 0 : i32
    %c0_i32_0 = arith.constant 0 : i32
    %c0_i32_1 = arith.constant 0 : i32
    return %c0_i32, %c0_i32_0 : i32, i32
  }
  func.func @transform_4(%arg0: i32) -> (i32, i32, i32) {
    %c0_i32 = arith.constant 0 : i32
    %c0_i32_0 = arith.constant 0 : i32
    %c0_i32_1 = arith.constant 0 : i32
    %c0_i32_2 = arith.constant 0 : i32
    return %c0_i32, %c0_i32_0, %c0_i32_1 : i32, i32, i32
  }
  func.func @transform_5(%arg0: i32) -> (i32, i32, i32) {
    %c0_i32 = arith.constant 0 : i32
    %c0_i32_0 = arith.constant 0 : i32
    %c0_i32_1 = arith.constant 0 : i32
    return %arg0, %c0_i32, %c0_i32_0 : i32, i32, i32
  }
  func.func @transform_6(%arg0: i32) -> (i32, i32, i32) {
    %c0_i32 = arith.constant 0 : i32
    %c0_i32_0 = arith.constant 0 : i32
    %c0_i32_1 = arith.constant 0 : i32
    return %arg0, %c0_i32, %c0_i32_0 : i32, i32, i32
  }
}

module attributes {stable_mosaic.version = 11 : i64} {
  func.func @_affine_relu_kernel(%arg0: i32, %arg1: memref<24x56xbf16, #tpu.memory_space<vmem>>, %arg2: memref<1x56xf32, #tpu.memory_space<vmem>>, %arg3: memref<1x56xf32, #tpu.memory_space<vmem>>, %arg4: memref<24x56xf32, #tpu.memory_space<vmem>>) attributes {dimension_semantics = [#tpu.dimension_semantics<parallel>], iteration_bounds = array<i64: 1>, scalar_prefetch = 0 : i64, scratch_operands = 0 : i64, tpu.core_type = #tpu.core_type<tc>, window_params = [{transform_indices = @transform_0, window_bounds = array<i64: 24, 56>}, {pipeline_mode = #tpu.pipeline_mode<synchronous>, transform_indices = @transform_1, window_bounds = array<i64: 1, 56>}, {pipeline_mode = #tpu.pipeline_mode<synchronous>, transform_indices = @transform_2, window_bounds = array<i64: 1, 56>}, {transform_indices = @transform_3, window_bounds = array<i64: 24, 56>}]} {
    %c0 = arith.constant 0 : index
    %c0_0 = arith.constant 0 : index
    %0 = vector.load %arg1[%c0, %c0_0] : memref<24x56xbf16, #tpu.memory_space<vmem>>, vector<24x56xbf16>
    %1 = arith.extf %0 : vector<24x56xbf16> to vector<24x56xf32>
    %c0_1 = arith.constant 0 : index
    %c0_2 = arith.constant 0 : index
    %2 = vector.load %arg2[%c0_1, %c0_2] : memref<1x56xf32, #tpu.memory_space<vmem>>, vector<1x56xf32>
    %3 = vector.broadcast %2 : vector<1x56xf32> to vector<24x56xf32>
    %4 = arith.mulf %1, %3 : vector<24x56xf32>
    %c0_3 = arith.constant 0 : index
    %c0_4 = arith.constant 0 : index
    %5 = vector.load %arg3[%c0_3, %c0_4] : memref<1x56xf32, #tpu.memory_space<vmem>>, vector<1x56xf32>
    %6 = vector.broadcast %5 : vector<1x56xf32> to vector<24x56xf32>
    %7 = arith.addf %4, %6 : vector<24x56xf32>
    %cst = arith.constant 0.000000e+00 : f32
    %8 = vector.broadcast %cst : f32 to vector<24x56xf32>
    %9 = arith.maximumf %7, %8 : vector<24x56xf32>
    %c0_5 = arith.constant 0 : index
    %c0_6 = arith.constant 0 : index
    %10 = vector.load %arg4[%c0_5, %c0_6] : memref<24x56xf32, #tpu.memory_space<vmem>>, vector<24x56xf32>
    tpu.vector_store %arg4[%c0_5, %c0_6], %9 {strides = array<i32>} : memref<24x56xf32, #tpu.memory_space<vmem>>, vector<24x56xf32>,
    return
  }
  func.func @transform_0(%arg0: i32) -> (i32, i32) {
    %c0_i32 = arith.constant 0 : i32
    %c0_i32_0 = arith.constant 0 : i32
    return %arg0, %c0_i32 : i32, i32
  }
  func.func @transform_1(%arg0: i32) -> (i32, i32) {
    %c0_i32 = arith.constant 0 : i32
    %c0_i32_0 = arith.constant 0 : i32
    %c0_i32_1 = arith.constant 0 : i32
    return %c0_i32, %c0_i32_0 : i32, i32
  }
  func.func @transform_2(%arg0: i32) -> (i32, i32) {
    %c0_i32 = arith.constant 0 : i32
    %c0_i32_0 = arith.constant 0 : i32
    %c0_i32_1 = arith.constant 0 : i32
    return %c0_i32, %c0_i32_0 : i32, i32
  }
  func.func @transform_3(%arg0: i32) -> (i32, i32) {
    %c0_i32 = arith.constant 0 : i32
    %c0_i32_0 = arith.constant 0 : i32
    return %arg0, %c0_i32 : i32, i32
  }
}

module attributes {stable_mosaic.version = 11 : i64} {
  func.func @_mm_kernel(%arg0: i32, %arg1: i32, %arg2: i32, %arg3: memref<8x128xbf16, #tpu.memory_space<vmem>>, %arg4: memref<128x128xbf16, #tpu.memory_space<vmem>>, %arg5: memref<1x128xf32, #tpu.memory_space<vmem>>, %arg6: memref<8x128xf32, #tpu.memory_space<vmem>>) attributes {dimension_semantics = [#tpu.dimension_semantics<parallel>, #tpu.dimension_semantics<parallel>, #tpu.dimension_semantics<arbitrary>], iteration_bounds = array<i64: 1, 1, 1>, scalar_prefetch = 0 : i64, scratch_operands = 0 : i64, tpu.core_type = #tpu.core_type<tc>, window_params = [{transform_indices = @transform_0, window_bounds = array<i64: 8, 128>}, {transform_indices = @transform_1, window_bounds = array<i64: 128, 128>}, {transform_indices = @transform_2, window_bounds = array<i64: 1, 128>}, {transform_indices = @transform_3, window_bounds = array<i64: 8, 128>}]} {
    %c0_i32 = arith.constant 0 : i32
    %0 = arith.cmpi eq, %arg2, %c0_i32 : i32
    %1 = arith.extui %0 : i1 to i32
    %c0_i32_0 = arith.constant 0 : i32
    %2 = arith.cmpi ne, %1, %c0_i32_0 : i32
    scf.if %2 {
      %cst_10 = arith.constant 0.000000e+00 : f32
      %12 = vector.broadcast %cst_10 : f32 to vector<8x128xf32>
      %c0_11 = arith.constant 0 : index
      %c0_12 = arith.constant 0 : index
      %13 = vector.load %arg6[%c0_11, %c0_12] : memref<8x128xf32, #tpu.memory_space<vmem>>, vector<8x128xf32>
      tpu.vector_store %arg6[%c0_11, %c0_12], %12 {strides = array<i32>} : memref<8x128xf32, #tpu.memory_space<vmem>>, vector<8x128xf32>,
    } else {
    }
    %c0 = arith.constant 0 : index
    %c0_1 = arith.constant 0 : index
    %3 = vector.load %arg3[%c0, %c0_1] : memref<8x128xbf16, #tpu.memory_space<vmem>>, vector<8x128xbf16>
    %c0_2 = arith.constant 0 : index
    %c0_3 = arith.constant 0 : index
    %4 = vector.load %arg6[%c0_2, %c0_3] : memref<8x128xf32, #tpu.memory_space<vmem>>, vector<8x128xf32>
    %c0_4 = arith.constant 0 : index
    %c0_5 = arith.constant 0 : index
    %5 = vector.load %arg4[%c0_4, %c0_5] : memref<128x128xbf16, #tpu.memory_space<vmem>>, vector<128x128xbf16>
    %cst = arith.constant dense<0.000000e+00> : vector<8x128xf32>
    %6 = tpu.matmul %3, %5, %cst {dimension_numbers = #tpu.dot_dimension_numbers<[1], [0], [0], [1], [0, 0, 1, 1], [], []>} : vector<8x128xbf16>, vector<128x128xbf16>, vector<8x128xf32> -> vector<8x128xf32>
    %7 = arith.addf %4, %6 : vector<8x128xf32>
    %c0_6 = arith.constant 0 : index
    %c0_7 = arith.constant 0 : index
    %8 = vector.load %arg6[%c0_6, %c0_7] : memref<8x128xf32, #tpu.memory_space<vmem>>, vector<8x128xf32>
    tpu.vector_store %arg6[%c0_6, %c0_7], %7 {strides = array<i32>} : memref<8x128xf32, #tpu.memory_space<vmem>>, vector<8x128xf32>,
    %c0_i32_8 = arith.constant 0 : i32
    %9 = arith.cmpi eq, %arg2, %c0_i32_8 : i32
    %10 = arith.extui %9 : i1 to i32
    %c0_i32_9 = arith.constant 0 : i32
    %11 = arith.cmpi ne, %10, %c0_i32_9 : i32
    scf.if %11 {
      %c0_10 = arith.constant 0 : index
      %c0_11 = arith.constant 0 : index
      %12 = vector.load %arg6[%c0_10, %c0_11] : memref<8x128xf32, #tpu.memory_space<vmem>>, vector<8x128xf32>
      %c0_12 = arith.constant 0 : index
      %c0_13 = arith.constant 0 : index
      %13 = vector.load %arg5[%c0_12, %c0_13] : memref<1x128xf32, #tpu.memory_space<vmem>>, vector<1x128xf32>
      %14 = vector.broadcast %13 : vector<1x128xf32> to vector<8x128xf32>
      %15 = arith.addf %12, %14 : vector<8x128xf32>
      %c0_14 = arith.constant 0 : index
      %c0_15 = arith.constant 0 : index
      %16 = vector.load %arg6[%c0_14, %c0_15] : memref<8x128xf32, #tpu.memory_space<vmem>>, vector<8x128xf32>
      tpu.vector_store %arg6[%c0_14, %c0_15], %15 {strides = array<i32>} : memref<8x128xf32, #tpu.memory_space<vmem>>, vector<8x128xf32>,
    } else {
    }
    return
  }
  func.func @transform_0(%arg0: i32, %arg1: i32, %arg2: i32) -> (i32, i32) {
    %c0_i32 = arith.constant 0 : i32
    return %arg0, %arg2 : i32, i32
  }
  func.func @transform_1(%arg0: i32, %arg1: i32, %arg2: i32) -> (i32, i32) {
    %c0_i32 = arith.constant 0 : i32
    return %arg2, %arg1 : i32, i32
  }
  func.func @transform_2(%arg0: i32, %arg1: i32, %arg2: i32) -> (i32, i32) {
    %c0_i32 = arith.constant 0 : i32
    %c0_i32_0 = arith.constant 0 : i32
    return %c0_i32, %arg1 : i32, i32
  }
  func.func @transform_3(%arg0: i32, %arg1: i32, %arg2: i32) -> (i32, i32) {
    %c0_i32 = arith.constant 0 : i32
    return %arg0, %arg1 : i32, i32
  }
}

</mosaic_0001>

<llo_original>
// kernel: densenet_forward.9
$region0: #{densenet_forward.9}
  #allocation0 [shape = 'u32[]', space=smem, size = 0x4, offset = 0x4, fixed_abs, tag = 'smem constant byte address 0x4 - core index']
  #allocation1 [shape = 'u32[144,128]{1,0:T(1,128)}', space=vmem, size = 0x12000, scoped, tag = 'internal scratch']
  %s0 = inlined_call_operand.vmem [shape: bf16[288,256], index: 0, kind: input, shape index: {}]
  %s1 = inlined_call_operand.vmem [shape: bf16[256,128], index: 1, kind: input, shape index: {}]
  %s2 = inlined_call_operand.vmem [shape: f32[1,128], index: 2, kind: input, shape index: {}]
  %s3 = inlined_call_operand.vmem [shape: f32[288,128], index: 3, kind: output, shape index: {}]
  %s4 = sld [smem:[#allocation0]]
  $region53: #{densenet_forward.9} parent=0
    _
  %s6 = ssub.s32 1, %s4
  %s7 = scalar_select 0, %s6, %s4
  loop: start=0, step=1, limit=4
  $region2: #{densenet_forward.9} parent=0 // loop_pre_header
    _
  $region3: #{densenet_forward.9} parent=0 // loop_header
    %s9 = sphi 0, %s13
    %p10 = scmp.ge.s32.totalorder %s9, 4
    %s16 = sphi 0, %s35
    %s17 = sphi 0, %s31
    %s18 = sphi 0, %s27
    %s19 = sphi 0, %s16
    %s20 = sphi 0, %s17
    %s21 = sphi 0, %s18
    %s22 = sphi 0, %s19
    %s23 = sphi 0, %s20
    %s24 = sphi 0, %s21
    %s40 = sphi 0, %s42
    %s43 = sphi 0, %s40
    %s44 = sphi 0, %s43
    %s60 = sphi 0, %s44
    %s68 = sphi 0, %s70
    %s71 = sphi 0, %s68
    %s72 = sphi 0, %s71
    %s88 = sphi 0, %s72
    %s94 = sphi 0, %s96
    %s97 = sphi 0, %s94
    %s98 = sphi 0, %s97
    %s114 = sphi 0, %s98
    %s122 = sphi 0, %s124
    %s125 = sphi 0, %s122
    %s126 = sphi 0, %s125
    %s142 = sphi 0, %s126
  $region4: #{densenet_forward.9} parent=0 // loop_header_branch
    %12 = sbr.rel (%p10) target = $region8
  $region5: #{densenet_forward.9} parent=0 // loop_body
    %s14 = ssub.s32 %s9, 1
    %s15 = ssub.s32 %s9, 2
    %s25 = sadd.s32 1, %s18
    %p26 = scmp.ge.s32.totalorder %s25, 1
    %s27 = scalar_select %p26, 0, %s25
    %s28 = sadd.s32 1, %s17
    %s29 = scalar_select %p26, %s28, %s17
    %p30 = scmp.ge.s32.totalorder %s29, 1
    %s31 = scalar_select %p30, 0, %s29
    %s32 = sadd.s32 1, %s16
    %s33 = scalar_select %p30, %s32, %s16
    %p34 = scmp.ge.s32.totalorder %s33, 2
    %s35 = scalar_select %p34, 0, %s33
    %s36 = ssub.s32 %s16, %s35
    %s37 = ssub.s32 %s18, %s27
    %s38 = sor.u32 %s36, %s37
    %p39 = scmp.eq.s32.totalorder %s38, 0
    %s41 = sadd.s32 %s40, 1
    %s42 = scalar_select %p39, %s40, %s41
    %p45 = pneg %p39
    %p46 = scmp.eq.s32.totalorder %s9, 1
    %p47 = por %p45, %p46
    %p48 = scmp.ne.s32.totalorder %s40, %s43
    %p49 = scmp.eq.s32.totalorder %s9, 0
    %p50 = por %p48, %p49
    %p51 = scmp.ne.s32.totalorder %s40, %s43
    %p52 = scmp.eq.s32.totalorder %s14, 1
    %p53 = por %p51, %p52
    %p54 = scmp.ne.s32.totalorder %s43, %s44
    %p55 = scmp.eq.s32.totalorder %s14, 0
    %p56 = por %p54, %p55
    %p57 = scmp.ne.s32.totalorder %s43, %s44
    %p58 = scmp.eq.s32.totalorder %s15, 1
    %p59 = por %p57, %p58
    %p61 = scmp.ne.s32.totalorder %s44, %s60
    %p62 = scmp.eq.s32.totalorder %s15, 0
    %p63 = por %p61, %p62
    %s64 = ssub.s32 %s18, %s27
    %s65 = ssub.s32 %s17, %s31
    %s66 = sor.u32 %s64, %s65
    %p67 = scmp.eq.s32.totalorder %s66, 0
    %s69 = sadd.s32 %s68, 1
    %s70 = scalar_select %p67, %s68, %s69
    %p73 = pneg %p67
    %p74 = scmp.eq.s32.totalorder %s9, 1
    %p75 = por %p73, %p74
    %p76 = scmp.ne.s32.totalorder %s68, %s71
    %p77 = scmp.eq.s32.totalorder %s9, 0
    %p78 = por %p76, %p77
    %p79 = scmp.ne.s32.totalorder %s68, %s71
    %p80 = scmp.eq.s32.totalorder %s14, 1
    %p81 = por %p79, %p80
    %p82 = scmp.ne.s32.totalorder %s71, %s72
    %p83 = scmp.eq.s32.totalorder %s14, 0
    %p84 = por %p82, %p83
    %p85 = scmp.ne.s32.totalorder %s71, %s72
    %p86 = scmp.eq.s32.totalorder %s15, 1
    %p87 = por %p85, %p86
    %p89 = scmp.ne.s32.totalorder %s72, %s88
    %p90 = scmp.eq.s32.totalorder %s15, 0
    %p91 = por %p89, %p90
    %s92 = ssub.s32 %s17, %s31
    %p93 = scmp.eq.s32.totalorder %s92, 0
    %s95 = sadd.s32 %s94, 1
    %s96 = scalar_select %p93, %s94, %s95
    %p99 = pneg %p93
    %p100 = scmp.eq.s32.totalorder %s9, 1
    %p101 = por %p99, %p100
    %p102 = scmp.ne.s32.totalorder %s94, %s97
    %p103 = scmp.eq.s32.totalorder %s9, 0
    %p104 = por %p102, %p103
    %p105 = scmp.ne.s32.totalorder %s94, %s97
    %p106 = scmp.eq.s32.totalorder %s14, 1
    %p107 = por %p105, %p106
    %p108 = scmp.ne.s32.totalorder %s97, %s98
    %p109 = scmp.eq.s32.totalorder %s14, 0
    %p110 = por %p108, %p109
    %p111 = scmp.ne.s32.totalorder %s97, %s98
    %p112 = scmp.eq.s32.totalorder %s15, 1
    %p113 = por %p111, %p112
    %p115 = scmp.ne.s32.totalorder %s98, %s114
    %p116 = scmp.eq.s32.totalorder %s15, 0
    %p117 = por %p115, %p116
    %s118 = ssub.s32 %s16, %s35
    %s119 = ssub.s32 %s17, %s31
    %s120 = sor.u32 %s118, %s119
    %p121 = scmp.eq.s32.totalorder %s120, 0
    %s123 = sadd.s32 %s122, 1
    %s124 = scalar_select %p121, %s122, %s123
    %p127 = pneg %p121
    %p128 = scmp.eq.s32.totalorder %s9, 1
    %p129 = por %p127, %p128
    %p130 = scmp.ne.s32.totalorder %s122, %s125
    %p131 = scmp.eq.s32.totalorder %s9, 0
    %p132 = por %p130, %p131
    %p133 = scmp.ne.s32.totalorder %s122, %s125
    %p134 = scmp.eq.s32.totalorder %s14, 1
    %p135 = por %p133, %p134
    %p136 = scmp.ne.s32.totalorder %s125, %s126
    %p137 = scmp.eq.s32.totalorder %s14, 0
    %p138 = por %p136, %p137
    %p139 = scmp.ne.s32.totalorder %s125, %s126
    %p140 = scmp.eq.s32.totalorder %s15, 1
    %p141 = por %p139, %p140
    %p143 = scmp.ne.s32.totalorder %s126, %s142
    %p144 = scmp.eq.s32.totalorder %s15, 0
    %p145 = por %p143, %p144
    %p146 = scmp.le.s32.totalorder 1, %s9
    %p147 = scmp.lt.s32.totalorder %s9, 3
    %p148 = pnand %p146, %p147
    %p149 = pneg %p148
    // Predicated region
    $region9: #{densenet_forward.9} parent=5 // pred_check
      _
    $region10: #{densenet_forward.9} parent=5 // pred_check_branch
      %151 = sbr.rel (%p148) target = $region12
    $region11: #{densenet_forward.9} parent=5 // pred_region
      %s152 = ssub.s32 %s9, 1
      // Predicated region
      $region13: #{densenet_forward.9} parent=11 // pred_check
        %p153 = pneg %p84
      $region14: #{densenet_forward.9} parent=11 // pred_check_branch
        %155 = sbr.rel (%p153) target = $region16
      $region15: #{densenet_forward.9} parent=11 // pred_region
        %s156 = smul.u32 32, %s21
        %p157 = scmp.lt.s32.totalorder %s156, 31
        %s158 = scalar_select %p157, %s156, 31
        %p159 = scmp.lt.s32.totalorder %s20, 0
        %s160 = scalar_select %p159, %s20, 0
        %s161 = sadd.s32 %s160, %s158
        %s162 = smul.addr %s161, 4
        %s163 = scalar_lea.vmem %s1, %s162
        %s164 = smul.u32 32, %s21
      $region16: #{densenet_forward.9} parent=11 // pred_fallthru
        _
      // Predicated region
      $region17: #{densenet_forward.9} parent=11 // pred_check
        %p165 = pneg %p110
      $region18: #{densenet_forward.9} parent=11 // pred_check_branch
        %167 = sbr.rel (%p165) target = $region20
      $region19: #{densenet_forward.9} parent=11 // pred_region
        %p168 = scmp.lt.s32.totalorder %s20, 0
        %s169 = scalar_select %p168, %s20, 0
        %s170 = scalar_lea.vmem %s2, %s169
      $region20: #{densenet_forward.9} parent=11 // pred_fallthru
        _
    $region12: #{densenet_forward.9} parent=5 // pred_fallthru
      _
    %p171 = scmp.lt.s32.totalorder %s9, 2
    // Predicated region
    $region21: #{densenet_forward.9} parent=5 // pred_check
      %p172 = pneg %p171
    $region22: #{densenet_forward.9} parent=5 // pred_check_branch
      %174 = sbr.rel (%p172) target = $region24
    $region23: #{densenet_forward.9} parent=5 // pred_region
      // Predicated region
      $region25: #{densenet_forward.9} parent=23 // pred_check
        %p175 = pneg %p50
      $region26: #{densenet_forward.9} parent=23 // pred_check_branch
        %177 = sbr.rel (%p175) target = $region28
      $region27: #{densenet_forward.9} parent=23 // pred_region
        %s178 = smul.u32 18, %s16
        %s179 = smul.u32 2, %s18
        %p180 = scmp.lt.s32.totalorder %s178, 35
        %s181 = scalar_select %p180, %s178, 35
        %p182 = scmp.lt.s32.totalorder %s179, 1
        %s183 = scalar_select %p182, %s179, 1
        %s184 = smul.addr %s181, 2
        %s185 = sadd.s32 %s183, %s184
        %s186 = smul.addr %s185, 4
        %s187 = scalar_lea.vmem %s0, %s186
        %s188 = smul.u32 18, %s16
        %s189 = smul.u32 2, %s18
      $region28: #{densenet_forward.9} parent=23 // pred_fallthru
        _
    $region24: #{densenet_forward.9} parent=5 // pred_fallthru
      _
    %p190 = scmp.le.s32.totalorder 1, %s9
    %p191 = scmp.lt.s32.totalorder %s9, 3
    %p192 = pnand %p190, %p191
    %p193 = pneg %p192
    // Predicated region
    $region29: #{densenet_forward.9} parent=5 // pred_check
      _
    $region30: #{densenet_forward.9} parent=5 // pred_check_branch
      %195 = sbr.rel (%p192) target = $region32
    $region31: #{densenet_forward.9} parent=5 // pred_region
      %s196 = ssub.s32 %s9, 1
      %s197 = smul.u32 18, %s19
      %s198 = smul.u32 2, %s21
      %p199 = scmp.lt.s32.totalorder %s197, 35
      %s200 = scalar_select %p199, %s197, 35
      %p201 = scmp.lt.s32.totalorder %s198, 1
      %s202 = scalar_select %p201, %s198, 1
      %s203 = smul.addr %s200, 2
      %s204 = sadd.s32 %s202, %s203
      %s205 = smul.addr %s204, 4
      %s206 = scalar_lea.vmem %s0, %s205
      %p207 = pneg %p56
      %p208 = pneg %p53
      %s209 = smul.u32 32, %s21
      %p210 = scmp.lt.s32.totalorder %s209, 31
      %s211 = scalar_select %p210, %s209, 31
      %p212 = scmp.lt.s32.totalorder %s20, 0
      %s213 = scalar_select %p212, %s20, 0
      %s214 = sadd.s32 %s213, %s211
      %s215 = smul.addr %s214, 4
      %s216 = scalar_lea.vmem %s1, %s215
      %p217 = pneg %p84
      %p218 = pneg %p81
      %p219 = scmp.lt.s32.totalorder %s20, 0
      %s220 = scalar_select %p219, %s20, 0
      %s221 = scalar_lea.vmem %s2, %s220
      %p222 = pneg %p110
      %p223 = pneg %p107
      %p224 = pneg %p138
      %p225 = pneg %p135
      %s226 = smul.u32 18, %s19
      %p227 = scmp.lt.s32.totalorder %s226, 35
      %s228 = scalar_select %p227, %s226, 35
      %p229 = scmp.lt.s32.totalorder %s20, 0
      %s230 = scalar_select %p229, %s20, 0
      %s231 = sadd.s32 %s230, %s228
      %s232 = smul.addr %s231, 8
      %s233 = scalar_lea.vmem %s3, %s232
      %s234 = smul.u32 18, %s19
      %s235 = smul.u32 2, %s21
      %p236 = scmp.lt.s32.totalorder %s234, 35
      %s237 = scalar_select %p236, %s234, 35
      %p238 = scmp.lt.s32.totalorder %s235, 1
      %s239 = scalar_select %p238, %s235, 1
      %s240 = smul.addr %s237, 2
      %s241 = sadd.s32 %s239, %s240
      %s242 = smul.addr %s241, 4
      %s243 = scalar_lea.vmem %s0, %s242
      %s244 = smul.u32 18, %s19
      %s245 = smul.u32 2, %s21
      %s246 = smul.u32 32, %s21
      %p247 = scmp.lt.s32.totalorder %s246, 31
      %s248 = scalar_select %p247, %s246, 31
      %p249 = scmp.lt.s32.totalorder %s20, 0
      %s250 = scalar_select %p249, %s20, 0
      %s251 = sadd.s32 %s250, %s248
      %s252 = smul.addr %s251, 4
      %s253 = scalar_lea.vmem %s1, %s252
      %s254 = smul.u32 32, %s21
      %p255 = scmp.lt.s32.totalorder %s20, 0
      %s256 = scalar_select %p255, %s20, 0
      %s257 = scalar_lea.vmem %s2, %s256
      %s258 = smul.u32 18, %s19
      %p259 = scmp.lt.s32.totalorder %s258, 35
      %s260 = scalar_select %p259, %s258, 35
      %p261 = scmp.lt.s32.totalorder %s20, 0
      %s262 = scalar_select %p261, %s20, 0
      %s263 = sadd.s32 %s262, %s260
      %s264 = smul.addr %s263, 8
      %s265 = scalar_lea.vmem %s3, %s264
      %s266 = smul.u32 18, %s19
      %p268 = scmp.eq.s32.totalorder %s21, 0
      // Predicated region
      $region33: #{densenet_forward.9} parent=31 // pred_check
        %p269 = pneg %p268
      $region34: #{densenet_forward.9} parent=31 // pred_check_branch
        %271 = sbr.rel (%p269) target = $region36
      $region35: #{densenet_forward.9} parent=31 // pred_region
        %272 = vst [vmem:[%s265] sm:$0xff] 0.0
        %273 = vst [vmem:[%s265 + $0x8] sm:$0xff] 0.0
        %274 = vst [vmem:[%s265 + $0x10] sm:$0xff] 0.0
        %275 = vst [vmem:[%s265 + $0x18] sm:$0xff] 0.0
        %276 = vst [vmem:[%s265 + $0x20] sm:$0xff] 0.0
        %277 = vst [vmem:[%s265 + $0x28] sm:$0xff] 0.0
        %278 = vst [vmem:[%s265 + $0x30] sm:$0xff] 0.0
        %279 = vst [vmem:[%s265 + $0x38] sm:$0xff] 0.0
        %280 = vst [vmem:[%s265 + $0x40] sm:$0xff] 0.0
        %281 = vst [vmem:[%s265 + $0x48] sm:$0xff] 0.0
        %282 = vst [vmem:[%s265 + $0x50] sm:$0xff] 0.0
        %283 = vst [vmem:[%s265 + $0x58] sm:$0xff] 0.0
        %284 = vst [vmem:[%s265 + $0x60] sm:$0xff] 0.0
        %285 = vst [vmem:[%s265 + $0x68] sm:$0xff] 0.0
        %286 = vst [vmem:[%s265 + $0x70] sm:$0xff] 0.0
        %287 = vst [vmem:[%s265 + $0x78] sm:$0xff] 0.0
        %288 = vst [vmem:[%s265 + $0x80] sm:$0xff] 0.0
        %289 = vst [vmem:[%s265 + $0x88] sm:$0xff] 0.0
      $region36: #{densenet_forward.9} parent=31 // pred_fallthru
        _
      %v290 = vld [vmem:[%s243] sm:$0xff]
      %v291 = vld [vmem:[%s243 + $0x8] sm:$0xff]
      %v292 = vld [vmem:[%s243 + $0x10] sm:$0xff]
      %v293 = vld [vmem:[%s243 + $0x18] sm:$0xff]
      %v294 = vld [vmem:[%s243 + $0x20] sm:$0xff]
      %v295 = vld [vmem:[%s243 + $0x28] sm:$0xff]
      %v296 = vld [vmem:[%s243 + $0x30] sm:$0xff]
      %v297 = vld [vmem:[%s243 + $0x38] sm:$0xff]
      %v298 = vld [vmem:[%s243 + $0x40] sm:$0xff]
      %v299 = vld [vmem:[%s243 + $0x48] sm:$0xff]
      %v300 = vld [vmem:[%s243 + $0x50] sm:$0xff]
      %v301 = vld [vmem:[%s243 + $0x58] sm:$0xff]
      %v302 = vld [vmem:[%s243 + $0x60] sm:$0xff]
      %v303 = vld [vmem:[%s243 + $0x68] sm:$0xff]
      %v304 = vld [vmem:[%s243 + $0x70] sm:$0xff]
      %v305 = vld [vmem:[%s243 + $0x78] sm:$0xff]
      %v306 = vld [vmem:[%s243 + $0x80] sm:$0xff]
      %v307 = vld [vmem:[%s243 + $0x88] sm:$0xff]
      %v308 = vld [vmem:[%s265] sm:$0xff]
      %v309 = vld [vmem:[%s265 + $0x8] sm:$0xff]
      %v310 = vld [vmem:[%s265 + $0x10] sm:$0xff]
      %v311 = vld [vmem:[%s265 + $0x18] sm:$0xff]
      %v312 = vld [vmem:[%s265 + $0x20] sm:$0xff]
      %v313 = vld [vmem:[%s265 + $0x28] sm:$0xff]
      %v314 = vld [vmem:[%s265 + $0x30] sm:$0xff]
      %v315 = vld [vmem:[%s265 + $0x38] sm:$0xff]
      %v316 = vld [vmem:[%s265 + $0x40] sm:$0xff]
      %v317 = vld [vmem:[%s265 + $0x48] sm:$0xff]
      %v318 = vld [vmem:[%s265 + $0x50] sm:$0xff]
      %v319 = vld [vmem:[%s265 + $0x58] sm:$0xff]
      %v320 = vld [vmem:[%s265 + $0x60] sm:$0xff]
      %v321 = vld [vmem:[%s265 + $0x68] sm:$0xff]
      %v322 = vld [vmem:[%s265 + $0x70] sm:$0xff]
      %v323 = vld [vmem:[%s265 + $0x78] sm:$0xff]
      %v324 = vld [vmem:[%s265 + $0x80] sm:$0xff]
      %v325 = vld [vmem:[%s265 + $0x88] sm:$0xff]
      %v326 = vld [vmem:[%s253] sm:$0xf]
      %v327 = vld [vmem:[%s253 + $0x4] sm:$0xf]
      %v328 = vld [vmem:[%s253 + $0x8] sm:$0xf]
      %v329 = vld [vmem:[%s253 + $0xc] sm:$0xf]
      %v330 = vld [vmem:[%s253 + $0x10] sm:$0xf]
      %v331 = vld [vmem:[%s253 + $0x14] sm:$0xf]
      %v332 = vld [vmem:[%s253 + $0x18] sm:$0xf]
      %v333 = vld [vmem:[%s253 + $0x1c] sm:$0xf]
      %v334 = vld [vmem:[%s253 + $0x20] sm:$0xf]
      %v335 = vld [vmem:[%s253 + $0x24] sm:$0xf]
      %v336 = vld [vmem:[%s253 + $0x28] sm:$0xf]
      %v337 = vld [vmem:[%s253 + $0x2c] sm:$0xf]
      %v338 = vld [vmem:[%s253 + $0x30] sm:$0xf]
      %v339 = vld [vmem:[%s253 + $0x34] sm:$0xf]
      %v340 = vld [vmem:[%s253 + $0x38] sm:$0xf]
      %v341 = vld [vmem:[%s253 + $0x3c] sm:$0xf]
      %v342 = vld [vmem:[%s253 + $0x40] sm:$0xf]
      %v343 = vld [vmem:[%s253 + $0x44] sm:$0xf]
      %v344 = vld [vmem:[%s253 + $0x48] sm:$0xf]
      %v345 = vld [vmem:[%s253 + $0x4c] sm:$0xf]
      %v346 = vld [vmem:[%s253 + $0x50] sm:$0xf]
      %v347 = vld [vmem:[%s253 + $0x54] sm:$0xf]
      %v348 = vld [vmem:[%s253 + $0x58] sm:$0xf]
      %v349 = vld [vmem:[%s253 + $0x5c] sm:$0xf]
      %v350 = vld [vmem:[%s253 + $0x60] sm:$0xf]
      %v351 = vld [vmem:[%s253 + $0x64] sm:$0xf]
      %v352 = vld [vmem:[%s253 + $0x68] sm:$0xf]
      %v353 = vld [vmem:[%s253 + $0x6c] sm:$0xf]
      %v354 = vld [vmem:[%s253 + $0x70] sm:$0xf]
      %v355 = vld [vmem:[%s253 + $0x74] sm:$0xf]
      %v356 = vld [vmem:[%s253 + $0x78] sm:$0xf]
      %v357 = vld [vmem:[%s253 + $0x7c] sm:$0xf]
      %v376 = vunpack.c.l.b16 %v290
      %v377 = vunpack.c.h.b16 %v290
      %v378 = vunpack.c.l.b16 %v291
      %v379 = vunpack.c.h.b16 %v291
      %v380 = vunpack.c.l.b16 %v292
      %v381 = vunpack.c.h.b16 %v292
      %v382 = vunpack.c.l.b16 %v293
      %v383 = vunpack.c.h.b16 %v293
      %v384 = vunpack.c.l.b16 %v294
      %v385 = vunpack.c.h.b16 %v294
      %v386 = vunpack.c.l.b16 %v295
      %v387 = vunpack.c.h.b16 %v295
      %v388 = vunpack.c.l.b16 %v296
      %v389 = vunpack.c.h.b16 %v296
      %v390 = vunpack.c.l.b16 %v297
      %v391 = vunpack.c.h.b16 %v297
      %v392 = vunpack.c.l.b16 %v298
      %v393 = vunpack.c.h.b16 %v298
      %v394 = vunpack.c.l.b16 %v299
      %v395 = vunpack.c.h.b16 %v299
      %v396 = vunpack.c.l.b16 %v300
      %v397 = vunpack.c.h.b16 %v300
      %v398 = vunpack.c.l.b16 %v301
      %v399 = vunpack.c.h.b16 %v301
      %v400 = vunpack.c.l.b16 %v302
      %v401 = vunpack.c.h.b16 %v302
      %v402 = vunpack.c.l.b16 %v303
      %v403 = vunpack.c.h.b16 %v303
      %v404 = vunpack.c.l.b16 %v304
      %v405 = vunpack.c.h.b16 %v304
      %v406 = vunpack.c.l.b16 %v305
      %v407 = vunpack.c.h.b16 %v305
      %v408 = vunpack.c.l.b16 %v306
      %v409 = vunpack.c.h.b16 %v306
      %v410 = vunpack.c.l.b16 %v307
      %v411 = vunpack.c.h.b16 %v307
      %v412 = vpack.c.b16 %v378, %v376
      %v413 = vpack.c.b16 %v379, %v377
      %v414 = vpack.c.b16 %v382, %v380
      %v415 = vpack.c.b16 %v383, %v381
      %v416 = vpack.c.b16 %v386, %v384
      %v417 = vpack.c.b16 %v387, %v385
      %v418 = vpack.c.b16 %v390, %v388
      %v419 = vpack.c.b16 %v391, %v389
      %v420 = vpack.c.b16 %v394, %v392
      %v421 = vpack.c.b16 %v395, %v393
      %v422 = vpack.c.b16 %v398, %v396
      %v423 = vpack.c.b16 %v399, %v397
      %v424 = vpack.c.b16 %v402, %v400
      %v425 = vpack.c.b16 %v403, %v401
      %v426 = vpack.c.b16 %v406, %v404
      %v427 = vpack.c.b16 %v407, %v405
      %v428 = vpack.c.b16 %v410, %v408
      %v429 = vpack.c.b16 %v411, %v409
      %v480 = vunpack.c.l.b16 %v326
      %v481 = vunpack.c.l.b16 %v327
      %v482 = vunpack.c.l.b16 %v328
      %v483 = vunpack.c.l.b16 %v329
      %v484 = vunpack.c.l.b16 %v330
      %v485 = vunpack.c.l.b16 %v331
      %v486 = vunpack.c.l.b16 %v332
      %v487 = vunpack.c.l.b16 %v333
      %v488 = vunpack.c.l.b16 %v334
      %v489 = vunpack.c.l.b16 %v335
      %v490 = vunpack.c.l.b16 %v336
      %v491 = vunpack.c.l.b16 %v337
      %v492 = vunpack.c.l.b16 %v338
      %v493 = vunpack.c.l.b16 %v339
      %v494 = vunpack.c.l.b16 %v340
      %v495 = vunpack.c.l.b16 %v341
      %v496 = vunpack.c.l.b16 %v342
      %v497 = vunpack.c.l.b16 %v343
      %v498 = vunpack.c.l.b16 %v344
      %v499 = vunpack.c.l.b16 %v345
      %v500 = vunpack.c.l.b16 %v346
      %v501 = vunpack.c.l.b16 %v347
      %v502 = vunpack.c.l.b16 %v348
      %v503 = vunpack.c.l.b16 %v349
      %v504 = vunpack.c.l.b16 %v350
      %v505 = vunpack.c.l.b16 %v351
      %v506 = vunpack.c.l.b16 %v352
      %v507 = vunpack.c.l.b16 %v353
      %v508 = vunpack.c.l.b16 %v354
      %v509 = vunpack.c.l.b16 %v355
      %v510 = vunpack.c.l.b16 %v356
      %v511 = vunpack.c.l.b16 %v357
      %v512 = vpack.c.b16 %v481, %v480
      %v513 = vpack.c.b16 %v483, %v482
      %v514 = vpack.c.b16 %v485, %v484
      %v515 = vpack.c.b16 %v487, %v486
      %v516 = vpack.c.b16 %v489, %v488
      %v517 = vpack.c.b16 %v491, %v490
      %v518 = vpack.c.b16 %v493, %v492
      %v519 = vpack.c.b16 %v495, %v494
      %v520 = vpack.c.b16 %v497, %v496
      %v521 = vpack.c.b16 %v499, %v498
      %v522 = vpack.c.b16 %v501, %v500
      %v523 = vpack.c.b16 %v503, %v502
      %v524 = vpack.c.b16 %v505, %v504
      %v525 = vpack.c.b16 %v507, %v506
      %v526 = vpack.c.b16 %v509, %v508
      %v527 = vpack.c.b16 %v511, %v510
      %544 = vmatprep.subr.bf16.mxu0 0
      %545 = vmatpush1.bf16.msra.mxu0 %v512
      %546 = vmatprep.subr.bf16.mxu0 0
      %547 = vmatpush1.bf16.msra.mxu0 %v513
      %548 = vmatprep.subr.bf16.mxu0 0
      %549 = vmatpush1.bf16.msra.mxu0 %v514
      %550 = vmatprep.subr.bf16.mxu0 0
      %551 = vmatpush1.bf16.msra.mxu0 %v515
      %552 = vmatprep.subr.bf16.mxu0 0
      %553 = vmatpush1.bf16.msra.mxu0 %v516
      %554 = vmatprep.subr.bf16.mxu0 0
      %555 = vmatpush1.bf16.msra.mxu0 %v517
      %556 = vmatprep.subr.bf16.mxu0 0
      %557 = vmatpush1.bf16.msra.mxu0 %v518
      %558 = vmatprep.subr.bf16.mxu0 0
      %559 = vmatpush1.bf16.msra.mxu0 %v519
      %560 = vmatprep.subr.bf16.mxu0 0
      %561 = vmatpush1.bf16.msra.mxu0 %v520
      %562 = vmatprep.subr.bf16.mxu0 0
      %563 = vmatpush1.bf16.msra.mxu0 %v521
      %564 = vmatprep.subr.bf16.mxu0 0
      %565 = vmatpush1.bf16.msra.mxu0 %v522
      %566 = vmatprep.subr.bf16.mxu0 0
      %567 = vmatpush1.bf16.msra.mxu0 %v523
      %568 = vmatprep.subr.bf16.mxu0 0
      %569 = vmatpush1.bf16.msra.mxu0 %v524
      %570 = vmatprep.subr.bf16.mxu0 0
      %571 = vmatpush1.bf16.msra.mxu0 %v525
      %572 = vmatprep.subr.bf16.mxu0 0
      %573 = vmatpush1.bf16.msra.mxu0 %v526
      %574 = vmatprep.subr.bf16.mxu0 0
      %575 = vmatpush1.bf16.msra.mxu0 %v527
      %576 = vmatprep.mubr.bf16.mxu0 %v413
      %577 = vmatmul.mubr.bf16.gmra.mrb[0].mxu0 %v412
      %v578 = vpop.f32.mrb[0].mxu0
      %v579 = vadd.f32 0.0, %v578
      %v580 = vpop.f32.mrb[0].mxu0
      %v581 = vpop.f32.mrb[0].mxu0
      %v582 = vadd.f32 0.0, %v581
      %v583 = vpop.f32.mrb[0].mxu0
      %584 = vmatprep.mubr.bf16.mxu0 %v415
      %585 = vmatmul.mubr.bf16.gmra.mrb[0].mxu0 %v414
      %v586 = vpop.f32.mrb[0].mxu0
      %v587 = vadd.f32 0.0, %v586
      %v588 = vpop.f32.mrb[0].mxu0
      %v589 = vpop.f32.mrb[0].mxu0
      %v590 = vadd.f32 0.0, %v589
      %v591 = vpop.f32.mrb[0].mxu0
      %592 = vmatprep.mubr.bf16.mxu0 %v417
      %593 = vmatmul.mubr.bf16.gmra.mrb[0].mxu0 %v416
      %v594 = vpop.f32.mrb[0].mxu0
      %v595 = vadd.f32 0.0, %v594
      %v596 = vpop.f32.mrb[0].mxu0
      %v597 = vpop.f32.mrb[0].mxu0
      %v598 = vadd.f32 0.0, %v597
      %v599 = vpop.f32.mrb[0].mxu0
      %600 = vmatprep.mubr.bf16.mxu0 %v419
      %601 = vmatmul.mubr.bf16.gmra.mrb[0].mxu0 %v418
      %v602 = vpop.f32.mrb[0].mxu0
      %v603 = vadd.f32 0.0, %v602
      %v604 = vpop.f32.mrb[0].mxu0
      %v605 = vpop.f32.mrb[0].mxu0
      %v606 = vadd.f32 0.0, %v605
      %v607 = vpop.f32.mrb[0].mxu0
      %608 = vmatprep.mubr.bf16.mxu0 %v421
      %609 = vmatmul.mubr.bf16.gmra.mrb[0].mxu0 %v420
      %v610 = vpop.f32.mrb[0].mxu0
      %v611 = vadd.f32 0.0, %v610
      %v612 = vpop.f32.mrb[0].mxu0
      %v613 = vpop.f32.mrb[0].mxu0
      %v614 = vadd.f32 0.0, %v613
      %v615 = vpop.f32.mrb[0].mxu0
      %616 = vmatprep.mubr.bf16.mxu0 %v423
      %617 = vmatmul.mubr.bf16.gmra.mrb[0].mxu0 %v422
      %v618 = vpop.f32.mrb[0].mxu0
      %v619 = vadd.f32 0.0, %v618
      %v620 = vpop.f32.mrb[0].mxu0
      %v621 = vpop.f32.mrb[0].mxu0
      %v622 = vadd.f32 0.0, %v621
      %v623 = vpop.f32.mrb[0].mxu0
      %624 = vmatprep.mubr.bf16.mxu0 %v425
      %625 = vmatmul.mubr.bf16.gmra.mrb[0].mxu0 %v424
      %v626 = vpop.f32.mrb[0].mxu0
      %v627 = vadd.f32 0.0, %v626
      %v628 = vpop.f32.mrb[0].mxu0
      %v629 = vpop.f32.mrb[0].mxu0
      %v630 = vadd.f32 0.0, %v629
      %v631 = vpop.f32.mrb[0].mxu0
      %632 = vmatprep.mubr.bf16.mxu0 %v427
      %633 = vmatmul.mubr.bf16.gmra.mrb[0].mxu0 %v426
      %v634 = vpop.f32.mrb[0].mxu0
      %v635 = vadd.f32 0.0, %v634
      %v636 = vpop.f32.mrb[0].mxu0
      %v637 = vpop.f32.mrb[0].mxu0
      %v638 = vadd.f32 0.0, %v637
      %v639 = vpop.f32.mrb[0].mxu0
      %640 = vmatprep.mubr.bf16.mxu0 %v429
      %641 = vmatmul.mubr.bf16.gmra.mrb[0].mxu0 %v428
      %v642 = vpop.f32.mrb[0].mxu0
      %v643 = vadd.f32 0.0, %v642
      %v644 = vpop.f32.mrb[0].mxu0
      %v645 = vpop.f32.mrb[0].mxu0
      %v646 = vadd.f32 0.0, %v645
      %v647 = vpop.f32.mrb[0].mxu0
      %648 = vdwg.mxu0
      %v649 = vadd.f32 %v308, %v579
      %v650 = vadd.f32 %v309, %v582
      %v651 = vadd.f32 %v310, %v587
      %v652 = vadd.f32 %v311, %v590
      %v653 = vadd.f32 %v312, %v595
      %v654 = vadd.f32 %v313, %v598
      %v655 = vadd.f32 %v314, %v603
      %v656 = vadd.f32 %v315, %v606
      %v657 = vadd.f32 %v316, %v611
      %v658 = vadd.f32 %v317, %v614
      %v659 = vadd.f32 %v318, %v619
      %v660 = vadd.f32 %v319, %v622
      %v661 = vadd.f32 %v320, %v627
      %v662 = vadd.f32 %v321, %v630
      %v663 = vadd.f32 %v322, %v635
      %v664 = vadd.f32 %v323, %v638
      %v665 = vadd.f32 %v324, %v643
      %v666 = vadd.f32 %v325, %v646
      %667 = vst [vmem:[%s265] sm:$0xff] %v649
      %668 = vst [vmem:[%s265 + $0x8] sm:$0xff] %v650
      %669 = vst [vmem:[%s265 + $0x10] sm:$0xff] %v651
      %670 = vst [vmem:[%s265 + $0x18] sm:$0xff] %v652
      %671 = vst [vmem:[%s265 + $0x20] sm:$0xff] %v653
      %672 = vst [vmem:[%s265 + $0x28] sm:$0xff] %v654
      %673 = vst [vmem:[%s265 + $0x30] sm:$0xff] %v655
      %674 = vst [vmem:[%s265 + $0x38] sm:$0xff] %v656
      %675 = vst [vmem:[%s265 + $0x40] sm:$0xff] %v657
      %676 = vst [vmem:[%s265 + $0x48] sm:$0xff] %v658
      %677 = vst [vmem:[%s265 + $0x50] sm:$0xff] %v659
      %678 = vst [vmem:[%s265 + $0x58] sm:$0xff] %v660
      %679 = vst [vmem:[%s265 + $0x60] sm:$0xff] %v661
      %680 = vst [vmem:[%s265 + $0x68] sm:$0xff] %v662
      %681 = vst [vmem:[%s265 + $0x70] sm:$0xff] %v663
      %682 = vst [vmem:[%s265 + $0x78] sm:$0xff] %v664
      %683 = vst [vmem:[%s265 + $0x80] sm:$0xff] %v665
      %684 = vst [vmem:[%s265 + $0x88] sm:$0xff] %v666
      // Predicated region
      $region37: #{densenet_forward.9} parent=31 // pred_check
        %p685 = pneg %p268
      $region38: #{densenet_forward.9} parent=31 // pred_check_branch
        %687 = sbr.rel (%p685) target = $region40
      $region39: #{densenet_forward.9} parent=31 // pred_region
        %v688 = vld [vmem:[%s265] sm:$0xff]
        %v689 = vld [vmem:[%s265 + $0x8] sm:$0xff]
        %v690 = vld [vmem:[%s265 + $0x10] sm:$0xff]
        %v691 = vld [vmem:[%s265 + $0x18] sm:$0xff]
        %v692 = vld [vmem:[%s265 + $0x20] sm:$0xff]
        %v693 = vld [vmem:[%s265 + $0x28] sm:$0xff]
        %v694 = vld [vmem:[%s265 + $0x30] sm:$0xff]
        %v695 = vld [vmem:[%s265 + $0x38] sm:$0xff]
        %v696 = vld [vmem:[%s265 + $0x40] sm:$0xff]
        %v697 = vld [vmem:[%s265 + $0x48] sm:$0xff]
        %v698 = vld [vmem:[%s265 + $0x50] sm:$0xff]
        %v699 = vld [vmem:[%s265 + $0x58] sm:$0xff]
        %v700 = vld [vmem:[%s265 + $0x60] sm:$0xff]
        %v701 = vld [vmem:[%s265 + $0x68] sm:$0xff]
        %v702 = vld [vmem:[%s265 + $0x70] sm:$0xff]
        %v703 = vld [vmem:[%s265 + $0x78] sm:$0xff]
        %v704 = vld [vmem:[%s265 + $0x80] sm:$0xff]
        %v705 = vld [vmem:[%s265 + $0x88] sm:$0xff]
        %v706 = vld [vmem:[%s257] sm:$0x1]
        %v708 = vlaneseq
        %v709 = vshrl.u32 %v708, 7
        %v710 = vsub.s32 0, %v709
        %v711 = vrot.slane %v706, %v710
        %v713 = vadd.f32 %v688, %v711
        %v714 = vadd.f32 %v689, %v711
        %v715 = vadd.f32 %v690, %v711
        %v716 = vadd.f32 %v691, %v711
        %v717 = vadd.f32 %v692, %v711
        %v718 = vadd.f32 %v693, %v711
        %v719 = vadd.f32 %v694, %v711
        %v720 = vadd.f32 %v695, %v711
        %v721 = vadd.f32 %v696, %v711
        %v722 = vadd.f32 %v697, %v711
        %v723 = vadd.f32 %v698, %v711
        %v724 = vadd.f32 %v699, %v711
        %v725 = vadd.f32 %v700, %v711
        %v726 = vadd.f32 %v701, %v711
        %v727 = vadd.f32 %v702, %v711
        %v728 = vadd.f32 %v703, %v711
        %v729 = vadd.f32 %v704, %v711
        %v730 = vadd.f32 %v705, %v711
        %731 = vst [vmem:[%s265] sm:$0xff] %v713
        %732 = vst [vmem:[%s265 + $0x8] sm:$0xff] %v714
        %733 = vst [vmem:[%s265 + $0x10] sm:$0xff] %v715
        %734 = vst [vmem:[%s265 + $0x18] sm:$0xff] %v716
        %735 = vst [vmem:[%s265 + $0x20] sm:$0xff] %v717
        %736 = vst [vmem:[%s265 + $0x28] sm:$0xff] %v718
        %737 = vst [vmem:[%s265 + $0x30] sm:$0xff] %v719
        %738 = vst [vmem:[%s265 + $0x38] sm:$0xff] %v720
        %739 = vst [vmem:[%s265 + $0x40] sm:$0xff] %v721
        %740 = vst [vmem:[%s265 + $0x48] sm:$0xff] %v722
        %741 = vst [vmem:[%s265 + $0x50] sm:$0xff] %v723
        %742 = vst [vmem:[%s265 + $0x58] sm:$0xff] %v724
        %743 = vst [vmem:[%s265 + $0x60] sm:$0xff] %v725
        %744 = vst [vmem:[%s265 + $0x68] sm:$0xff] %v726
        %745 = vst [vmem:[%s265 + $0x70] sm:$0xff] %v727
        %746 = vst [vmem:[%s265 + $0x78] sm:$0xff] %v728
        %747 = vst [vmem:[%s265 + $0x80] sm:$0xff] %v729
        %748 = vst [vmem:[%s265 + $0x88] sm:$0xff] %v730
      $region40: #{densenet_forward.9} parent=31 // pred_fallthru
        _
      %s749 = smul.u32 18, %s19
      %p750 = scmp.lt.s32.totalorder %s749, 35
      %s751 = scalar_select %p750, %s749, 35
      %p752 = scmp.lt.s32.totalorder %s20, 0
      %s753 = scalar_select %p752, %s20, 0
      %s754 = sadd.s32 %s753, %s751
      %s755 = smul.addr %s754, 8
      %s756 = scalar_lea.vmem %s3, %s755
      // Predicated region
      $region41: #{densenet_forward.9} parent=31 // pred_check
        %p757 = pneg %p135
      $region42: #{densenet_forward.9} parent=31 // pred_check_branch
        %759 = sbr.rel (%p757) target = $region44
      $region43: #{densenet_forward.9} parent=31 // pred_region
        %s760 = smul.u32 18, %s19
      $region44: #{densenet_forward.9} parent=31 // pred_fallthru
        _
    $region32: #{densenet_forward.9} parent=5 // pred_fallthru
      _
    %p761 = scmp.le.s32.totalorder 2, %s9
    // Predicated region
    $region45: #{densenet_forward.9} parent=5 // pred_check
      %p762 = pneg %p761
    $region46: #{densenet_forward.9} parent=5 // pred_check_branch
      %764 = sbr.rel (%p762) target = $region48
    $region47: #{densenet_forward.9} parent=5 // pred_region
      %s765 = ssub.s32 %s9, 2
      // Predicated region
      $region49: #{densenet_forward.9} parent=47 // pred_check
        %p766 = pneg %p141
      $region50: #{densenet_forward.9} parent=47 // pred_check_branch
        %768 = sbr.rel (%p766) target = $region52
      $region51: #{densenet_forward.9} parent=47 // pred_region
        %s769 = smul.u32 18, %s22
        %p770 = scmp.lt.s32.totalorder %s769, 35
        %s771 = scalar_select %p770, %s769, 35
        %p772 = scmp.lt.s32.totalorder %s23, 0
        %s773 = scalar_select %p772, %s23, 0
        %s774 = sadd.s32 %s773, %s771
        %s775 = smul.addr %s774, 8
        %s776 = scalar_lea.vmem %s3, %s775
      $region52: #{densenet_forward.9} parent=47 // pred_fallthru
        _
    $region48: #{densenet_forward.9} parent=5 // pred_fallthru
      _
  $region6: #{densenet_forward.9} parent=0 // loop_footer
    %s13 = sadd.s32 1, %s9
  $region7: #{densenet_forward.9} parent=0 // loop_footer_branch
    %8 = sbr.rel target = $region3
  $region8: #{densenet_forward.9} parent=0 // loop_exit
    _

// kernel: densenet_forward.10
$region0: #{densenet_forward.10}
  #allocation0 [shape = 'u32[]', space=smem, size = 0x4, offset = 0x4, fixed_abs, tag = 'smem constant byte address 0x4 - core index']
  #allocation1 [shape = 'u32[144,128]{1,0:T(1,128)}', space=vmem, size = 0x12000, scoped, tag = 'internal scratch']
  %s0 = inlined_call_operand.vmem [shape: f32[288,64], index: 0, kind: input, shape index: {}]
  %s1 = inlined_call_operand.vmem [shape: f32[1,64], index: 1, kind: input, shape index: {}]
  %s2 = inlined_call_operand.vmem [shape: f32[1,64], index: 2, kind: input, shape index: {}]
  %s3 = inlined_call_operand.vmem [shape: f32[288,64], index: 3, kind: output, shape index: {}]
  %s4 = sld [smem:[#allocation0]]
  $region22: #{densenet_forward.10} parent=0
    _
  %s6 = ssub.s32 1, %s4
  %s7 = scalar_select 0, %s6, %s4
  // Predicated region
  $region2: #{densenet_forward.10} parent=0 // pred_check
    _
  $region3: #{densenet_forward.10} parent=0 // pred_check_branch
    %9 = sbr.rel (0) target = $region5
  $region4: #{densenet_forward.10} parent=0 // pred_region
    _
  $region5: #{densenet_forward.10} parent=0 // pred_fallthru
    _
  // Predicated region
  $region6: #{densenet_forward.10} parent=0 // pred_check
    _
  $region7: #{densenet_forward.10} parent=0 // pred_check_branch
    %11 = sbr.rel (0) target = $region9
  $region8: #{densenet_forward.10} parent=0 // pred_region
    _
  $region9: #{densenet_forward.10} parent=0 // pred_fallthru
    _
  // Predicated region
  $region10: #{densenet_forward.10} parent=0 // pred_check
    _
  $region11: #{densenet_forward.10} parent=0 // pred_check_branch
    %13 = sbr.rel (0) target = $region13
  $region12: #{densenet_forward.10} parent=0 // pred_region
    _
  $region13: #{densenet_forward.10} parent=0 // pred_fallthru
    _
  %v14 = vld [vmem:[%s0] sm:$0xff]
  %v15 = vld [vmem:[%s0 + $0x8] sm:$0xff]
  %v16 = vld [vmem:[%s0 + $0x10] sm:$0xff]
  %v17 = vld [vmem:[%s0 + $0x18] sm:$0xff]
  %v18 = vld [vmem:[%s0 + $0x20] sm:$0xff]
  %v19 = vld [vmem:[%s0 + $0x28] sm:$0xff]
  %v20 = vld [vmem:[%s0 + $0x30] sm:$0xff]
  %v21 = vld [vmem:[%s0 + $0x38] sm:$0xff]
  %v22 = vld [vmem:[%s0 + $0x40] sm:$0xff]
  %v23 = vld [vmem:[%s0 + $0x48] sm:$0xff]
  %v24 = vld [vmem:[%s0 + $0x50] sm:$0xff]
  %v25 = vld [vmem:[%s0 + $0x58] sm:$0xff]
  %v26 = vld [vmem:[%s0 + $0x60] sm:$0xff]
  %v27 = vld [vmem:[%s0 + $0x68] sm:$0xff]
  %v28 = vld [vmem:[%s0 + $0x70] sm:$0xff]
  %v29 = vld [vmem:[%s0 + $0x78] sm:$0xff]
  %v30 = vld [vmem:[%s0 + $0x80] sm:$0xff]
  %v31 = vld [vmem:[%s0 + $0x88] sm:$0xff]
  %v32 = vld [vmem:[%s0 + $0x90] sm:$0xff]
  %v33 = vld [vmem:[%s0 + $0x98] sm:$0xff]
  %v34 = vld [vmem:[%s0 + $0xa0] sm:$0xff]
  %v35 = vld [vmem:[%s0 + $0xa8] sm:$0xff]
  %v36 = vld [vmem:[%s0 + $0xb0] sm:$0xff]
  %v37 = vld [vmem:[%s0 + $0xb8] sm:$0xff]
  %v38 = vld [vmem:[%s0 + $0xc0] sm:$0xff]
  %v39 = vld [vmem:[%s0 + $0xc8] sm:$0xff]
  %v40 = vld [vmem:[%s0 + $0xd0] sm:$0xff]
  %v41 = vld [vmem:[%s0 + $0xd8] sm:$0xff]
  %v42 = vld [vmem:[%s0 + $0xe0] sm:$0xff]
  %v43 = vld [vmem:[%s0 + $0xe8] sm:$0xff]
  %v44 = vld [vmem:[%s0 + $0xf0] sm:$0xff]
  %v45 = vld [vmem:[%s0 + $0xf8] sm:$0xff]
  %v46 = vld [vmem:[%s0 + $0x100] sm:$0xff]
  %v47 = vld [vmem:[%s0 + $0x108] sm:$0xff]
  %v48 = vld [vmem:[%s0 + $0x110] sm:$0xff]
  %v49 = vld [vmem:[%s0 + $0x118] sm:$0xff]
  %v50 = vld [vmem:[%s1] sm:$0x1]
  %v52 = vlaneseq
  %v53 = vshrl.u32 %v52, 7
  %v54 = vsub.s32 0, %v53
  %v55 = vrot.slane %v50, %v54
  %v57 = vmul.f32 %v14, %v55
  %v58 = vmul.f32 %v15, %v55
  %v59 = vmul.f32 %v16, %v55
  %v60 = vmul.f32 %v17, %v55
  %v61 = vmul.f32 %v18, %v55
  %v62 = vmul.f32 %v19, %v55
  %v63 = vmul.f32 %v20, %v55
  %v64 = vmul.f32 %v21, %v55
  %v65 = vmul.f32 %v22, %v55
  %v66 = vmul.f32 %v23, %v55
  %v67 = vmul.f32 %v24, %v55
  %v68 = vmul.f32 %v25, %v55
  %v69 = vmul.f32 %v26, %v55
  %v70 = vmul.f32 %v27, %v55
  %v71 = vmul.f32 %v28, %v55
  %v72 = vmul.f32 %v29, %v55
  %v73 = vmul.f32 %v30, %v55
  %v74 = vmul.f32 %v31, %v55
  %v75 = vmul.f32 %v32, %v55
  %v76 = vmul.f32 %v33, %v55
  %v77 = vmul.f32 %v34, %v55
  %v78 = vmul.f32 %v35, %v55
  %v79 = vmul.f32 %v36, %v55
  %v80 = vmul.f32 %v37, %v55
  %v81 = vmul.f32 %v38, %v55
  %v82 = vmul.f32 %v39, %v55
  %v83 = vmul.f32 %v40, %v55
  %v84 = vmul.f32 %v41, %v55
  %v85 = vmul.f32 %v42, %v55
  %v86 = vmul.f32 %v43, %v55
  %v87 = vmul.f32 %v44, %v55
  %v88 = vmul.f32 %v45, %v55
  %v89 = vmul.f32 %v46, %v55
  %v90 = vmul.f32 %v47, %v55
  %v91 = vmul.f32 %v48, %v55
  %v92 = vmul.f32 %v49, %v55
  %v93 = vld [vmem:[%s2] sm:$0x1]
  %v95 = vlaneseq
  %v96 = vshrl.u32 %v95, 7
  %v97 = vsub.s32 0, %v96
  %v98 = vrot.slane %v93, %v97
  %v100 = vadd.f32 %v57, %v98
  %v101 = vadd.f32 %v58, %v98
  %v102 = vadd.f32 %v59, %v98
  %v103 = vadd.f32 %v60, %v98
  %v104 = vadd.f32 %v61, %v98
  %v105 = vadd.f32 %v62, %v98
  %v106 = vadd.f32 %v63, %v98
  %v107 = vadd.f32 %v64, %v98
  %v108 = vadd.f32 %v65, %v98
  %v109 = vadd.f32 %v66, %v98
  %v110 = vadd.f32 %v67, %v98
  %v111 = vadd.f32 %v68, %v98
  %v112 = vadd.f32 %v69, %v98
  %v113 = vadd.f32 %v70, %v98
  %v114 = vadd.f32 %v71, %v98
  %v115 = vadd.f32 %v72, %v98
  %v116 = vadd.f32 %v73, %v98
  %v117 = vadd.f32 %v74, %v98
  %v118 = vadd.f32 %v75, %v98
  %v119 = vadd.f32 %v76, %v98
  %v120 = vadd.f32 %v77, %v98
  %v121 = vadd.f32 %v78, %v98
  %v122 = vadd.f32 %v79, %v98
  %v123 = vadd.f32 %v80, %v98
  %v124 = vadd.f32 %v81, %v98
  %v125 = vadd.f32 %v82, %v98
  %v126 = vadd.f32 %v83, %v98
  %v127 = vadd.f32 %v84, %v98
  %v128 = vadd.f32 %v85, %v98
  %v129 = vadd.f32 %v86, %v98
  %v130 = vadd.f32 %v87, %v98
  %v131 = vadd.f32 %v88, %v98
  %v132 = vadd.f32 %v89, %v98
  %v133 = vadd.f32 %v90, %v98
  %v134 = vadd.f32 %v91, %v98
  %v135 = vadd.f32 %v92, %v98
  %v136 = vmax.f32 %v100, 0.0
  %v137 = vmax.f32 %v101, 0.0
  %v138 = vmax.f32 %v102, 0.0
  %v139 = vmax.f32 %v103, 0.0
  %v140 = vmax.f32 %v104, 0.0
  %v141 = vmax.f32 %v105, 0.0
  %v142 = vmax.f32 %v106, 0.0
  %v143 = vmax.f32 %v107, 0.0
  %v144 = vmax.f32 %v108, 0.0
  %v145 = vmax.f32 %v109, 0.0
  %v146 = vmax.f32 %v110, 0.0
  %v147 = vmax.f32 %v111, 0.0
  %v148 = vmax.f32 %v112, 0.0
  %v149 = vmax.f32 %v113, 0.0
  %v150 = vmax.f32 %v114, 0.0
  %v151 = vmax.f32 %v115, 0.0
  %v152 = vmax.f32 %v116, 0.0
  %v153 = vmax.f32 %v117, 0.0
  %v154 = vmax.f32 %v118, 0.0
  %v155 = vmax.f32 %v119, 0.0
  %v156 = vmax.f32 %v120, 0.0
  %v157 = vmax.f32 %v121, 0.0
  %v158 = vmax.f32 %v122, 0.0
  %v159 = vmax.f32 %v123, 0.0
  %v160 = vmax.f32 %v124, 0.0
  %v161 = vmax.f32 %v125, 0.0
  %v162 = vmax.f32 %v126, 0.0
  %v163 = vmax.f32 %v127, 0.0
  %v164 = vmax.f32 %v128, 0.0
  %v165 = vmax.f32 %v129, 0.0
  %v166 = vmax.f32 %v130, 0.0
  %v167 = vmax.f32 %v131, 0.0
  %v168 = vmax.f32 %v132, 0.0
  %v169 = vmax.f32 %v133, 0.0
  %v170 = vmax.f32 %v134, 0.0
  %v171 = vmax.f32 %v135, 0.0
  %vm172 = vcmask 523264
  %173 = vst.msk [vmem:[%s3] sm:$0xff] %vm172, %v136
  %174 = vst.msk [vmem:[%s3 + $0x8] sm:$0xff] %vm172, %v137
  %175 = vst.msk [vmem:[%s3 + $0x10] sm:$0xff] %vm172, %v138
  %176 = vst.msk [vmem:[%s3 + $0x18] sm:$0xff] %vm172, %v139
  %177 = vst.msk [vmem:[%s3 + $0x20] sm:$0xff] %vm172, %v140
  %178 = vst.msk [vmem:[%s3 + $0x28] sm:$0xff] %vm172, %v141
  %179 = vst.msk [vmem:[%s3 + $0x30] sm:$0xff] %vm172, %v142
  %180 = vst.msk [vmem:[%s3 + $0x38] sm:$0xff] %vm172, %v143
  %181 = vst.msk [vmem:[%s3 + $0x40] sm:$0xff] %vm172, %v144
  %182 = vst.msk [vmem:[%s3 + $0x48] sm:$0xff] %vm172, %v145
  %183 = vst.msk [vmem:[%s3 + $0x50] sm:$0xff] %vm172, %v146
  %184 = vst.msk [vmem:[%s3 + $0x58] sm:$0xff] %vm172, %v147
  %185 = vst.msk [vmem:[%s3 + $0x60] sm:$0xff] %vm172, %v148
  %186 = vst.msk [vmem:[%s3 + $0x68] sm:$0xff] %vm172, %v149
  %187 = vst.msk [vmem:[%s3 + $0x70] sm:$0xff] %vm172, %v150
  %188 = vst.msk [vmem:[%s3 + $0x78] sm:$0xff] %vm172, %v151
  %189 = vst.msk [vmem:[%s3 + $0x80] sm:$0xff] %vm172, %v152
  %190 = vst.msk [vmem:[%s3 + $0x88] sm:$0xff] %vm172, %v153
  %191 = vst.msk [vmem:[%s3 + $0x90] sm:$0xff] %vm172, %v154
  %192 = vst.msk [vmem:[%s3 + $0x98] sm:$0xff] %vm172, %v155
  %193 = vst.msk [vmem:[%s3 + $0xa0] sm:$0xff] %vm172, %v156
  %194 = vst.msk [vmem:[%s3 + $0xa8] sm:$0xff] %vm172, %v157
  %195 = vst.msk [vmem:[%s3 + $0xb0] sm:$0xff] %vm172, %v158
  %196 = vst.msk [vmem:[%s3 + $0xb8] sm:$0xff] %vm172, %v159
  %197 = vst.msk [vmem:[%s3 + $0xc0] sm:$0xff] %vm172, %v160
  %198 = vst.msk [vmem:[%s3 + $0xc8] sm:$0xff] %vm172, %v161
  %199 = vst.msk [vmem:[%s3 + $0xd0] sm:$0xff] %vm172, %v162
  %200 = vst.msk [vmem:[%s3 + $0xd8] sm:$0xff] %vm172, %v163
  %201 = vst.msk [vmem:[%s3 + $0xe0] sm:$0xff] %vm172, %v164
  %202 = vst.msk [vmem:[%s3 + $0xe8] sm:$0xff] %vm172, %v165
  %203 = vst.msk [vmem:[%s3 + $0xf0] sm:$0xff] %vm172, %v166
  %204 = vst.msk [vmem:[%s3 + $0xf8] sm:$0xff] %vm172, %v167
  %205 = vst.msk [vmem:[%s3 + $0x100] sm:$0xff] %vm172, %v168
  %206 = vst.msk [vmem:[%s3 + $0x108] sm:$0xff] %vm172, %v169
  %207 = vst.msk [vmem:[%s3 + $0x110] sm:$0xff] %vm172, %v170
  %208 = vst.msk [vmem:[%s3 + $0x118] sm:$0xff] %vm172, %v171
  // Predicated region
  $region14: #{densenet_forward.10} parent=0 // pred_check
    _
  $region15: #{densenet_forward.10} parent=0 // pred_check_branch
    %210 = sbr.rel (0) target = $region17
  $region16: #{densenet_forward.10} parent=0 // pred_region
    _
  $region17: #{densenet_forward.10} parent=0 // pred_fallthru
    _
  // Predicated region
  $region18: #{densenet_forward.10} parent=0 // pred_check
    _
  $region19: #{densenet_forward.10} parent=0 // pred_check_branch
    %212 = sbr.rel (0) target = $region21
  $region20: #{densenet_forward.10} parent=0 // pred_region
    _
  $region21: #{densenet_forward.10} parent=0 // pred_fallthru
    _

// kernel: densenet_forward.11
$region0: #{densenet_forward.11}
  #allocation0 [shape = 'u32[]', space=smem, size = 0x4, offset = 0x4, fixed_abs, tag = 'smem constant byte address 0x4 - core index']
  #allocation1 [shape = 'u32[144,128]{1,0:T(1,128)}', space=vmem, size = 0x12000, scoped, tag = 'internal scratch']
  #allocation2 [shape = 'bf16[51,64]{1,0:T(8,128)(2,1)}', space=vmem, size = 0x3800, scoped, tag = 'scratch operand']
  %s0 = inlined_call_operand.vmem [shape: bf16[2,36,64], index: 0, kind: input, shape index: {}]
  %s1 = inlined_call_operand.vmem [shape: bf16[9,64,8], index: 1, kind: input, shape index: {}]
  %s2 = inlined_call_operand.vmem [shape: f32[1,64], index: 2, kind: input, shape index: {}]
  %s3 = inlined_call_operand.vmem [shape: f32[1,64], index: 3, kind: input, shape index: {}]
  %s4 = inlined_call_operand.vmem [shape: f32[9,36,1], index: 4, kind: input, shape index: {}]
  %s5 = inlined_call_operand.vmem [shape: bf16[2,36,8], index: 5, kind: output, shape index: {0}]
  %s6 = inlined_call_operand.vmem [shape: f32[2,2,8], index: 6, kind: output, shape index: {1}]
  %7 = xla_tuple %s5, %s6
  %s8 = sld [smem:[#allocation0]]
  $region65: #{densenet_forward.11} parent=0
    _
  %s10 = ssub.s32 1, %s8
  %s11 = scalar_select 0, %s10, %s8
  loop: start=0, step=1, limit=4
  $region2: #{densenet_forward.11} parent=0 // loop_pre_header
    _
  $region3: #{densenet_forward.11} parent=0 // loop_header
    %s13 = sphi 0, %s17
    %p14 = scmp.ge.s32.totalorder %s13, 4
    %s23 = sphi 0, %s25
    %s26 = sphi 0, %s23
    %s27 = sphi 0, %s26
    %s43 = sphi 0, %s27
    %s47 = sphi 0, %s47
    %s49 = sphi 0, %s47
    %s50 = sphi 0, %s49
    %s64 = sphi 0, %s50
    %s68 = sphi 0, %s68
    %s70 = sphi 0, %s68
    %s71 = sphi 0, %s70
    %s85 = sphi 0, %s71
    %s89 = sphi 0, %s89
    %s91 = sphi 0, %s89
    %s92 = sphi 0, %s91
    %s106 = sphi 0, %s92
    %s110 = sphi 0, %s110
    %s112 = sphi 0, %s110
    %s113 = sphi 0, %s112
    %s127 = sphi 0, %s113
    %s133 = sphi 0, %s135
    %s136 = sphi 0, %s133
    %s137 = sphi 0, %s136
    %s153 = sphi 0, %s137
    %s159 = sphi 0, %s161
    %s162 = sphi 0, %s159
    %s163 = sphi 0, %s162
    %s179 = sphi 0, %s163
  $region4: #{densenet_forward.11} parent=0 // loop_header_branch
    %16 = sbr.rel (%p14) target = $region8
  $region5: #{densenet_forward.11} parent=0 // loop_body
    %s18 = ssub.s32 %s13, 1
    %s19 = ssub.s32 %s13, 2
    %s20 = sadd.s32 %s13, 1
    %s21 = ssub.s32 %s13, %s20
    %p22 = scmp.eq.s32.totalorder %s21, 0
    %s24 = sadd.s32 %s23, 1
    %s25 = scalar_select %p22, %s23, %s24
    %p28 = pneg %p22
    %p29 = scmp.eq.s32.totalorder %s13, 1
    %p30 = por %p28, %p29
    %p31 = scmp.ne.s32.totalorder %s23, %s26
    %p32 = scmp.eq.s32.totalorder %s13, 0
    %p33 = por %p31, %p32
    %p34 = scmp.ne.s32.totalorder %s23, %s26
    %p35 = scmp.eq.s32.totalorder %s18, 1
    %p36 = por %p34, %p35
    %p37 = scmp.ne.s32.totalorder %s26, %s27
    %p38 = scmp.eq.s32.totalorder %s18, 0
    %p39 = por %p37, %p38
    %p40 = scmp.ne.s32.totalorder %s26, %s27
    %p41 = scmp.eq.s32.totalorder %s19, 1
    %p42 = por %p40, %p41
    %p44 = scmp.ne.s32.totalorder %s27, %s43
    %p45 = scmp.eq.s32.totalorder %s19, 0
    %p46 = por %p44, %p45
    %s48 = sadd.s32 %s47, 1
    %p51 = scmp.eq.s32.totalorder %s13, 1
    %p52 = scmp.ne.s32.totalorder %s47, %s49
    %p53 = scmp.eq.s32.totalorder %s13, 0
    %p54 = por %p52, %p53
    %p55 = scmp.ne.s32.totalorder %s47, %s49
    %p56 = scmp.eq.s32.totalorder %s18, 1
    %p57 = por %p55, %p56
    %p58 = scmp.ne.s32.totalorder %s49, %s50
    %p59 = scmp.eq.s32.totalorder %s18, 0
    %p60 = por %p58, %p59
    %p61 = scmp.ne.s32.totalorder %s49, %s50
    %p62 = scmp.eq.s32.totalorder %s19, 1
    %p63 = por %p61, %p62
    %p65 = scmp.ne.s32.totalorder %s50, %s64
    %p66 = scmp.eq.s32.totalorder %s19, 0
    %p67 = por %p65, %p66
    %s69 = sadd.s32 %s68, 1
    %p72 = scmp.eq.s32.totalorder %s13, 1
    %p73 = scmp.ne.s32.totalorder %s68, %s70
    %p74 = scmp.eq.s32.totalorder %s13, 0
    %p75 = por %p73, %p74
    %p76 = scmp.ne.s32.totalorder %s68, %s70
    %p77 = scmp.eq.s32.totalorder %s18, 1
    %p78 = por %p76, %p77
    %p79 = scmp.ne.s32.totalorder %s70, %s71
    %p80 = scmp.eq.s32.totalorder %s18, 0
    %p81 = por %p79, %p80
    %p82 = scmp.ne.s32.totalorder %s70, %s71
    %p83 = scmp.eq.s32.totalorder %s19, 1
    %p84 = por %p82, %p83
    %p86 = scmp.ne.s32.totalorder %s71, %s85
    %p87 = scmp.eq.s32.totalorder %s19, 0
    %p88 = por %p86, %p87
    %s90 = sadd.s32 %s89, 1
    %p93 = scmp.eq.s32.totalorder %s13, 1
    %p94 = scmp.ne.s32.totalorder %s89, %s91
    %p95 = scmp.eq.s32.totalorder %s13, 0
    %p96 = por %p94, %p95
    %p97 = scmp.ne.s32.totalorder %s89, %s91
    %p98 = scmp.eq.s32.totalorder %s18, 1
    %p99 = por %p97, %p98
    %p100 = scmp.ne.s32.totalorder %s91, %s92
    %p101 = scmp.eq.s32.totalorder %s18, 0
    %p102 = por %p100, %p101
    %p103 = scmp.ne.s32.totalorder %s91, %s92
    %p104 = scmp.eq.s32.totalorder %s19, 1
    %p105 = por %p103, %p104
    %p107 = scmp.ne.s32.totalorder %s92, %s106
    %p108 = scmp.eq.s32.totalorder %s19, 0
    %p109 = por %p107, %p108
    %s111 = sadd.s32 %s110, 1
    %p114 = scmp.eq.s32.totalorder %s13, 1
    %p115 = scmp.ne.s32.totalorder %s110, %s112
    %p116 = scmp.eq.s32.totalorder %s13, 0
    %p117 = por %p115, %p116
    %p118 = scmp.ne.s32.totalorder %s110, %s112
    %p119 = scmp.eq.s32.totalorder %s18, 1
    %p120 = por %p118, %p119
    %p121 = scmp.ne.s32.totalorder %s112, %s113
    %p122 = scmp.eq.s32.totalorder %s18, 0
    %p123 = por %p121, %p122
    %p124 = scmp.ne.s32.totalorder %s112, %s113
    %p125 = scmp.eq.s32.totalorder %s19, 1
    %p126 = por %p124, %p125
    %p128 = scmp.ne.s32.totalorder %s113, %s127
    %p129 = scmp.eq.s32.totalorder %s19, 0
    %p130 = por %p128, %p129
    %s131 = ssub.s32 %s13, %s20
    %p132 = scmp.eq.s32.totalorder %s131, 0
    %s134 = sadd.s32 %s133, 1
    %s135 = scalar_select %p132, %s133, %s134
    %p138 = pneg %p132
    %p139 = scmp.eq.s32.totalorder %s13, 1
    %p140 = por %p138, %p139
    %p141 = scmp.ne.s32.totalorder %s133, %s136
    %p142 = scmp.eq.s32.totalorder %s13, 0
    %p143 = por %p141, %p142
    %p144 = scmp.ne.s32.totalorder %s133, %s136
    %p145 = scmp.eq.s32.totalorder %s18, 1
    %p146 = por %p144, %p145
    %p147 = scmp.ne.s32.totalorder %s136, %s137
    %p148 = scmp.eq.s32.totalorder %s18, 0
    %p149 = por %p147, %p148
    %p150 = scmp.ne.s32.totalorder %s136, %s137
    %p151 = scmp.eq.s32.totalorder %s19, 1
    %p152 = por %p150, %p151
    %p154 = scmp.ne.s32.totalorder %s137, %s153
    %p155 = scmp.eq.s32.totalorder %s19, 0
    %p156 = por %p154, %p155
    %s157 = ssub.s32 %s13, %s20
    %p158 = scmp.eq.s32.totalorder %s157, 0
    %s160 = sadd.s32 %s159, 1
    %s161 = scalar_select %p158, %s159, %s160
    %p164 = pneg %p158
    %p165 = scmp.eq.s32.totalorder %s13, 1
    %p166 = por %p164, %p165
    %p167 = scmp.ne.s32.totalorder %s159, %s162
    %p168 = scmp.eq.s32.totalorder %s13, 0
    %p169 = por %p167, %p168
    %p170 = scmp.ne.s32.totalorder %s159, %s162
    %p171 = scmp.eq.s32.totalorder %s18, 1
    %p172 = por %p170, %p171
    %p173 = scmp.ne.s32.totalorder %s162, %s163
    %p174 = scmp.eq.s32.totalorder %s18, 0
    %p175 = por %p173, %p174
    %p176 = scmp.ne.s32.totalorder %s162, %s163
    %p177 = scmp.eq.s32.totalorder %s19, 1
    %p178 = por %p176, %p177
    %p180 = scmp.ne.s32.totalorder %s163, %s179
    %p181 = scmp.eq.s32.totalorder %s19, 0
    %p182 = por %p180, %p181
    %p183 = scmp.le.s32.totalorder 1, %s13
    %p184 = scmp.lt.s32.totalorder %s13, 3
    %p185 = pnand %p183, %p184
    %p186 = pneg %p185
    // Predicated region
    $region9: #{densenet_forward.11} parent=5 // pred_check
      _
    $region10: #{densenet_forward.11} parent=5 // pred_check_branch
      %188 = sbr.rel (%p185) target = $region12
    $region11: #{densenet_forward.11} parent=5 // pred_region
      %s189 = ssub.s32 %s13, 1
      // Predicated region
      $region13: #{densenet_forward.11} parent=11 // pred_check
        %p190 = pneg %p60
      $region14: #{densenet_forward.11} parent=11 // pred_check_branch
        %192 = sbr.rel (%p190) target = $region16
      $region15: #{densenet_forward.11} parent=11 // pred_region
        _
      $region16: #{densenet_forward.11} parent=11 // pred_fallthru
        _
      // Predicated region
      $region17: #{densenet_forward.11} parent=11 // pred_check
        %p193 = pneg %p81
      $region18: #{densenet_forward.11} parent=11 // pred_check_branch
        %195 = sbr.rel (%p193) target = $region20
      $region19: #{densenet_forward.11} parent=11 // pred_region
        _
      $region20: #{densenet_forward.11} parent=11 // pred_fallthru
        _
      // Predicated region
      $region21: #{densenet_forward.11} parent=11 // pred_check
        %p196 = pneg %p102
      $region22: #{densenet_forward.11} parent=11 // pred_check_branch
        %198 = sbr.rel (%p196) target = $region24
      $region23: #{densenet_forward.11} parent=11 // pred_region
        _
      $region24: #{densenet_forward.11} parent=11 // pred_fallthru
        _
      // Predicated region
      $region25: #{densenet_forward.11} parent=11 // pred_check
        %p199 = pneg %p123
      $region26: #{densenet_forward.11} parent=11 // pred_check_branch
        %201 = sbr.rel (%p199) target = $region28
      $region27: #{densenet_forward.11} parent=11 // pred_region
        _
      $region28: #{densenet_forward.11} parent=11 // pred_fallthru
        _
    $region12: #{densenet_forward.11} parent=5 // pred_fallthru
      _
    %p202 = scmp.lt.s32.totalorder %s13, 2
    // Predicated region
    $region29: #{densenet_forward.11} parent=5 // pred_check
      %p203 = pneg %p202
    $region30: #{densenet_forward.11} parent=5 // pred_check_branch
      %205 = sbr.rel (%p203) target = $region32
    $region31: #{densenet_forward.11} parent=5 // pred_region
      // Predicated region
      $region33: #{densenet_forward.11} parent=31 // pred_check
        %p206 = pneg %p33
      $region34: #{densenet_forward.11} parent=31 // pred_check_branch
        %208 = sbr.rel (%p206) target = $region36
      $region35: #{densenet_forward.11} parent=31 // pred_region
        %p209 = scmp.lt.s32.totalorder %s13, 1
        %s210 = scalar_select %p209, %s13, 1
        %s211 = smul.addr %s210, 5
        %s212 = smul.addr %s211, 4
        %s213 = scalar_lea.vmem %s0, %s212
      $region36: #{densenet_forward.11} parent=31 // pred_fallthru
        _
    $region32: #{densenet_forward.11} parent=5 // pred_fallthru
      _
    %p214 = scmp.le.s32.totalorder 1, %s13
    %p215 = scmp.lt.s32.totalorder %s13, 3
    %p216 = pnand %p214, %p215
    %p217 = pneg %p216
    // Predicated region
    $region37: #{densenet_forward.11} parent=5 // pred_check
      _
    $region38: #{densenet_forward.11} parent=5 // pred_check_branch
      %219 = sbr.rel (%p216) target = $region40
    $region39: #{densenet_forward.11} parent=5 // pred_region
      %s220 = ssub.s32 %s13, 1
      %p221 = scmp.lt.s32.totalorder %s18, 1
      %s222 = scalar_select %p221, %s18, 1
      %s223 = smul.addr %s222, 5
      %s224 = smul.addr %s223, 4
      %s225 = scalar_lea.vmem %s0, %s224
      %p226 = pneg %p39
      %p227 = pneg %p36
      %p228 = pneg %p60
      %p229 = pneg %p57
      %p230 = pneg %p81
      %p231 = pneg %p78
      %p232 = pneg %p102
      %p233 = pneg %p99
      %p234 = pneg %p123
      %p235 = pneg %p120
      %p236 = pneg %p149
      %p237 = pneg %p146
      %p238 = scmp.lt.s32.totalorder %s18, 1
      %s239 = scalar_select %p238, %s18, 1
      %s240 = smul.addr %s239, 5
      %s241 = smul.addr %s240, 4
      %s242 = scalar_lea.vmem %s5, %s241
      %p243 = pneg %p175
      %p244 = pneg %p172
      %p245 = scmp.lt.s32.totalorder %s18, 1
      %s246 = scalar_select %p245, %s18, 1
      %s247 = smul.addr %s246, 2
      %s248 = scalar_lea.vmem %s6, %s247
      %p249 = scmp.lt.s32.totalorder %s18, 1
      %s250 = scalar_select %p249, %s18, 1
      %s251 = smul.addr %s250, 5
      %s252 = smul.addr %s251, 4
      %s253 = scalar_lea.vmem %s0, %s252
      %p254 = scmp.lt.s32.totalorder %s18, 1
      %s255 = scalar_select %p254, %s18, 1
      %s256 = smul.addr %s255, 5
      %s257 = smul.addr %s256, 4
      %s258 = scalar_lea.vmem %s5, %s257
      %p259 = scmp.lt.s32.totalorder %s18, 1
      %s260 = scalar_select %p259, %s18, 1
      %s261 = smul.addr %s260, 2
      %s262 = scalar_lea.vmem %s6, %s261
      %p264 = scmp.eq.s32.totalorder %s18, 0
      // Predicated region
      $region41: #{densenet_forward.11} parent=39 // pred_check
        %p265 = pneg %p264
      $region42: #{densenet_forward.11} parent=39 // pred_check_branch
        %267 = sbr.rel (%p265) target = $region44
      $region43: #{densenet_forward.11} parent=39 // pred_region
        %vm268 = vcmask 519168
        %269 = vst.msk [vmem:[#allocation2] sm:$0xf] %vm268, 0
        %270 = vst.msk [vmem:[#allocation2 + $0x4] sm:$0xf] %vm268, 0
        %271 = vst.msk [vmem:[#allocation2 + $0x8] sm:$0xf] %vm268, 0
        %272 = vst.msk [vmem:[#allocation2 + $0xc] sm:$0xf] %vm268, 0
        %273 = vst.msk [vmem:[#allocation2 + $0x10] sm:$0xf] %vm268, 0
        %274 = vst.msk [vmem:[#allocation2 + $0x14] sm:$0xf] %vm268, 0
        %vm275 = vcmask 517120
        %vm276 = vsmask.f32 1280
        %vm277 = vmand %vm275, %vm276
        %v278 = vld [vmem:[#allocation2 + $0x18] sm:$0x3]
        %v279 = vsel %vm277, 0, %v278
        %280 = vst [vmem:[#allocation2 + $0x18] sm:$0x3] %v279
      $region44: #{densenet_forward.11} parent=39 // pred_fallthru
        _
      %v281 = vld [vmem:[%s253] sm:$0xf]
      %v282 = vld [vmem:[%s253 + $0x4] sm:$0xf]
      %v283 = vld [vmem:[%s253 + $0x8] sm:$0xf]
      %v284 = vld [vmem:[%s253 + $0xc] sm:$0xf]
      %v285 = vld [vmem:[%s253 + $0x10] sm:$0x3]
      %v286 = vunpack.c.l.bf16 %v281
      %v287 = vunpack.c.l.bf16 %v282
      %v288 = vunpack.c.l.bf16 %v283
      %v289 = vunpack.c.l.bf16 %v284
      %v290 = vunpack.c.l.bf16 %v285
      %v291 = vld [vmem:[%s2] sm:$0x1]
      %v293 = vlaneseq
      %v294 = vshrl.u32 %v293, 7
      %v295 = vsub.s32 0, %v294
      %v296 = vrot.slane %v291, %v295
      %v298 = vmul.f32 %v286, %v296
      %v299 = vmul.f32 %v287, %v296
      %v300 = vmul.f32 %v288, %v296
      %v301 = vmul.f32 %v289, %v296
      %v302 = vmul.f32 %v290, %v296
      %v303 = vld [vmem:[%s3] sm:$0x1]
      %v305 = vlaneseq
      %v306 = vshrl.u32 %v305, 7
      %v307 = vsub.s32 0, %v306
      %v308 = vrot.slane %v303, %v307
      %v310 = vadd.f32 %v298, %v308
      %v311 = vadd.f32 %v299, %v308
      %v312 = vadd.f32 %v300, %v308
      %v313 = vadd.f32 %v301, %v308
      %v314 = vadd.f32 %v302, %v308
      %v315 = vmax.f32 %v310, 0.0
      %v316 = vmax.f32 %v311, 0.0
      %v317 = vmax.f32 %v312, 0.0
      %v318 = vmax.f32 %v313, 0.0
      %v319 = vmax.f32 %v314, 0.0
      %v320 = vpack.c.bf16 %v316, %v315
      %v321 = vpack.c.bf16 %v318, %v317
      %v322 = vpack.c.bf16 %v319, %v319
      %v326 = vunpack.c.l.b16 %v320
      %v327 = vunpack.c.h.b16 %v320
      %v328 = vunpack.c.l.b16 %v321
      %v329 = vunpack.c.h.b16 %v321
      %v330 = vunpack.c.l.b16 %v322
      %v331 = vpack.c.b16 %v326, %v326
      %v332 = vpack.c.b16 %v327, %v327
      %v333 = vpack.c.b16 %v328, %v328
      %v334 = vpack.c.b16 %v329, %v329
      %v335 = vpack.c.b16 %v330, %v330
      %vm341 = vcmask 519168
      %342 = vst.msk [vmem:[#allocation2 + $0x4] sm:$0xf] %vm341, %v331
      %343 = vst.msk [vmem:[#allocation2 + $0x8] sm:$0xf] %vm341, %v332
      %344 = vst.msk [vmem:[#allocation2 + $0xc] sm:$0xf] %vm341, %v333
      %345 = vst.msk [vmem:[#allocation2 + $0x10] sm:$0xf] %vm341, %v334
      %vm346 = vcmask 517120
      %347 = vst.msk [vmem:[#allocation2 + $0x14] sm:$0x3] %vm346, %v335
      %v348 = vld [vmem:[#allocation2] sm:$0xf]
      %v349 = vld [vmem:[#allocation2 + $0x4] sm:$0xf]
      %v350 = vld [vmem:[#allocation2 + $0x8] sm:$0xf]
      %v351 = vld [vmem:[#allocation2 + $0xc] sm:$0xf]
      %v352 = vld [vmem:[#allocation2 + $0x10] sm:$0x7]
      %v353 = vld [vmem:[%s1] sm:$0xf]
      %v354 = vld [vmem:[%s1 + $0x4] sm:$0xf]
      %v355 = vld [vmem:[%s1 + $0x8] sm:$0xf]
      %v356 = vld [vmem:[%s1 + $0xc] sm:$0xf]
      %v357 = vld [vmem:[%s1 + $0x10] sm:$0xf]
      %v358 = vld [vmem:[%s1 + $0x14] sm:$0xf]
      %v359 = vld [vmem:[%s1 + $0x18] sm:$0xf]
      %v360 = vld [vmem:[%s1 + $0x1c] sm:$0xf]
      %v366 = vunpack.c.l.b16 %v348
      %v367 = vunpack.c.l.b16 %v349
      %v368 = vunpack.c.l.b16 %v350
      %v369 = vunpack.c.l.b16 %v351
      %v370 = vunpack.c.l.b16 %v352
      %v371 = vpack.c.b16 %v367, %v366
      %v372 = vpack.c.b16 %v369, %v368
      %v373 = vpack.c.b16 %v370, %v370
      %vm374 = vsmask.f32 7424
      %v376 = vshrl.u32 %v371, 16
      %v378 = vshll.u32 %v371, 16
      %v380 = vrot.slane %v378, 1
      %v381 = vor.u32 %v376, %v380
      %v383 = vshll.u32 %v372, 16
      %v385 = vrot.slane %v383, 1
      %v386 = vsel %vm374, %v381, %v385
      %v387 = vshrl.u32 %v372, 16
      %v389 = vor.u32 %v387, %v385
      %v391 = vshll.u32 %v373, 16
      %v393 = vrot.slane %v391, 1
      %v394 = vsel %vm374, %v389, %v393
      %v395 = vshrl.u32 %v373, 16
      %v397 = vor.u32 %v395, %v393
      %v406 = vunpack.c.l.b16 %v353
      %v407 = vunpack.c.l.b16 %v354
      %v408 = vunpack.c.l.b16 %v355
      %v409 = vunpack.c.l.b16 %v356
      %v410 = vunpack.c.l.b16 %v357
      %v411 = vunpack.c.l.b16 %v358
      %v412 = vunpack.c.l.b16 %v359
      %v413 = vunpack.c.l.b16 %v360
      %v414 = vpack.c.b16 %v407, %v406
      %v415 = vpack.c.b16 %v409, %v408
      %v416 = vpack.c.b16 %v411, %v410
      %v417 = vpack.c.b16 %v413, %v412
      %vm422 = vcmask 523264
      %v424 = vsel %vm422, %v386, 0
      %v427 = vsel %vm422, %v394, 0
      %v430 = vsel %vm422, %v397, 0
      %432 = vmatprep.subr.bf16.mxu0 0
      %433 = vmatpush1.bf16.msra.mxu0 %v414
      %434 = vmatprep.subr.bf16.mxu0 0
      %435 = vmatpush1.bf16.msra.mxu0 %v415
      %436 = vmatprep.subr.bf16.mxu0 0
      %437 = vmatpush1.bf16.msra.mxu0 %v416
      %438 = vmatprep.subr.bf16.mxu0 0
      %439 = vmatpush1.bf16.msra.mxu0 %v417
      %440 = vmatprep.subr.bf16.mxu0 0
      %441 = vmatpush1.bf16.msra.mxu0 0
      %442 = vmatprep.subr.bf16.mxu0 0
      %443 = vmatpush1.bf16.msra.mxu0 0
      %444 = vmatprep.subr.bf16.mxu0 0
      %445 = vmatpush1.bf16.msra.mxu0 0
      %446 = vmatprep.subr.bf16.mxu0 0
      %447 = vmatpush1.bf16.msra.mxu0 0
      %448 = vmatprep.subr.bf16.mxu0 0
      %449 = vmatpush1.bf16.msra.mxu0 0
      %450 = vmatprep.subr.bf16.mxu0 0
      %451 = vmatpush1.bf16.msra.mxu0 0
      %452 = vmatprep.subr.bf16.mxu0 0
      %453 = vmatpush1.bf16.msra.mxu0 0
      %454 = vmatprep.subr.bf16.mxu0 0
      %455 = vmatpush1.bf16.msra.mxu0 0
      %456 = vmatprep.subr.bf16.mxu0 0
      %457 = vmatpush1.bf16.msra.mxu0 0
      %458 = vmatprep.subr.bf16.mxu0 0
      %459 = vmatpush1.bf16.msra.mxu0 0
      %460 = vmatprep.subr.bf16.mxu0 0
      %461 = vmatpush1.bf16.msra.mxu0 0
      %462 = vmatprep.subr.bf16.mxu0 0
      %463 = vmatpush1.bf16.msra.mxu0 0
      %464 = vmatprep.mubr.bf16.mxu0 0
      %465 = vmatmul.mubr.bf16.gmra.mrb[0].mxu0 %v424
      %v466 = vpop.f32.mrb[0].mxu0
      %v467 = vadd.f32 0.0, %v466
      %v468 = vpop.f32.mrb[0].mxu0
      %v469 = vpop.f32.mrb[0].mxu0
      %v470 = vadd.f32 0.0, %v469
      %v471 = vpop.f32.mrb[0].mxu0
      %472 = vmatprep.mubr.bf16.mxu0 0
      %473 = vmatmul.mubr.bf16.gmra.mrb[0].mxu0 %v427
      %v474 = vpop.f32.mrb[0].mxu0
      %v475 = vadd.f32 0.0, %v474
      %v476 = vpop.f32.mrb[0].mxu0
      %v477 = vpop.f32.mrb[0].mxu0
      %v478 = vadd.f32 0.0, %v477
      %v479 = vpop.f32.mrb[0].mxu0
      %480 = vmatprep.mubr.bf16.mxu0 0
      %481 = vmatmul.mubr.bf16.gmra.mrb[0].mxu0 %v430
      %v482 = vpop.f32.mrb[0].mxu0
      %v483 = vadd.f32 0.0, %v482
      %v484 = vpop.f32.mrb[0].mxu0
      %v485 = vpop.f32.mrb[0].mxu0
      %v486 = vpop.f32.mrb[0].mxu0
      %487 = vdwg.mxu0
      %v488 = vld [vmem:[%s4] sm:$0xff]
      %v489 = vld [vmem:[%s4 + $0x8] sm:$0xff]
      %v490 = vld [vmem:[%s4 + $0x10] sm:$0xff]
      %v491 = vld [vmem:[%s4 + $0x18] sm:$0xff]
      %v492 = vld [vmem:[%s4 + $0x20] sm:$0xf]
      %vm493 = vcmp.gt.f32.partialorder %v488, 0.5
      %vm494 = vcmp.gt.f32.partialorder %v489, 0.5
      %vm495 = vcmp.gt.f32.partialorder %v490, 0.5
      %vm496 = vcmp.gt.f32.partialorder %v491, 0.5
      %vm497 = vcmp.gt.f32.partialorder %v492, 0.5
      %v498 = vsel %vm493, 1, 0
      %v499 = vsel %vm494, 1, 0
      %v500 = vsel %vm495, 1, 0
      %v501 = vsel %vm496, 1, 0
      %v502 = vsel %vm497, 1, 0
      %503 = vset.pattern.permute.xlu0 0
      %504 = vperm.xlu0 %503, %v498
      %v505 = vpop.permute.xlu0 %504
      %506 = vset.pattern.permute.xlu0 0
      %507 = vperm.xlu0 %506, %v499
      %v508 = vpop.permute.xlu0 %507
      %509 = vset.pattern.permute.xlu0 0
      %510 = vperm.xlu0 %509, %v500
      %v511 = vpop.permute.xlu0 %510
      %512 = vset.pattern.permute.xlu0 0
      %513 = vperm.xlu0 %512, %v501
      %v514 = vpop.permute.xlu0 %513
      %515 = vset.pattern.permute.xlu0 0
      %516 = vperm.xlu0 %515, %v502
      %v517 = vpop.permute.xlu0 %516
      %vm518 = vcmp.eq.s32.totalorder %v505, 1
      %vm519 = vcmp.eq.s32.totalorder %v508, 1
      %vm520 = vcmp.eq.s32.totalorder %v511, 1
      %vm521 = vcmp.eq.s32.totalorder %v514, 1
      %vm522 = vcmp.eq.s32.totalorder %v517, 1
      %v523 = vsel %vm518, %v467, 0.0
      %v524 = vsel %vm519, %v470, 0.0
      %v525 = vsel %vm520, %v475, 0.0
      %v526 = vsel %vm521, %v478, 0.0
      %v527 = vsel %vm522, %v483, 0.0
      %v528 = vadd.f32 %v523, 0.0
      %v529 = vadd.f32 %v524, 0.0
      %v530 = vadd.f32 %v525, 0.0
      %v531 = vadd.f32 %v526, 0.0
      %v532 = vadd.f32 %v527, 0.0
      %v533 = vld [vmem:[#allocation2] sm:$0xe]
      %s534 = scalar_lea.vmem %s1, 32
      %v535 = vld [vmem:[%s534] sm:$0xf]
      %v536 = vld [vmem:[%s534 + $0x4] sm:$0xf]
      %v537 = vld [vmem:[%s534 + $0x8] sm:$0xf]
      %v538 = vld [vmem:[%s534 + $0xc] sm:$0xf]
      %v539 = vld [vmem:[%s534 + $0x10] sm:$0xf]
      %v540 = vld [vmem:[%s534 + $0x14] sm:$0xf]
      %v541 = vld [vmem:[%s534 + $0x18] sm:$0xf]
      %v542 = vld [vmem:[%s534 + $0x1c] sm:$0xf]
      %v544 = vunpack.c.l.b16 %v533
      %v545 = vpack.c.b16 %v367, %v544
      %vm546 = vcmask 1046528
      %v547 = vrot.slane %v545, 1
      %v548 = vrot.slane %v372, 1
      %v549 = vsel %vm546, %v547, %v548
      %v550 = vrot.slane %v373, 1
      %v551 = vsel %vm546, %v548, %v550
      %v560 = vunpack.c.l.b16 %v535
      %v561 = vunpack.c.l.b16 %v536
      %v562 = vunpack.c.l.b16 %v537
      %v563 = vunpack.c.l.b16 %v538
      %v564 = vunpack.c.l.b16 %v539
      %v565 = vunpack.c.l.b16 %v540
      %v566 = vunpack.c.l.b16 %v541
      %v567 = vunpack.c.l.b16 %v542
      %v568 = vpack.c.b16 %v561, %v560
      %v569 = vpack.c.b16 %v563, %v562
      %v570 = vpack.c.b16 %v565, %v564
      %v571 = vpack.c.b16 %v567, %v566
      %v577 = vsel %vm422, %v549, 0
      %v580 = vsel %vm422, %v551, 0
      %v583 = vsel %vm422, %v550, 0
      %585 = vmatprep.subr.bf16.mxu0 0
      %586 = vmatpush1.bf16.msra.mxu0 %v568
      %587 = vmatprep.subr.bf16.mxu0 0
      %588 = vmatpush1.bf16.msra.mxu0 %v569
      %589 = vmatprep.subr.bf16.mxu0 0
      %590 = vmatpush1.bf16.msra.mxu0 %v570
      %591 = vmatprep.subr.bf16.mxu0 0
      %592 = vmatpush1.bf16.msra.mxu0 %v571
      %593 = vmatprep.subr.bf16.mxu0 0
      %594 = vmatpush1.bf16.msra.mxu0 0
      %595 = vmatprep.subr.bf16.mxu0 0
      %596 = vmatpush1.bf16.msra.mxu0 0
      %597 = vmatprep.subr.bf16.mxu0 0
      %598 = vmatpush1.bf16.msra.mxu0 0
      %599 = vmatprep.subr.bf16.mxu0 0
      %600 = vmatpush1.bf16.msra.mxu0 0
      %601 = vmatprep.subr.bf16.mxu0 0
      %602 = vmatpush1.bf16.msra.mxu0 0
      %603 = vmatprep.subr.bf16.mxu0 0
      %604 = vmatpush1.bf16.msra.mxu0 0
      %605 = vmatprep.subr.bf16.mxu0 0
      %606 = vmatpush1.bf16.msra.mxu0 0
      %607 = vmatprep.subr.bf16.mxu0 0
      %608 = vmatpush1.bf16.msra.mxu0 0
      %609 = vmatprep.subr.bf16.mxu0 0
      %610 = vmatpush1.bf16.msra.mxu0 0
      %611 = vmatprep.subr.bf16.mxu0 0
      %612 = vmatpush1.bf16.msra.mxu0 0
      %613 = vmatprep.subr.bf16.mxu0 0
      %614 = vmatpush1.bf16.msra.mxu0 0
      %615 = vmatprep.subr.bf16.mxu0 0
      %616 = vmatpush1.bf16.msra.mxu0 0
      %617 = vmatprep.mubr.bf16.mxu0 0
      %618 = vmatmul.mubr.bf16.gmra.mrb[0].mxu0 %v577
      %v619 = vpop.f32.mrb[0].mxu0
      %v620 = vadd.f32 0.0, %v619
      %v621 = vpop.f32.mrb[0].mxu0
      %v622 = vpop.f32.mrb[0].mxu0
      %v623 = vadd.f32 0.0, %v622
      %v624 = vpop.f32.mrb[0].mxu0
      %625 = vmatprep.mubr.bf16.mxu0 0
      %626 = vmatmul.mubr.bf16.gmra.mrb[0].mxu0 %v580
      %v627 = vpop.f32.mrb[0].mxu0
      %v628 = vadd.f32 0.0, %v627
      %v629 = vpop.f32.mrb[0].mxu0
      %v630 = vpop.f32.mrb[0].mxu0
      %v631 = vadd.f32 0.0, %v630
      %v632 = vpop.f32.mrb[0].mxu0
      %633 = vmatprep.mubr.bf16.mxu0 0
      %634 = vmatmul.mubr.bf16.gmra.mrb[0].mxu0 %v583
      %v635 = vpop.f32.mrb[0].mxu0
      %v636 = vadd.f32 0.0, %v635
      %v637 = vpop.f32.mrb[0].mxu0
      %v638 = vpop.f32.mrb[0].mxu0
      %v639 = vpop.f32.mrb[0].mxu0
      %640 = vdwg.mxu0
      %s641 = scalar_lea.vmem %s4, 40
      %v642 = vld [vmem:[%s641] sm:$0xff]
      %v643 = vld [vmem:[%s641 + $0x8] sm:$0xff]
      %v644 = vld [vmem:[%s641 + $0x10] sm:$0xff]
      %v645 = vld [vmem:[%s641 + $0x18] sm:$0xff]
      %v646 = vld [vmem:[%s641 + $0x20] sm:$0xf]
      %vm647 = vcmp.gt.f32.partialorder %v642, 0.5
      %vm648 = vcmp.gt.f32.partialorder %v643, 0.5
      %vm649 = vcmp.gt.f32.partialorder %v644, 0.5
      %vm650 = vcmp.gt.f32.partialorder %v645, 0.5
      %vm651 = vcmp.gt.f32.partialorder %v646, 0.5
      %v652 = vsel %vm647, 1, 0
      %v653 = vsel %vm648, 1, 0
      %v654 = vsel %vm649, 1, 0
      %v655 = vsel %vm650, 1, 0
      %v656 = vsel %vm651, 1, 0
      %657 = vset.pattern.permute.xlu0 0
      %658 = vperm.xlu0 %657, %v652
      %v659 = vpop.permute.xlu0 %658
      %660 = vset.pattern.permute.xlu0 0
      %661 = vperm.xlu0 %660, %v653
      %v662 = vpop.permute.xlu0 %661
      %663 = vset.pattern.permute.xlu0 0
      %664 = vperm.xlu0 %663, %v654
      %v665 = vpop.permute.xlu0 %664
      %666 = vset.pattern.permute.xlu0 0
      %667 = vperm.xlu0 %666, %v655
      %v668 = vpop.permute.xlu0 %667
      %669 = vset.pattern.permute.xlu0 0
      %670 = vperm.xlu0 %669, %v656
      %v671 = vpop.permute.xlu0 %670
      %vm672 = vcmp.eq.s32.totalorder %v659, 1
      %vm673 = vcmp.eq.s32.totalorder %v662, 1
      %vm674 = vcmp.eq.s32.totalorder %v665, 1
      %vm675 = vcmp.eq.s32.totalorder %v668, 1
      %vm676 = vcmp.eq.s32.totalorder %v671, 1
      %v677 = vsel %vm672, %v620, 0.0
      %v678 = vsel %vm673, %v623, 0.0
      %v679 = vsel %vm674, %v628, 0.0
      %v680 = vsel %vm675, %v631, 0.0
      %v681 = vsel %vm676, %v636, 0.0
      %v682 = vadd.f32 %v528, %v677
      %v683 = vadd.f32 %v529, %v678
      %v684 = vadd.f32 %v530, %v679
      %v685 = vadd.f32 %v531, %v680
      %v686 = vadd.f32 %v532, %v681
      %v687 = vld [vmem:[#allocation2 + $0x10] sm:$0xf]
      %s688 = scalar_lea.vmem %s1, 64
      %v689 = vld [vmem:[%s688] sm:$0xf]
      %v690 = vld [vmem:[%s688 + $0x4] sm:$0xf]
      %v691 = vld [vmem:[%s688 + $0x8] sm:$0xf]
      %v692 = vld [vmem:[%s688 + $0xc] sm:$0xf]
      %v693 = vld [vmem:[%s688 + $0x10] sm:$0xf]
      %v694 = vld [vmem:[%s688 + $0x14] sm:$0xf]
      %v695 = vld [vmem:[%s688 + $0x18] sm:$0xf]
      %v696 = vld [vmem:[%s688 + $0x1c] sm:$0xf]
      %v698 = vunpack.c.l.b16 %v687
      %v699 = vpack.c.b16 %v698, %v698
      %vm700 = vsmask.f32 6400
      %v702 = vshrl.u32 %v545, 16
      %v704 = vrot.slane %v702, 1
      %v705 = vshll.u32 %v545, 16
      %v707 = vrot.slane %v705, 2
      %v708 = vor.u32 %v704, %v707
      %v709 = vrot.slane %v387, 1
      %v710 = vrot.slane %v383, 2
      %v711 = vor.u32 %v709, %v710
      %v712 = vsel %vm700, %v708, %v711
      %v714 = vshrl.u32 %v699, 16
      %v716 = vrot.slane %v714, 1
      %v717 = vshll.u32 %v699, 16
      %v719 = vrot.slane %v717, 2
      %v720 = vor.u32 %v716, %v719
      %v721 = vsel %vm700, %v711, %v720
      %v730 = vunpack.c.l.b16 %v689
      %v731 = vunpack.c.l.b16 %v690
      %v732 = vunpack.c.l.b16 %v691
      %v733 = vunpack.c.l.b16 %v692
      %v734 = vunpack.c.l.b16 %v693
      %v735 = vunpack.c.l.b16 %v694
      %v736 = vunpack.c.l.b16 %v695
      %v737 = vunpack.c.l.b16 %v696
      %v738 = vpack.c.b16 %v731, %v730
      %v739 = vpack.c.b16 %v733, %v732
      %v740 = vpack.c.b16 %v735, %v734
      %v741 = vpack.c.b16 %v737, %v736
      %v747 = vsel %vm422, %v712, 0
      %v750 = vsel %vm422, %v721, 0
      %v753 = vsel %vm422, %v720, 0
      %755 = vmatprep.subr.bf16.mxu0 0
      %756 = vmatpush1.bf16.msra.mxu0 %v738
      %757 = vmatprep.subr.bf16.mxu0 0
      %758 = vmatpush1.bf16.msra.mxu0 %v739
      %759 = vmatprep.subr.bf16.mxu0 0
      %760 = vmatpush1.bf16.msra.mxu0 %v740
      %761 = vmatprep.subr.bf16.mxu0 0
      %762 = vmatpush1.bf16.msra.mxu0 %v741
      %763 = vmatprep.subr.bf16.mxu0 0
      %764 = vmatpush1.bf16.msra.mxu0 0
      %765 = vmatprep.subr.bf16.mxu0 0
      %766 = vmatpush1.bf16.msra.mxu0 0
      %767 = vmatprep.subr.bf16.mxu0 0
      %768 = vmatpush1.bf16.msra.mxu0 0
      %769 = vmatprep.subr.bf16.mxu0 0
      %770 = vmatpush1.bf16.msra.mxu0 0
      %771 = vmatprep.subr.bf16.mxu0 0
      %772 = vmatpush1.bf16.msra.mxu0 0
      %773 = vmatprep.subr.bf16.mxu0 0
      %774 = vmatpush1.bf16.msra.mxu0 0
      %775 = vmatprep.subr.bf16.mxu0 0
      %776 = vmatpush1.bf16.msra.mxu0 0
      %777 = vmatprep.subr.bf16.mxu0 0
      %778 = vmatpush1.bf16.msra.mxu0 0
      %779 = vmatprep.subr.bf16.mxu0 0
      %780 = vmatpush1.bf16.msra.mxu0 0
      %781 = vmatprep.subr.bf16.mxu0 0
      %782 = vmatpush1.bf16.msra.mxu0 0
      %783 = vmatprep.subr.bf16.mxu0 0
      %784 = vmatpush1.bf16.msra.mxu0 0
      %785 = vmatprep.subr.bf16.mxu0 0
      %786 = vmatpush1.bf16.msra.mxu0 0
      %787 = vmatprep.mubr.bf16.mxu0 0
      %788 = vmatmul.mubr.bf16.gmra.mrb[0].mxu0 %v747
      %v789 = vpop.f32.mrb[0].mxu0
      %v790 = vadd.f32 0.0, %v789
      %v791 = vpop.f32.mrb[0].mxu0
      %v792 = vpop.f32.mrb[0].mxu0
      %v793 = vadd.f32 0.0, %v792
      %v794 = vpop.f32.mrb[0].mxu0
      %795 = vmatprep.mubr.bf16.mxu0 0
      %796 = vmatmul.mubr.bf16.gmra.mrb[0].mxu0 %v750
      %v797 = vpop.f32.mrb[0].mxu0
      %v798 = vadd.f32 0.0, %v797
      %v799 = vpop.f32.mrb[0].mxu0
      %v800 = vpop.f32.mrb[0].mxu0
      %v801 = vadd.f32 0.0, %v800
      %v802 = vpop.f32.mrb[0].mxu0
      %803 = vmatprep.mubr.bf16.mxu0 0
      %804 = vmatmul.mubr.bf16.gmra.mrb[0].mxu0 %v753
      %v805 = vpop.f32.mrb[0].mxu0
      %v806 = vadd.f32 0.0, %v805
      %v807 = vpop.f32.mrb[0].mxu0
      %v808 = vpop.f32.mrb[0].mxu0
      %v809 = vpop.f32.mrb[0].mxu0
      %810 = vdwg.mxu0
      %s811 = scalar_lea.vmem %s4, 80
      %v812 = vld [vmem:[%s811] sm:$0xff]
      %v813 = vld [vmem:[%s811 + $0x8] sm:$0xff]
      %v814 = vld [vmem:[%s811 + $0x10] sm:$0xff]
      %v815 = vld [vmem:[%s811 + $0x18] sm:$0xff]
      %v816 = vld [vmem:[%s811 + $0x20] sm:$0xf]
      %vm817 = vcmp.gt.f32.partialorder %v812, 0.5
      %vm818 = vcmp.gt.f32.partialorder %v813, 0.5
      %vm819 = vcmp.gt.f32.partialorder %v814, 0.5
      %vm820 = vcmp.gt.f32.partialorder %v815, 0.5
      %vm821 = vcmp.gt.f32.partialorder %v816, 0.5
      %v822 = vsel %vm817, 1, 0
      %v823 = vsel %vm818, 1, 0
      %v824 = vsel %vm819, 1, 0
      %v825 = vsel %vm820, 1, 0
      %v826 = vsel %vm821, 1, 0
      %827 = vset.pattern.permute.xlu0 0
      %828 = vperm.xlu0 %827, %v822
      %v829 = vpop.permute.xlu0 %828
      %830 = vset.pattern.permute.xlu0 0
      %831 = vperm.xlu0 %830, %v823
      %v832 = vpop.permute.xlu0 %831
      %833 = vset.pattern.permute.xlu0 0
      %834 = vperm.xlu0 %833, %v824
      %v835 = vpop.permute.xlu0 %834
      %836 = vset.pattern.permute.xlu0 0
      %837 = vperm.xlu0 %836, %v825
      %v838 = vpop.permute.xlu0 %837
      %839 = vset.pattern.permute.xlu0 0
      %840 = vperm.xlu0 %839, %v826
      %v841 = vpop.permute.xlu0 %840
      %vm842 = vcmp.eq.s32.totalorder %v829, 1
      %vm843 = vcmp.eq.s32.totalorder %v832, 1
      %vm844 = vcmp.eq.s32.totalorder %v835, 1
      %vm845 = vcmp.eq.s32.totalorder %v838, 1
      %vm846 = vcmp.eq.s32.totalorder %v841, 1
      %v847 = vsel %vm842, %v790, 0.0
      %v848 = vsel %vm843, %v793, 0.0
      %v849 = vsel %vm844, %v798, 0.0
      %v850 = vsel %vm845, %v801, 0.0
      %v851 = vsel %vm846, %v806, 0.0
      %v852 = vadd.f32 %v682, %v847
      %v853 = vadd.f32 %v683, %v848
      %v854 = vadd.f32 %v684, %v849
      %v855 = vadd.f32 %v685, %v850
      %v856 = vadd.f32 %v686, %v851
      %v857 = vld [vmem:[#allocation2] sm:$0x8]
      %v858 = vld [vmem:[#allocation2 + $0x4] sm:$0xf]
      %v859 = vld [vmem:[#allocation2 + $0x8] sm:$0xf]
      %v860 = vld [vmem:[#allocation2 + $0xc] sm:$0xf]
      %v861 = vld [vmem:[#allocation2 + $0x10] sm:$0xf]
      %v862 = vld [vmem:[#allocation2 + $0x14] sm:$0x3]
      %s863 = scalar_lea.vmem %s1, 96
      %v864 = vld [vmem:[%s863] sm:$0xf]
      %v865 = vld [vmem:[%s863 + $0x4] sm:$0xf]
      %v866 = vld [vmem:[%s863 + $0x8] sm:$0xf]
      %v867 = vld [vmem:[%s863 + $0xc] sm:$0xf]
      %v868 = vld [vmem:[%s863 + $0x10] sm:$0xf]
      %v869 = vld [vmem:[%s863 + $0x14] sm:$0xf]
      %v870 = vld [vmem:[%s863 + $0x18] sm:$0xf]
      %v871 = vld [vmem:[%s863 + $0x1c] sm:$0xf]
      %v878 = vunpack.c.l.b16 %v857
      %v879 = vunpack.c.l.b16 %v858
      %v880 = vunpack.c.l.b16 %v859
      %v881 = vunpack.c.l.b16 %v860
      %v882 = vunpack.c.l.b16 %v861
      %v883 = vunpack.c.l.b16 %v862
      %v884 = vpack.c.b16 %v879, %v878
      %v885 = vpack.c.b16 %v881, %v880
      %v886 = vpack.c.b16 %v883, %v882
      %vm887 = vsmask.f32 4352
      %v889 = vshrl.u32 %v884, 16
      %v891 = vrot.slane %v889, 3
      %v892 = vshll.u32 %v884, 16
      %v894 = vrot.slane %v892, 4
      %v895 = vor.u32 %v891, %v894
      %v897 = vshrl.u32 %v885, 16
      %v899 = vrot.slane %v897, 3
      %v900 = vshll.u32 %v885, 16
      %v902 = vrot.slane %v900, 4
      %v903 = vor.u32 %v899, %v902
      %v904 = vsel %vm887, %v895, %v903
      %v906 = vshrl.u32 %v886, 16
      %v908 = vrot.slane %v906, 3
      %v909 = vshll.u32 %v886, 16
      %v911 = vrot.slane %v909, 4
      %v912 = vor.u32 %v908, %v911
      %v913 = vsel %vm887, %v903, %v912
      %v922 = vunpack.c.l.b16 %v864
      %v923 = vunpack.c.l.b16 %v865
      %v924 = vunpack.c.l.b16 %v866
      %v925 = vunpack.c.l.b16 %v867
      %v926 = vunpack.c.l.b16 %v868
      %v927 = vunpack.c.l.b16 %v869
      %v928 = vunpack.c.l.b16 %v870
      %v929 = vunpack.c.l.b16 %v871
      %v930 = vpack.c.b16 %v923, %v922
      %v931 = vpack.c.b16 %v925, %v924
      %v932 = vpack.c.b16 %v927, %v926
      %v933 = vpack.c.b16 %v929, %v928
      %v939 = vsel %vm422, %v904, 0
      %v942 = vsel %vm422, %v913, 0
      %v945 = vsel %vm422, %v912, 0
      %947 = vmatprep.subr.bf16.mxu0 0
      %948 = vmatpush1.bf16.msra.mxu0 %v930
      %949 = vmatprep.subr.bf16.mxu0 0
      %950 = vmatpush1.bf16.msra.mxu0 %v931
      %951 = vmatprep.subr.bf16.mxu0 0
      %952 = vmatpush1.bf16.msra.mxu0 %v932
      %953 = vmatprep.subr.bf16.mxu0 0
      %954 = vmatpush1.bf16.msra.mxu0 %v933
      %955 = vmatprep.subr.bf16.mxu0 0
      %956 = vmatpush1.bf16.msra.mxu0 0
      %957 = vmatprep.subr.bf16.mxu0 0
      %958 = vmatpush1.bf16.msra.mxu0 0
      %959 = vmatprep.subr.bf16.mxu0 0
      %960 = vmatpush1.bf16.msra.mxu0 0
      %961 = vmatprep.subr.bf16.mxu0 0
      %962 = vmatpush1.bf16.msra.mxu0 0
      %963 = vmatprep.subr.bf16.mxu0 0
      %964 = vmatpush1.bf16.msra.mxu0 0
      %965 = vmatprep.subr.bf16.mxu0 0
      %966 = vmatpush1.bf16.msra.mxu0 0
      %967 = vmatprep.subr.bf16.mxu0 0
      %968 = vmatpush1.bf16.msra.mxu0 0
      %969 = vmatprep.subr.bf16.mxu0 0
      %970 = vmatpush1.bf16.msra.mxu0 0
      %971 = vmatprep.subr.bf16.mxu0 0
      %972 = vmatpush1.bf16.msra.mxu0 0
      %973 = vmatprep.subr.bf16.mxu0 0
      %974 = vmatpush1.bf16.msra.mxu0 0
      %975 = vmatprep.subr.bf16.mxu0 0
      %976 = vmatpush1.bf16.msra.mxu0 0
      %977 = vmatprep.subr.bf16.mxu0 0
      %978 = vmatpush1.bf16.msra.mxu0 0
      %979 = vmatprep.mubr.bf16.mxu0 0
      %980 = vmatmul.mubr.bf16.gmra.mrb[0].mxu0 %v939
      %v981 = vpop.f32.mrb[0].mxu0
      %v982 = vadd.f32 0.0, %v981
      %v983 = vpop.f32.mrb[0].mxu0
      %v984 = vpop.f32.mrb[0].mxu0
      %v985 = vadd.f32 0.0, %v984
      %v986 = vpop.f32.mrb[0].mxu0
      %987 = vmatprep.mubr.bf16.mxu0 0
      %988 = vmatmul.mubr.bf16.gmra.mrb[0].mxu0 %v942
      %v989 = vpop.f32.mrb[0].mxu0
      %v990 = vadd.f32 0.0, %v989
      %v991 = vpop.f32.mrb[0].mxu0
      %v992 = vpop.f32.mrb[0].mxu0
      %v993 = vadd.f32 0.0, %v992
      %v994 = vpop.f32.mrb[0].mxu0
      %995 = vmatprep.mubr.bf16.mxu0 0
      %996 = vmatmul.mubr.bf16.gmra.mrb[0].mxu0 %v945
      %v997 = vpop.f32.mrb[0].mxu0
      %v998 = vadd.f32 0.0, %v997
      %v999 = vpop.f32.mrb[0].mxu0
      %v1000 = vpop.f32.mrb[0].mxu0
      %v1001 = vpop.f32.mrb[0].mxu0
      %1002 = vdwg.mxu0
      %s1003 = scalar_lea.vmem %s4, 120
      %v1004 = vld [vmem:[%s1003] sm:$0xff]
      %v1005 = vld [vmem:[%s1003 + $0x8] sm:$0xff]
      %v1006 = vld [vmem:[%s1003 + $0x10] sm:$0xff]
      %v1007 = vld [vmem:[%s1003 + $0x18] sm:$0xff]
      %v1008 = vld [vmem:[%s1003 + $0x20] sm:$0xf]
      %vm1009 = vcmp.gt.f32.partialorder %v1004, 0.5
      %vm1010 = vcmp.gt.f32.partialorder %v1005, 0.5
      %vm1011 = vcmp.gt.f32.partialorder %v1006, 0.5
      %vm1012 = vcmp.gt.f32.partialorder %v1007, 0.5
      %vm1013 = vcmp.gt.f32.partialorder %v1008, 0.5
      %v1014 = vsel %vm1009, 1, 0
      %v1015 = vsel %vm1010, 1, 0
      %v1016 = vsel %vm1011, 1, 0
      %v1017 = vsel %vm1012, 1, 0
      %v1018 = vsel %vm1013, 1, 0
      %1019 = vset.pattern.permute.xlu0 0
      %1020 = vperm.xlu0 %1019, %v1014
      %v1021 = vpop.permute.xlu0 %1020
      %1022 = vset.pattern.permute.xlu0 0
      %1023 = vperm.xlu0 %1022, %v1015
      %v1024 = vpop.permute.xlu0 %1023
      %1025 = vset.pattern.permute.xlu0 0
      %1026 = vperm.xlu0 %1025, %v1016
      %v1027 = vpop.permute.xlu0 %1026
      %1028 = vset.pattern.permute.xlu0 0
      %1029 = vperm.xlu0 %1028, %v1017
      %v1030 = vpop.permute.xlu0 %1029
      %1031 = vset.pattern.permute.xlu0 0
      %1032 = vperm.xlu0 %1031, %v1018
      %v1033 = vpop.permute.xlu0 %1032
      %vm1034 = vcmp.eq.s32.totalorder %v1021, 1
      %vm1035 = vcmp.eq.s32.totalorder %v1024, 1
      %vm1036 = vcmp.eq.s32.totalorder %v1027, 1
      %vm1037 = vcmp.eq.s32.totalorder %v1030, 1
      %vm1038 = vcmp.eq.s32.totalorder %v1033, 1
      %v1039 = vsel %vm1034, %v982, 0.0
      %v1040 = vsel %vm1035, %v985, 0.0
      %v1041 = vsel %vm1036, %v990, 0.0
      %v1042 = vsel %vm1037, %v993, 0.0
      %v1043 = vsel %vm1038, %v998, 0.0
      %v1044 = vadd.f32 %v852, %v1039
      %v1045 = vadd.f32 %v853, %v1040
      %v1046 = vadd.f32 %v854, %v1041
      %v1047 = vadd.f32 %v855, %v1042
      %v1048 = vadd.f32 %v856, %v1043
      %s1049 = scalar_lea.vmem %s1, 128
      %v1050 = vld [vmem:[%s1049] sm:$0xf]
      %v1051 = vld [vmem:[%s1049 + $0x4] sm:$0xf]
      %v1052 = vld [vmem:[%s1049 + $0x8] sm:$0xf]
      %v1053 = vld [vmem:[%s1049 + $0xc] sm:$0xf]
      %v1054 = vld [vmem:[%s1049 + $0x10] sm:$0xf]
      %v1055 = vld [vmem:[%s1049 + $0x14] sm:$0xf]
      %v1056 = vld [vmem:[%s1049 + $0x18] sm:$0xf]
      %v1057 = vld [vmem:[%s1049 + $0x1c] sm:$0xf]
      %v1058 = vpack.c.b16 %v880, %v879
      %v1059 = vpack.c.b16 %v882, %v881
      %v1060 = vpack.c.b16 %v883, %v883
      %v1069 = vunpack.c.l.b16 %v1050
      %v1070 = vunpack.c.l.b16 %v1051
      %v1071 = vunpack.c.l.b16 %v1052
      %v1072 = vunpack.c.l.b16 %v1053
      %v1073 = vunpack.c.l.b16 %v1054
      %v1074 = vunpack.c.l.b16 %v1055
      %v1075 = vunpack.c.l.b16 %v1056
      %v1076 = vunpack.c.l.b16 %v1057
      %v1077 = vpack.c.b16 %v1070, %v1069
      %v1078 = vpack.c.b16 %v1072, %v1071
      %v1079 = vpack.c.b16 %v1074, %v1073
      %v1080 = vpack.c.b16 %v1076, %v1075
      %v1086 = vsel %vm422, %v1058, 0
      %v1089 = vsel %vm422, %v1059, 0
      %v1092 = vsel %vm422, %v1060, 0
      %1094 = vmatprep.subr.bf16.mxu0 0
      %1095 = vmatpush1.bf16.msra.mxu0 %v1077
      %1096 = vmatprep.subr.bf16.mxu0 0
      %1097 = vmatpush1.bf16.msra.mxu0 %v1078
      %1098 = vmatprep.subr.bf16.mxu0 0
      %1099 = vmatpush1.bf16.msra.mxu0 %v1079
      %1100 = vmatprep.subr.bf16.mxu0 0
      %1101 = vmatpush1.bf16.msra.mxu0 %v1080
      %1102 = vmatprep.subr.bf16.mxu0 0
      %1103 = vmatpush1.bf16.msra.mxu0 0
      %1104 = vmatprep.subr.bf16.mxu0 0
      %1105 = vmatpush1.bf16.msra.mxu0 0
      %1106 = vmatprep.subr.bf16.mxu0 0
      %1107 = vmatpush1.bf16.msra.mxu0 0
      %1108 = vmatprep.subr.bf16.mxu0 0
      %1109 = vmatpush1.bf16.msra.mxu0 0
      %1110 = vmatprep.subr.bf16.mxu0 0
      %1111 = vmatpush1.bf16.msra.mxu0 0
      %1112 = vmatprep.subr.bf16.mxu0 0
      %1113 = vmatpush1.bf16.msra.mxu0 0
      %1114 = vmatprep.subr.bf16.mxu0 0
      %1115 = vmatpush1.bf16.msra.mxu0 0
      %1116 = vmatprep.subr.bf16.mxu0 0
      %1117 = vmatpush1.bf16.msra.mxu0 0
      %1118 = vmatprep.subr.bf16.mxu0 0
      %1119 = vmatpush1.bf16.msra.mxu0 0
      %1120 = vmatprep.subr.bf16.mxu0 0
      %1121 = vmatpush1.bf16.msra.mxu0 0
      %1122 = vmatprep.subr.bf16.mxu0 0
      %1123 = vmatpush1.bf16.msra.mxu0 0
      %1124 = vmatprep.subr.bf16.mxu0 0
      %1125 = vmatpush1.bf16.msra.mxu0 0
      %1126 = vmatprep.mubr.bf16.mxu0 0
      %1127 = vmatmul.mubr.bf16.gmra.mrb[0].mxu0 %v1086
      %v1128 = vpop.f32.mrb[0].mxu0
      %v1129 = vadd.f32 0.0, %v1128
      %v1130 = vpop.f32.mrb[0].mxu0
      %v1131 = vpop.f32.mrb[0].mxu0
      %v1132 = vadd.f32 0.0, %v1131
      %v1133 = vpop.f32.mrb[0].mxu0
      %1134 = vmatprep.mubr.bf16.mxu0 0
      %1135 = vmatmul.mubr.bf16.gmra.mrb[0].mxu0 %v1089
      %v1136 = vpop.f32.mrb[0].mxu0
      %v1137 = vadd.f32 0.0, %v1136
      %v1138 = vpop.f32.mrb[0].mxu0
      %v1139 = vpop.f32.mrb[0].mxu0
      %v1140 = vadd.f32 0.0, %v1139
      %v1141 = vpop.f32.mrb[0].mxu0
      %1142 = vmatprep.mubr.bf16.mxu0 0
      %1143 = vmatmul.mubr.bf16.gmra.mrb[0].mxu0 %v1092
      %v1144 = vpop.f32.mrb[0].mxu0
      %v1145 = vadd.f32 0.0, %v1144
      %v1146 = vpop.f32.mrb[0].mxu0
      %v1147 = vpop.f32.mrb[0].mxu0
      %v1148 = vpop.f32.mrb[0].mxu0
      %1149 = vdwg.mxu0
      %s1150 = scalar_lea.vmem %s4, 160
      %v1151 = vld [vmem:[%s1150] sm:$0xff]
      %v1152 = vld [vmem:[%s1150 + $0x8] sm:$0xff]
      %v1153 = vld [vmem:[%s1150 + $0x10] sm:$0xff]
      %v1154 = vld [vmem:[%s1150 + $0x18] sm:$0xff]
      %v1155 = vld [vmem:[%s1150 + $0x20] sm:$0xf]
      %vm1156 = vcmp.gt.f32.partialorder %v1151, 0.5
      %vm1157 = vcmp.gt.f32.partialorder %v1152, 0.5
      %vm1158 = vcmp.gt.f32.partialorder %v1153, 0.5
      %vm1159 = vcmp.gt.f32.partialorder %v1154, 0.5
      %vm1160 = vcmp.gt.f32.partialorder %v1155, 0.5
      %v1161 = vsel %vm1156, 1, 0
      %v1162 = vsel %vm1157, 1, 0
      %v1163 = vsel %vm1158, 1, 0
      %v1164 = vsel %vm1159, 1, 0
      %v1165 = vsel %vm1160, 1, 0
      %1166 = vset.pattern.permute.xlu0 0
      %1167 = vperm.xlu0 %1166, %v1161
      %v1168 = vpop.permute.xlu0 %1167
      %1169 = vset.pattern.permute.xlu0 0
      %1170 = vperm.xlu0 %1169, %v1162
      %v1171 = vpop.permute.xlu0 %1170
      %1172 = vset.pattern.permute.xlu0 0
      %1173 = vperm.xlu0 %1172, %v1163
      %v1174 = vpop.permute.xlu0 %1173
      %1175 = vset.pattern.permute.xlu0 0
      %1176 = vperm.xlu0 %1175, %v1164
      %v1177 = vpop.permute.xlu0 %1176
      %1178 = vset.pattern.permute.xlu0 0
      %1179 = vperm.xlu0 %1178, %v1165
      %v1180 = vpop.permute.xlu0 %1179
      %vm1181 = vcmp.eq.s32.totalorder %v1168, 1
      %vm1182 = vcmp.eq.s32.totalorder %v1171, 1
      %vm1183 = vcmp.eq.s32.totalorder %v1174, 1
      %vm1184 = vcmp.eq.s32.totalorder %v1177, 1
      %vm1185 = vcmp.eq.s32.totalorder %v1180, 1
      %v1186 = vsel %vm1181, %v1129, 0.0
      %v1187 = vsel %vm1182, %v1132, 0.0
      %v1188 = vsel %vm1183, %v1137, 0.0
      %v1189 = vsel %vm1184, %v1140, 0.0
      %v1190 = vsel %vm1185, %v1145, 0.0
      %v1191 = vadd.f32 %v1044, %v1186
      %v1192 = vadd.f32 %v1045, %v1187
      %v1193 = vadd.f32 %v1046, %v1188
      %v1194 = vadd.f32 %v1047, %v1189
      %v1195 = vadd.f32 %v1048, %v1190
      %v1196 = vld [vmem:[#allocation2 + $0x14] sm:$0x7]
      %s1197 = scalar_lea.vmem %s1, 160
      %v1198 = vld [vmem:[%s1197] sm:$0xf]
      %v1199 = vld [vmem:[%s1197 + $0x4] sm:$0xf]
      %v1200 = vld [vmem:[%s1197 + $0x8] sm:$0xf]
      %v1201 = vld [vmem:[%s1197 + $0xc] sm:$0xf]
      %v1202 = vld [vmem:[%s1197 + $0x10] sm:$0xf]
      %v1203 = vld [vmem:[%s1197 + $0x14] sm:$0xf]
      %v1204 = vld [vmem:[%s1197 + $0x18] sm:$0xf]
      %v1205 = vld [vmem:[%s1197 + $0x1c] sm:$0xf]
      %v1207 = vunpack.c.l.b16 %v1196
      %v1208 = vpack.c.b16 %v1207, %v1207
      %v1209 = vshrl.u32 %v1058, 16
      %v1211 = vshll.u32 %v1058, 16
      %v1213 = vrot.slane %v1211, 1
      %v1214 = vor.u32 %v1209, %v1213
      %v1215 = vshll.u32 %v1059, 16
      %v1217 = vrot.slane %v1215, 1
      %v1218 = vsel %vm374, %v1214, %v1217
      %v1219 = vshrl.u32 %v1059, 16
      %v1221 = vor.u32 %v1219, %v1217
      %v1223 = vshll.u32 %v1208, 16
      %v1225 = vrot.slane %v1223, 1
      %v1226 = vsel %vm374, %v1221, %v1225
      %v1227 = vshrl.u32 %v1208, 16
      %v1229 = vor.u32 %v1227, %v1225
      %v1238 = vunpack.c.l.b16 %v1198
      %v1239 = vunpack.c.l.b16 %v1199
      %v1240 = vunpack.c.l.b16 %v1200
      %v1241 = vunpack.c.l.b16 %v1201
      %v1242 = vunpack.c.l.b16 %v1202
      %v1243 = vunpack.c.l.b16 %v1203
      %v1244 = vunpack.c.l.b16 %v1204
      %v1245 = vunpack.c.l.b16 %v1205
      %v1246 = vpack.c.b16 %v1239, %v1238
      %v1247 = vpack.c.b16 %v1241, %v1240
      %v1248 = vpack.c.b16 %v1243, %v1242
      %v1249 = vpack.c.b16 %v1245, %v1244
      %v1255 = vsel %vm422, %v1218, 0
      %v1258 = vsel %vm422, %v1226, 0
      %v1261 = vsel %vm422, %v1229, 0
      %1263 = vmatprep.subr.bf16.mxu0 0
      %1264 = vmatpush1.bf16.msra.mxu0 %v1246
      %1265 = vmatprep.subr.bf16.mxu0 0
      %1266 = vmatpush1.bf16.msra.mxu0 %v1247
      %1267 = vmatprep.subr.bf16.mxu0 0
      %1268 = vmatpush1.bf16.msra.mxu0 %v1248
      %1269 = vmatprep.subr.bf16.mxu0 0
      %1270 = vmatpush1.bf16.msra.mxu0 %v1249
      %1271 = vmatprep.subr.bf16.mxu0 0
      %1272 = vmatpush1.bf16.msra.mxu0 0
      %1273 = vmatprep.subr.bf16.mxu0 0
      %1274 = vmatpush1.bf16.msra.mxu0 0
      %1275 = vmatprep.subr.bf16.mxu0 0
      %1276 = vmatpush1.bf16.msra.mxu0 0
      %1277 = vmatprep.subr.bf16.mxu0 0
      %1278 = vmatpush1.bf16.msra.mxu0 0
      %1279 = vmatprep.subr.bf16.mxu0 0
      %1280 = vmatpush1.bf16.msra.mxu0 0
      %1281 = vmatprep.subr.bf16.mxu0 0
      %1282 = vmatpush1.bf16.msra.mxu0 0
      %1283 = vmatprep.subr.bf16.mxu0 0
      %1284 = vmatpush1.bf16.msra.mxu0 0
      %1285 = vmatprep.subr.bf16.mxu0 0
      %1286 = vmatpush1.bf16.msra.mxu0 0
      %1287 = vmatprep.subr.bf16.mxu0 0
      %1288 = vmatpush1.bf16.msra.mxu0 0
      %1289 = vmatprep.subr.bf16.mxu0 0
      %1290 = vmatpush1.bf16.msra.mxu0 0
      %1291 = vmatprep.subr.bf16.mxu0 0
      %1292 = vmatpush1.bf16.msra.mxu0 0
      %1293 = vmatprep.subr.bf16.mxu0 0
      %1294 = vmatpush1.bf16.msra.mxu0 0
      %1295 = vmatprep.mubr.bf16.mxu0 0
      %1296 = vmatmul.mubr.bf16.gmra.mrb[0].mxu0 %v1255
      %v1297 = vpop.f32.mrb[0].mxu0
      %v1298 = vadd.f32 0.0, %v1297
      %v1299 = vpop.f32.mrb[0].mxu0
      %v1300 = vpop.f32.mrb[0].mxu0
      %v1301 = vadd.f32 0.0, %v1300
      %v1302 = vpop.f32.mrb[0].mxu0
      %1303 = vmatprep.mubr.bf16.mxu0 0
      %1304 = vmatmul.mubr.bf16.gmra.mrb[0].mxu0 %v1258
      %v1305 = vpop.f32.mrb[0].mxu0
      %v1306 = vadd.f32 0.0, %v1305
      %v1307 = vpop.f32.mrb[0].mxu0
      %v1308 = vpop.f32.mrb[0].mxu0
      %v1309 = vadd.f32 0.0, %v1308
      %v1310 = vpop.f32.mrb[0].mxu0
      %1311 = vmatprep.mubr.bf16.mxu0 0
      %1312 = vmatmul.mubr.bf16.gmra.mrb[0].mxu0 %v1261
      %v1313 = vpop.f32.mrb[0].mxu0
      %v1314 = vadd.f32 0.0, %v1313
      %v1315 = vpop.f32.mrb[0].mxu0
      %v1316 = vpop.f32.mrb[0].mxu0
      %v1317 = vpop.f32.mrb[0].mxu0
      %1318 = vdwg.mxu0
      %s1319 = scalar_lea.vmem %s4, 200
      %v1320 = vld [vmem:[%s1319] sm:$0xff]
      %v1321 = vld [vmem:[%s1319 + $0x8] sm:$0xff]
      %v1322 = vld [vmem:[%s1319 + $0x10] sm:$0xff]
      %v1323 = vld [vmem:[%s1319 + $0x18] sm:$0xff]
      %v1324 = vld [vmem:[%s1319 + $0x20] sm:$0xf]
      %vm1325 = vcmp.gt.f32.partialorder %v1320, 0.5
      %vm1326 = vcmp.gt.f32.partialorder %v1321, 0.5
      %vm1327 = vcmp.gt.f32.partialorder %v1322, 0.5
      %vm1328 = vcmp.gt.f32.partialorder %v1323, 0.5
      %vm1329 = vcmp.gt.f32.partialorder %v1324, 0.5
      %v1330 = vsel %vm1325, 1, 0
      %v1331 = vsel %vm1326, 1, 0
      %v1332 = vsel %vm1327, 1, 0
      %v1333 = vsel %vm1328, 1, 0
      %v1334 = vsel %vm1329, 1, 0
      %1335 = vset.pattern.permute.xlu0 0
      %1336 = vperm.xlu0 %1335, %v1330
      %v1337 = vpop.permute.xlu0 %1336
      %1338 = vset.pattern.permute.xlu0 0
      %1339 = vperm.xlu0 %1338, %v1331
      %v1340 = vpop.permute.xlu0 %1339
      %1341 = vset.pattern.permute.xlu0 0
      %1342 = vperm.xlu0 %1341, %v1332
      %v1343 = vpop.permute.xlu0 %1342
      %1344 = vset.pattern.permute.xlu0 0
      %1345 = vperm.xlu0 %1344, %v1333
      %v1346 = vpop.permute.xlu0 %1345
      %1347 = vset.pattern.permute.xlu0 0
      %1348 = vperm.xlu0 %1347, %v1334
      %v1349 = vpop.permute.xlu0 %1348
      %vm1350 = vcmp.eq.s32.totalorder %v1337, 1
      %vm1351 = vcmp.eq.s32.totalorder %v1340, 1
      %vm1352 = vcmp.eq.s32.totalorder %v1343, 1
      %vm1353 = vcmp.eq.s32.totalorder %v1346, 1
      %vm1354 = vcmp.eq.s32.totalorder %v1349, 1
      %v1355 = vsel %vm1350, %v1298, 0.0
      %v1356 = vsel %vm1351, %v1301, 0.0
      %v1357 = vsel %vm1352, %v1306, 0.0
      %v1358 = vsel %vm1353, %v1309, 0.0
      %v1359 = vsel %vm1354, %v1314, 0.0
      %v1360 = vadd.f32 %v1191, %v1355
      %v1361 = vadd.f32 %v1192, %v1356
      %v1362 = vadd.f32 %v1193, %v1357
      %v1363 = vadd.f32 %v1194, %v1358
      %v1364 = vadd.f32 %v1195, %v1359
      %v1365 = vld [vmem:[#allocation2 + $0x4] sm:$0xc]
      %v1366 = vld [vmem:[#allocation2 + $0x8] sm:$0xf]
      %v1367 = vld [vmem:[#allocation2 + $0xc] sm:$0xf]
      %v1368 = vld [vmem:[#allocation2 + $0x10] sm:$0xf]
      %v1369 = vld [vmem:[#allocation2 + $0x14] sm:$0xf]
      %v1370 = vld [vmem:[#allocation2 + $0x18] sm:$0x1]
      %s1371 = scalar_lea.vmem %s1, 192
      %v1372 = vld [vmem:[%s1371] sm:$0xf]
      %v1373 = vld [vmem:[%s1371 + $0x4] sm:$0xf]
      %v1374 = vld [vmem:[%s1371 + $0x8] sm:$0xf]
      %v1375 = vld [vmem:[%s1371 + $0xc] sm:$0xf]
      %v1376 = vld [vmem:[%s1371 + $0x10] sm:$0xf]
      %v1377 = vld [vmem:[%s1371 + $0x14] sm:$0xf]
      %v1378 = vld [vmem:[%s1371 + $0x18] sm:$0xf]
      %v1379 = vld [vmem:[%s1371 + $0x1c] sm:$0xf]
      %v1386 = vunpack.c.l.b16 %v1365
      %v1387 = vunpack.c.l.b16 %v1366
      %v1388 = vunpack.c.l.b16 %v1367
      %v1389 = vunpack.c.l.b16 %v1368
      %v1390 = vunpack.c.l.b16 %v1369
      %v1391 = vunpack.c.l.b16 %v1370
      %v1392 = vpack.c.b16 %v1387, %v1386
      %v1393 = vpack.c.b16 %v1389, %v1388
      %v1394 = vpack.c.b16 %v1391, %v1390
      %vm1395 = vsmask.f32 5376
      %v1397 = vshrl.u32 %v1392, 16
      %v1399 = vrot.slane %v1397, 2
      %v1400 = vshll.u32 %v1392, 16
      %v1402 = vrot.slane %v1400, 3
      %v1403 = vor.u32 %v1399, %v1402
      %v1405 = vshrl.u32 %v1393, 16
      %v1407 = vrot.slane %v1405, 2
      %v1408 = vshll.u32 %v1393, 16
      %v1410 = vrot.slane %v1408, 3
      %v1411 = vor.u32 %v1407, %v1410
      %v1412 = vsel %vm1395, %v1403, %v1411
      %v1414 = vshrl.u32 %v1394, 16
      %v1416 = vrot.slane %v1414, 2
      %v1417 = vshll.u32 %v1394, 16
      %v1419 = vrot.slane %v1417, 3
      %v1420 = vor.u32 %v1416, %v1419
      %v1421 = vsel %vm1395, %v1411, %v1420
      %v1430 = vunpack.c.l.b16 %v1372
      %v1431 = vunpack.c.l.b16 %v1373
      %v1432 = vunpack.c.l.b16 %v1374
      %v1433 = vunpack.c.l.b16 %v1375
      %v1434 = vunpack.c.l.b16 %v1376
      %v1435 = vunpack.c.l.b16 %v1377
      %v1436 = vunpack.c.l.b16 %v1378
      %v1437 = vunpack.c.l.b16 %v1379
      %v1438 = vpack.c.b16 %v1431, %v1430
      %v1439 = vpack.c.b16 %v1433, %v1432
      %v1440 = vpack.c.b16 %v1435, %v1434
      %v1441 = vpack.c.b16 %v1437, %v1436
      %v1447 = vsel %vm422, %v1412, 0
      %v1450 = vsel %vm422, %v1421, 0
      %v1453 = vsel %vm422, %v1420, 0
      %1455 = vmatprep.subr.bf16.mxu0 0
      %1456 = vmatpush1.bf16.msra.mxu0 %v1438
      %1457 = vmatprep.subr.bf16.mxu0 0
      %1458 = vmatpush1.bf16.msra.mxu0 %v1439
      %1459 = vmatprep.subr.bf16.mxu0 0
      %1460 = vmatpush1.bf16.msra.mxu0 %v1440
      %1461 = vmatprep.subr.bf16.mxu0 0
      %1462 = vmatpush1.bf16.msra.mxu0 %v1441
      %1463 = vmatprep.subr.bf16.mxu0 0
      %1464 = vmatpush1.bf16.msra.mxu0 0
      %1465 = vmatprep.subr.bf16.mxu0 0
      %1466 = vmatpush1.bf16.msra.mxu0 0
      %1467 = vmatprep.subr.bf16.mxu0 0
      %1468 = vmatpush1.bf16.msra.mxu0 0
      %1469 = vmatprep.subr.bf16.mxu0 0
      %1470 = vmatpush1.bf16.msra.mxu0 0
      %1471 = vmatprep.subr.bf16.mxu0 0
      %1472 = vmatpush1.bf16.msra.mxu0 0
      %1473 = vmatprep.subr.bf16.mxu0 0
      %1474 = vmatpush1.bf16.msra.mxu0 0
      %1475 = vmatprep.subr.bf16.mxu0 0
      %1476 = vmatpush1.bf16.msra.mxu0 0
      %1477 = vmatprep.subr.bf16.mxu0 0
      %1478 = vmatpush1.bf16.msra.mxu0 0
      %1479 = vmatprep.subr.bf16.mxu0 0
      %1480 = vmatpush1.bf16.msra.mxu0 0
      %1481 = vmatprep.subr.bf16.mxu0 0
      %1482 = vmatpush1.bf16.msra.mxu0 0
      %1483 = vmatprep.subr.bf16.mxu0 0
      %1484 = vmatpush1.bf16.msra.mxu0 0
      %1485 = vmatprep.subr.bf16.mxu0 0
      %1486 = vmatpush1.bf16.msra.mxu0 0
      %1487 = vmatprep.mubr.bf16.mxu0 0
      %1488 = vmatmul.mubr.bf16.gmra.mrb[0].mxu0 %v1447
      %v1489 = vpop.f32.mrb[0].mxu0
      %v1490 = vadd.f32 0.0, %v1489
      %v1491 = vpop.f32.mrb[0].mxu0
      %v1492 = vpop.f32.mrb[0].mxu0
      %v1493 = vadd.f32 0.0, %v1492
      %v1494 = vpop.f32.mrb[0].mxu0
      %1495 = vmatprep.mubr.bf16.mxu0 0
      %1496 = vmatmul.mubr.bf16.gmra.mrb[0].mxu0 %v1450
      %v1497 = vpop.f32.mrb[0].mxu0
      %v1498 = vadd.f32 0.0, %v1497
      %v1499 = vpop.f32.mrb[0].mxu0
      %v1500 = vpop.f32.mrb[0].mxu0
      %v1501 = vadd.f32 0.0, %v1500
      %v1502 = vpop.f32.mrb[0].mxu0
      %1503 = vmatprep.mubr.bf16.mxu0 0
      %1504 = vmatmul.mubr.bf16.gmra.mrb[0].mxu0 %v1453
      %v1505 = vpop.f32.mrb[0].mxu0
      %v1506 = vadd.f32 0.0, %v1505
      %v1507 = vpop.f32.mrb[0].mxu0
      %v1508 = vpop.f32.mrb[0].mxu0
      %v1509 = vpop.f32.mrb[0].mxu0
      %1510 = vdwg.mxu0
      %s1511 = scalar_lea.vmem %s4, 240
      %v1512 = vld [vmem:[%s1511] sm:$0xff]
      %v1513 = vld [vmem:[%s1511 + $0x8] sm:$0xff]
      %v1514 = vld [vmem:[%s1511 + $0x10] sm:$0xff]
      %v1515 = vld [vmem:[%s1511 + $0x18] sm:$0xff]
      %v1516 = vld [vmem:[%s1511 + $0x20] sm:$0xf]
      %vm1517 = vcmp.gt.f32.partialorder %v1512, 0.5
      %vm1518 = vcmp.gt.f32.partialorder %v1513, 0.5
      %vm1519 = vcmp.gt.f32.partialorder %v1514, 0.5
      %vm1520 = vcmp.gt.f32.partialorder %v1515, 0.5
      %vm1521 = vcmp.gt.f32.partialorder %v1516, 0.5
      %v1522 = vsel %vm1517, 1, 0
      %v1523 = vsel %vm1518, 1, 0
      %v1524 = vsel %vm1519, 1, 0
      %v1525 = vsel %vm1520, 1, 0
      %v1526 = vsel %vm1521, 1, 0
      %1527 = vset.pattern.permute.xlu0 0
      %1528 = vperm.xlu0 %1527, %v1522
      %v1529 = vpop.permute.xlu0 %1528
      %1530 = vset.pattern.permute.xlu0 0
      %1531 = vperm.xlu0 %1530, %v1523
      %v1532 = vpop.permute.xlu0 %1531
      %1533 = vset.pattern.permute.xlu0 0
      %1534 = vperm.xlu0 %1533, %v1524
      %v1535 = vpop.permute.xlu0 %1534
      %1536 = vset.pattern.permute.xlu0 0
      %1537 = vperm.xlu0 %1536, %v1525
      %v1538 = vpop.permute.xlu0 %1537
      %1539 = vset.pattern.permute.xlu0 0
      %1540 = vperm.xlu0 %1539, %v1526
      %v1541 = vpop.permute.xlu0 %1540
      %vm1542 = vcmp.eq.s32.totalorder %v1529, 1
      %vm1543 = vcmp.eq.s32.totalorder %v1532, 1
      %vm1544 = vcmp.eq.s32.totalorder %v1535, 1
      %vm1545 = vcmp.eq.s32.totalorder %v1538, 1
      %vm1546 = vcmp.eq.s32.totalorder %v1541, 1
      %v1547 = vsel %vm1542, %v1490, 0.0
      %v1548 = vsel %vm1543, %v1493, 0.0
      %v1549 = vsel %vm1544, %v1498, 0.0
      %v1550 = vsel %vm1545, %v1501, 0.0
      %v1551 = vsel %vm1546, %v1506, 0.0
      %v1552 = vadd.f32 %v1360, %v1547
      %v1553 = vadd.f32 %v1361, %v1548
      %v1554 = vadd.f32 %v1362, %v1549
      %v1555 = vadd.f32 %v1363, %v1550
      %v1556 = vadd.f32 %v1364, %v1551
      %v1557 = vld [vmem:[#allocation2 + $0x4] sm:$0x8]
      %s1558 = scalar_lea.vmem %s1, 224
      %v1559 = vld [vmem:[%s1558] sm:$0xf]
      %v1560 = vld [vmem:[%s1558 + $0x4] sm:$0xf]
      %v1561 = vld [vmem:[%s1558 + $0x8] sm:$0xf]
      %v1562 = vld [vmem:[%s1558 + $0xc] sm:$0xf]
      %v1563 = vld [vmem:[%s1558 + $0x10] sm:$0xf]
      %v1564 = vld [vmem:[%s1558 + $0x14] sm:$0xf]
      %v1565 = vld [vmem:[%s1558 + $0x18] sm:$0xf]
      %v1566 = vld [vmem:[%s1558 + $0x1c] sm:$0xf]
      %v1568 = vunpack.c.l.b16 %v1557
      %v1569 = vpack.c.b16 %v1387, %v1568
      %vm1570 = vcmask 1044480
      %v1571 = vrot.slane %v1569, 3
      %v1572 = vrot.slane %v1393, 3
      %v1573 = vsel %vm1570, %v1571, %v1572
      %v1574 = vrot.slane %v1394, 3
      %v1575 = vsel %vm1570, %v1572, %v1574
      %v1584 = vunpack.c.l.b16 %v1559
      %v1585 = vunpack.c.l.b16 %v1560
      %v1586 = vunpack.c.l.b16 %v1561
      %v1587 = vunpack.c.l.b16 %v1562
      %v1588 = vunpack.c.l.b16 %v1563
      %v1589 = vunpack.c.l.b16 %v1564
      %v1590 = vunpack.c.l.b16 %v1565
      %v1591 = vunpack.c.l.b16 %v1566
      %v1592 = vpack.c.b16 %v1585, %v1584
      %v1593 = vpack.c.b16 %v1587, %v1586
      %v1594 = vpack.c.b16 %v1589, %v1588
      %v1595 = vpack.c.b16 %v1591, %v1590
      %v1601 = vsel %vm422, %v1573, 0
      %v1604 = vsel %vm422, %v1575, 0
      %v1607 = vsel %vm422, %v1574, 0
      %1609 = vmatprep.subr.bf16.mxu0 0
      %1610 = vmatpush1.bf16.msra.mxu0 %v1592
      %1611 = vmatprep.subr.bf16.mxu0 0
      %1612 = vmatpush1.bf16.msra.mxu0 %v1593
      %1613 = vmatprep.subr.bf16.mxu0 0
      %1614 = vmatpush1.bf16.msra.mxu0 %v1594
      %1615 = vmatprep.subr.bf16.mxu0 0
      %1616 = vmatpush1.bf16.msra.mxu0 %v1595
      %1617 = vmatprep.subr.bf16.mxu0 0
      %1618 = vmatpush1.bf16.msra.mxu0 0
      %1619 = vmatprep.subr.bf16.mxu0 0
      %1620 = vmatpush1.bf16.msra.mxu0 0
      %1621 = vmatprep.subr.bf16.mxu0 0
      %1622 = vmatpush1.bf16.msra.mxu0 0
      %1623 = vmatprep.subr.bf16.mxu0 0
      %1624 = vmatpush1.bf16.msra.mxu0 0
      %1625 = vmatprep.subr.bf16.mxu0 0
      %1626 = vmatpush1.bf16.msra.mxu0 0
      %1627 = vmatprep.subr.bf16.mxu0 0
      %1628 = vmatpush1.bf16.msra.mxu0 0
      %1629 = vmatprep.subr.bf16.mxu0 0
      %1630 = vmatpush1.bf16.msra.mxu0 0
      %1631 = vmatprep.subr.bf16.mxu0 0
      %1632 = vmatpush1.bf16.msra.mxu0 0
      %1633 = vmatprep.subr.bf16.mxu0 0
      %1634 = vmatpush1.bf16.msra.mxu0 0
      %1635 = vmatprep.subr.bf16.mxu0 0
      %1636 = vmatpush1.bf16.msra.mxu0 0
      %1637 = vmatprep.subr.bf16.mxu0 0
      %1638 = vmatpush1.bf16.msra.mxu0 0
      %1639 = vmatprep.subr.bf16.mxu0 0
      %1640 = vmatpush1.bf16.msra.mxu0 0
      %1641 = vmatprep.mubr.bf16.mxu0 0
      %1642 = vmatmul.mubr.bf16.gmra.mrb[0].mxu0 %v1601
      %v1643 = vpop.f32.mrb[0].mxu0
      %v1644 = vadd.f32 0.0, %v1643
      %v1645 = vpop.f32.mrb[0].mxu0
      %v1646 = vpop.f32.mrb[0].mxu0
      %v1647 = vadd.f32 0.0, %v1646
      %v1648 = vpop.f32.mrb[0].mxu0
      %1649 = vmatprep.mubr.bf16.mxu0 0
      %1650 = vmatmul.mubr.bf16.gmra.mrb[0].mxu0 %v1604
      %v1651 = vpop.f32.mrb[0].mxu0
      %v1652 = vadd.f32 0.0, %v1651
      %v1653 = vpop.f32.mrb[0].mxu0
      %v1654 = vpop.f32.mrb[0].mxu0
      %v1655 = vadd.f32 0.0, %v1654
      %v1656 = vpop.f32.mrb[0].mxu0
      %1657 = vmatprep.mubr.bf16.mxu0 0
      %1658 = vmatmul.mubr.bf16.gmra.mrb[0].mxu0 %v1607
      %v1659 = vpop.f32.mrb[0].mxu0
      %v1660 = vadd.f32 0.0, %v1659
      %v1661 = vpop.f32.mrb[0].mxu0
      %v1662 = vpop.f32.mrb[0].mxu0
      %v1663 = vpop.f32.mrb[0].mxu0
      %1664 = vdwg.mxu0
      %s1665 = scalar_lea.vmem %s4, 280
      %v1666 = vld [vmem:[%s1665] sm:$0xff]
      %v1667 = vld [vmem:[%s1665 + $0x8] sm:$0xff]
      %v1668 = vld [vmem:[%s1665 + $0x10] sm:$0xff]
      %v1669 = vld [vmem:[%s1665 + $0x18] sm:$0xff]
      %v1670 = vld [vmem:[%s1665 + $0x20] sm:$0xf]
      %vm1671 = vcmp.gt.f32.partialorder %v1666, 0.5
      %vm1672 = vcmp.gt.f32.partialorder %v1667, 0.5
      %vm1673 = vcmp.gt.f32.partialorder %v1668, 0.5
      %vm1674 = vcmp.gt.f32.partialorder %v1669, 0.5
      %vm1675 = vcmp.gt.f32.partialorder %v1670, 0.5
      %v1676 = vsel %vm1671, 1, 0
      %v1677 = vsel %vm1672, 1, 0
      %v1678 = vsel %vm1673, 1, 0
      %v1679 = vsel %vm1674, 1, 0
      %v1680 = vsel %vm1675, 1, 0
      %1681 = vset.pattern.permute.xlu0 0
      %1682 = vperm.xlu0 %1681, %v1676
      %v1683 = vpop.permute.xlu0 %1682
      %1684 = vset.pattern.permute.xlu0 0
      %1685 = vperm.xlu0 %1684, %v1677
      %v1686 = vpop.permute.xlu0 %1685
      %1687 = vset.pattern.permute.xlu0 0
      %1688 = vperm.xlu0 %1687, %v1678
      %v1689 = vpop.permute.xlu0 %1688
      %1690 = vset.pattern.permute.xlu0 0
      %1691 = vperm.xlu0 %1690, %v1679
      %v1692 = vpop.permute.xlu0 %1691
      %1693 = vset.pattern.permute.xlu0 0
      %1694 = vperm.xlu0 %1693, %v1680
      %v1695 = vpop.permute.xlu0 %1694
      %vm1696 = vcmp.eq.s32.totalorder %v1683, 1
      %vm1697 = vcmp.eq.s32.totalorder %v1686, 1
      %vm1698 = vcmp.eq.s32.totalorder %v1689, 1
      %vm1699 = vcmp.eq.s32.totalorder %v1692, 1
      %vm1700 = vcmp.eq.s32.totalorder %v1695, 1
      %v1701 = vsel %vm1696, %v1644, 0.0
      %v1702 = vsel %vm1697, %v1647, 0.0
      %v1703 = vsel %vm1698, %v1652, 0.0
      %v1704 = vsel %vm1699, %v1655, 0.0
      %v1705 = vsel %vm1700, %v1660, 0.0
      %v1706 = vadd.f32 %v1552, %v1701
      %v1707 = vadd.f32 %v1553, %v1702
      %v1708 = vadd.f32 %v1554, %v1703
      %v1709 = vadd.f32 %v1555, %v1704
      %v1710 = vadd.f32 %v1556, %v1705
      %v1711 = vld [vmem:[#allocation2 + $0x18] sm:$0x3]
      %s1712 = scalar_lea.vmem %s1, 256
      %v1713 = vld [vmem:[%s1712] sm:$0xf]
      %v1714 = vld [vmem:[%s1712 + $0x4] sm:$0xf]
      %v1715 = vld [vmem:[%s1712 + $0x8] sm:$0xf]
      %v1716 = vld [vmem:[%s1712 + $0xc] sm:$0xf]
      %v1717 = vld [vmem:[%s1712 + $0x10] sm:$0xf]
      %v1718 = vld [vmem:[%s1712 + $0x14] sm:$0xf]
      %v1719 = vld [vmem:[%s1712 + $0x18] sm:$0xf]
      %v1720 = vld [vmem:[%s1712 + $0x1c] sm:$0xf]
      %v1722 = vunpack.c.l.b16 %v1711
      %v1723 = vpack.c.b16 %v1722, %v1390
      %v1725 = vshrl.u32 %v1569, 16
      %v1727 = vrot.slane %v1725, 3
      %v1728 = vshll.u32 %v1569, 16
      %v1730 = vrot.slane %v1728, 4
      %v1731 = vor.u32 %v1727, %v1730
      %v1732 = vrot.slane %v1405, 3
      %v1733 = vrot.slane %v1408, 4
      %v1734 = vor.u32 %v1732, %v1733
      %v1735 = vsel %vm887, %v1731, %v1734
      %v1737 = vshrl.u32 %v1723, 16
      %v1739 = vrot.slane %v1737, 3
      %v1740 = vshll.u32 %v1723, 16
      %v1742 = vrot.slane %v1740, 4
      %v1743 = vor.u32 %v1739, %v1742
      %v1744 = vsel %vm887, %v1734, %v1743
      %v1753 = vunpack.c.l.b16 %v1713
      %v1754 = vunpack.c.l.b16 %v1714
      %v1755 = vunpack.c.l.b16 %v1715
      %v1756 = vunpack.c.l.b16 %v1716
      %v1757 = vunpack.c.l.b16 %v1717
      %v1758 = vunpack.c.l.b16 %v1718
      %v1759 = vunpack.c.l.b16 %v1719
      %v1760 = vunpack.c.l.b16 %v1720
      %v1761 = vpack.c.b16 %v1754, %v1753
      %v1762 = vpack.c.b16 %v1756, %v1755
      %v1763 = vpack.c.b16 %v1758, %v1757
      %v1764 = vpack.c.b16 %v1760, %v1759
      %v1770 = vsel %vm422, %v1735, 0
      %v1773 = vsel %vm422, %v1744, 0
      %v1776 = vsel %vm422, %v1743, 0
      %1778 = vmatprep.subr.bf16.mxu0 0
      %1779 = vmatpush1.bf16.msra.mxu0 %v1761
      %1780 = vmatprep.subr.bf16.mxu0 0
      %1781 = vmatpush1.bf16.msra.mxu0 %v1762
      %1782 = vmatprep.subr.bf16.mxu0 0
      %1783 = vmatpush1.bf16.msra.mxu0 %v1763
      %1784 = vmatprep.subr.bf16.mxu0 0
      %1785 = vmatpush1.bf16.msra.mxu0 %v1764
      %1786 = vmatprep.subr.bf16.mxu0 0
      %1787 = vmatpush1.bf16.msra.mxu0 0
      %1788 = vmatprep.subr.bf16.mxu0 0
      %1789 = vmatpush1.bf16.msra.mxu0 0
      %1790 = vmatprep.subr.bf16.mxu0 0
      %1791 = vmatpush1.bf16.msra.mxu0 0
      %1792 = vmatprep.subr.bf16.mxu0 0
      %1793 = vmatpush1.bf16.msra.mxu0 0
      %1794 = vmatprep.subr.bf16.mxu0 0
      %1795 = vmatpush1.bf16.msra.mxu0 0
      %1796 = vmatprep.subr.bf16.mxu0 0
      %1797 = vmatpush1.bf16.msra.mxu0 0
      %1798 = vmatprep.subr.bf16.mxu0 0
      %1799 = vmatpush1.bf16.msra.mxu0 0
      %1800 = vmatprep.subr.bf16.mxu0 0
      %1801 = vmatpush1.bf16.msra.mxu0 0
      %1802 = vmatprep.subr.bf16.mxu0 0
      %1803 = vmatpush1.bf16.msra.mxu0 0
      %1804 = vmatprep.subr.bf16.mxu0 0
      %1805 = vmatpush1.bf16.msra.mxu0 0
      %1806 = vmatprep.subr.bf16.mxu0 0
      %1807 = vmatpush1.bf16.msra.mxu0 0
      %1808 = vmatprep.subr.bf16.mxu0 0
      %1809 = vmatpush1.bf16.msra.mxu0 0
      %1810 = vmatprep.mubr.bf16.mxu0 0
      %1811 = vmatmul.mubr.bf16.gmra.mrb[0].mxu0 %v1770
      %v1812 = vpop.f32.mrb[0].mxu0
      %v1813 = vadd.f32 0.0, %v1812
      %v1814 = vpop.f32.mrb[0].mxu0
      %v1815 = vpop.f32.mrb[0].mxu0
      %v1816 = vadd.f32 0.0, %v1815
      %v1817 = vpop.f32.mrb[0].mxu0
      %1818 = vmatprep.mubr.bf16.mxu0 0
      %1819 = vmatmul.mubr.bf16.gmra.mrb[0].mxu0 %v1773
      %v1820 = vpop.f32.mrb[0].mxu0
      %v1821 = vadd.f32 0.0, %v1820
      %v1822 = vpop.f32.mrb[0].mxu0
      %v1823 = vpop.f32.mrb[0].mxu0
      %v1824 = vadd.f32 0.0, %v1823
      %v1825 = vpop.f32.mrb[0].mxu0
      %1826 = vmatprep.mubr.bf16.mxu0 0
      %1827 = vmatmul.mubr.bf16.gmra.mrb[0].mxu0 %v1776
      %v1828 = vpop.f32.mrb[0].mxu0
      %v1829 = vadd.f32 0.0, %v1828
      %v1830 = vpop.f32.mrb[0].mxu0
      %v1831 = vpop.f32.mrb[0].mxu0
      %v1832 = vpop.f32.mrb[0].mxu0
      %1833 = vdwg.mxu0
      %s1834 = scalar_lea.vmem %s4, 320
      %v1835 = vld [vmem:[%s1834] sm:$0xff]
      %v1836 = vld [vmem:[%s1834 + $0x8] sm:$0xff]
      %v1837 = vld [vmem:[%s1834 + $0x10] sm:$0xff]
      %v1838 = vld [vmem:[%s1834 + $0x18] sm:$0xff]
      %v1839 = vld [vmem:[%s1834 + $0x20] sm:$0xf]
      %vm1840 = vcmp.gt.f32.partialorder %v1835, 0.5
      %vm1841 = vcmp.gt.f32.partialorder %v1836, 0.5
      %vm1842 = vcmp.gt.f32.partialorder %v1837, 0.5
      %vm1843 = vcmp.gt.f32.partialorder %v1838, 0.5
      %vm1844 = vcmp.gt.f32.partialorder %v1839, 0.5
      %v1845 = vsel %vm1840, 1, 0
      %v1846 = vsel %vm1841, 1, 0
      %v1847 = vsel %vm1842, 1, 0
      %v1848 = vsel %vm1843, 1, 0
      %v1849 = vsel %vm1844, 1, 0
      %1850 = vset.pattern.permute.xlu0 0
      %1851 = vperm.xlu0 %1850, %v1845
      %v1852 = vpop.permute.xlu0 %1851
      %1853 = vset.pattern.permute.xlu0 0
      %1854 = vperm.xlu0 %1853, %v1846
      %v1855 = vpop.permute.xlu0 %1854
      %1856 = vset.pattern.permute.xlu0 0
      %1857 = vperm.xlu0 %1856, %v1847
      %v1858 = vpop.permute.xlu0 %1857
      %1859 = vset.pattern.permute.xlu0 0
      %1860 = vperm.xlu0 %1859, %v1848
      %v1861 = vpop.permute.xlu0 %1860
      %1862 = vset.pattern.permute.xlu0 0
      %1863 = vperm.xlu0 %1862, %v1849
      %v1864 = vpop.permute.xlu0 %1863
      %vm1865 = vcmp.eq.s32.totalorder %v1852, 1
      %vm1866 = vcmp.eq.s32.totalorder %v1855, 1
      %vm1867 = vcmp.eq.s32.totalorder %v1858, 1
      %vm1868 = vcmp.eq.s32.totalorder %v1861, 1
      %vm1869 = vcmp.eq.s32.totalorder %v1864, 1
      %v1870 = vsel %vm1865, %v1813, 0.0
      %v1871 = vsel %vm1866, %v1816, 0.0
      %v1872 = vsel %vm1867, %v1821, 0.0
      %v1873 = vsel %vm1868, %v1824, 0.0
      %v1874 = vsel %vm1869, %v1829, 0.0
      %v1875 = vadd.f32 %v1706, %v1870
      %v1876 = vadd.f32 %v1707, %v1871
      %v1877 = vadd.f32 %v1708, %v1872
      %v1878 = vadd.f32 %v1709, %v1873
      %v1879 = vadd.f32 %v1710, %v1874
      %v1880 = vpack.c.bf16 %v1876, %v1875
      %v1881 = vpack.c.bf16 %v1878, %v1877
      %v1882 = vpack.c.bf16 %v1879, %v1879
      %v1886 = vunpack.c.l.b16 %v1880
      %v1887 = vunpack.c.h.b16 %v1880
      %v1888 = vunpack.c.l.b16 %v1881
      %v1889 = vunpack.c.h.b16 %v1881
      %v1890 = vunpack.c.l.b16 %v1882
      %v1891 = vpack.c.b16 %v1886, %v1886
      %v1892 = vpack.c.b16 %v1887, %v1887
      %v1893 = vpack.c.b16 %v1888, %v1888
      %v1894 = vpack.c.b16 %v1889, %v1889
      %v1895 = vpack.c.b16 %v1890, %v1890
      %vm1901 = vcmask 60416
      %1902 = vst.msk [vmem:[%s258] sm:$0xf] %vm1901, %v1891
      %1903 = vst.msk [vmem:[%s258 + $0x4] sm:$0xf] %vm1901, %v1892
      %1904 = vst.msk [vmem:[%s258 + $0x8] sm:$0xf] %vm1901, %v1893
      %1905 = vst.msk [vmem:[%s258 + $0xc] sm:$0xf] %vm1901, %v1894
      %vm1906 = vcmask 58368
      %1907 = vst.msk [vmem:[%s258 + $0x10] sm:$0x3] %vm1906, %v1895
      %v1908 = vunpack.c.l.bf16 %v1880
      %v1909 = vunpack.c.h.bf16 %v1880
      %v1910 = vunpack.c.l.bf16 %v1881
      %v1911 = vunpack.c.h.bf16 %v1881
      %v1912 = vunpack.c.l.bf16 %v1882
      %vm1913 = vcmask 64512
      %v1914 = vsel %vm1913, %v1908, 0.0
      %v1915 = vsel %vm1913, %v1909, 0.0
      %v1916 = vadd.f32 %v1914, %v1915
      %v1917 = vsel %vm1913, %v1910, 0.0
      %v1918 = vadd.f32 %v1916, %v1917
      %v1919 = vsel %vm1913, %v1911, 0.0
      %v1920 = vadd.f32 %v1918, %v1919
      %v1921 = vsel %vm1901, %v1912, 0.0
      %v1922 = vadd.f32 %v1920, %v1921
      %v1923 = vrot.slane %v1922, 4
      %v1924 = vadd.f32 %v1922, %v1923
      %v1925 = vrot.slane %v1924, 2
      %v1926 = vadd.f32 %v1924, %v1925
      %v1927 = vrot.slane %v1926, 1
      %v1928 = vadd.f32 %v1926, %v1927
      %v1929 = vmul.f32 %v1908, %v1908
      %v1930 = vmul.f32 %v1909, %v1909
      %v1931 = vmul.f32 %v1910, %v1910
      %v1932 = vmul.f32 %v1911, %v1911
      %v1933 = vmul.f32 %v1912, %v1912
      %v1934 = vsel %vm1913, %v1929, 0.0
      %v1935 = vsel %vm1913, %v1930, 0.0
      %v1936 = vadd.f32 %v1934, %v1935
      %v1937 = vsel %vm1913, %v1931, 0.0
      %v1938 = vadd.f32 %v1936, %v1937
      %v1939 = vsel %vm1913, %v1932, 0.0
      %v1940 = vadd.f32 %v1938, %v1939
      %v1941 = vsel %vm1901, %v1933, 0.0
      %v1942 = vadd.f32 %v1940, %v1941
      %v1943 = vrot.slane %v1942, 4
      %v1944 = vadd.f32 %v1942, %v1943
      %v1945 = vrot.slane %v1944, 2
      %v1946 = vadd.f32 %v1944, %v1945
      %v1947 = vrot.slane %v1946, 1
      %v1948 = vadd.f32 %v1946, %v1947
      %vm1949 = vcmask 1040384
      %v1950 = vsel %vm1949, %v1928, %v1948
      %1951 = vst.msk [vmem:[%s262] sm:$0x3] %vm1906, %v1950
      %p1952 = scmp.lt.s32.totalorder %s18, 1
      %s1953 = scalar_select %p1952, %s18, 1
      %s1954 = smul.addr %s1953, 5
      %s1955 = smul.addr %s1954, 4
      %s1956 = scalar_lea.vmem %s5, %s1955
      %p1957 = scmp.lt.s32.totalorder %s18, 1
      %s1958 = scalar_select %p1957, %s18, 1
      %s1959 = smul.addr %s1958, 2
      %s1960 = scalar_lea.vmem %s6, %s1959
      // Predicated region
      $region45: #{densenet_forward.11} parent=39 // pred_check
        %p1961 = pneg %p146
      $region46: #{densenet_forward.11} parent=39 // pred_check_branch
        %1963 = sbr.rel (%p1961) target = $region48
      $region47: #{densenet_forward.11} parent=39 // pred_region
        _
      $region48: #{densenet_forward.11} parent=39 // pred_fallthru
        _
      // Predicated region
      $region49: #{densenet_forward.11} parent=39 // pred_check
        %p1964 = pneg %p172
      $region50: #{densenet_forward.11} parent=39 // pred_check_branch
        %1966 = sbr.rel (%p1964) target = $region52
      $region51: #{densenet_forward.11} parent=39 // pred_region
        _
      $region52: #{densenet_forward.11} parent=39 // pred_fallthru
        _
    $region40: #{densenet_forward.11} parent=5 // pred_fallthru
      _
    %p1967 = scmp.le.s32.totalorder 2, %s13
    // Predicated region
    $region53: #{densenet_forward.11} parent=5 // pred_check
      %p1968 = pneg %p1967
    $region54: #{densenet_forward.11} parent=5 // pred_check_branch
      %1970 = sbr.rel (%p1968) target = $region56
    $region55: #{densenet_forward.11} parent=5 // pred_region
      %s1971 = ssub.s32 %s13, 2
      // Predicated region
      $region57: #{densenet_forward.11} parent=55 // pred_check
        %p1972 = pneg %p152
      $region58: #{densenet_forward.11} parent=55 // pred_check_branch
        %1974 = sbr.rel (%p1972) target = $region60
      $region59: #{densenet_forward.11} parent=55 // pred_region
        %p1975 = scmp.lt.s32.totalorder %s19, 1
        %s1976 = scalar_select %p1975, %s19, 1
        %s1977 = smul.addr %s1976, 5
        %s1978 = smul.addr %s1977, 4
        %s1979 = scalar_lea.vmem %s5, %s1978
      $region60: #{densenet_forward.11} parent=55 // pred_fallthru
        _
      // Predicated region
      $region61: #{densenet_forward.11} parent=55 // pred_check
        %p1980 = pneg %p178
      $region62: #{densenet_forward.11} parent=55 // pred_check_branch
        %1982 = sbr.rel (%p1980) target = $region64
      $region63: #{densenet_forward.11} parent=55 // pred_region
        %p1983 = scmp.lt.s32.totalorder %s19, 1
        %s1984 = scalar_select %p1983, %s19, 1
        %s1985 = smul.addr %s1984, 2
        %s1986 = scalar_lea.vmem %s6, %s1985
      $region64: #{densenet_forward.11} parent=55 // pred_fallthru
        _
    $region56: #{densenet_forward.11} parent=5 // pred_fallthru
      _
  $region6: #{densenet_forward.11} parent=0 // loop_footer
    %s17 = sadd.s32 1, %s13
  $region7: #{densenet_forward.11} parent=0 // loop_footer_branch
    %12 = sbr.rel target = $region3
  $region8: #{densenet_forward.11} parent=0 // loop_exit
    _

// kernel: densenet_forward.12
$region0: #{densenet_forward.12}
  #allocation0 [shape = 'u32[]', space=smem, size = 0x4, offset = 0x4, fixed_abs, tag = 'smem constant byte address 0x4 - core index']
  #allocation1 [shape = 'u32[144,128]{1,0:T(1,128)}', space=vmem, size = 0x12000, scoped, tag = 'internal scratch']
  #allocation2 [shape = 'bf16[51,72]{1,0:T(8,128)(2,1)}', space=vmem, size = 0x3800, scoped, tag = 'scratch operand']
  %s0 = inlined_call_operand.vmem [shape: bf16[2,36,72], index: 0, kind: input, shape index: {}]
  %s1 = inlined_call_operand.vmem [shape: bf16[9,72,8], index: 1, kind: input, shape index: {}]
  %s2 = inlined_call_operand.vmem [shape: f32[1,72], index: 2, kind: input, shape index: {}]
  %s3 = inlined_call_operand.vmem [shape: f32[1,72], index: 3, kind: input, shape index: {}]
  %s4 = inlined_call_operand.vmem [shape: f32[9,36,1], index: 4, kind: input, shape index: {}]
  %s5 = inlined_call_operand.vmem [shape: bf16[2,36,8], index: 5, kind: output, shape index: {0}]
  %s6 = inlined_call_operand.vmem [shape: f32[2,2,8], index: 6, kind: output, shape index: {1}]
  %7 = xla_tuple %s5, %s6
  %s8 = sld [smem:[#allocation0]]
  $region65: #{densenet_forward.12} parent=0
    _
  %s10 = ssub.s32 1, %s8
  %s11 = scalar_select 0, %s10, %s8
  loop: start=0, step=1, limit=4
  $region2: #{densenet_forward.12} parent=0 // loop_pre_header
    _
  $region3: #{densenet_forward.12} parent=0 // loop_header
    %s13 = sphi 0, %s17
    %p14 = scmp.ge.s32.totalorder %s13, 4
    %s23 = sphi 0, %s25
    %s26 = sphi 0, %s23
    %s27 = sphi 0, %s26
    %s43 = sphi 0, %s27
    %s47 = sphi 0, %s47
    %s49 = sphi 0, %s47
    %s50 = sphi 0, %s49
    %s64 = sphi 0, %s50
    %s68 = sphi 0, %s68
    %s70 = sphi 0, %s68
    %s71 = sphi 0, %s70
    %s85 = sphi 0, %s71
    %s89 = sphi 0, %s89
    %s91 = sphi 0, %s89
    %s92 = sphi 0, %s91
    %s106 = sphi 0, %s92
    %s110 = sphi 0, %s110
    %s112 = sphi 0, %s110
    %s113 = sphi 0, %s112
    %s127 = sphi 0, %s113
    %s133 = sphi 0, %s135
    %s136 = sphi 0, %s133
    %s137 = sphi 0, %s136
    %s153 = sphi 0, %s137
    %s159 = sphi 0, %s161
    %s162 = sphi 0, %s159
    %s163 = sphi 0, %s162
    %s179 = sphi 0, %s163
  $region4: #{densenet_forward.12} parent=0 // loop_header_branch
    %16 = sbr.rel (%p14) target = $region8
  $region5: #{densenet_forward.12} parent=0 // loop_body
    %s18 = ssub.s32 %s13, 1
    %s19 = ssub.s32 %s13, 2
    %s20 = sadd.s32 %s13, 1
    %s21 = ssub.s32 %s13, %s20
    %p22 = scmp.eq.s32.totalorder %s21, 0
    %s24 = sadd.s32 %s23, 1
    %s25 = scalar_select %p22, %s23, %s24
    %p28 = pneg %p22
    %p29 = scmp.eq.s32.totalorder %s13, 1
    %p30 = por %p28, %p29
    %p31 = scmp.ne.s32.totalorder %s23, %s26
    %p32 = scmp.eq.s32.totalorder %s13, 0
    %p33 = por %p31, %p32
    %p34 = scmp.ne.s32.totalorder %s23, %s26
    %p35 = scmp.eq.s32.totalorder %s18, 1
    %p36 = por %p34, %p35
    %p37 = scmp.ne.s32.totalorder %s26, %s27
    %p38 = scmp.eq.s32.totalorder %s18, 0
    %p39 = por %p37, %p38
    %p40 = scmp.ne.s32.totalorder %s26, %s27
    %p41 = scmp.eq.s32.totalorder %s19, 1
    %p42 = por %p40, %p41
    %p44 = scmp.ne.s32.totalorder %s27, %s43
    %p45 = scmp.eq.s32.totalorder %s19, 0
    %p46 = por %p44, %p45
    %s48 = sadd.s32 %s47, 1
    %p51 = scmp.eq.s32.totalorder %s13, 1
    %p52 = scmp.ne.s32.totalorder %s47, %s49
    %p53 = scmp.eq.s32.totalorder %s13, 0
    %p54 = por %p52, %p53
    %p55 = scmp.ne.s32.totalorder %s47, %s49
    %p56 = scmp.eq.s32.totalorder %s18, 1
    %p57 = por %p55, %p56
    %p58 = scmp.ne.s32.totalorder %s49, %s50
    %p59 = scmp.eq.s32.totalorder %s18, 0
    %p60 = por %p58, %p59
    %p61 = scmp.ne.s32.totalorder %s49, %s50
    %p62 = scmp.eq.s32.totalorder %s19, 1
    %p63 = por %p61, %p62
    %p65 = scmp.ne.s32.totalorder %s50, %s64
    %p66 = scmp.eq.s32.totalorder %s19, 0
    %p67 = por %p65, %p66
    %s69 = sadd.s32 %s68, 1
    %p72 = scmp.eq.s32.totalorder %s13, 1
    %p73 = scmp.ne.s32.totalorder %s68, %s70
    %p74 = scmp.eq.s32.totalorder %s13, 0
    %p75 = por %p73, %p74
    %p76 = scmp.ne.s32.totalorder %s68, %s70
    %p77 = scmp.eq.s32.totalorder %s18, 1
    %p78 = por %p76, %p77
    %p79 = scmp.ne.s32.totalorder %s70, %s71
    %p80 = scmp.eq.s32.totalorder %s18, 0
    %p81 = por %p79, %p80
    %p82 = scmp.ne.s32.totalorder %s70, %s71
    %p83 = scmp.eq.s32.totalorder %s19, 1
    %p84 = por %p82, %p83
    %p86 = scmp.ne.s32.totalorder %s71, %s85
    %p87 = scmp.eq.s32.totalorder %s19, 0
    %p88 = por %p86, %p87
    %s90 = sadd.s32 %s89, 1
    %p93 = scmp.eq.s32.totalorder %s13, 1
    %p94 = scmp.ne.s32.totalorder %s89, %s91
    %p95 = scmp.eq.s32.totalorder %s13, 0
    %p96 = por %p94, %p95
    %p97 = scmp.ne.s32.totalorder %s89, %s91
    %p98 = scmp.eq.s32.totalorder %s18, 1
    %p99 = por %p97, %p98
    %p100 = scmp.ne.s32.totalorder %s91, %s92
    %p101 = scmp.eq.s32.totalorder %s18, 0
    %p102 = por %p100, %p101
    %p103 = scmp.ne.s32.totalorder %s91, %s92
    %p104 = scmp.eq.s32.totalorder %s19, 1
    %p105 = por %p103, %p104
    %p107 = scmp.ne.s32.totalorder %s92, %s106
    %p108 = scmp.eq.s32.totalorder %s19, 0
    %p109 = por %p107, %p108
    %s111 = sadd.s32 %s110, 1
    %p114 = scmp.eq.s32.totalorder %s13, 1
    %p115 = scmp.ne.s32.totalorder %s110, %s112
    %p116 = scmp.eq.s32.totalorder %s13, 0
    %p117 = por %p115, %p116
    %p118 = scmp.ne.s32.totalorder %s110, %s112
    %p119 = scmp.eq.s32.totalorder %s18, 1
    %p120 = por %p118, %p119
    %p121 = scmp.ne.s32.totalorder %s112, %s113
    %p122 = scmp.eq.s32.totalorder %s18, 0
    %p123 = por %p121, %p122
    %p124 = scmp.ne.s32.totalorder %s112, %s113
    %p125 = scmp.eq.s32.totalorder %s19, 1
    %p126 = por %p124, %p125
    %p128 = scmp.ne.s32.totalorder %s113, %s127
    %p129 = scmp.eq.s32.totalorder %s19, 0
    %p130 = por %p128, %p129
    %s131 = ssub.s32 %s13, %s20
    %p132 = scmp.eq.s32.totalorder %s131, 0
    %s134 = sadd.s32 %s133, 1
    %s135 = scalar_select %p132, %s133, %s134
    %p138 = pneg %p132
    %p139 = scmp.eq.s32.totalorder %s13, 1
    %p140 = por %p138, %p139
    %p141 = scmp.ne.s32.totalorder %s133, %s136
    %p142 = scmp.eq.s32.totalorder %s13, 0
    %p143 = por %p141, %p142
    %p144 = scmp.ne.s32.totalorder %s133, %s136
    %p145 = scmp.eq.s32.totalorder %s18, 1
    %p146 = por %p144, %p145
    %p147 = scmp.ne.s32.totalorder %s136, %s137
    %p148 = scmp.eq.s32.totalorder %s18, 0
    %p149 = por %p147, %p148
    %p150 = scmp.ne.s32.totalorder %s136, %s137
    %p151 = scmp.eq.s32.totalorder %s19, 1
    %p152 = por %p150, %p151
    %p154 = scmp.ne.s32.totalorder %s137, %s153
    %p155 = scmp.eq.s32.totalorder %s19, 0
    %p156 = por %p154, %p155
    %s157 = ssub.s32 %s13, %s20
    %p158 = scmp.eq.s32.totalorder %s157, 0
    %s160 = sadd.s32 %s159, 1
    %s161 = scalar_select %p158, %s159, %s160
    %p164 = pneg %p158
    %p165 = scmp.eq.s32.totalorder %s13, 1
    %p166 = por %p164, %p165
    %p167 = scmp.ne.s32.totalorder %s159, %s162
    %p168 = scmp.eq.s32.totalorder %s13, 0
    %p169 = por %p167, %p168
    %p170 = scmp.ne.s32.totalorder %s159, %s162
    %p171 = scmp.eq.s32.totalorder %s18, 1
    %p172 = por %p170, %p171
    %p173 = scmp.ne.s32.totalorder %s162, %s163
    %p174 = scmp.eq.s32.totalorder %s18, 0
    %p175 = por %p173, %p174
    %p176 = scmp.ne.s32.totalorder %s162, %s163
    %p177 = scmp.eq.s32.totalorder %s19, 1
    %p178 = por %p176, %p177
    %p180 = scmp.ne.s32.totalorder %s163, %s179
    %p181 = scmp.eq.s32.totalorder %s19, 0
    %p182 = por %p180, %p181
    %p183 = scmp.le.s32.totalorder 1, %s13
    %p184 = scmp.lt.s32.totalorder %s13, 3
    %p185 = pnand %p183, %p184
    %p186 = pneg %p185
    // Predicated region
    $region9: #{densenet_forward.12} parent=5 // pred_check
      _
    $region10: #{densenet_forward.12} parent=5 // pred_check_branch
      %188 = sbr.rel (%p185) target = $region12
    $region11: #{densenet_forward.12} parent=5 // pred_region
      %s189 = ssub.s32 %s13, 1
      // Predicated region
      $region13: #{densenet_forward.12} parent=11 // pred_check
        %p190 = pneg %p60
      $region14: #{densenet_forward.12} parent=11 // pred_check_branch
        %192 = sbr.rel (%p190) target = $region16
      $region15: #{densenet_forward.12} parent=11 // pred_region
        _
      $region16: #{densenet_forward.12} parent=11 // pred_fallthru
        _
      // Predicated region
      $region17: #{densenet_forward.12} parent=11 // pred_check
        %p193 = pneg %p81
      $region18: #{densenet_forward.12} parent=11 // pred_check_branch
        %195 = sbr.rel (%p193) target = $region20
      $region19: #{densenet_forward.12} parent=11 // pred_region
        _
      $region20: #{densenet_forward.12} parent=11 // pred_fallthru
        _
      // Predicated region
      $region21: #{densenet_forward.12} parent=11 // pred_check
        %p196 = pneg %p102
      $region22: #{densenet_forward.12} parent=11 // pred_check_branch
        %198 = sbr.rel (%p196) target = $region24
      $region23: #{densenet_forward.12} parent=11 // pred_region
        _
      $region24: #{densenet_forward.12} parent=11 // pred_fallthru
        _
      // Predicated region
      $region25: #{densenet_forward.12} parent=11 // pred_check
        %p199 = pneg %p123
      $region26: #{densenet_forward.12} parent=11 // pred_check_branch
        %201 = sbr.rel (%p199) target = $region28
      $region27: #{densenet_forward.12} parent=11 // pred_region
        _
      $region28: #{densenet_forward.12} parent=11 // pred_fallthru
        _
    $region12: #{densenet_forward.12} parent=5 // pred_fallthru
      _
    %p202 = scmp.lt.s32.totalorder %s13, 2
    // Predicated region
    $region29: #{densenet_forward.12} parent=5 // pred_check
      %p203 = pneg %p202
    $region30: #{densenet_forward.12} parent=5 // pred_check_branch
      %205 = sbr.rel (%p203) target = $region32
    $region31: #{densenet_forward.12} parent=5 // pred_region
      // Predicated region
      $region33: #{densenet_forward.12} parent=31 // pred_check
        %p206 = pneg %p33
      $region34: #{densenet_forward.12} parent=31 // pred_check_branch
        %208 = sbr.rel (%p206) target = $region36
      $region35: #{densenet_forward.12} parent=31 // pred_region
        %p209 = scmp.lt.s32.totalorder %s13, 1
        %s210 = scalar_select %p209, %s13, 1
        %s211 = smul.addr %s210, 5
        %s212 = smul.addr %s211, 4
        %s213 = scalar_lea.vmem %s0, %s212
      $region36: #{densenet_forward.12} parent=31 // pred_fallthru
        _
    $region32: #{densenet_forward.12} parent=5 // pred_fallthru
      _
    %p214 = scmp.le.s32.totalorder 1, %s13
    %p215 = scmp.lt.s32.totalorder %s13, 3
    %p216 = pnand %p214, %p215
    %p217 = pneg %p216
    // Predicated region
    $region37: #{densenet_forward.12} parent=5 // pred_check
      _
    $region38: #{densenet_forward.12} parent=5 // pred_check_branch
      %219 = sbr.rel (%p216) target = $region40
    $region39: #{densenet_forward.12} parent=5 // pred_region
      %s220 = ssub.s32 %s13, 1
      %p221 = scmp.lt.s32.totalorder %s18, 1
      %s222 = scalar_select %p221, %s18, 1
      %s223 = smul.addr %s222, 5
      %s224 = smul.addr %s223, 4
      %s225 = scalar_lea.vmem %s0, %s224
      %p226 = pneg %p39
      %p227 = pneg %p36
      %p228 = pneg %p60
      %p229 = pneg %p57
      %p230 = pneg %p81
      %p231 = pneg %p78
      %p232 = pneg %p102
      %p233 = pneg %p99
      %p234 = pneg %p123
      %p235 = pneg %p120
      %p236 = pneg %p149
      %p237 = pneg %p146
      %p238 = scmp.lt.s32.totalorder %s18, 1
      %s239 = scalar_select %p238, %s18, 1
      %s240 = smul.addr %s239, 5
      %s241 = smul.addr %s240, 4
      %s242 = scalar_lea.vmem %s5, %s241
      %p243 = pneg %p175
      %p244 = pneg %p172
      %p245 = scmp.lt.s32.totalorder %s18, 1
      %s246 = scalar_select %p245, %s18, 1
      %s247 = smul.addr %s246, 2
      %s248 = scalar_lea.vmem %s6, %s247
      %p249 = scmp.lt.s32.totalorder %s18, 1
      %s250 = scalar_select %p249, %s18, 1
      %s251 = smul.addr %s250, 5
      %s252 = smul.addr %s251, 4
      %s253 = scalar_lea.vmem %s0, %s252
      %p254 = scmp.lt.s32.totalorder %s18, 1
      %s255 = scalar_select %p254, %s18, 1
      %s256 = smul.addr %s255, 5
      %s257 = smul.addr %s256, 4
      %s258 = scalar_lea.vmem %s5, %s257
      %p259 = scmp.lt.s32.totalorder %s18, 1
      %s260 = scalar_select %p259, %s18, 1
      %s261 = smul.addr %s260, 2
      %s262 = scalar_lea.vmem %s6, %s261
      %p264 = scmp.eq.s32.totalorder %s18, 0
      // Predicated region
      $region41: #{densenet_forward.12} parent=39 // pred_check
        %p265 = pneg %p264
      $region42: #{densenet_forward.12} parent=39 // pred_check_branch
        %267 = sbr.rel (%p265) target = $region44
      $region43: #{densenet_forward.12} parent=39 // pred_region
        %vm268 = vcmask 584704
        %269 = vst.msk [vmem:[#allocation2] sm:$0xf] %vm268, 0
        %270 = vst.msk [vmem:[#allocation2 + $0x4] sm:$0xf] %vm268, 0
        %271 = vst.msk [vmem:[#allocation2 + $0x8] sm:$0xf] %vm268, 0
        %272 = vst.msk [vmem:[#allocation2 + $0xc] sm:$0xf] %vm268, 0
        %273 = vst.msk [vmem:[#allocation2 + $0x10] sm:$0xf] %vm268, 0
        %274 = vst.msk [vmem:[#allocation2 + $0x14] sm:$0xf] %vm268, 0
        %vm275 = vcmask 582656
        %vm276 = vsmask.f32 1280
        %vm277 = vmand %vm275, %vm276
        %v278 = vld [vmem:[#allocation2 + $0x18] sm:$0x3]
        %v279 = vsel %vm277, 0, %v278
        %280 = vst [vmem:[#allocation2 + $0x18] sm:$0x3] %v279
      $region44: #{densenet_forward.12} parent=39 // pred_fallthru
        _
      %v281 = vld [vmem:[%s253] sm:$0xf]
      %v282 = vld [vmem:[%s253 + $0x4] sm:$0xf]
      %v283 = vld [vmem:[%s253 + $0x8] sm:$0xf]
      %v284 = vld [vmem:[%s253 + $0xc] sm:$0xf]
      %v285 = vld [vmem:[%s253 + $0x10] sm:$0x3]
      %v286 = vunpack.c.l.bf16 %v281
      %v287 = vunpack.c.l.bf16 %v282
      %v288 = vunpack.c.l.bf16 %v283
      %v289 = vunpack.c.l.bf16 %v284
      %v290 = vunpack.c.l.bf16 %v285
      %v291 = vld [vmem:[%s2] sm:$0x1]
      %v293 = vlaneseq
      %v294 = vshrl.u32 %v293, 7
      %v295 = vsub.s32 0, %v294
      %v296 = vrot.slane %v291, %v295
      %v298 = vmul.f32 %v286, %v296
      %v299 = vmul.f32 %v287, %v296
      %v300 = vmul.f32 %v288, %v296
      %v301 = vmul.f32 %v289, %v296
      %v302 = vmul.f32 %v290, %v296
      %v303 = vld [vmem:[%s3] sm:$0x1]
      %v305 = vlaneseq
      %v306 = vshrl.u32 %v305, 7
      %v307 = vsub.s32 0, %v306
      %v308 = vrot.slane %v303, %v307
      %v310 = vadd.f32 %v298, %v308
      %v311 = vadd.f32 %v299, %v308
      %v312 = vadd.f32 %v300, %v308
      %v313 = vadd.f32 %v301, %v308
      %v314 = vadd.f32 %v302, %v308
      %v315 = vmax.f32 %v310, 0.0
      %v316 = vmax.f32 %v311, 0.0
      %v317 = vmax.f32 %v312, 0.0
      %v318 = vmax.f32 %v313, 0.0
      %v319 = vmax.f32 %v314, 0.0
      %v320 = vpack.c.bf16 %v316, %v315
      %v321 = vpack.c.bf16 %v318, %v317
      %v322 = vpack.c.bf16 %v319, %v319
      %v326 = vunpack.c.l.b16 %v320
      %v327 = vunpack.c.h.b16 %v320
      %v328 = vunpack.c.l.b16 %v321
      %v329 = vunpack.c.h.b16 %v321
      %v330 = vunpack.c.l.b16 %v322
      %v331 = vpack.c.b16 %v326, %v326
      %v332 = vpack.c.b16 %v327, %v327
      %v333 = vpack.c.b16 %v328, %v328
      %v334 = vpack.c.b16 %v329, %v329
      %v335 = vpack.c.b16 %v330, %v330
      %vm341 = vcmask 584704
      %342 = vst.msk [vmem:[#allocation2 + $0x4] sm:$0xf] %vm341, %v331
      %343 = vst.msk [vmem:[#allocation2 + $0x8] sm:$0xf] %vm341, %v332
      %344 = vst.msk [vmem:[#allocation2 + $0xc] sm:$0xf] %vm341, %v333
      %345 = vst.msk [vmem:[#allocation2 + $0x10] sm:$0xf] %vm341, %v334
      %vm346 = vcmask 582656
      %347 = vst.msk [vmem:[#allocation2 + $0x14] sm:$0x3] %vm346, %v335
      %v348 = vld [vmem:[#allocation2] sm:$0xf]
      %v349 = vld [vmem:[#allocation2 + $0x4] sm:$0xf]
      %v350 = vld [vmem:[#allocation2 + $0x8] sm:$0xf]
      %v351 = vld [vmem:[#allocation2 + $0xc] sm:$0xf]
      %v352 = vld [vmem:[#allocation2 + $0x10] sm:$0x7]
      %v353 = vld [vmem:[%s1] sm:$0xf]
      %v354 = vld [vmem:[%s1 + $0x4] sm:$0xf]
      %v355 = vld [vmem:[%s1 + $0x8] sm:$0xf]
      %v356 = vld [vmem:[%s1 + $0xc] sm:$0xf]
      %v357 = vld [vmem:[%s1 + $0x10] sm:$0xf]
      %v358 = vld [vmem:[%s1 + $0x14] sm:$0xf]
      %v359 = vld [vmem:[%s1 + $0x18] sm:$0xf]
      %v360 = vld [vmem:[%s1 + $0x1c] sm:$0xf]
      %v361 = vld [vmem:[%s1 + $0x20] sm:$0xf]
      %v367 = vunpack.c.l.b16 %v348
      %v368 = vunpack.c.l.b16 %v349
      %v369 = vunpack.c.l.b16 %v350
      %v370 = vunpack.c.l.b16 %v351
      %v371 = vunpack.c.l.b16 %v352
      %v372 = vpack.c.b16 %v368, %v367
      %v373 = vpack.c.b16 %v370, %v369
      %v374 = vpack.c.b16 %v371, %v371
      %vm375 = vsmask.f32 7424
      %v377 = vshrl.u32 %v372, 16
      %v379 = vshll.u32 %v372, 16
      %v381 = vrot.slane %v379, 1
      %v382 = vor.u32 %v377, %v381
      %v384 = vshll.u32 %v373, 16
      %v386 = vrot.slane %v384, 1
      %v387 = vsel %vm375, %v382, %v386
      %v388 = vshrl.u32 %v373, 16
      %v390 = vor.u32 %v388, %v386
      %v392 = vshll.u32 %v374, 16
      %v394 = vrot.slane %v392, 1
      %v395 = vsel %vm375, %v390, %v394
      %v396 = vshrl.u32 %v374, 16
      %v398 = vor.u32 %v396, %v394
      %v408 = vunpack.c.l.b16 %v353
      %v409 = vunpack.c.l.b16 %v354
      %v410 = vunpack.c.l.b16 %v355
      %v411 = vunpack.c.l.b16 %v356
      %v412 = vunpack.c.l.b16 %v357
      %v413 = vunpack.c.l.b16 %v358
      %v414 = vunpack.c.l.b16 %v359
      %v415 = vunpack.c.l.b16 %v360
      %v416 = vunpack.c.l.b16 %v361
      %v417 = vpack.c.b16 %v409, %v408
      %v418 = vpack.c.b16 %v411, %v410
      %v419 = vpack.c.b16 %v413, %v412
      %v420 = vpack.c.b16 %v415, %v414
      %v421 = vpack.c.b16 %v416, %v416
      %vm426 = vcmask 588800
      %v428 = vsel %vm426, %v387, 0
      %v431 = vsel %vm426, %v395, 0
      %v434 = vsel %vm426, %v398, 0
      %vm436 = vcmask 1043456
      %v438 = vsel %vm436, %v421, 0
      %440 = vmatprep.subr.bf16.mxu0 0
      %441 = vmatpush1.bf16.msra.mxu0 %v417
      %442 = vmatprep.subr.bf16.mxu0 0
      %443 = vmatpush1.bf16.msra.mxu0 %v418
      %444 = vmatprep.subr.bf16.mxu0 0
      %445 = vmatpush1.bf16.msra.mxu0 %v419
      %446 = vmatprep.subr.bf16.mxu0 0
      %447 = vmatpush1.bf16.msra.mxu0 %v420
      %448 = vmatprep.subr.bf16.mxu0 0
      %449 = vmatpush1.bf16.msra.mxu0 %v438
      %450 = vmatprep.subr.bf16.mxu0 0
      %451 = vmatpush1.bf16.msra.mxu0 0
      %452 = vmatprep.subr.bf16.mxu0 0
      %453 = vmatpush1.bf16.msra.mxu0 0
      %454 = vmatprep.subr.bf16.mxu0 0
      %455 = vmatpush1.bf16.msra.mxu0 0
      %456 = vmatprep.subr.bf16.mxu0 0
      %457 = vmatpush1.bf16.msra.mxu0 0
      %458 = vmatprep.subr.bf16.mxu0 0
      %459 = vmatpush1.bf16.msra.mxu0 0
      %460 = vmatprep.subr.bf16.mxu0 0
      %461 = vmatpush1.bf16.msra.mxu0 0
      %462 = vmatprep.subr.bf16.mxu0 0
      %463 = vmatpush1.bf16.msra.mxu0 0
      %464 = vmatprep.subr.bf16.mxu0 0
      %465 = vmatpush1.bf16.msra.mxu0 0
      %466 = vmatprep.subr.bf16.mxu0 0
      %467 = vmatpush1.bf16.msra.mxu0 0
      %468 = vmatprep.subr.bf16.mxu0 0
      %469 = vmatpush1.bf16.msra.mxu0 0
      %470 = vmatprep.subr.bf16.mxu0 0
      %471 = vmatpush1.bf16.msra.mxu0 0
      %472 = vmatprep.mubr.bf16.mxu0 0
      %473 = vmatmul.mubr.bf16.gmra.mrb[0].mxu0 %v428
      %v474 = vpop.f32.mrb[0].mxu0
      %v475 = vadd.f32 0.0, %v474
      %v476 = vpop.f32.mrb[0].mxu0
      %v477 = vpop.f32.mrb[0].mxu0
      %v478 = vadd.f32 0.0, %v477
      %v479 = vpop.f32.mrb[0].mxu0
      %480 = vmatprep.mubr.bf16.mxu0 0
      %481 = vmatmul.mubr.bf16.gmra.mrb[0].mxu0 %v431
      %v482 = vpop.f32.mrb[0].mxu0
      %v483 = vadd.f32 0.0, %v482
      %v484 = vpop.f32.mrb[0].mxu0
      %v485 = vpop.f32.mrb[0].mxu0
      %v486 = vadd.f32 0.0, %v485
      %v487 = vpop.f32.mrb[0].mxu0
      %488 = vmatprep.mubr.bf16.mxu0 0
      %489 = vmatmul.mubr.bf16.gmra.mrb[0].mxu0 %v434
      %v490 = vpop.f32.mrb[0].mxu0
      %v491 = vadd.f32 0.0, %v490
      %v492 = vpop.f32.mrb[0].mxu0
      %v493 = vpop.f32.mrb[0].mxu0
      %v494 = vpop.f32.mrb[0].mxu0
      %495 = vdwg.mxu0
      %v496 = vld [vmem:[%s4] sm:$0xff]
      %v497 = vld [vmem:[%s4 + $0x8] sm:$0xff]
      %v498 = vld [vmem:[%s4 + $0x10] sm:$0xff]
      %v499 = vld [vmem:[%s4 + $0x18] sm:$0xff]
      %v500 = vld [vmem:[%s4 + $0x20] sm:$0xf]
      %vm501 = vcmp.gt.f32.partialorder %v496, 0.5
      %vm502 = vcmp.gt.f32.partialorder %v497, 0.5
      %vm503 = vcmp.gt.f32.partialorder %v498, 0.5
      %vm504 = vcmp.gt.f32.partialorder %v499, 0.5
      %vm505 = vcmp.gt.f32.partialorder %v500, 0.5
      %v506 = vsel %vm501, 1, 0
      %v507 = vsel %vm502, 1, 0
      %v508 = vsel %vm503, 1, 0
      %v509 = vsel %vm504, 1, 0
      %v510 = vsel %vm505, 1, 0
      %511 = vset.pattern.permute.xlu0 0
      %512 = vperm.xlu0 %511, %v506
      %v513 = vpop.permute.xlu0 %512
      %514 = vset.pattern.permute.xlu0 0
      %515 = vperm.xlu0 %514, %v507
      %v516 = vpop.permute.xlu0 %515
      %517 = vset.pattern.permute.xlu0 0
      %518 = vperm.xlu0 %517, %v508
      %v519 = vpop.permute.xlu0 %518
      %520 = vset.pattern.permute.xlu0 0
      %521 = vperm.xlu0 %520, %v509
      %v522 = vpop.permute.xlu0 %521
      %523 = vset.pattern.permute.xlu0 0
      %524 = vperm.xlu0 %523, %v510
      %v525 = vpop.permute.xlu0 %524
      %vm526 = vcmp.eq.s32.totalorder %v513, 1
      %vm527 = vcmp.eq.s32.totalorder %v516, 1
      %vm528 = vcmp.eq.s32.totalorder %v519, 1
      %vm529 = vcmp.eq.s32.totalorder %v522, 1
      %vm530 = vcmp.eq.s32.totalorder %v525, 1
      %v531 = vsel %vm526, %v475, 0.0
      %v532 = vsel %vm527, %v478, 0.0
      %v533 = vsel %vm528, %v483, 0.0
      %v534 = vsel %vm529, %v486, 0.0
      %v535 = vsel %vm530, %v491, 0.0
      %v536 = vadd.f32 %v531, 0.0
      %v537 = vadd.f32 %v532, 0.0
      %v538 = vadd.f32 %v533, 0.0
      %v539 = vadd.f32 %v534, 0.0
      %v540 = vadd.f32 %v535, 0.0
      %v541 = vld [vmem:[#allocation2] sm:$0xe]
      %s542 = scalar_lea.vmem %s1, 36
      %v543 = vld [vmem:[%s542] sm:$0xf]
      %v544 = vld [vmem:[%s542 + $0x4] sm:$0xf]
      %v545 = vld [vmem:[%s542 + $0x8] sm:$0xf]
      %v546 = vld [vmem:[%s542 + $0xc] sm:$0xf]
      %v547 = vld [vmem:[%s542 + $0x10] sm:$0xf]
      %v548 = vld [vmem:[%s542 + $0x14] sm:$0xf]
      %v549 = vld [vmem:[%s542 + $0x18] sm:$0xf]
      %v550 = vld [vmem:[%s542 + $0x1c] sm:$0xf]
      %v551 = vld [vmem:[%s542 + $0x20] sm:$0xf]
      %v553 = vunpack.c.l.b16 %v541
      %v554 = vpack.c.b16 %v368, %v553
      %vm555 = vcmask 1046528
      %v556 = vrot.slane %v554, 1
      %v557 = vrot.slane %v373, 1
      %v558 = vsel %vm555, %v556, %v557
      %v559 = vrot.slane %v374, 1
      %v560 = vsel %vm555, %v557, %v559
      %v570 = vunpack.c.l.b16 %v543
      %v571 = vunpack.c.l.b16 %v544
      %v572 = vunpack.c.l.b16 %v545
      %v573 = vunpack.c.l.b16 %v546
      %v574 = vunpack.c.l.b16 %v547
      %v575 = vunpack.c.l.b16 %v548
      %v576 = vunpack.c.l.b16 %v549
      %v577 = vunpack.c.l.b16 %v550
      %v578 = vunpack.c.l.b16 %v551
      %v579 = vpack.c.b16 %v571, %v570
      %v580 = vpack.c.b16 %v573, %v572
      %v581 = vpack.c.b16 %v575, %v574
      %v582 = vpack.c.b16 %v577, %v576
      %v583 = vpack.c.b16 %v578, %v578
      %v589 = vsel %vm426, %v558, 0
      %v592 = vsel %vm426, %v560, 0
      %v595 = vsel %vm426, %v559, 0
      %v598 = vsel %vm436, %v583, 0
      %600 = vmatprep.subr.bf16.mxu0 0
      %601 = vmatpush1.bf16.msra.mxu0 %v579
      %602 = vmatprep.subr.bf16.mxu0 0
      %603 = vmatpush1.bf16.msra.mxu0 %v580
      %604 = vmatprep.subr.bf16.mxu0 0
      %605 = vmatpush1.bf16.msra.mxu0 %v581
      %606 = vmatprep.subr.bf16.mxu0 0
      %607 = vmatpush1.bf16.msra.mxu0 %v582
      %608 = vmatprep.subr.bf16.mxu0 0
      %609 = vmatpush1.bf16.msra.mxu0 %v598
      %610 = vmatprep.subr.bf16.mxu0 0
      %611 = vmatpush1.bf16.msra.mxu0 0
      %612 = vmatprep.subr.bf16.mxu0 0
      %613 = vmatpush1.bf16.msra.mxu0 0
      %614 = vmatprep.subr.bf16.mxu0 0
      %615 = vmatpush1.bf16.msra.mxu0 0
      %616 = vmatprep.subr.bf16.mxu0 0
      %617 = vmatpush1.bf16.msra.mxu0 0
      %618 = vmatprep.subr.bf16.mxu0 0
      %619 = vmatpush1.bf16.msra.mxu0 0
      %620 = vmatprep.subr.bf16.mxu0 0
      %621 = vmatpush1.bf16.msra.mxu0 0
      %622 = vmatprep.subr.bf16.mxu0 0
      %623 = vmatpush1.bf16.msra.mxu0 0
      %624 = vmatprep.subr.bf16.mxu0 0
      %625 = vmatpush1.bf16.msra.mxu0 0
      %626 = vmatprep.subr.bf16.mxu0 0
      %627 = vmatpush1.bf16.msra.mxu0 0
      %628 = vmatprep.subr.bf16.mxu0 0
      %629 = vmatpush1.bf16.msra.mxu0 0
      %630 = vmatprep.subr.bf16.mxu0 0
      %631 = vmatpush1.bf16.msra.mxu0 0
      %632 = vmatprep.mubr.bf16.mxu0 0
      %633 = vmatmul.mubr.bf16.gmra.mrb[0].mxu0 %v589
      %v634 = vpop.f32.mrb[0].mxu0
      %v635 = vadd.f32 0.0, %v634
      %v636 = vpop.f32.mrb[0].mxu0
      %v637 = vpop.f32.mrb[0].mxu0
      %v638 = vadd.f32 0.0, %v637
      %v639 = vpop.f32.mrb[0].mxu0
      %640 = vmatprep.mubr.bf16.mxu0 0
      %641 = vmatmul.mubr.bf16.gmra.mrb[0].mxu0 %v592
      %v642 = vpop.f32.mrb[0].mxu0
      %v643 = vadd.f32 0.0, %v642
      %v644 = vpop.f32.mrb[0].mxu0
      %v645 = vpop.f32.mrb[0].mxu0
      %v646 = vadd.f32 0.0, %v645
      %v647 = vpop.f32.mrb[0].mxu0
      %648 = vmatprep.mubr.bf16.mxu0 0
      %649 = vmatmul.mubr.bf16.gmra.mrb[0].mxu0 %v595
      %v650 = vpop.f32.mrb[0].mxu0
      %v651 = vadd.f32 0.0, %v650
      %v652 = vpop.f32.mrb[0].mxu0
      %v653 = vpop.f32.mrb[0].mxu0
      %v654 = vpop.f32.mrb[0].mxu0
      %655 = vdwg.mxu0
      %s656 = scalar_lea.vmem %s4, 40
      %v657 = vld [vmem:[%s656] sm:$0xff]
      %v658 = vld [vmem:[%s656 + $0x8] sm:$0xff]
      %v659 = vld [vmem:[%s656 + $0x10] sm:$0xff]
      %v660 = vld [vmem:[%s656 + $0x18] sm:$0xff]
      %v661 = vld [vmem:[%s656 + $0x20] sm:$0xf]
      %vm662 = vcmp.gt.f32.partialorder %v657, 0.5
      %vm663 = vcmp.gt.f32.partialorder %v658, 0.5
      %vm664 = vcmp.gt.f32.partialorder %v659, 0.5
      %vm665 = vcmp.gt.f32.partialorder %v660, 0.5
      %vm666 = vcmp.gt.f32.partialorder %v661, 0.5
      %v667 = vsel %vm662, 1, 0
      %v668 = vsel %vm663, 1, 0
      %v669 = vsel %vm664, 1, 0
      %v670 = vsel %vm665, 1, 0
      %v671 = vsel %vm666, 1, 0
      %672 = vset.pattern.permute.xlu0 0
      %673 = vperm.xlu0 %672, %v667
      %v674 = vpop.permute.xlu0 %673
      %675 = vset.pattern.permute.xlu0 0
      %676 = vperm.xlu0 %675, %v668
      %v677 = vpop.permute.xlu0 %676
      %678 = vset.pattern.permute.xlu0 0
      %679 = vperm.xlu0 %678, %v669
      %v680 = vpop.permute.xlu0 %679
      %681 = vset.pattern.permute.xlu0 0
      %682 = vperm.xlu0 %681, %v670
      %v683 = vpop.permute.xlu0 %682
      %684 = vset.pattern.permute.xlu0 0
      %685 = vperm.xlu0 %684, %v671
      %v686 = vpop.permute.xlu0 %685
      %vm687 = vcmp.eq.s32.totalorder %v674, 1
      %vm688 = vcmp.eq.s32.totalorder %v677, 1
      %vm689 = vcmp.eq.s32.totalorder %v680, 1
      %vm690 = vcmp.eq.s32.totalorder %v683, 1
      %vm691 = vcmp.eq.s32.totalorder %v686, 1
      %v692 = vsel %vm687, %v635, 0.0
      %v693 = vsel %vm688, %v638, 0.0
      %v694 = vsel %vm689, %v643, 0.0
      %v695 = vsel %vm690, %v646, 0.0
      %v696 = vsel %vm691, %v651, 0.0
      %v697 = vadd.f32 %v536, %v692
      %v698 = vadd.f32 %v537, %v693
      %v699 = vadd.f32 %v538, %v694
      %v700 = vadd.f32 %v539, %v695
      %v701 = vadd.f32 %v540, %v696
      %v702 = vld [vmem:[#allocation2 + $0x10] sm:$0xf]
      %s703 = scalar_lea.vmem %s1, 72
      %v704 = vld [vmem:[%s703] sm:$0xf]
      %v705 = vld [vmem:[%s703 + $0x4] sm:$0xf]
      %v706 = vld [vmem:[%s703 + $0x8] sm:$0xf]
      %v707 = vld [vmem:[%s703 + $0xc] sm:$0xf]
      %v708 = vld [vmem:[%s703 + $0x10] sm:$0xf]
      %v709 = vld [vmem:[%s703 + $0x14] sm:$0xf]
      %v710 = vld [vmem:[%s703 + $0x18] sm:$0xf]
      %v711 = vld [vmem:[%s703 + $0x1c] sm:$0xf]
      %v712 = vld [vmem:[%s703 + $0x20] sm:$0xf]
      %v714 = vunpack.c.l.b16 %v702
      %v715 = vpack.c.b16 %v714, %v714
      %vm716 = vsmask.f32 6400
      %v718 = vshrl.u32 %v554, 16
      %v720 = vrot.slane %v718, 1
      %v721 = vshll.u32 %v554, 16
      %v723 = vrot.slane %v721, 2
      %v724 = vor.u32 %v720, %v723
      %v725 = vrot.slane %v388, 1
      %v726 = vrot.slane %v384, 2
      %v727 = vor.u32 %v725, %v726
      %v728 = vsel %vm716, %v724, %v727
      %v730 = vshrl.u32 %v715, 16
      %v732 = vrot.slane %v730, 1
      %v733 = vshll.u32 %v715, 16
      %v735 = vrot.slane %v733, 2
      %v736 = vor.u32 %v732, %v735
      %v737 = vsel %vm716, %v727, %v736
      %v747 = vunpack.c.l.b16 %v704
      %v748 = vunpack.c.l.b16 %v705
      %v749 = vunpack.c.l.b16 %v706
      %v750 = vunpack.c.l.b16 %v707
      %v751 = vunpack.c.l.b16 %v708
      %v752 = vunpack.c.l.b16 %v709
      %v753 = vunpack.c.l.b16 %v710
      %v754 = vunpack.c.l.b16 %v711
      %v755 = vunpack.c.l.b16 %v712
      %v756 = vpack.c.b16 %v748, %v747
      %v757 = vpack.c.b16 %v750, %v749
      %v758 = vpack.c.b16 %v752, %v751
      %v759 = vpack.c.b16 %v754, %v753
      %v760 = vpack.c.b16 %v755, %v755
      %v766 = vsel %vm426, %v728, 0
      %v769 = vsel %vm426, %v737, 0
      %v772 = vsel %vm426, %v736, 0
      %v775 = vsel %vm436, %v760, 0
      %777 = vmatprep.subr.bf16.mxu0 0
      %778 = vmatpush1.bf16.msra.mxu0 %v756
      %779 = vmatprep.subr.bf16.mxu0 0
      %780 = vmatpush1.bf16.msra.mxu0 %v757
      %781 = vmatprep.subr.bf16.mxu0 0
      %782 = vmatpush1.bf16.msra.mxu0 %v758
      %783 = vmatprep.subr.bf16.mxu0 0
      %784 = vmatpush1.bf16.msra.mxu0 %v759
      %785 = vmatprep.subr.bf16.mxu0 0
      %786 = vmatpush1.bf16.msra.mxu0 %v775
      %787 = vmatprep.subr.bf16.mxu0 0
      %788 = vmatpush1.bf16.msra.mxu0 0
      %789 = vmatprep.subr.bf16.mxu0 0
      %790 = vmatpush1.bf16.msra.mxu0 0
      %791 = vmatprep.subr.bf16.mxu0 0
      %792 = vmatpush1.bf16.msra.mxu0 0
      %793 = vmatprep.subr.bf16.mxu0 0
      %794 = vmatpush1.bf16.msra.mxu0 0
      %795 = vmatprep.subr.bf16.mxu0 0
      %796 = vmatpush1.bf16.msra.mxu0 0
      %797 = vmatprep.subr.bf16.mxu0 0
      %798 = vmatpush1.bf16.msra.mxu0 0
      %799 = vmatprep.subr.bf16.mxu0 0
      %800 = vmatpush1.bf16.msra.mxu0 0
      %801 = vmatprep.subr.bf16.mxu0 0
      %802 = vmatpush1.bf16.msra.mxu0 0
      %803 = vmatprep.subr.bf16.mxu0 0
      %804 = vmatpush1.bf16.msra.mxu0 0
      %805 = vmatprep.subr.bf16.mxu0 0
      %806 = vmatpush1.bf16.msra.mxu0 0
      %807 = vmatprep.subr.bf16.mxu0 0
      %808 = vmatpush1.bf16.msra.mxu0 0
      %809 = vmatprep.mubr.bf16.mxu0 0
      %810 = vmatmul.mubr.bf16.gmra.mrb[0].mxu0 %v766
      %v811 = vpop.f32.mrb[0].mxu0
      %v812 = vadd.f32 0.0, %v811
      %v813 = vpop.f32.mrb[0].mxu0
      %v814 = vpop.f32.mrb[0].mxu0
      %v815 = vadd.f32 0.0, %v814
      %v816 = vpop.f32.mrb[0].mxu0
      %817 = vmatprep.mubr.bf16.mxu0 0
      %818 = vmatmul.mubr.bf16.gmra.mrb[0].mxu0 %v769
      %v819 = vpop.f32.mrb[0].mxu0
      %v820 = vadd.f32 0.0, %v819
      %v821 = vpop.f32.mrb[0].mxu0
      %v822 = vpop.f32.mrb[0].mxu0
      %v823 = vadd.f32 0.0, %v822
      %v824 = vpop.f32.mrb[0].mxu0
      %825 = vmatprep.mubr.bf16.mxu0 0
      %826 = vmatmul.mubr.bf16.gmra.mrb[0].mxu0 %v772
      %v827 = vpop.f32.mrb[0].mxu0
      %v828 = vadd.f32 0.0, %v827
      %v829 = vpop.f32.mrb[0].mxu0
      %v830 = vpop.f32.mrb[0].mxu0
      %v831 = vpop.f32.mrb[0].mxu0
      %832 = vdwg.mxu0
      %s833 = scalar_lea.vmem %s4, 80
      %v834 = vld [vmem:[%s833] sm:$0xff]
      %v835 = vld [vmem:[%s833 + $0x8] sm:$0xff]
      %v836 = vld [vmem:[%s833 + $0x10] sm:$0xff]
      %v837 = vld [vmem:[%s833 + $0x18] sm:$0xff]
      %v838 = vld [vmem:[%s833 + $0x20] sm:$0xf]
      %vm839 = vcmp.gt.f32.partialorder %v834, 0.5
      %vm840 = vcmp.gt.f32.partialorder %v835, 0.5
      %vm841 = vcmp.gt.f32.partialorder %v836, 0.5
      %vm842 = vcmp.gt.f32.partialorder %v837, 0.5
      %vm843 = vcmp.gt.f32.partialorder %v838, 0.5
      %v844 = vsel %vm839, 1, 0
      %v845 = vsel %vm840, 1, 0
      %v846 = vsel %vm841, 1, 0
      %v847 = vsel %vm842, 1, 0
      %v848 = vsel %vm843, 1, 0
      %849 = vset.pattern.permute.xlu0 0
      %850 = vperm.xlu0 %849, %v844
      %v851 = vpop.permute.xlu0 %850
      %852 = vset.pattern.permute.xlu0 0
      %853 = vperm.xlu0 %852, %v845
      %v854 = vpop.permute.xlu0 %853
      %855 = vset.pattern.permute.xlu0 0
      %856 = vperm.xlu0 %855, %v846
      %v857 = vpop.permute.xlu0 %856
      %858 = vset.pattern.permute.xlu0 0
      %859 = vperm.xlu0 %858, %v847
      %v860 = vpop.permute.xlu0 %859
      %861 = vset.pattern.permute.xlu0 0
      %862 = vperm.xlu0 %861, %v848
      %v863 = vpop.permute.xlu0 %862
      %vm864 = vcmp.eq.s32.totalorder %v851, 1
      %vm865 = vcmp.eq.s32.totalorder %v854, 1
      %vm866 = vcmp.eq.s32.totalorder %v857, 1
      %vm867 = vcmp.eq.s32.totalorder %v860, 1
      %vm868 = vcmp.eq.s32.totalorder %v863, 1
      %v869 = vsel %vm864, %v812, 0.0
      %v870 = vsel %vm865, %v815, 0.0
      %v871 = vsel %vm866, %v820, 0.0
      %v872 = vsel %vm867, %v823, 0.0
      %v873 = vsel %vm868, %v828, 0.0
      %v874 = vadd.f32 %v697, %v869
      %v875 = vadd.f32 %v698, %v870
      %v876 = vadd.f32 %v699, %v871
      %v877 = vadd.f32 %v700, %v872
      %v878 = vadd.f32 %v701, %v873
      %v879 = vld [vmem:[#allocation2] sm:$0x8]
      %v880 = vld [vmem:[#allocation2 + $0x4] sm:$0xf]
      %v881 = vld [vmem:[#allocation2 + $0x8] sm:$0xf]
      %v882 = vld [vmem:[#allocation2 + $0xc] sm:$0xf]
      %v883 = vld [vmem:[#allocation2 + $0x10] sm:$0xf]
      %v884 = vld [vmem:[#allocation2 + $0x14] sm:$0x3]
      %s885 = scalar_lea.vmem %s1, 108
      %v886 = vld [vmem:[%s885] sm:$0xf]
      %v887 = vld [vmem:[%s885 + $0x4] sm:$0xf]
      %v888 = vld [vmem:[%s885 + $0x8] sm:$0xf]
      %v889 = vld [vmem:[%s885 + $0xc] sm:$0xf]
      %v890 = vld [vmem:[%s885 + $0x10] sm:$0xf]
      %v891 = vld [vmem:[%s885 + $0x14] sm:$0xf]
      %v892 = vld [vmem:[%s885 + $0x18] sm:$0xf]
      %v893 = vld [vmem:[%s885 + $0x1c] sm:$0xf]
      %v894 = vld [vmem:[%s885 + $0x20] sm:$0xf]
      %v901 = vunpack.c.l.b16 %v879
      %v902 = vunpack.c.l.b16 %v880
      %v903 = vunpack.c.l.b16 %v881
      %v904 = vunpack.c.l.b16 %v882
      %v905 = vunpack.c.l.b16 %v883
      %v906 = vunpack.c.l.b16 %v884
      %v907 = vpack.c.b16 %v902, %v901
      %v908 = vpack.c.b16 %v904, %v903
      %v909 = vpack.c.b16 %v906, %v905
      %vm910 = vsmask.f32 4352
      %v912 = vshrl.u32 %v907, 16
      %v914 = vrot.slane %v912, 3
      %v915 = vshll.u32 %v907, 16
      %v917 = vrot.slane %v915, 4
      %v918 = vor.u32 %v914, %v917
      %v920 = vshrl.u32 %v908, 16
      %v922 = vrot.slane %v920, 3
      %v923 = vshll.u32 %v908, 16
      %v925 = vrot.slane %v923, 4
      %v926 = vor.u32 %v922, %v925
      %v927 = vsel %vm910, %v918, %v926
      %v929 = vshrl.u32 %v909, 16
      %v931 = vrot.slane %v929, 3
      %v932 = vshll.u32 %v909, 16
      %v934 = vrot.slane %v932, 4
      %v935 = vor.u32 %v931, %v934
      %v936 = vsel %vm910, %v926, %v935
      %v946 = vunpack.c.l.b16 %v886
      %v947 = vunpack.c.l.b16 %v887
      %v948 = vunpack.c.l.b16 %v888
      %v949 = vunpack.c.l.b16 %v889
      %v950 = vunpack.c.l.b16 %v890
      %v951 = vunpack.c.l.b16 %v891
      %v952 = vunpack.c.l.b16 %v892
      %v953 = vunpack.c.l.b16 %v893
      %v954 = vunpack.c.l.b16 %v894
      %v955 = vpack.c.b16 %v947, %v946
      %v956 = vpack.c.b16 %v949, %v948
      %v957 = vpack.c.b16 %v951, %v950
      %v958 = vpack.c.b16 %v953, %v952
      %v959 = vpack.c.b16 %v954, %v954
      %v965 = vsel %vm426, %v927, 0
      %v968 = vsel %vm426, %v936, 0
      %v971 = vsel %vm426, %v935, 0
      %v974 = vsel %vm436, %v959, 0
      %976 = vmatprep.subr.bf16.mxu0 0
      %977 = vmatpush1.bf16.msra.mxu0 %v955
      %978 = vmatprep.subr.bf16.mxu0 0
      %979 = vmatpush1.bf16.msra.mxu0 %v956
      %980 = vmatprep.subr.bf16.mxu0 0
      %981 = vmatpush1.bf16.msra.mxu0 %v957
      %982 = vmatprep.subr.bf16.mxu0 0
      %983 = vmatpush1.bf16.msra.mxu0 %v958
      %984 = vmatprep.subr.bf16.mxu0 0
      %985 = vmatpush1.bf16.msra.mxu0 %v974
      %986 = vmatprep.subr.bf16.mxu0 0
      %987 = vmatpush1.bf16.msra.mxu0 0
      %988 = vmatprep.subr.bf16.mxu0 0
      %989 = vmatpush1.bf16.msra.mxu0 0
      %990 = vmatprep.subr.bf16.mxu0 0
      %991 = vmatpush1.bf16.msra.mxu0 0
      %992 = vmatprep.subr.bf16.mxu0 0
      %993 = vmatpush1.bf16.msra.mxu0 0
      %994 = vmatprep.subr.bf16.mxu0 0
      %995 = vmatpush1.bf16.msra.mxu0 0
      %996 = vmatprep.subr.bf16.mxu0 0
      %997 = vmatpush1.bf16.msra.mxu0 0
      %998 = vmatprep.subr.bf16.mxu0 0
      %999 = vmatpush1.bf16.msra.mxu0 0
      %1000 = vmatprep.subr.bf16.mxu0 0
      %1001 = vmatpush1.bf16.msra.mxu0 0
      %1002 = vmatprep.subr.bf16.mxu0 0
      %1003 = vmatpush1.bf16.msra.mxu0 0
      %1004 = vmatprep.subr.bf16.mxu0 0
      %1005 = vmatpush1.bf16.msra.mxu0 0
      %1006 = vmatprep.subr.bf16.mxu0 0
      %1007 = vmatpush1.bf16.msra.mxu0 0
      %1008 = vmatprep.mubr.bf16.mxu0 0
      %1009 = vmatmul.mubr.bf16.gmra.mrb[0].mxu0 %v965
      %v1010 = vpop.f32.mrb[0].mxu0
      %v1011 = vadd.f32 0.0, %v1010
      %v1012 = vpop.f32.mrb[0].mxu0
      %v1013 = vpop.f32.mrb[0].mxu0
      %v1014 = vadd.f32 0.0, %v1013
      %v1015 = vpop.f32.mrb[0].mxu0
      %1016 = vmatprep.mubr.bf16.mxu0 0
      %1017 = vmatmul.mubr.bf16.gmra.mrb[0].mxu0 %v968
      %v1018 = vpop.f32.mrb[0].mxu0
      %v1019 = vadd.f32 0.0, %v1018
      %v1020 = vpop.f32.mrb[0].mxu0
      %v1021 = vpop.f32.mrb[0].mxu0
      %v1022 = vadd.f32 0.0, %v1021
      %v1023 = vpop.f32.mrb[0].mxu0
      %1024 = vmatprep.mubr.bf16.mxu0 0
      %1025 = vmatmul.mubr.bf16.gmra.mrb[0].mxu0 %v971
      %v1026 = vpop.f32.mrb[0].mxu0
      %v1027 = vadd.f32 0.0, %v1026
      %v1028 = vpop.f32.mrb[0].mxu0
      %v1029 = vpop.f32.mrb[0].mxu0
      %v1030 = vpop.f32.mrb[0].mxu0
      %1031 = vdwg.mxu0
      %s1032 = scalar_lea.vmem %s4, 120
      %v1033 = vld [vmem:[%s1032] sm:$0xff]
      %v1034 = vld [vmem:[%s1032 + $0x8] sm:$0xff]
      %v1035 = vld [vmem:[%s1032 + $0x10] sm:$0xff]
      %v1036 = vld [vmem:[%s1032 + $0x18] sm:$0xff]
      %v1037 = vld [vmem:[%s1032 + $0x20] sm:$0xf]
      %vm1038 = vcmp.gt.f32.partialorder %v1033, 0.5
      %vm1039 = vcmp.gt.f32.partialorder %v1034, 0.5
      %vm1040 = vcmp.gt.f32.partialorder %v1035, 0.5
      %vm1041 = vcmp.gt.f32.partialorder %v1036, 0.5
      %vm1042 = vcmp.gt.f32.partialorder %v1037, 0.5
      %v1043 = vsel %vm1038, 1, 0
      %v1044 = vsel %vm1039, 1, 0
      %v1045 = vsel %vm1040, 1, 0
      %v1046 = vsel %vm1041, 1, 0
      %v1047 = vsel %vm1042, 1, 0
      %1048 = vset.pattern.permute.xlu0 0
      %1049 = vperm.xlu0 %1048, %v1043
      %v1050 = vpop.permute.xlu0 %1049
      %1051 = vset.pattern.permute.xlu0 0
      %1052 = vperm.xlu0 %1051, %v1044
      %v1053 = vpop.permute.xlu0 %1052
      %1054 = vset.pattern.permute.xlu0 0
      %1055 = vperm.xlu0 %1054, %v1045
      %v1056 = vpop.permute.xlu0 %1055
      %1057 = vset.pattern.permute.xlu0 0
      %1058 = vperm.xlu0 %1057, %v1046
      %v1059 = vpop.permute.xlu0 %1058
      %1060 = vset.pattern.permute.xlu0 0
      %1061 = vperm.xlu0 %1060, %v1047
      %v1062 = vpop.permute.xlu0 %1061
      %vm1063 = vcmp.eq.s32.totalorder %v1050, 1
      %vm1064 = vcmp.eq.s32.totalorder %v1053, 1
      %vm1065 = vcmp.eq.s32.totalorder %v1056, 1
      %vm1066 = vcmp.eq.s32.totalorder %v1059, 1
      %vm1067 = vcmp.eq.s32.totalorder %v1062, 1
      %v1068 = vsel %vm1063, %v1011, 0.0
      %v1069 = vsel %vm1064, %v1014, 0.0
      %v1070 = vsel %vm1065, %v1019, 0.0
      %v1071 = vsel %vm1066, %v1022, 0.0
      %v1072 = vsel %vm1067, %v1027, 0.0
      %v1073 = vadd.f32 %v874, %v1068
      %v1074 = vadd.f32 %v875, %v1069
      %v1075 = vadd.f32 %v876, %v1070
      %v1076 = vadd.f32 %v877, %v1071
      %v1077 = vadd.f32 %v878, %v1072
      %s1078 = scalar_lea.vmem %s1, 144
      %v1079 = vld [vmem:[%s1078] sm:$0xf]
      %v1080 = vld [vmem:[%s1078 + $0x4] sm:$0xf]
      %v1081 = vld [vmem:[%s1078 + $0x8] sm:$0xf]
      %v1082 = vld [vmem:[%s1078 + $0xc] sm:$0xf]
      %v1083 = vld [vmem:[%s1078 + $0x10] sm:$0xf]
      %v1084 = vld [vmem:[%s1078 + $0x14] sm:$0xf]
      %v1085 = vld [vmem:[%s1078 + $0x18] sm:$0xf]
      %v1086 = vld [vmem:[%s1078 + $0x1c] sm:$0xf]
      %v1087 = vld [vmem:[%s1078 + $0x20] sm:$0xf]
      %v1088 = vpack.c.b16 %v903, %v902
      %v1089 = vpack.c.b16 %v905, %v904
      %v1090 = vpack.c.b16 %v906, %v906
      %v1100 = vunpack.c.l.b16 %v1079
      %v1101 = vunpack.c.l.b16 %v1080
      %v1102 = vunpack.c.l.b16 %v1081
      %v1103 = vunpack.c.l.b16 %v1082
      %v1104 = vunpack.c.l.b16 %v1083
      %v1105 = vunpack.c.l.b16 %v1084
      %v1106 = vunpack.c.l.b16 %v1085
      %v1107 = vunpack.c.l.b16 %v1086
      %v1108 = vunpack.c.l.b16 %v1087
      %v1109 = vpack.c.b16 %v1101, %v1100
      %v1110 = vpack.c.b16 %v1103, %v1102
      %v1111 = vpack.c.b16 %v1105, %v1104
      %v1112 = vpack.c.b16 %v1107, %v1106
      %v1113 = vpack.c.b16 %v1108, %v1108
      %v1119 = vsel %vm426, %v1088, 0
      %v1122 = vsel %vm426, %v1089, 0
      %v1125 = vsel %vm426, %v1090, 0
      %v1128 = vsel %vm436, %v1113, 0
      %1130 = vmatprep.subr.bf16.mxu0 0
      %1131 = vmatpush1.bf16.msra.mxu0 %v1109
      %1132 = vmatprep.subr.bf16.mxu0 0
      %1133 = vmatpush1.bf16.msra.mxu0 %v1110
      %1134 = vmatprep.subr.bf16.mxu0 0
      %1135 = vmatpush1.bf16.msra.mxu0 %v1111
      %1136 = vmatprep.subr.bf16.mxu0 0
      %1137 = vmatpush1.bf16.msra.mxu0 %v1112
      %1138 = vmatprep.subr.bf16.mxu0 0
      %1139 = vmatpush1.bf16.msra.mxu0 %v1128
      %1140 = vmatprep.subr.bf16.mxu0 0
      %1141 = vmatpush1.bf16.msra.mxu0 0
      %1142 = vmatprep.subr.bf16.mxu0 0
      %1143 = vmatpush1.bf16.msra.mxu0 0
      %1144 = vmatprep.subr.bf16.mxu0 0
      %1145 = vmatpush1.bf16.msra.mxu0 0
      %1146 = vmatprep.subr.bf16.mxu0 0
      %1147 = vmatpush1.bf16.msra.mxu0 0
      %1148 = vmatprep.subr.bf16.mxu0 0
      %1149 = vmatpush1.bf16.msra.mxu0 0
      %1150 = vmatprep.subr.bf16.mxu0 0
      %1151 = vmatpush1.bf16.msra.mxu0 0
      %1152 = vmatprep.subr.bf16.mxu0 0
      %1153 = vmatpush1.bf16.msra.mxu0 0
      %1154 = vmatprep.subr.bf16.mxu0 0
      %1155 = vmatpush1.bf16.msra.mxu0 0
      %1156 = vmatprep.subr.bf16.mxu0 0
      %1157 = vmatpush1.bf16.msra.mxu0 0
      %1158 = vmatprep.subr.bf16.mxu0 0
      %1159 = vmatpush1.bf16.msra.mxu0 0
      %1160 = vmatprep.subr.bf16.mxu0 0
      %1161 = vmatpush1.bf16.msra.mxu0 0
      %1162 = vmatprep.mubr.bf16.mxu0 0
      %1163 = vmatmul.mubr.bf16.gmra.mrb[0].mxu0 %v1119
      %v1164 = vpop.f32.mrb[0].mxu0
      %v1165 = vadd.f32 0.0, %v1164
      %v1166 = vpop.f32.mrb[0].mxu0
      %v1167 = vpop.f32.mrb[0].mxu0
      %v1168 = vadd.f32 0.0, %v1167
      %v1169 = vpop.f32.mrb[0].mxu0
      %1170 = vmatprep.mubr.bf16.mxu0 0
      %1171 = vmatmul.mubr.bf16.gmra.mrb[0].mxu0 %v1122
      %v1172 = vpop.f32.mrb[0].mxu0
      %v1173 = vadd.f32 0.0, %v1172
      %v1174 = vpop.f32.mrb[0].mxu0
      %v1175 = vpop.f32.mrb[0].mxu0
      %v1176 = vadd.f32 0.0, %v1175
      %v1177 = vpop.f32.mrb[0].mxu0
      %1178 = vmatprep.mubr.bf16.mxu0 0
      %1179 = vmatmul.mubr.bf16.gmra.mrb[0].mxu0 %v1125
      %v1180 = vpop.f32.mrb[0].mxu0
      %v1181 = vadd.f32 0.0, %v1180
      %v1182 = vpop.f32.mrb[0].mxu0
      %v1183 = vpop.f32.mrb[0].mxu0
      %v1184 = vpop.f32.mrb[0].mxu0
      %1185 = vdwg.mxu0
      %s1186 = scalar_lea.vmem %s4, 160
      %v1187 = vld [vmem:[%s1186] sm:$0xff]
      %v1188 = vld [vmem:[%s1186 + $0x8] sm:$0xff]
      %v1189 = vld [vmem:[%s1186 + $0x10] sm:$0xff]
      %v1190 = vld [vmem:[%s1186 + $0x18] sm:$0xff]
      %v1191 = vld [vmem:[%s1186 + $0x20] sm:$0xf]
      %vm1192 = vcmp.gt.f32.partialorder %v1187, 0.5
      %vm1193 = vcmp.gt.f32.partialorder %v1188, 0.5
      %vm1194 = vcmp.gt.f32.partialorder %v1189, 0.5
      %vm1195 = vcmp.gt.f32.partialorder %v1190, 0.5
      %vm1196 = vcmp.gt.f32.partialorder %v1191, 0.5
      %v1197 = vsel %vm1192, 1, 0
      %v1198 = vsel %vm1193, 1, 0
      %v1199 = vsel %vm1194, 1, 0
      %v1200 = vsel %vm1195, 1, 0
      %v1201 = vsel %vm1196, 1, 0
      %1202 = vset.pattern.permute.xlu0 0
      %1203 = vperm.xlu0 %1202, %v1197
      %v1204 = vpop.permute.xlu0 %1203
      %1205 = vset.pattern.permute.xlu0 0
      %1206 = vperm.xlu0 %1205, %v1198
      %v1207 = vpop.permute.xlu0 %1206
      %1208 = vset.pattern.permute.xlu0 0
      %1209 = vperm.xlu0 %1208, %v1199
      %v1210 = vpop.permute.xlu0 %1209
      %1211 = vset.pattern.permute.xlu0 0
      %1212 = vperm.xlu0 %1211, %v1200
      %v1213 = vpop.permute.xlu0 %1212
      %1214 = vset.pattern.permute.xlu0 0
      %1215 = vperm.xlu0 %1214, %v1201
      %v1216 = vpop.permute.xlu0 %1215
      %vm1217 = vcmp.eq.s32.totalorder %v1204, 1
      %vm1218 = vcmp.eq.s32.totalorder %v1207, 1
      %vm1219 = vcmp.eq.s32.totalorder %v1210, 1
      %vm1220 = vcmp.eq.s32.totalorder %v1213, 1
      %vm1221 = vcmp.eq.s32.totalorder %v1216, 1
      %v1222 = vsel %vm1217, %v1165, 0.0
      %v1223 = vsel %vm1218, %v1168, 0.0
      %v1224 = vsel %vm1219, %v1173, 0.0
      %v1225 = vsel %vm1220, %v1176, 0.0
      %v1226 = vsel %vm1221, %v1181, 0.0
      %v1227 = vadd.f32 %v1073, %v1222
      %v1228 = vadd.f32 %v1074, %v1223
      %v1229 = vadd.f32 %v1075, %v1224
      %v1230 = vadd.f32 %v1076, %v1225
      %v1231 = vadd.f32 %v1077, %v1226
      %v1232 = vld [vmem:[#allocation2 + $0x14] sm:$0x7]
      %s1233 = scalar_lea.vmem %s1, 180
      %v1234 = vld [vmem:[%s1233] sm:$0xf]
      %v1235 = vld [vmem:[%s1233 + $0x4] sm:$0xf]
      %v1236 = vld [vmem:[%s1233 + $0x8] sm:$0xf]
      %v1237 = vld [vmem:[%s1233 + $0xc] sm:$0xf]
      %v1238 = vld [vmem:[%s1233 + $0x10] sm:$0xf]
      %v1239 = vld [vmem:[%s1233 + $0x14] sm:$0xf]
      %v1240 = vld [vmem:[%s1233 + $0x18] sm:$0xf]
      %v1241 = vld [vmem:[%s1233 + $0x1c] sm:$0xf]
      %v1242 = vld [vmem:[%s1233 + $0x20] sm:$0xf]
      %v1244 = vunpack.c.l.b16 %v1232
      %v1245 = vpack.c.b16 %v1244, %v1244
      %v1246 = vshrl.u32 %v1088, 16
      %v1248 = vshll.u32 %v1088, 16
      %v1250 = vrot.slane %v1248, 1
      %v1251 = vor.u32 %v1246, %v1250
      %v1252 = vshll.u32 %v1089, 16
      %v1254 = vrot.slane %v1252, 1
      %v1255 = vsel %vm375, %v1251, %v1254
      %v1256 = vshrl.u32 %v1089, 16
      %v1258 = vor.u32 %v1256, %v1254
      %v1260 = vshll.u32 %v1245, 16
      %v1262 = vrot.slane %v1260, 1
      %v1263 = vsel %vm375, %v1258, %v1262
      %v1264 = vshrl.u32 %v1245, 16
      %v1266 = vor.u32 %v1264, %v1262
      %v1276 = vunpack.c.l.b16 %v1234
      %v1277 = vunpack.c.l.b16 %v1235
      %v1278 = vunpack.c.l.b16 %v1236
      %v1279 = vunpack.c.l.b16 %v1237
      %v1280 = vunpack.c.l.b16 %v1238
      %v1281 = vunpack.c.l.b16 %v1239
      %v1282 = vunpack.c.l.b16 %v1240
      %v1283 = vunpack.c.l.b16 %v1241
      %v1284 = vunpack.c.l.b16 %v1242
      %v1285 = vpack.c.b16 %v1277, %v1276
      %v1286 = vpack.c.b16 %v1279, %v1278
      %v1287 = vpack.c.b16 %v1281, %v1280
      %v1288 = vpack.c.b16 %v1283, %v1282
      %v1289 = vpack.c.b16 %v1284, %v1284
      %v1295 = vsel %vm426, %v1255, 0
      %v1298 = vsel %vm426, %v1263, 0
      %v1301 = vsel %vm426, %v1266, 0
      %v1304 = vsel %vm436, %v1289, 0
      %1306 = vmatprep.subr.bf16.mxu0 0
      %1307 = vmatpush1.bf16.msra.mxu0 %v1285
      %1308 = vmatprep.subr.bf16.mxu0 0
      %1309 = vmatpush1.bf16.msra.mxu0 %v1286
      %1310 = vmatprep.subr.bf16.mxu0 0
      %1311 = vmatpush1.bf16.msra.mxu0 %v1287
      %1312 = vmatprep.subr.bf16.mxu0 0
      %1313 = vmatpush1.bf16.msra.mxu0 %v1288
      %1314 = vmatprep.subr.bf16.mxu0 0
      %1315 = vmatpush1.bf16.msra.mxu0 %v1304
      %1316 = vmatprep.subr.bf16.mxu0 0
      %1317 = vmatpush1.bf16.msra.mxu0 0
      %1318 = vmatprep.subr.bf16.mxu0 0
      %1319 = vmatpush1.bf16.msra.mxu0 0
      %1320 = vmatprep.subr.bf16.mxu0 0
      %1321 = vmatpush1.bf16.msra.mxu0 0
      %1322 = vmatprep.subr.bf16.mxu0 0
      %1323 = vmatpush1.bf16.msra.mxu0 0
      %1324 = vmatprep.subr.bf16.mxu0 0
      %1325 = vmatpush1.bf16.msra.mxu0 0
      %1326 = vmatprep.subr.bf16.mxu0 0
      %1327 = vmatpush1.bf16.msra.mxu0 0
      %1328 = vmatprep.subr.bf16.mxu0 0
      %1329 = vmatpush1.bf16.msra.mxu0 0
      %1330 = vmatprep.subr.bf16.mxu0 0
      %1331 = vmatpush1.bf16.msra.mxu0 0
      %1332 = vmatprep.subr.bf16.mxu0 0
      %1333 = vmatpush1.bf16.msra.mxu0 0
      %1334 = vmatprep.subr.bf16.mxu0 0
      %1335 = vmatpush1.bf16.msra.mxu0 0
      %1336 = vmatprep.subr.bf16.mxu0 0
      %1337 = vmatpush1.bf16.msra.mxu0 0
      %1338 = vmatprep.mubr.bf16.mxu0 0
      %1339 = vmatmul.mubr.bf16.gmra.mrb[0].mxu0 %v1295
      %v1340 = vpop.f32.mrb[0].mxu0
      %v1341 = vadd.f32 0.0, %v1340
      %v1342 = vpop.f32.mrb[0].mxu0
      %v1343 = vpop.f32.mrb[0].mxu0
      %v1344 = vadd.f32 0.0, %v1343
      %v1345 = vpop.f32.mrb[0].mxu0
      %1346 = vmatprep.mubr.bf16.mxu0 0
      %1347 = vmatmul.mubr.bf16.gmra.mrb[0].mxu0 %v1298
      %v1348 = vpop.f32.mrb[0].mxu0
      %v1349 = vadd.f32 0.0, %v1348
      %v1350 = vpop.f32.mrb[0].mxu0
      %v1351 = vpop.f32.mrb[0].mxu0
      %v1352 = vadd.f32 0.0, %v1351
      %v1353 = vpop.f32.mrb[0].mxu0
      %1354 = vmatprep.mubr.bf16.mxu0 0
      %1355 = vmatmul.mubr.bf16.gmra.mrb[0].mxu0 %v1301
      %v1356 = vpop.f32.mrb[0].mxu0
      %v1357 = vadd.f32 0.0, %v1356
      %v1358 = vpop.f32.mrb[0].mxu0
      %v1359 = vpop.f32.mrb[0].mxu0
      %v1360 = vpop.f32.mrb[0].mxu0
      %1361 = vdwg.mxu0
      %s1362 = scalar_lea.vmem %s4, 200
      %v1363 = vld [vmem:[%s1362] sm:$0xff]
      %v1364 = vld [vmem:[%s1362 + $0x8] sm:$0xff]
      %v1365 = vld [vmem:[%s1362 + $0x10] sm:$0xff]
      %v1366 = vld [vmem:[%s1362 + $0x18] sm:$0xff]
      %v1367 = vld [vmem:[%s1362 + $0x20] sm:$0xf]
      %vm1368 = vcmp.gt.f32.partialorder %v1363, 0.5
      %vm1369 = vcmp.gt.f32.partialorder %v1364, 0.5
      %vm1370 = vcmp.gt.f32.partialorder %v1365, 0.5
      %vm1371 = vcmp.gt.f32.partialorder %v1366, 0.5
      %vm1372 = vcmp.gt.f32.partialorder %v1367, 0.5
      %v1373 = vsel %vm1368, 1, 0
      %v1374 = vsel %vm1369, 1, 0
      %v1375 = vsel %vm1370, 1, 0
      %v1376 = vsel %vm1371, 1, 0
      %v1377 = vsel %vm1372, 1, 0
      %1378 = vset.pattern.permute.xlu0 0
      %1379 = vperm.xlu0 %1378, %v1373
      %v1380 = vpop.permute.xlu0 %1379
      %1381 = vset.pattern.permute.xlu0 0
      %1382 = vperm.xlu0 %1381, %v1374
      %v1383 = vpop.permute.xlu0 %1382
      %1384 = vset.pattern.permute.xlu0 0
      %1385 = vperm.xlu0 %1384, %v1375
      %v1386 = vpop.permute.xlu0 %1385
      %1387 = vset.pattern.permute.xlu0 0
      %1388 = vperm.xlu0 %1387, %v1376
      %v1389 = vpop.permute.xlu0 %1388
      %1390 = vset.pattern.permute.xlu0 0
      %1391 = vperm.xlu0 %1390, %v1377
      %v1392 = vpop.permute.xlu0 %1391
      %vm1393 = vcmp.eq.s32.totalorder %v1380, 1
      %vm1394 = vcmp.eq.s32.totalorder %v1383, 1
      %vm1395 = vcmp.eq.s32.totalorder %v1386, 1
      %vm1396 = vcmp.eq.s32.totalorder %v1389, 1
      %vm1397 = vcmp.eq.s32.totalorder %v1392, 1
      %v1398 = vsel %vm1393, %v1341, 0.0
      %v1399 = vsel %vm1394, %v1344, 0.0
      %v1400 = vsel %vm1395, %v1349, 0.0
      %v1401 = vsel %vm1396, %v1352, 0.0
      %v1402 = vsel %vm1397, %v1357, 0.0
      %v1403 = vadd.f32 %v1227, %v1398
      %v1404 = vadd.f32 %v1228, %v1399
      %v1405 = vadd.f32 %v1229, %v1400
      %v1406 = vadd.f32 %v1230, %v1401
      %v1407 = vadd.f32 %v1231, %v1402
      %v1408 = vld [vmem:[#allocation2 + $0x4] sm:$0xc]
      %v1409 = vld [vmem:[#allocation2 + $0x8] sm:$0xf]
      %v1410 = vld [vmem:[#allocation2 + $0xc] sm:$0xf]
      %v1411 = vld [vmem:[#allocation2 + $0x10] sm:$0xf]
      %v1412 = vld [vmem:[#allocation2 + $0x14] sm:$0xf]
      %v1413 = vld [vmem:[#allocation2 + $0x18] sm:$0x1]
      %s1414 = scalar_lea.vmem %s1, 216
      %v1415 = vld [vmem:[%s1414] sm:$0xf]
      %v1416 = vld [vmem:[%s1414 + $0x4] sm:$0xf]
      %v1417 = vld [vmem:[%s1414 + $0x8] sm:$0xf]
      %v1418 = vld [vmem:[%s1414 + $0xc] sm:$0xf]
      %v1419 = vld [vmem:[%s1414 + $0x10] sm:$0xf]
      %v1420 = vld [vmem:[%s1414 + $0x14] sm:$0xf]
      %v1421 = vld [vmem:[%s1414 + $0x18] sm:$0xf]
      %v1422 = vld [vmem:[%s1414 + $0x1c] sm:$0xf]
      %v1423 = vld [vmem:[%s1414 + $0x20] sm:$0xf]
      %v1430 = vunpack.c.l.b16 %v1408
      %v1431 = vunpack.c.l.b16 %v1409
      %v1432 = vunpack.c.l.b16 %v1410
      %v1433 = vunpack.c.l.b16 %v1411
      %v1434 = vunpack.c.l.b16 %v1412
      %v1435 = vunpack.c.l.b16 %v1413
      %v1436 = vpack.c.b16 %v1431, %v1430
      %v1437 = vpack.c.b16 %v1433, %v1432
      %v1438 = vpack.c.b16 %v1435, %v1434
      %vm1439 = vsmask.f32 5376
      %v1441 = vshrl.u32 %v1436, 16
      %v1443 = vrot.slane %v1441, 2
      %v1444 = vshll.u32 %v1436, 16
      %v1446 = vrot.slane %v1444, 3
      %v1447 = vor.u32 %v1443, %v1446
      %v1449 = vshrl.u32 %v1437, 16
      %v1451 = vrot.slane %v1449, 2
      %v1452 = vshll.u32 %v1437, 16
      %v1454 = vrot.slane %v1452, 3
      %v1455 = vor.u32 %v1451, %v1454
      %v1456 = vsel %vm1439, %v1447, %v1455
      %v1458 = vshrl.u32 %v1438, 16
      %v1460 = vrot.slane %v1458, 2
      %v1461 = vshll.u32 %v1438, 16
      %v1463 = vrot.slane %v1461, 3
      %v1464 = vor.u32 %v1460, %v1463
      %v1465 = vsel %vm1439, %v1455, %v1464
      %v1475 = vunpack.c.l.b16 %v1415
      %v1476 = vunpack.c.l.b16 %v1416
      %v1477 = vunpack.c.l.b16 %v1417
      %v1478 = vunpack.c.l.b16 %v1418
      %v1479 = vunpack.c.l.b16 %v1419
      %v1480 = vunpack.c.l.b16 %v1420
      %v1481 = vunpack.c.l.b16 %v1421
      %v1482 = vunpack.c.l.b16 %v1422
      %v1483 = vunpack.c.l.b16 %v1423
      %v1484 = vpack.c.b16 %v1476, %v1475
      %v1485 = vpack.c.b16 %v1478, %v1477
      %v1486 = vpack.c.b16 %v1480, %v1479
      %v1487 = vpack.c.b16 %v1482, %v1481
      %v1488 = vpack.c.b16 %v1483, %v1483
      %v1494 = vsel %vm426, %v1456, 0
      %v1497 = vsel %vm426, %v1465, 0
      %v1500 = vsel %vm426, %v1464, 0
      %v1503 = vsel %vm436, %v1488, 0
      %1505 = vmatprep.subr.bf16.mxu0 0
      %1506 = vmatpush1.bf16.msra.mxu0 %v1484
      %1507 = vmatprep.subr.bf16.mxu0 0
      %1508 = vmatpush1.bf16.msra.mxu0 %v1485
      %1509 = vmatprep.subr.bf16.mxu0 0
      %1510 = vmatpush1.bf16.msra.mxu0 %v1486
      %1511 = vmatprep.subr.bf16.mxu0 0
      %1512 = vmatpush1.bf16.msra.mxu0 %v1487
      %1513 = vmatprep.subr.bf16.mxu0 0
      %1514 = vmatpush1.bf16.msra.mxu0 %v1503
      %1515 = vmatprep.subr.bf16.mxu0 0
      %1516 = vmatpush1.bf16.msra.mxu0 0
      %1517 = vmatprep.subr.bf16.mxu0 0
      %1518 = vmatpush1.bf16.msra.mxu0 0
      %1519 = vmatprep.subr.bf16.mxu0 0
      %1520 = vmatpush1.bf16.msra.mxu0 0
      %1521 = vmatprep.subr.bf16.mxu0 0
      %1522 = vmatpush1.bf16.msra.mxu0 0
      %1523 = vmatprep.subr.bf16.mxu0 0
      %1524 = vmatpush1.bf16.msra.mxu0 0
      %1525 = vmatprep.subr.bf16.mxu0 0
      %1526 = vmatpush1.bf16.msra.mxu0 0
      %1527 = vmatprep.subr.bf16.mxu0 0
      %1528 = vmatpush1.bf16.msra.mxu0 0
      %1529 = vmatprep.subr.bf16.mxu0 0
      %1530 = vmatpush1.bf16.msra.mxu0 0
      %1531 = vmatprep.subr.bf16.mxu0 0
      %1532 = vmatpush1.bf16.msra.mxu0 0
      %1533 = vmatprep.subr.bf16.mxu0 0
      %1534 = vmatpush1.bf16.msra.mxu0 0
      %1535 = vmatprep.subr.bf16.mxu0 0
      %1536 = vmatpush1.bf16.msra.mxu0 0
      %1537 = vmatprep.mubr.bf16.mxu0 0
      %1538 = vmatmul.mubr.bf16.gmra.mrb[0].mxu0 %v1494
      %v1539 = vpop.f32.mrb[0].mxu0
      %v1540 = vadd.f32 0.0, %v1539
      %v1541 = vpop.f32.mrb[0].mxu0
      %v1542 = vpop.f32.mrb[0].mxu0
      %v1543 = vadd.f32 0.0, %v1542
      %v1544 = vpop.f32.mrb[0].mxu0
      %1545 = vmatprep.mubr.bf16.mxu0 0
      %1546 = vmatmul.mubr.bf16.gmra.mrb[0].mxu0 %v1497
      %v1547 = vpop.f32.mrb[0].mxu0
      %v1548 = vadd.f32 0.0, %v1547
      %v1549 = vpop.f32.mrb[0].mxu0
      %v1550 = vpop.f32.mrb[0].mxu0
      %v1551 = vadd.f32 0.0, %v1550
      %v1552 = vpop.f32.mrb[0].mxu0
      %1553 = vmatprep.mubr.bf16.mxu0 0
      %1554 = vmatmul.mubr.bf16.gmra.mrb[0].mxu0 %v1500
      %v1555 = vpop.f32.mrb[0].mxu0
      %v1556 = vadd.f32 0.0, %v1555
      %v1557 = vpop.f32.mrb[0].mxu0
      %v1558 = vpop.f32.mrb[0].mxu0
      %v1559 = vpop.f32.mrb[0].mxu0
      %1560 = vdwg.mxu0
      %s1561 = scalar_lea.vmem %s4, 240
      %v1562 = vld [vmem:[%s1561] sm:$0xff]
      %v1563 = vld [vmem:[%s1561 + $0x8] sm:$0xff]
      %v1564 = vld [vmem:[%s1561 + $0x10] sm:$0xff]
      %v1565 = vld [vmem:[%s1561 + $0x18] sm:$0xff]
      %v1566 = vld [vmem:[%s1561 + $0x20] sm:$0xf]
      %vm1567 = vcmp.gt.f32.partialorder %v1562, 0.5
      %vm1568 = vcmp.gt.f32.partialorder %v1563, 0.5
      %vm1569 = vcmp.gt.f32.partialorder %v1564, 0.5
      %vm1570 = vcmp.gt.f32.partialorder %v1565, 0.5
      %vm1571 = vcmp.gt.f32.partialorder %v1566, 0.5
      %v1572 = vsel %vm1567, 1, 0
      %v1573 = vsel %vm1568, 1, 0
      %v1574 = vsel %vm1569, 1, 0
      %v1575 = vsel %vm1570, 1, 0
      %v1576 = vsel %vm1571, 1, 0
      %1577 = vset.pattern.permute.xlu0 0
      %1578 = vperm.xlu0 %1577, %v1572
      %v1579 = vpop.permute.xlu0 %1578
      %1580 = vset.pattern.permute.xlu0 0
      %1581 = vperm.xlu0 %1580, %v1573
      %v1582 = vpop.permute.xlu0 %1581
      %1583 = vset.pattern.permute.xlu0 0
      %1584 = vperm.xlu0 %1583, %v1574
      %v1585 = vpop.permute.xlu0 %1584
      %1586 = vset.pattern.permute.xlu0 0
      %1587 = vperm.xlu0 %1586, %v1575
      %v1588 = vpop.permute.xlu0 %1587
      %1589 = vset.pattern.permute.xlu0 0
      %1590 = vperm.xlu0 %1589, %v1576
      %v1591 = vpop.permute.xlu0 %1590
      %vm1592 = vcmp.eq.s32.totalorder %v1579, 1
      %vm1593 = vcmp.eq.s32.totalorder %v1582, 1
      %vm1594 = vcmp.eq.s32.totalorder %v1585, 1
      %vm1595 = vcmp.eq.s32.totalorder %v1588, 1
      %vm1596 = vcmp.eq.s32.totalorder %v1591, 1
      %v1597 = vsel %vm1592, %v1540, 0.0
      %v1598 = vsel %vm1593, %v1543, 0.0
      %v1599 = vsel %vm1594, %v1548, 0.0
      %v1600 = vsel %vm1595, %v1551, 0.0
      %v1601 = vsel %vm1596, %v1556, 0.0
      %v1602 = vadd.f32 %v1403, %v1597
      %v1603 = vadd.f32 %v1404, %v1598
      %v1604 = vadd.f32 %v1405, %v1599
      %v1605 = vadd.f32 %v1406, %v1600
      %v1606 = vadd.f32 %v1407, %v1601
      %v1607 = vld [vmem:[#allocation2 + $0x4] sm:$0x8]
      %s1608 = scalar_lea.vmem %s1, 252
      %v1609 = vld [vmem:[%s1608] sm:$0xf]
      %v1610 = vld [vmem:[%s1608 + $0x4] sm:$0xf]
      %v1611 = vld [vmem:[%s1608 + $0x8] sm:$0xf]
      %v1612 = vld [vmem:[%s1608 + $0xc] sm:$0xf]
      %v1613 = vld [vmem:[%s1608 + $0x10] sm:$0xf]
      %v1614 = vld [vmem:[%s1608 + $0x14] sm:$0xf]
      %v1615 = vld [vmem:[%s1608 + $0x18] sm:$0xf]
      %v1616 = vld [vmem:[%s1608 + $0x1c] sm:$0xf]
      %v1617 = vld [vmem:[%s1608 + $0x20] sm:$0xf]
      %v1619 = vunpack.c.l.b16 %v1607
      %v1620 = vpack.c.b16 %v1431, %v1619
      %vm1621 = vcmask 1044480
      %v1622 = vrot.slane %v1620, 3
      %v1623 = vrot.slane %v1437, 3
      %v1624 = vsel %vm1621, %v1622, %v1623
      %v1625 = vrot.slane %v1438, 3
      %v1626 = vsel %vm1621, %v1623, %v1625
      %v1636 = vunpack.c.l.b16 %v1609
      %v1637 = vunpack.c.l.b16 %v1610
      %v1638 = vunpack.c.l.b16 %v1611
      %v1639 = vunpack.c.l.b16 %v1612
      %v1640 = vunpack.c.l.b16 %v1613
      %v1641 = vunpack.c.l.b16 %v1614
      %v1642 = vunpack.c.l.b16 %v1615
      %v1643 = vunpack.c.l.b16 %v1616
      %v1644 = vunpack.c.l.b16 %v1617
      %v1645 = vpack.c.b16 %v1637, %v1636
      %v1646 = vpack.c.b16 %v1639, %v1638
      %v1647 = vpack.c.b16 %v1641, %v1640
      %v1648 = vpack.c.b16 %v1643, %v1642
      %v1649 = vpack.c.b16 %v1644, %v1644
      %v1655 = vsel %vm426, %v1624, 0
      %v1658 = vsel %vm426, %v1626, 0
      %v1661 = vsel %vm426, %v1625, 0
      %v1664 = vsel %vm436, %v1649, 0
      %1666 = vmatprep.subr.bf16.mxu0 0
      %1667 = vmatpush1.bf16.msra.mxu0 %v1645
      %1668 = vmatprep.subr.bf16.mxu0 0
      %1669 = vmatpush1.bf16.msra.mxu0 %v1646
      %1670 = vmatprep.subr.bf16.mxu0 0
      %1671 = vmatpush1.bf16.msra.mxu0 %v1647
      %1672 = vmatprep.subr.bf16.mxu0 0
      %1673 = vmatpush1.bf16.msra.mxu0 %v1648
      %1674 = vmatprep.subr.bf16.mxu0 0
      %1675 = vmatpush1.bf16.msra.mxu0 %v1664
      %1676 = vmatprep.subr.bf16.mxu0 0
      %1677 = vmatpush1.bf16.msra.mxu0 0
      %1678 = vmatprep.subr.bf16.mxu0 0
      %1679 = vmatpush1.bf16.msra.mxu0 0
      %1680 = vmatprep.subr.bf16.mxu0 0
      %1681 = vmatpush1.bf16.msra.mxu0 0
      %1682 = vmatprep.subr.bf16.mxu0 0
      %1683 = vmatpush1.bf16.msra.mxu0 0
      %1684 = vmatprep.subr.bf16.mxu0 0
      %1685 = vmatpush1.bf16.msra.mxu0 0
      %1686 = vmatprep.subr.bf16.mxu0 0
      %1687 = vmatpush1.bf16.msra.mxu0 0
      %1688 = vmatprep.subr.bf16.mxu0 0
      %1689 = vmatpush1.bf16.msra.mxu0 0
      %1690 = vmatprep.subr.bf16.mxu0 0
      %1691 = vmatpush1.bf16.msra.mxu0 0
      %1692 = vmatprep.subr.bf16.mxu0 0
      %1693 = vmatpush1.bf16.msra.mxu0 0
      %1694 = vmatprep.subr.bf16.mxu0 0
      %1695 = vmatpush1.bf16.msra.mxu0 0
      %1696 = vmatprep.subr.bf16.mxu0 0
      %1697 = vmatpush1.bf16.msra.mxu0 0
      %1698 = vmatprep.mubr.bf16.mxu0 0
      %1699 = vmatmul.mubr.bf16.gmra.mrb[0].mxu0 %v1655
      %v1700 = vpop.f32.mrb[0].mxu0
      %v1701 = vadd.f32 0.0, %v1700
      %v1702 = vpop.f32.mrb[0].mxu0
      %v1703 = vpop.f32.mrb[0].mxu0
      %v1704 = vadd.f32 0.0, %v1703
      %v1705 = vpop.f32.mrb[0].mxu0
      %1706 = vmatprep.mubr.bf16.mxu0 0
      %1707 = vmatmul.mubr.bf16.gmra.mrb[0].mxu0 %v1658
      %v1708 = vpop.f32.mrb[0].mxu0
      %v1709 = vadd.f32 0.0, %v1708
      %v1710 = vpop.f32.mrb[0].mxu0
      %v1711 = vpop.f32.mrb[0].mxu0
      %v1712 = vadd.f32 0.0, %v1711
      %v1713 = vpop.f32.mrb[0].mxu0
      %1714 = vmatprep.mubr.bf16.mxu0 0
      %1715 = vmatmul.mubr.bf16.gmra.mrb[0].mxu0 %v1661
      %v1716 = vpop.f32.mrb[0].mxu0
      %v1717 = vadd.f32 0.0, %v1716
      %v1718 = vpop.f32.mrb[0].mxu0
      %v1719 = vpop.f32.mrb[0].mxu0
      %v1720 = vpop.f32.mrb[0].mxu0
      %1721 = vdwg.mxu0
      %s1722 = scalar_lea.vmem %s4, 280
      %v1723 = vld [vmem:[%s1722] sm:$0xff]
      %v1724 = vld [vmem:[%s1722 + $0x8] sm:$0xff]
      %v1725 = vld [vmem:[%s1722 + $0x10] sm:$0xff]
      %v1726 = vld [vmem:[%s1722 + $0x18] sm:$0xff]
      %v1727 = vld [vmem:[%s1722 + $0x20] sm:$0xf]
      %vm1728 = vcmp.gt.f32.partialorder %v1723, 0.5
      %vm1729 = vcmp.gt.f32.partialorder %v1724, 0.5
      %vm1730 = vcmp.gt.f32.partialorder %v1725, 0.5
      %vm1731 = vcmp.gt.f32.partialorder %v1726, 0.5
      %vm1732 = vcmp.gt.f32.partialorder %v1727, 0.5
      %v1733 = vsel %vm1728, 1, 0
      %v1734 = vsel %vm1729, 1, 0
      %v1735 = vsel %vm1730, 1, 0
      %v1736 = vsel %vm1731, 1, 0
      %v1737 = vsel %vm1732, 1, 0
      %1738 = vset.pattern.permute.xlu0 0
      %1739 = vperm.xlu0 %1738, %v1733
      %v1740 = vpop.permute.xlu0 %1739
      %1741 = vset.pattern.permute.xlu0 0
      %1742 = vperm.xlu0 %1741, %v1734
      %v1743 = vpop.permute.xlu0 %1742
      %1744 = vset.pattern.permute.xlu0 0
      %1745 = vperm.xlu0 %1744, %v1735
      %v1746 = vpop.permute.xlu0 %1745
      %1747 = vset.pattern.permute.xlu0 0
      %1748 = vperm.xlu0 %1747, %v1736
      %v1749 = vpop.permute.xlu0 %1748
      %1750 = vset.pattern.permute.xlu0 0
      %1751 = vperm.xlu0 %1750, %v1737
      %v1752 = vpop.permute.xlu0 %1751
      %vm1753 = vcmp.eq.s32.totalorder %v1740, 1
      %vm1754 = vcmp.eq.s32.totalorder %v1743, 1
      %vm1755 = vcmp.eq.s32.totalorder %v1746, 1
      %vm1756 = vcmp.eq.s32.totalorder %v1749, 1
      %vm1757 = vcmp.eq.s32.totalorder %v1752, 1
      %v1758 = vsel %vm1753, %v1701, 0.0
      %v1759 = vsel %vm1754, %v1704, 0.0
      %v1760 = vsel %vm1755, %v1709, 0.0
      %v1761 = vsel %vm1756, %v1712, 0.0
      %v1762 = vsel %vm1757, %v1717, 0.0
      %v1763 = vadd.f32 %v1602, %v1758
      %v1764 = vadd.f32 %v1603, %v1759
      %v1765 = vadd.f32 %v1604, %v1760
      %v1766 = vadd.f32 %v1605, %v1761
      %v1767 = vadd.f32 %v1606, %v1762
      %v1768 = vld [vmem:[#allocation2 + $0x18] sm:$0x3]
      %s1769 = scalar_lea.vmem %s1, 288
      %v1770 = vld [vmem:[%s1769] sm:$0xf]
      %v1771 = vld [vmem:[%s1769 + $0x4] sm:$0xf]
      %v1772 = vld [vmem:[%s1769 + $0x8] sm:$0xf]
      %v1773 = vld [vmem:[%s1769 + $0xc] sm:$0xf]
      %v1774 = vld [vmem:[%s1769 + $0x10] sm:$0xf]
      %v1775 = vld [vmem:[%s1769 + $0x14] sm:$0xf]
      %v1776 = vld [vmem:[%s1769 + $0x18] sm:$0xf]
      %v1777 = vld [vmem:[%s1769 + $0x1c] sm:$0xf]
      %v1778 = vld [vmem:[%s1769 + $0x20] sm:$0xf]
      %v1780 = vunpack.c.l.b16 %v1768
      %v1781 = vpack.c.b16 %v1780, %v1434
      %v1783 = vshrl.u32 %v1620, 16
      %v1785 = vrot.slane %v1783, 3
      %v1786 = vshll.u32 %v1620, 16
      %v1788 = vrot.slane %v1786, 4
      %v1789 = vor.u32 %v1785, %v1788
      %v1790 = vrot.slane %v1449, 3
      %v1791 = vrot.slane %v1452, 4
      %v1792 = vor.u32 %v1790, %v1791
      %v1793 = vsel %vm910, %v1789, %v1792
      %v1795 = vshrl.u32 %v1781, 16
      %v1797 = vrot.slane %v1795, 3
      %v1798 = vshll.u32 %v1781, 16
      %v1800 = vrot.slane %v1798, 4
      %v1801 = vor.u32 %v1797, %v1800
      %v1802 = vsel %vm910, %v1792, %v1801
      %v1812 = vunpack.c.l.b16 %v1770
      %v1813 = vunpack.c.l.b16 %v1771
      %v1814 = vunpack.c.l.b16 %v1772
      %v1815 = vunpack.c.l.b16 %v1773
      %v1816 = vunpack.c.l.b16 %v1774
      %v1817 = vunpack.c.l.b16 %v1775
      %v1818 = vunpack.c.l.b16 %v1776
      %v1819 = vunpack.c.l.b16 %v1777
      %v1820 = vunpack.c.l.b16 %v1778
      %v1821 = vpack.c.b16 %v1813, %v1812
      %v1822 = vpack.c.b16 %v1815, %v1814
      %v1823 = vpack.c.b16 %v1817, %v1816
      %v1824 = vpack.c.b16 %v1819, %v1818
      %v1825 = vpack.c.b16 %v1820, %v1820
      %v1831 = vsel %vm426, %v1793, 0
      %v1834 = vsel %vm426, %v1802, 0
      %v1837 = vsel %vm426, %v1801, 0
      %v1840 = vsel %vm436, %v1825, 0
      %1842 = vmatprep.subr.bf16.mxu0 0
      %1843 = vmatpush1.bf16.msra.mxu0 %v1821
      %1844 = vmatprep.subr.bf16.mxu0 0
      %1845 = vmatpush1.bf16.msra.mxu0 %v1822
      %1846 = vmatprep.subr.bf16.mxu0 0
      %1847 = vmatpush1.bf16.msra.mxu0 %v1823
      %1848 = vmatprep.subr.bf16.mxu0 0
      %1849 = vmatpush1.bf16.msra.mxu0 %v1824
      %1850 = vmatprep.subr.bf16.mxu0 0
      %1851 = vmatpush1.bf16.msra.mxu0 %v1840
      %1852 = vmatprep.subr.bf16.mxu0 0
      %1853 = vmatpush1.bf16.msra.mxu0 0
      %1854 = vmatprep.subr.bf16.mxu0 0
      %1855 = vmatpush1.bf16.msra.mxu0 0
      %1856 = vmatprep.subr.bf16.mxu0 0
      %1857 = vmatpush1.bf16.msra.mxu0 0
      %1858 = vmatprep.subr.bf16.mxu0 0
      %1859 = vmatpush1.bf16.msra.mxu0 0
      %1860 = vmatprep.subr.bf16.mxu0 0
      %1861 = vmatpush1.bf16.msra.mxu0 0
      %1862 = vmatprep.subr.bf16.mxu0 0
      %1863 = vmatpush1.bf16.msra.mxu0 0
      %1864 = vmatprep.subr.bf16.mxu0 0
      %1865 = vmatpush1.bf16.msra.mxu0 0
      %1866 = vmatprep.subr.bf16.mxu0 0
      %1867 = vmatpush1.bf16.msra.mxu0 0
      %1868 = vmatprep.subr.bf16.mxu0 0
      %1869 = vmatpush1.bf16.msra.mxu0 0
      %1870 = vmatprep.subr.bf16.mxu0 0
      %1871 = vmatpush1.bf16.msra.mxu0 0
      %1872 = vmatprep.subr.bf16.mxu0 0
      %1873 = vmatpush1.bf16.msra.mxu0 0
      %1874 = vmatprep.mubr.bf16.mxu0 0
      %1875 = vmatmul.mubr.bf16.gmra.mrb[0].mxu0 %v1831
      %v1876 = vpop.f32.mrb[0].mxu0
      %v1877 = vadd.f32 0.0, %v1876
      %v1878 = vpop.f32.mrb[0].mxu0
      %v1879 = vpop.f32.mrb[0].mxu0
      %v1880 = vadd.f32 0.0, %v1879
      %v1881 = vpop.f32.mrb[0].mxu0
      %1882 = vmatprep.mubr.bf16.mxu0 0
      %1883 = vmatmul.mubr.bf16.gmra.mrb[0].mxu0 %v1834
      %v1884 = vpop.f32.mrb[0].mxu0
      %v1885 = vadd.f32 0.0, %v1884
      %v1886 = vpop.f32.mrb[0].mxu0
      %v1887 = vpop.f32.mrb[0].mxu0
      %v1888 = vadd.f32 0.0, %v1887
      %v1889 = vpop.f32.mrb[0].mxu0
      %1890 = vmatprep.mubr.bf16.mxu0 0
      %1891 = vmatmul.mubr.bf16.gmra.mrb[0].mxu0 %v1837
      %v1892 = vpop.f32.mrb[0].mxu0
      %v1893 = vadd.f32 0.0, %v1892
      %v1894 = vpop.f32.mrb[0].mxu0
      %v1895 = vpop.f32.mrb[0].mxu0
      %v1896 = vpop.f32.mrb[0].mxu0
      %1897 = vdwg.mxu0
      %s1898 = scalar_lea.vmem %s4, 320
      %v1899 = vld [vmem:[%s1898] sm:$0xff]
      %v1900 = vld [vmem:[%s1898 + $0x8] sm:$0xff]
      %v1901 = vld [vmem:[%s1898 + $0x10] sm:$0xff]
      %v1902 = vld [vmem:[%s1898 + $0x18] sm:$0xff]
      %v1903 = vld [vmem:[%s1898 + $0x20] sm:$0xf]
      %vm1904 = vcmp.gt.f32.partialorder %v1899, 0.5
      %vm1905 = vcmp.gt.f32.partialorder %v1900, 0.5
      %vm1906 = vcmp.gt.f32.partialorder %v1901, 0.5
      %vm1907 = vcmp.gt.f32.partialorder %v1902, 0.5
      %vm1908 = vcmp.gt.f32.partialorder %v1903, 0.5
      %v1909 = vsel %vm1904, 1, 0
      %v1910 = vsel %vm1905, 1, 0
      %v1911 = vsel %vm1906, 1, 0
      %v1912 = vsel %vm1907, 1, 0
      %v1913 = vsel %vm1908, 1, 0
      %1914 = vset.pattern.permute.xlu0 0
      %1915 = vperm.xlu0 %1914, %v1909
      %v1916 = vpop.permute.xlu0 %1915
      %1917 = vset.pattern.permute.xlu0 0
      %1918 = vperm.xlu0 %1917, %v1910
      %v1919 = vpop.permute.xlu0 %1918
      %1920 = vset.pattern.permute.xlu0 0
      %1921 = vperm.xlu0 %1920, %v1911
      %v1922 = vpop.permute.xlu0 %1921
      %1923 = vset.pattern.permute.xlu0 0
      %1924 = vperm.xlu0 %1923, %v1912
      %v1925 = vpop.permute.xlu0 %1924
      %1926 = vset.pattern.permute.xlu0 0
      %1927 = vperm.xlu0 %1926, %v1913
      %v1928 = vpop.permute.xlu0 %1927
      %vm1929 = vcmp.eq.s32.totalorder %v1916, 1
      %vm1930 = vcmp.eq.s32.totalorder %v1919, 1
      %vm1931 = vcmp.eq.s32.totalorder %v1922, 1
      %vm1932 = vcmp.eq.s32.totalorder %v1925, 1
      %vm1933 = vcmp.eq.s32.totalorder %v1928, 1
      %v1934 = vsel %vm1929, %v1877, 0.0
      %v1935 = vsel %vm1930, %v1880, 0.0
      %v1936 = vsel %vm1931, %v1885, 0.0
      %v1937 = vsel %vm1932, %v1888, 0.0
      %v1938 = vsel %vm1933, %v1893, 0.0
      %v1939 = vadd.f32 %v1763, %v1934
      %v1940 = vadd.f32 %v1764, %v1935
      %v1941 = vadd.f32 %v1765, %v1936
      %v1942 = vadd.f32 %v1766, %v1937
      %v1943 = vadd.f32 %v1767, %v1938
      %v1944 = vpack.c.bf16 %v1940, %v1939
      %v1945 = vpack.c.bf16 %v1942, %v1941
      %v1946 = vpack.c.bf16 %v1943, %v1943
      %v1950 = vunpack.c.l.b16 %v1944
      %v1951 = vunpack.c.h.b16 %v1944
      %v1952 = vunpack.c.l.b16 %v1945
      %v1953 = vunpack.c.h.b16 %v1945
      %v1954 = vunpack.c.l.b16 %v1946
      %v1955 = vpack.c.b16 %v1950, %v1950
      %v1956 = vpack.c.b16 %v1951, %v1951
      %v1957 = vpack.c.b16 %v1952, %v1952
      %v1958 = vpack.c.b16 %v1953, %v1953
      %v1959 = vpack.c.b16 %v1954, %v1954
      %vm1965 = vcmask 60416
      %1966 = vst.msk [vmem:[%s258] sm:$0xf] %vm1965, %v1955
      %1967 = vst.msk [vmem:[%s258 + $0x4] sm:$0xf] %vm1965, %v1956
      %1968 = vst.msk [vmem:[%s258 + $0x8] sm:$0xf] %vm1965, %v1957
      %1969 = vst.msk [vmem:[%s258 + $0xc] sm:$0xf] %vm1965, %v1958
      %vm1970 = vcmask 58368
      %1971 = vst.msk [vmem:[%s258 + $0x10] sm:$0x3] %vm1970, %v1959
      %v1972 = vunpack.c.l.bf16 %v1944
      %v1973 = vunpack.c.h.bf16 %v1944
      %v1974 = vunpack.c.l.bf16 %v1945
      %v1975 = vunpack.c.h.bf16 %v1945
      %v1976 = vunpack.c.l.bf16 %v1946
      %vm1977 = vcmask 64512
      %v1978 = vsel %vm1977, %v1972, 0.0
      %v1979 = vsel %vm1977, %v1973, 0.0
      %v1980 = vadd.f32 %v1978, %v1979
      %v1981 = vsel %vm1977, %v1974, 0.0
      %v1982 = vadd.f32 %v1980, %v1981
      %v1983 = vsel %vm1977, %v1975, 0.0
      %v1984 = vadd.f32 %v1982, %v1983
      %v1985 = vsel %vm1965, %v1976, 0.0
      %v1986 = vadd.f32 %v1984, %v1985
      %v1987 = vrot.slane %v1986, 4
      %v1988 = vadd.f32 %v1986, %v1987
      %v1989 = vrot.slane %v1988, 2
      %v1990 = vadd.f32 %v1988, %v1989
      %v1991 = vrot.slane %v1990, 1
      %v1992 = vadd.f32 %v1990, %v1991
      %v1993 = vmul.f32 %v1972, %v1972
      %v1994 = vmul.f32 %v1973, %v1973
      %v1995 = vmul.f32 %v1974, %v1974
      %v1996 = vmul.f32 %v1975, %v1975
      %v1997 = vmul.f32 %v1976, %v1976
      %v1998 = vsel %vm1977, %v1993, 0.0
      %v1999 = vsel %vm1977, %v1994, 0.0
      %v2000 = vadd.f32 %v1998, %v1999
      %v2001 = vsel %vm1977, %v1995, 0.0
      %v2002 = vadd.f32 %v2000, %v2001
      %v2003 = vsel %vm1977, %v1996, 0.0
      %v2004 = vadd.f32 %v2002, %v2003
      %v2005 = vsel %vm1965, %v1997, 0.0
      %v2006 = vadd.f32 %v2004, %v2005
      %v2007 = vrot.slane %v2006, 4
      %v2008 = vadd.f32 %v2006, %v2007
      %v2009 = vrot.slane %v2008, 2
      %v2010 = vadd.f32 %v2008, %v2009
      %v2011 = vrot.slane %v2010, 1
      %v2012 = vadd.f32 %v2010, %v2011
      %vm2013 = vcmask 1040384
      %v2014 = vsel %vm2013, %v1992, %v2012
      %2015 = vst.msk [vmem:[%s262] sm:$0x3] %vm1970, %v2014
      %p2016 = scmp.lt.s32.totalorder %s18, 1
      %s2017 = scalar_select %p2016, %s18, 1
      %s2018 = smul.addr %s2017, 5
      %s2019 = smul.addr %s2018, 4
      %s2020 = scalar_lea.vmem %s5, %s2019
      %p2021 = scmp.lt.s32.totalorder %s18, 1
      %s2022 = scalar_select %p2021, %s18, 1
      %s2023 = smul.addr %s2022, 2
      %s2024 = scalar_lea.vmem %s6, %s2023
      // Predicated region
      $region45: #{densenet_forward.12} parent=39 // pred_check
        %p2025 = pneg %p146
      $region46: #{densenet_forward.12} parent=39 // pred_check_branch
        %2027 = sbr.rel (%p2025) target = $region48
      $region47: #{densenet_forward.12} parent=39 // pred_region
        _
      $region48: #{densenet_forward.12} parent=39 // pred_fallthru
        _
      // Predicated region
      $region49: #{densenet_forward.12} parent=39 // pred_check
        %p2028 = pneg %p172
      $region50: #{densenet_forward.12} parent=39 // pred_check_branch
        %2030 = sbr.rel (%p2028) target = $region52
      $region51: #{densenet_forward.12} parent=39 // pred_region
        _
      $region52: #{densenet_forward.12} parent=39 // pred_fallthru
        _
    $region40: #{densenet_forward.12} parent=5 // pred_fallthru
      _
    %p2031 = scmp.le.s32.totalorder 2, %s13
    // Predicated region
    $region53: #{densenet_forward.12} parent=5 // pred_check
      %p2032 = pneg %p2031
    $region54: #{densenet_forward.12} parent=5 // pred_check_branch
      %2034 = sbr.rel (%p2032) target = $region56
    $region55: #{densenet_forward.12} parent=5 // pred_region
      %s2035 = ssub.s32 %s13, 2
      // Predicated region
      $region57: #{densenet_forward.12} parent=55 // pred_check
        %p2036 = pneg %p152
      $region58: #{densenet_forward.12} parent=55 // pred_check_branch
        %2038 = sbr.rel (%p2036) target = $region60
      $region59: #{densenet_forward.12} parent=55 // pred_region
        %p2039 = scmp.lt.s32.totalorder %s19, 1
        %s2040 = scalar_select %p2039, %s19, 1
        %s2041 = smul.addr %s2040, 5
        %s2042 = smul.addr %s2041, 4
        %s2043 = scalar_lea.vmem %s5, %s2042
      $region60: #{densenet_forward.12} parent=55 // pred_fallthru
        _
      // Predicated region
      $region61: #{densenet_forward.12} parent=55 // pred_check
        %p2044 = pneg %p178
      $region62: #{densenet_forward.12} parent=55 // pred_check_branch
        %2046 = sbr.rel (%p2044) target = $region64
      $region63: #{densenet_forward.12} parent=55 // pred_region
        %p2047 = scmp.lt.s32.totalorder %s19, 1
        %s2048 = scalar_select %p2047, %s19, 1
        %s2049 = smul.addr %s2048, 2
        %s2050 = scalar_lea.vmem %s6, %s2049
      $region64: #{densenet_forward.12} parent=55 // pred_fallthru
        _
    $region56: #{densenet_forward.12} parent=5 // pred_fallthru
      _
  $region6: #{densenet_forward.12} parent=0 // loop_footer
    %s17 = sadd.s32 1, %s13
  $region7: #{densenet_forward.12} parent=0 // loop_footer_branch
    %12 = sbr.rel target = $region3
  $region8: #{densenet_forward.12} parent=0 // loop_exit
    _

// kernel: densenet_forward.13
$region0: #{densenet_forward.13}
  #allocation0 [shape = 'u32[]', space=smem, size = 0x4, offset = 0x4, fixed_abs, tag = 'smem constant byte address 0x4 - core index']
  #allocation1 [shape = 'u32[144,128]{1,0:T(1,128)}', space=vmem, size = 0x12000, scoped, tag = 'internal scratch']
  %s0 = inlined_call_operand.vmem [shape: bf16[72,128], index: 0, kind: input, shape index: {}]
  %s1 = inlined_call_operand.vmem [shape: bf16[128,128], index: 1, kind: input, shape index: {}]
  %s2 = inlined_call_operand.vmem [shape: f32[1,128], index: 2, kind: input, shape index: {}]
  %s3 = inlined_call_operand.vmem [shape: f32[1,128], index: 3, kind: input, shape index: {}]
  %s4 = inlined_call_operand.vmem [shape: f32[1,128], index: 4, kind: input, shape index: {}]
  %s5 = inlined_call_operand.vmem [shape: f32[72,128], index: 5, kind: output, shape index: {}]
  %s6 = sld [smem:[#allocation0]]
  $region38: #{densenet_forward.13} parent=0
    _
  %s8 = ssub.s32 1, %s6
  %s9 = scalar_select 0, %s8, %s6
  // Predicated region
  $region2: #{densenet_forward.13} parent=0 // pred_check
    _
  $region3: #{densenet_forward.13} parent=0 // pred_check_branch
    %11 = sbr.rel (0) target = $region5
  $region4: #{densenet_forward.13} parent=0 // pred_region
    _
  $region5: #{densenet_forward.13} parent=0 // pred_fallthru
    _
  // Predicated region
  $region6: #{densenet_forward.13} parent=0 // pred_check
    _
  $region7: #{densenet_forward.13} parent=0 // pred_check_branch
    %13 = sbr.rel (0) target = $region9
  $region8: #{densenet_forward.13} parent=0 // pred_region
    _
  $region9: #{densenet_forward.13} parent=0 // pred_fallthru
    _
  // Predicated region
  $region10: #{densenet_forward.13} parent=0 // pred_check
    _
  $region11: #{densenet_forward.13} parent=0 // pred_check_branch
    %15 = sbr.rel (0) target = $region13
  $region12: #{densenet_forward.13} parent=0 // pred_region
    _
  $region13: #{densenet_forward.13} parent=0 // pred_fallthru
    _
  // Predicated region
  $region14: #{densenet_forward.13} parent=0 // pred_check
    _
  $region15: #{densenet_forward.13} parent=0 // pred_check_branch
    %17 = sbr.rel (0) target = $region17
  $region16: #{densenet_forward.13} parent=0 // pred_region
    _
  $region17: #{densenet_forward.13} parent=0 // pred_fallthru
    _
  // Predicated region
  $region18: #{densenet_forward.13} parent=0 // pred_check
    _
  $region19: #{densenet_forward.13} parent=0 // pred_check_branch
    %19 = sbr.rel (0) target = $region21
  $region20: #{densenet_forward.13} parent=0 // pred_region
    _
  $region21: #{densenet_forward.13} parent=0 // pred_fallthru
    _
  %p21 = scmp.eq.s32.totalorder 0, 0
  // Predicated region
  $region22: #{densenet_forward.13} parent=0 // pred_check
    %p22 = pneg %p21
  $region23: #{densenet_forward.13} parent=0 // pred_check_branch
    %24 = sbr.rel (%p22) target = $region25
  $region24: #{densenet_forward.13} parent=0 // pred_region
    %25 = vst [vmem:[%s5] sm:$0xff] 0.0
    %26 = vst [vmem:[%s5 + $0x8] sm:$0xff] 0.0
    %27 = vst [vmem:[%s5 + $0x10] sm:$0xff] 0.0
    %28 = vst [vmem:[%s5 + $0x18] sm:$0xff] 0.0
    %29 = vst [vmem:[%s5 + $0x20] sm:$0xff] 0.0
    %30 = vst [vmem:[%s5 + $0x28] sm:$0xff] 0.0
    %31 = vst [vmem:[%s5 + $0x30] sm:$0xff] 0.0
    %32 = vst [vmem:[%s5 + $0x38] sm:$0xff] 0.0
    %33 = vst [vmem:[%s5 + $0x40] sm:$0xff] 0.0
  $region25: #{densenet_forward.13} parent=0 // pred_fallthru
    _
  %v34 = vld [vmem:[%s0] sm:$0xf]
  %v35 = vld [vmem:[%s0 + $0x4] sm:$0xf]
  %v36 = vld [vmem:[%s0 + $0x8] sm:$0xf]
  %v37 = vld [vmem:[%s0 + $0xc] sm:$0xf]
  %v38 = vld [vmem:[%s0 + $0x10] sm:$0xf]
  %v39 = vld [vmem:[%s0 + $0x14] sm:$0xf]
  %v40 = vld [vmem:[%s0 + $0x18] sm:$0xf]
  %v41 = vld [vmem:[%s0 + $0x1c] sm:$0xf]
  %v42 = vld [vmem:[%s0 + $0x20] sm:$0xf]
  %v43 = vunpack.c.l.bf16 %v34
  %v44 = vunpack.c.l.bf16 %v35
  %v45 = vunpack.c.l.bf16 %v36
  %v46 = vunpack.c.l.bf16 %v37
  %v47 = vunpack.c.l.bf16 %v38
  %v48 = vunpack.c.l.bf16 %v39
  %v49 = vunpack.c.l.bf16 %v40
  %v50 = vunpack.c.l.bf16 %v41
  %v51 = vunpack.c.l.bf16 %v42
  %v52 = vld [vmem:[%s2] sm:$0x1]
  %v54 = vlaneseq
  %v55 = vshrl.u32 %v54, 7
  %v56 = vsub.s32 0, %v55
  %v57 = vrot.slane %v52, %v56
  %v59 = vmul.f32 %v43, %v57
  %v60 = vmul.f32 %v44, %v57
  %v61 = vmul.f32 %v45, %v57
  %v62 = vmul.f32 %v46, %v57
  %v63 = vmul.f32 %v47, %v57
  %v64 = vmul.f32 %v48, %v57
  %v65 = vmul.f32 %v49, %v57
  %v66 = vmul.f32 %v50, %v57
  %v67 = vmul.f32 %v51, %v57
  %v68 = vld [vmem:[%s3] sm:$0x1]
  %v70 = vlaneseq
  %v71 = vshrl.u32 %v70, 7
  %v72 = vsub.s32 0, %v71
  %v73 = vrot.slane %v68, %v72
  %v75 = vadd.f32 %v59, %v73
  %v76 = vadd.f32 %v60, %v73
  %v77 = vadd.f32 %v61, %v73
  %v78 = vadd.f32 %v62, %v73
  %v79 = vadd.f32 %v63, %v73
  %v80 = vadd.f32 %v64, %v73
  %v81 = vadd.f32 %v65, %v73
  %v82 = vadd.f32 %v66, %v73
  %v83 = vadd.f32 %v67, %v73
  %v84 = vmax.f32 %v75, 0.0
  %v85 = vmax.f32 %v76, 0.0
  %v86 = vmax.f32 %v77, 0.0
  %v87 = vmax.f32 %v78, 0.0
  %v88 = vmax.f32 %v79, 0.0
  %v89 = vmax.f32 %v80, 0.0
  %v90 = vmax.f32 %v81, 0.0
  %v91 = vmax.f32 %v82, 0.0
  %v92 = vmax.f32 %v83, 0.0
  %v93 = vpack.c.bf16 %v85, %v84
  %v94 = vpack.c.bf16 %v87, %v86
  %v95 = vpack.c.bf16 %v89, %v88
  %v96 = vpack.c.bf16 %v91, %v90
  %v97 = vpack.c.bf16 %v92, %v92
  %v98 = vld [vmem:[%s5] sm:$0xff]
  %v99 = vld [vmem:[%s5 + $0x8] sm:$0xff]
  %v100 = vld [vmem:[%s5 + $0x10] sm:$0xff]
  %v101 = vld [vmem:[%s5 + $0x18] sm:$0xff]
  %v102 = vld [vmem:[%s5 + $0x20] sm:$0xff]
  %v103 = vld [vmem:[%s5 + $0x28] sm:$0xff]
  %v104 = vld [vmem:[%s5 + $0x30] sm:$0xff]
  %v105 = vld [vmem:[%s5 + $0x38] sm:$0xff]
  %v106 = vld [vmem:[%s5 + $0x40] sm:$0xff]
  %v107 = vld [vmem:[%s1] sm:$0xf]
  %v108 = vld [vmem:[%s1 + $0x4] sm:$0xf]
  %v109 = vld [vmem:[%s1 + $0x8] sm:$0xf]
  %v110 = vld [vmem:[%s1 + $0xc] sm:$0xf]
  %v111 = vld [vmem:[%s1 + $0x10] sm:$0xf]
  %v112 = vld [vmem:[%s1 + $0x14] sm:$0xf]
  %v113 = vld [vmem:[%s1 + $0x18] sm:$0xf]
  %v114 = vld [vmem:[%s1 + $0x1c] sm:$0xf]
  %v115 = vld [vmem:[%s1 + $0x20] sm:$0xf]
  %v116 = vld [vmem:[%s1 + $0x24] sm:$0xf]
  %v117 = vld [vmem:[%s1 + $0x28] sm:$0xf]
  %v118 = vld [vmem:[%s1 + $0x2c] sm:$0xf]
  %v119 = vld [vmem:[%s1 + $0x30] sm:$0xf]
  %v120 = vld [vmem:[%s1 + $0x34] sm:$0xf]
  %v121 = vld [vmem:[%s1 + $0x38] sm:$0xf]
  %v122 = vld [vmem:[%s1 + $0x3c] sm:$0xf]
  %v139 = vunpack.c.l.b16 %v107
  %v140 = vunpack.c.l.b16 %v108
  %v141 = vunpack.c.l.b16 %v109
  %v142 = vunpack.c.l.b16 %v110
  %v143 = vunpack.c.l.b16 %v111
  %v144 = vunpack.c.l.b16 %v112
  %v145 = vunpack.c.l.b16 %v113
  %v146 = vunpack.c.l.b16 %v114
  %v147 = vunpack.c.l.b16 %v115
  %v148 = vunpack.c.l.b16 %v116
  %v149 = vunpack.c.l.b16 %v117
  %v150 = vunpack.c.l.b16 %v118
  %v151 = vunpack.c.l.b16 %v119
  %v152 = vunpack.c.l.b16 %v120
  %v153 = vunpack.c.l.b16 %v121
  %v154 = vunpack.c.l.b16 %v122
  %v155 = vpack.c.b16 %v140, %v139
  %v156 = vpack.c.b16 %v142, %v141
  %v157 = vpack.c.b16 %v144, %v143
  %v158 = vpack.c.b16 %v146, %v145
  %v159 = vpack.c.b16 %v148, %v147
  %v160 = vpack.c.b16 %v150, %v149
  %v161 = vpack.c.b16 %v152, %v151
  %v162 = vpack.c.b16 %v154, %v153
  %171 = vmatprep.subr.bf16.mxu0 0
  %172 = vmatpush1.bf16.msra.mxu0 %v155
  %173 = vmatprep.subr.bf16.mxu0 0
  %174 = vmatpush1.bf16.msra.mxu0 %v156
  %175 = vmatprep.subr.bf16.mxu0 0
  %176 = vmatpush1.bf16.msra.mxu0 %v157
  %177 = vmatprep.subr.bf16.mxu0 0
  %178 = vmatpush1.bf16.msra.mxu0 %v158
  %179 = vmatprep.subr.bf16.mxu0 0
  %180 = vmatpush1.bf16.msra.mxu0 %v159
  %181 = vmatprep.subr.bf16.mxu0 0
  %182 = vmatpush1.bf16.msra.mxu0 %v160
  %183 = vmatprep.subr.bf16.mxu0 0
  %184 = vmatpush1.bf16.msra.mxu0 %v161
  %185 = vmatprep.subr.bf16.mxu0 0
  %186 = vmatpush1.bf16.msra.mxu0 %v162
  %187 = vmatprep.subr.bf16.mxu0 0
  %188 = vmatpush1.bf16.msra.mxu0 0
  %189 = vmatprep.subr.bf16.mxu0 0
  %190 = vmatpush1.bf16.msra.mxu0 0
  %191 = vmatprep.subr.bf16.mxu0 0
  %192 = vmatpush1.bf16.msra.mxu0 0
  %193 = vmatprep.subr.bf16.mxu0 0
  %194 = vmatpush1.bf16.msra.mxu0 0
  %195 = vmatprep.subr.bf16.mxu0 0
  %196 = vmatpush1.bf16.msra.mxu0 0
  %197 = vmatprep.subr.bf16.mxu0 0
  %198 = vmatpush1.bf16.msra.mxu0 0
  %199 = vmatprep.subr.bf16.mxu0 0
  %200 = vmatpush1.bf16.msra.mxu0 0
  %201 = vmatprep.subr.bf16.mxu0 0
  %202 = vmatpush1.bf16.msra.mxu0 0
  %203 = vmatprep.mubr.bf16.mxu0 0
  %204 = vmatmul.mubr.bf16.gmra.mrb[0].mxu0 %v93
  %v205 = vpop.f32.mrb[0].mxu0
  %v206 = vadd.f32 0.0, %v205
  %v207 = vpop.f32.mrb[0].mxu0
  %v208 = vpop.f32.mrb[0].mxu0
  %v209 = vadd.f32 0.0, %v208
  %v210 = vpop.f32.mrb[0].mxu0
  %211 = vmatprep.mubr.bf16.mxu0 0
  %212 = vmatmul.mubr.bf16.gmra.mrb[0].mxu0 %v94
  %v213 = vpop.f32.mrb[0].mxu0
  %v214 = vadd.f32 0.0, %v213
  %v215 = vpop.f32.mrb[0].mxu0
  %v216 = vpop.f32.mrb[0].mxu0
  %v217 = vadd.f32 0.0, %v216
  %v218 = vpop.f32.mrb[0].mxu0
  %219 = vmatprep.mubr.bf16.mxu0 0
  %220 = vmatmul.mubr.bf16.gmra.mrb[0].mxu0 %v95
  %v221 = vpop.f32.mrb[0].mxu0
  %v222 = vadd.f32 0.0, %v221
  %v223 = vpop.f32.mrb[0].mxu0
  %v224 = vpop.f32.mrb[0].mxu0
  %v225 = vadd.f32 0.0, %v224
  %v226 = vpop.f32.mrb[0].mxu0
  %227 = vmatprep.mubr.bf16.mxu0 0
  %228 = vmatmul.mubr.bf16.gmra.mrb[0].mxu0 %v96
  %v229 = vpop.f32.mrb[0].mxu0
  %v230 = vadd.f32 0.0, %v229
  %v231 = vpop.f32.mrb[0].mxu0
  %v232 = vpop.f32.mrb[0].mxu0
  %v233 = vadd.f32 0.0, %v232
  %v234 = vpop.f32.mrb[0].mxu0
  %235 = vmatprep.mubr.bf16.mxu0 0
  %236 = vmatmul.mubr.bf16.gmra.mrb[0].mxu0 %v97
  %v237 = vpop.f32.mrb[0].mxu0
  %v238 = vadd.f32 0.0, %v237
  %v239 = vpop.f32.mrb[0].mxu0
  %v240 = vpop.f32.mrb[0].mxu0
  %v241 = vpop.f32.mrb[0].mxu0
  %242 = vdwg.mxu0
  %v243 = vadd.f32 %v98, %v206
  %v244 = vadd.f32 %v99, %v209
  %v245 = vadd.f32 %v100, %v214
  %v246 = vadd.f32 %v101, %v217
  %v247 = vadd.f32 %v102, %v222
  %v248 = vadd.f32 %v103, %v225
  %v249 = vadd.f32 %v104, %v230
  %v250 = vadd.f32 %v105, %v233
  %v251 = vadd.f32 %v106, %v238
  %252 = vst [vmem:[%s5] sm:$0xff] %v243
  %253 = vst [vmem:[%s5 + $0x8] sm:$0xff] %v244
  %254 = vst [vmem:[%s5 + $0x10] sm:$0xff] %v245
  %255 = vst [vmem:[%s5 + $0x18] sm:$0xff] %v246
  %256 = vst [vmem:[%s5 + $0x20] sm:$0xff] %v247
  %257 = vst [vmem:[%s5 + $0x28] sm:$0xff] %v248
  %258 = vst [vmem:[%s5 + $0x30] sm:$0xff] %v249
  %259 = vst [vmem:[%s5 + $0x38] sm:$0xff] %v250
  %260 = vst [vmem:[%s5 + $0x40] sm:$0xff] %v251
  // Predicated region
  $region26: #{densenet_forward.13} parent=0 // pred_check
    %p261 = pneg %p21
  $region27: #{densenet_forward.13} parent=0 // pred_check_branch
    %263 = sbr.rel (%p261) target = $region29
  $region28: #{densenet_forward.13} parent=0 // pred_region
    %v264 = vld [vmem:[%s5] sm:$0xff]
    %v265 = vld [vmem:[%s5 + $0x8] sm:$0xff]
    %v266 = vld [vmem:[%s5 + $0x10] sm:$0xff]
    %v267 = vld [vmem:[%s5 + $0x18] sm:$0xff]
    %v268 = vld [vmem:[%s5 + $0x20] sm:$0xff]
    %v269 = vld [vmem:[%s5 + $0x28] sm:$0xff]
    %v270 = vld [vmem:[%s5 + $0x30] sm:$0xff]
    %v271 = vld [vmem:[%s5 + $0x38] sm:$0xff]
    %v272 = vld [vmem:[%s5 + $0x40] sm:$0xff]
    %v273 = vld [vmem:[%s4] sm:$0x1]
    %v275 = vlaneseq
    %v276 = vshrl.u32 %v275, 7
    %v277 = vsub.s32 0, %v276
    %v278 = vrot.slane %v273, %v277
    %v280 = vadd.f32 %v264, %v278
    %v281 = vadd.f32 %v265, %v278
    %v282 = vadd.f32 %v266, %v278
    %v283 = vadd.f32 %v267, %v278
    %v284 = vadd.f32 %v268, %v278
    %v285 = vadd.f32 %v269, %v278
    %v286 = vadd.f32 %v270, %v278
    %v287 = vadd.f32 %v271, %v278
    %v288 = vadd.f32 %v272, %v278
    %289 = vst [vmem:[%s5] sm:$0xff] %v280
    %290 = vst [vmem:[%s5 + $0x8] sm:$0xff] %v281
    %291 = vst [vmem:[%s5 + $0x10] sm:$0xff] %v282
    %292 = vst [vmem:[%s5 + $0x18] sm:$0xff] %v283
    %293 = vst [vmem:[%s5 + $0x20] sm:$0xff] %v284
    %294 = vst [vmem:[%s5 + $0x28] sm:$0xff] %v285
    %295 = vst [vmem:[%s5 + $0x30] sm:$0xff] %v286
    %296 = vst [vmem:[%s5 + $0x38] sm:$0xff] %v287
    %297 = vst [vmem:[%s5 + $0x40] sm:$0xff] %v288
  $region29: #{densenet_forward.13} parent=0 // pred_fallthru
    _
  // Predicated region
  $region30: #{densenet_forward.13} parent=0 // pred_check
    _
  $region31: #{densenet_forward.13} parent=0 // pred_check_branch
    %299 = sbr.rel (0) target = $region33
  $region32: #{densenet_forward.13} parent=0 // pred_region
    _
  $region33: #{densenet_forward.13} parent=0 // pred_fallthru
    _
  // Predicated region
  $region34: #{densenet_forward.13} parent=0 // pred_check
    _
  $region35: #{densenet_forward.13} parent=0 // pred_check_branch
    %301 = sbr.rel (0) target = $region37
  $region36: #{densenet_forward.13} parent=0 // pred_region
    _
  $region37: #{densenet_forward.13} parent=0 // pred_fallthru
    _

// kernel: densenet_forward.14
$region0: #{densenet_forward.14}
  #allocation0 [shape = 'u32[]', space=smem, size = 0x4, offset = 0x4, fixed_abs, tag = 'smem constant byte address 0x4 - core index']
  #allocation1 [shape = 'u32[144,128]{1,0:T(1,128)}', space=vmem, size = 0x12000, scoped, tag = 'internal scratch']
  #allocation2 [shape = 'bf16[21,40]{1,0:T(8,128)(2,1)}', space=vmem, size = 0x1800, scoped, tag = 'scratch operand']
  %s0 = inlined_call_operand.vmem [shape: bf16[2,9,40], index: 0, kind: input, shape index: {}]
  %s1 = inlined_call_operand.vmem [shape: bf16[9,40,8], index: 1, kind: input, shape index: {}]
  %s2 = inlined_call_operand.vmem [shape: f32[1,40], index: 2, kind: input, shape index: {}]
  %s3 = inlined_call_operand.vmem [shape: f32[1,40], index: 3, kind: input, shape index: {}]
  %s4 = inlined_call_operand.vmem [shape: f32[9,9,1], index: 4, kind: input, shape index: {}]
  %s5 = inlined_call_operand.vmem [shape: bf16[2,9,8], index: 5, kind: output, shape index: {0}]
  %s6 = inlined_call_operand.vmem [shape: f32[2,2,8], index: 6, kind: output, shape index: {1}]
  %7 = xla_tuple %s5, %s6
  %s8 = sld [smem:[#allocation0]]
  $region65: #{densenet_forward.14} parent=0
    _
  %s10 = ssub.s32 1, %s8
  %s11 = scalar_select 0, %s10, %s8
  loop: start=0, step=1, limit=4
  $region2: #{densenet_forward.14} parent=0 // loop_pre_header
    _
  $region3: #{densenet_forward.14} parent=0 // loop_header
    %s13 = sphi 0, %s17
    %p14 = scmp.ge.s32.totalorder %s13, 4
    %s23 = sphi 0, %s25
    %s26 = sphi 0, %s23
    %s27 = sphi 0, %s26
    %s43 = sphi 0, %s27
    %s47 = sphi 0, %s47
    %s49 = sphi 0, %s47
    %s50 = sphi 0, %s49
    %s64 = sphi 0, %s50
    %s68 = sphi 0, %s68
    %s70 = sphi 0, %s68
    %s71 = sphi 0, %s70
    %s85 = sphi 0, %s71
    %s89 = sphi 0, %s89
    %s91 = sphi 0, %s89
    %s92 = sphi 0, %s91
    %s106 = sphi 0, %s92
    %s110 = sphi 0, %s110
    %s112 = sphi 0, %s110
    %s113 = sphi 0, %s112
    %s127 = sphi 0, %s113
    %s133 = sphi 0, %s135
    %s136 = sphi 0, %s133
    %s137 = sphi 0, %s136
    %s153 = sphi 0, %s137
    %s159 = sphi 0, %s161
    %s162 = sphi 0, %s159
    %s163 = sphi 0, %s162
    %s179 = sphi 0, %s163
  $region4: #{densenet_forward.14} parent=0 // loop_header_branch
    %16 = sbr.rel (%p14) target = $region8
  $region5: #{densenet_forward.14} parent=0 // loop_body
    %s18 = ssub.s32 %s13, 1
    %s19 = ssub.s32 %s13, 2
    %s20 = sadd.s32 %s13, 1
    %s21 = ssub.s32 %s13, %s20
    %p22 = scmp.eq.s32.totalorder %s21, 0
    %s24 = sadd.s32 %s23, 1
    %s25 = scalar_select %p22, %s23, %s24
    %p28 = pneg %p22
    %p29 = scmp.eq.s32.totalorder %s13, 1
    %p30 = por %p28, %p29
    %p31 = scmp.ne.s32.totalorder %s23, %s26
    %p32 = scmp.eq.s32.totalorder %s13, 0
    %p33 = por %p31, %p32
    %p34 = scmp.ne.s32.totalorder %s23, %s26
    %p35 = scmp.eq.s32.totalorder %s18, 1
    %p36 = por %p34, %p35
    %p37 = scmp.ne.s32.totalorder %s26, %s27
    %p38 = scmp.eq.s32.totalorder %s18, 0
    %p39 = por %p37, %p38
    %p40 = scmp.ne.s32.totalorder %s26, %s27
    %p41 = scmp.eq.s32.totalorder %s19, 1
    %p42 = por %p40, %p41
    %p44 = scmp.ne.s32.totalorder %s27, %s43
    %p45 = scmp.eq.s32.totalorder %s19, 0
    %p46 = por %p44, %p45
    %s48 = sadd.s32 %s47, 1
    %p51 = scmp.eq.s32.totalorder %s13, 1
    %p52 = scmp.ne.s32.totalorder %s47, %s49
    %p53 = scmp.eq.s32.totalorder %s13, 0
    %p54 = por %p52, %p53
    %p55 = scmp.ne.s32.totalorder %s47, %s49
    %p56 = scmp.eq.s32.totalorder %s18, 1
    %p57 = por %p55, %p56
    %p58 = scmp.ne.s32.totalorder %s49, %s50
    %p59 = scmp.eq.s32.totalorder %s18, 0
    %p60 = por %p58, %p59
    %p61 = scmp.ne.s32.totalorder %s49, %s50
    %p62 = scmp.eq.s32.totalorder %s19, 1
    %p63 = por %p61, %p62
    %p65 = scmp.ne.s32.totalorder %s50, %s64
    %p66 = scmp.eq.s32.totalorder %s19, 0
    %p67 = por %p65, %p66
    %s69 = sadd.s32 %s68, 1
    %p72 = scmp.eq.s32.totalorder %s13, 1
    %p73 = scmp.ne.s32.totalorder %s68, %s70
    %p74 = scmp.eq.s32.totalorder %s13, 0
    %p75 = por %p73, %p74
    %p76 = scmp.ne.s32.totalorder %s68, %s70
    %p77 = scmp.eq.s32.totalorder %s18, 1
    %p78 = por %p76, %p77
    %p79 = scmp.ne.s32.totalorder %s70, %s71
    %p80 = scmp.eq.s32.totalorder %s18, 0
    %p81 = por %p79, %p80
    %p82 = scmp.ne.s32.totalorder %s70, %s71
    %p83 = scmp.eq.s32.totalorder %s19, 1
    %p84 = por %p82, %p83
    %p86 = scmp.ne.s32.totalorder %s71, %s85
    %p87 = scmp.eq.s32.totalorder %s19, 0
    %p88 = por %p86, %p87
    %s90 = sadd.s32 %s89, 1
    %p93 = scmp.eq.s32.totalorder %s13, 1
    %p94 = scmp.ne.s32.totalorder %s89, %s91
    %p95 = scmp.eq.s32.totalorder %s13, 0
    %p96 = por %p94, %p95
    %p97 = scmp.ne.s32.totalorder %s89, %s91
    %p98 = scmp.eq.s32.totalorder %s18, 1
    %p99 = por %p97, %p98
    %p100 = scmp.ne.s32.totalorder %s91, %s92
    %p101 = scmp.eq.s32.totalorder %s18, 0
    %p102 = por %p100, %p101
    %p103 = scmp.ne.s32.totalorder %s91, %s92
    %p104 = scmp.eq.s32.totalorder %s19, 1
    %p105 = por %p103, %p104
    %p107 = scmp.ne.s32.totalorder %s92, %s106
    %p108 = scmp.eq.s32.totalorder %s19, 0
    %p109 = por %p107, %p108
    %s111 = sadd.s32 %s110, 1
    %p114 = scmp.eq.s32.totalorder %s13, 1
    %p115 = scmp.ne.s32.totalorder %s110, %s112
    %p116 = scmp.eq.s32.totalorder %s13, 0
    %p117 = por %p115, %p116
    %p118 = scmp.ne.s32.totalorder %s110, %s112
    %p119 = scmp.eq.s32.totalorder %s18, 1
    %p120 = por %p118, %p119
    %p121 = scmp.ne.s32.totalorder %s112, %s113
    %p122 = scmp.eq.s32.totalorder %s18, 0
    %p123 = por %p121, %p122
    %p124 = scmp.ne.s32.totalorder %s112, %s113
    %p125 = scmp.eq.s32.totalorder %s19, 1
    %p126 = por %p124, %p125
    %p128 = scmp.ne.s32.totalorder %s113, %s127
    %p129 = scmp.eq.s32.totalorder %s19, 0
    %p130 = por %p128, %p129
    %s131 = ssub.s32 %s13, %s20
    %p132 = scmp.eq.s32.totalorder %s131, 0
    %s134 = sadd.s32 %s133, 1
    %s135 = scalar_select %p132, %s133, %s134
    %p138 = pneg %p132
    %p139 = scmp.eq.s32.totalorder %s13, 1
    %p140 = por %p138, %p139
    %p141 = scmp.ne.s32.totalorder %s133, %s136
    %p142 = scmp.eq.s32.totalorder %s13, 0
    %p143 = por %p141, %p142
    %p144 = scmp.ne.s32.totalorder %s133, %s136
    %p145 = scmp.eq.s32.totalorder %s18, 1
    %p146 = por %p144, %p145
    %p147 = scmp.ne.s32.totalorder %s136, %s137
    %p148 = scmp.eq.s32.totalorder %s18, 0
    %p149 = por %p147, %p148
    %p150 = scmp.ne.s32.totalorder %s136, %s137
    %p151 = scmp.eq.s32.totalorder %s19, 1
    %p152 = por %p150, %p151
    %p154 = scmp.ne.s32.totalorder %s137, %s153
    %p155 = scmp.eq.s32.totalorder %s19, 0
    %p156 = por %p154, %p155
    %s157 = ssub.s32 %s13, %s20
    %p158 = scmp.eq.s32.totalorder %s157, 0
    %s160 = sadd.s32 %s159, 1
    %s161 = scalar_select %p158, %s159, %s160
    %p164 = pneg %p158
    %p165 = scmp.eq.s32.totalorder %s13, 1
    %p166 = por %p164, %p165
    %p167 = scmp.ne.s32.totalorder %s159, %s162
    %p168 = scmp.eq.s32.totalorder %s13, 0
    %p169 = por %p167, %p168
    %p170 = scmp.ne.s32.totalorder %s159, %s162
    %p171 = scmp.eq.s32.totalorder %s18, 1
    %p172 = por %p170, %p171
    %p173 = scmp.ne.s32.totalorder %s162, %s163
    %p174 = scmp.eq.s32.totalorder %s18, 0
    %p175 = por %p173, %p174
    %p176 = scmp.ne.s32.totalorder %s162, %s163
    %p177 = scmp.eq.s32.totalorder %s19, 1
    %p178 = por %p176, %p177
    %p180 = scmp.ne.s32.totalorder %s163, %s179
    %p181 = scmp.eq.s32.totalorder %s19, 0
    %p182 = por %p180, %p181
    %p183 = scmp.le.s32.totalorder 1, %s13
    %p184 = scmp.lt.s32.totalorder %s13, 3
    %p185 = pnand %p183, %p184
    %p186 = pneg %p185
    // Predicated region
    $region9: #{densenet_forward.14} parent=5 // pred_check
      _
    $region10: #{densenet_forward.14} parent=5 // pred_check_branch
      %188 = sbr.rel (%p185) target = $region12
    $region11: #{densenet_forward.14} parent=5 // pred_region
      %s189 = ssub.s32 %s13, 1
      // Predicated region
      $region13: #{densenet_forward.14} parent=11 // pred_check
        %p190 = pneg %p60
      $region14: #{densenet_forward.14} parent=11 // pred_check_branch
        %192 = sbr.rel (%p190) target = $region16
      $region15: #{densenet_forward.14} parent=11 // pred_region
        _
      $region16: #{densenet_forward.14} parent=11 // pred_fallthru
        _
      // Predicated region
      $region17: #{densenet_forward.14} parent=11 // pred_check
        %p193 = pneg %p81
      $region18: #{densenet_forward.14} parent=11 // pred_check_branch
        %195 = sbr.rel (%p193) target = $region20
      $region19: #{densenet_forward.14} parent=11 // pred_region
        _
      $region20: #{densenet_forward.14} parent=11 // pred_fallthru
        _
      // Predicated region
      $region21: #{densenet_forward.14} parent=11 // pred_check
        %p196 = pneg %p102
      $region22: #{densenet_forward.14} parent=11 // pred_check_branch
        %198 = sbr.rel (%p196) target = $region24
      $region23: #{densenet_forward.14} parent=11 // pred_region
        _
      $region24: #{densenet_forward.14} parent=11 // pred_fallthru
        _
      // Predicated region
      $region25: #{densenet_forward.14} parent=11 // pred_check
        %p199 = pneg %p123
      $region26: #{densenet_forward.14} parent=11 // pred_check_branch
        %201 = sbr.rel (%p199) target = $region28
      $region27: #{densenet_forward.14} parent=11 // pred_region
        _
      $region28: #{densenet_forward.14} parent=11 // pred_fallthru
        _
    $region12: #{densenet_forward.14} parent=5 // pred_fallthru
      _
    %p202 = scmp.lt.s32.totalorder %s13, 2
    // Predicated region
    $region29: #{densenet_forward.14} parent=5 // pred_check
      %p203 = pneg %p202
    $region30: #{densenet_forward.14} parent=5 // pred_check_branch
      %205 = sbr.rel (%p203) target = $region32
    $region31: #{densenet_forward.14} parent=5 // pred_region
      // Predicated region
      $region33: #{densenet_forward.14} parent=31 // pred_check
        %p206 = pneg %p33
      $region34: #{densenet_forward.14} parent=31 // pred_check_branch
        %208 = sbr.rel (%p206) target = $region36
      $region35: #{densenet_forward.14} parent=31 // pred_region
        %p209 = scmp.lt.s32.totalorder %s13, 1
        %s210 = scalar_select %p209, %s13, 1
        %s211 = smul.addr %s210, 2
        %s212 = smul.addr %s211, 4
        %s213 = scalar_lea.vmem %s0, %s212
      $region36: #{densenet_forward.14} parent=31 // pred_fallthru
        _
    $region32: #{densenet_forward.14} parent=5 // pred_fallthru
      _
    %p214 = scmp.le.s32.totalorder 1, %s13
    %p215 = scmp.lt.s32.totalorder %s13, 3
    %p216 = pnand %p214, %p215
    %p217 = pneg %p216
    // Predicated region
    $region37: #{densenet_forward.14} parent=5 // pred_check
      _
    $region38: #{densenet_forward.14} parent=5 // pred_check_branch
      %219 = sbr.rel (%p216) target = $region40
    $region39: #{densenet_forward.14} parent=5 // pred_region
      %s220 = ssub.s32 %s13, 1
      %p221 = scmp.lt.s32.totalorder %s18, 1
      %s222 = scalar_select %p221, %s18, 1
      %s223 = smul.addr %s222, 2
      %s224 = smul.addr %s223, 4
      %s225 = scalar_lea.vmem %s0, %s224
      %p226 = pneg %p39
      %p227 = pneg %p36
      %p228 = pneg %p60
      %p229 = pneg %p57
      %p230 = pneg %p81
      %p231 = pneg %p78
      %p232 = pneg %p102
      %p233 = pneg %p99
      %p234 = pneg %p123
      %p235 = pneg %p120
      %p236 = pneg %p149
      %p237 = pneg %p146
      %p238 = scmp.lt.s32.totalorder %s18, 1
      %s239 = scalar_select %p238, %s18, 1
      %s240 = smul.addr %s239, 2
      %s241 = smul.addr %s240, 4
      %s242 = scalar_lea.vmem %s5, %s241
      %p243 = pneg %p175
      %p244 = pneg %p172
      %p245 = scmp.lt.s32.totalorder %s18, 1
      %s246 = scalar_select %p245, %s18, 1
      %s247 = smul.addr %s246, 2
      %s248 = scalar_lea.vmem %s6, %s247
      %p249 = scmp.lt.s32.totalorder %s18, 1
      %s250 = scalar_select %p249, %s18, 1
      %s251 = smul.addr %s250, 2
      %s252 = smul.addr %s251, 4
      %s253 = scalar_lea.vmem %s0, %s252
      %p254 = scmp.lt.s32.totalorder %s18, 1
      %s255 = scalar_select %p254, %s18, 1
      %s256 = smul.addr %s255, 2
      %s257 = smul.addr %s256, 4
      %s258 = scalar_lea.vmem %s5, %s257
      %p259 = scmp.lt.s32.totalorder %s18, 1
      %s260 = scalar_select %p259, %s18, 1
      %s261 = smul.addr %s260, 2
      %s262 = scalar_lea.vmem %s6, %s261
      %p264 = scmp.eq.s32.totalorder %s18, 0
      // Predicated region
      $region41: #{densenet_forward.14} parent=39 // pred_check
        %p265 = pneg %p264
      $region42: #{densenet_forward.14} parent=39 // pred_check_branch
        %267 = sbr.rel (%p265) target = $region44
      $region43: #{densenet_forward.14} parent=39 // pred_region
        %vm268 = vcmask 322560
        %269 = vst.msk [vmem:[#allocation2] sm:$0xf] %vm268, 0
        %270 = vst.msk [vmem:[#allocation2 + $0x4] sm:$0xf] %vm268, 0
        %vm271 = vcmask 321536
        %vm272 = vsmask.f32 2304
        %vm273 = vmand %vm271, %vm272
        %v274 = vld [vmem:[#allocation2 + $0x8] sm:$0x7]
        %v275 = vsel %vm273, 0, %v274
        %276 = vst [vmem:[#allocation2 + $0x8] sm:$0x7] %v275
      $region44: #{densenet_forward.14} parent=39 // pred_fallthru
        _
      %v277 = vld [vmem:[%s253] sm:$0xf]
      %v278 = vld [vmem:[%s253 + $0x4] sm:$0x1]
      %v279 = vunpack.c.l.bf16 %v277
      %v280 = vunpack.c.l.bf16 %v278
      %v281 = vld [vmem:[%s2] sm:$0x1]
      %v283 = vlaneseq
      %v284 = vshrl.u32 %v283, 7
      %v285 = vsub.s32 0, %v284
      %v286 = vrot.slane %v281, %v285
      %v288 = vmul.f32 %v279, %v286
      %v289 = vmul.f32 %v280, %v286
      %v290 = vld [vmem:[%s3] sm:$0x1]
      %v292 = vlaneseq
      %v293 = vshrl.u32 %v292, 7
      %v294 = vsub.s32 0, %v293
      %v295 = vrot.slane %v290, %v294
      %v297 = vadd.f32 %v288, %v295
      %v298 = vadd.f32 %v289, %v295
      %v299 = vmax.f32 %v297, 0.0
      %v300 = vmax.f32 %v298, 0.0
      %v301 = vpack.c.bf16 %v300, %v299
      %v303 = vunpack.c.l.b16 %v301
      %v304 = vunpack.c.h.b16 %v301
      %v305 = vpack.c.b16 %v303, %v303
      %v306 = vpack.c.b16 %v304, %v304
      %vm309 = vcmask 322560
      %310 = vst.msk [vmem:[#allocation2 + $0x4] sm:$0xf] %vm309, %v305
      %vm311 = vcmask 319488
      %vm312 = vsmask.f32 256
      %vm313 = vmand %vm311, %vm312
      %v314 = vld [vmem:[#allocation2 + $0x8] sm:$0x1]
      %v315 = vsel %vm313, %v306, %v314
      %316 = vst [vmem:[#allocation2 + $0x8] sm:$0x1] %v315
      %v317 = vld [vmem:[#allocation2] sm:$0xc]
      %v318 = vld [vmem:[#allocation2 + $0x4] sm:$0x7]
      %v319 = vld [vmem:[%s1] sm:$0xf]
      %v320 = vld [vmem:[%s1 + $0x4] sm:$0xf]
      %v321 = vld [vmem:[%s1 + $0x8] sm:$0xf]
      %v322 = vld [vmem:[%s1 + $0xc] sm:$0xf]
      %v323 = vld [vmem:[%s1 + $0x10] sm:$0xf]
      %v326 = vunpack.c.l.b16 %v317
      %v327 = vunpack.c.l.b16 %v318
      %v328 = vpack.c.b16 %v327, %v326
      %v329 = vrot.slane %v328, 2
      %v335 = vunpack.c.l.b16 %v319
      %v336 = vunpack.c.l.b16 %v320
      %v337 = vunpack.c.l.b16 %v321
      %v338 = vunpack.c.l.b16 %v322
      %v339 = vunpack.c.l.b16 %v323
      %v340 = vpack.c.b16 %v336, %v335
      %v341 = vpack.c.b16 %v338, %v337
      %v342 = vpack.c.b16 %v339, %v339
      %vm345 = vcmask 326656
      %v347 = vsel %vm345, %v329, 0
      %vm349 = vcmask 1043456
      %v351 = vsel %vm349, %v342, 0
      %353 = vmatprep.subr.bf16.mxu0 0
      %354 = vmatpush1.bf16.msra.mxu0 %v340
      %355 = vmatprep.subr.bf16.mxu0 0
      %356 = vmatpush1.bf16.msra.mxu0 %v341
      %357 = vmatprep.subr.bf16.mxu0 0
      %358 = vmatpush1.bf16.msra.mxu0 %v351
      %359 = vmatprep.subr.bf16.mxu0 0
      %360 = vmatpush1.bf16.msra.mxu0 0
      %361 = vmatprep.subr.bf16.mxu0 0
      %362 = vmatpush1.bf16.msra.mxu0 0
      %363 = vmatprep.subr.bf16.mxu0 0
      %364 = vmatpush1.bf16.msra.mxu0 0
      %365 = vmatprep.subr.bf16.mxu0 0
      %366 = vmatpush1.bf16.msra.mxu0 0
      %367 = vmatprep.subr.bf16.mxu0 0
      %368 = vmatpush1.bf16.msra.mxu0 0
      %369 = vmatprep.subr.bf16.mxu0 0
      %370 = vmatpush1.bf16.msra.mxu0 0
      %371 = vmatprep.subr.bf16.mxu0 0
      %372 = vmatpush1.bf16.msra.mxu0 0
      %373 = vmatprep.subr.bf16.mxu0 0
      %374 = vmatpush1.bf16.msra.mxu0 0
      %375 = vmatprep.subr.bf16.mxu0 0
      %376 = vmatpush1.bf16.msra.mxu0 0
      %377 = vmatprep.subr.bf16.mxu0 0
      %378 = vmatpush1.bf16.msra.mxu0 0
      %379 = vmatprep.subr.bf16.mxu0 0
      %380 = vmatpush1.bf16.msra.mxu0 0
      %381 = vmatprep.subr.bf16.mxu0 0
      %382 = vmatpush1.bf16.msra.mxu0 0
      %383 = vmatprep.subr.bf16.mxu0 0
      %384 = vmatpush1.bf16.msra.mxu0 0
      %385 = vmatprep.mubr.bf16.mxu0 0
      %386 = vmatmul.mubr.bf16.gmra.mrb[0].mxu0 %v347
      %v387 = vpop.f32.mrb[0].mxu0
      %v388 = vadd.f32 0.0, %v387
      %v389 = vpop.f32.mrb[0].mxu0
      %v390 = vpop.f32.mrb[0].mxu0
      %v391 = vadd.f32 0.0, %v390
      %v392 = vpop.f32.mrb[0].mxu0
      %393 = vdwg.mxu0
      %v394 = vld [vmem:[%s4] sm:$0xff]
      %v395 = vld [vmem:[%s4 + $0x8] sm:$0x1]
      %vm396 = vcmp.gt.f32.partialorder %v394, 0.5
      %vm397 = vcmp.gt.f32.partialorder %v395, 0.5
      %v398 = vsel %vm396, 1, 0
      %v399 = vsel %vm397, 1, 0
      %400 = vset.pattern.permute.xlu0 0
      %401 = vperm.xlu0 %400, %v398
      %v402 = vpop.permute.xlu0 %401
      %403 = vset.pattern.permute.xlu0 0
      %404 = vperm.xlu0 %403, %v399
      %v405 = vpop.permute.xlu0 %404
      %vm406 = vcmp.eq.s32.totalorder %v402, 1
      %vm407 = vcmp.eq.s32.totalorder %v405, 1
      %v408 = vsel %vm406, %v388, 0.0
      %v409 = vsel %vm407, %v391, 0.0
      %v410 = vadd.f32 %v408, 0.0
      %v411 = vadd.f32 %v409, 0.0
      %s412 = scalar_lea.vmem %s1, 20
      %v413 = vld [vmem:[%s412] sm:$0xf]
      %v414 = vld [vmem:[%s412 + $0x4] sm:$0xf]
      %v415 = vld [vmem:[%s412 + $0x8] sm:$0xf]
      %v416 = vld [vmem:[%s412 + $0xc] sm:$0xf]
      %v417 = vld [vmem:[%s412 + $0x10] sm:$0xf]
      %v419 = vshrl.u32 %v328, 16
      %v421 = vrot.slane %v419, 2
      %v422 = vshll.u32 %v328, 16
      %v424 = vrot.slane %v422, 3
      %v425 = vor.u32 %v421, %v424
      %v431 = vunpack.c.l.b16 %v413
      %v432 = vunpack.c.l.b16 %v414
      %v433 = vunpack.c.l.b16 %v415
      %v434 = vunpack.c.l.b16 %v416
      %v435 = vunpack.c.l.b16 %v417
      %v436 = vpack.c.b16 %v432, %v431
      %v437 = vpack.c.b16 %v434, %v433
      %v438 = vpack.c.b16 %v435, %v435
      %v442 = vsel %vm345, %v425, 0
      %v445 = vsel %vm349, %v438, 0
      %447 = vmatprep.subr.bf16.mxu0 0
      %448 = vmatpush1.bf16.msra.mxu0 %v436
      %449 = vmatprep.subr.bf16.mxu0 0
      %450 = vmatpush1.bf16.msra.mxu0 %v437
      %451 = vmatprep.subr.bf16.mxu0 0
      %452 = vmatpush1.bf16.msra.mxu0 %v445
      %453 = vmatprep.subr.bf16.mxu0 0
      %454 = vmatpush1.bf16.msra.mxu0 0
      %455 = vmatprep.subr.bf16.mxu0 0
      %456 = vmatpush1.bf16.msra.mxu0 0
      %457 = vmatprep.subr.bf16.mxu0 0
      %458 = vmatpush1.bf16.msra.mxu0 0
      %459 = vmatprep.subr.bf16.mxu0 0
      %460 = vmatpush1.bf16.msra.mxu0 0
      %461 = vmatprep.subr.bf16.mxu0 0
      %462 = vmatpush1.bf16.msra.mxu0 0
      %463 = vmatprep.subr.bf16.mxu0 0
      %464 = vmatpush1.bf16.msra.mxu0 0
      %465 = vmatprep.subr.bf16.mxu0 0
      %466 = vmatpush1.bf16.msra.mxu0 0
      %467 = vmatprep.subr.bf16.mxu0 0
      %468 = vmatpush1.bf16.msra.mxu0 0
      %469 = vmatprep.subr.bf16.mxu0 0
      %470 = vmatpush1.bf16.msra.mxu0 0
      %471 = vmatprep.subr.bf16.mxu0 0
      %472 = vmatpush1.bf16.msra.mxu0 0
      %473 = vmatprep.subr.bf16.mxu0 0
      %474 = vmatpush1.bf16.msra.mxu0 0
      %475 = vmatprep.subr.bf16.mxu0 0
      %476 = vmatpush1.bf16.msra.mxu0 0
      %477 = vmatprep.subr.bf16.mxu0 0
      %478 = vmatpush1.bf16.msra.mxu0 0
      %479 = vmatprep.mubr.bf16.mxu0 0
      %480 = vmatmul.mubr.bf16.gmra.mrb[0].mxu0 %v442
      %v481 = vpop.f32.mrb[0].mxu0
      %v482 = vadd.f32 0.0, %v481
      %v483 = vpop.f32.mrb[0].mxu0
      %v484 = vpop.f32.mrb[0].mxu0
      %v485 = vadd.f32 0.0, %v484
      %v486 = vpop.f32.mrb[0].mxu0
      %487 = vdwg.mxu0
      %s488 = scalar_lea.vmem %s4, 16
      %v489 = vld [vmem:[%s488] sm:$0xff]
      %v490 = vld [vmem:[%s488 + $0x8] sm:$0x1]
      %vm491 = vcmp.gt.f32.partialorder %v489, 0.5
      %vm492 = vcmp.gt.f32.partialorder %v490, 0.5
      %v493 = vsel %vm491, 1, 0
      %v494 = vsel %vm492, 1, 0
      %495 = vset.pattern.permute.xlu0 0
      %496 = vperm.xlu0 %495, %v493
      %v497 = vpop.permute.xlu0 %496
      %498 = vset.pattern.permute.xlu0 0
      %499 = vperm.xlu0 %498, %v494
      %v500 = vpop.permute.xlu0 %499
      %vm501 = vcmp.eq.s32.totalorder %v497, 1
      %vm502 = vcmp.eq.s32.totalorder %v500, 1
      %v503 = vsel %vm501, %v482, 0.0
      %v504 = vsel %vm502, %v485, 0.0
      %v505 = vadd.f32 %v410, %v503
      %v506 = vadd.f32 %v411, %v504
      %v507 = vld [vmem:[#allocation2] sm:$0x8]
      %v508 = vld [vmem:[#allocation2 + $0x4] sm:$0xf]
      %s509 = scalar_lea.vmem %s1, 40
      %v510 = vld [vmem:[%s509] sm:$0xf]
      %v511 = vld [vmem:[%s509 + $0x4] sm:$0xf]
      %v512 = vld [vmem:[%s509 + $0x8] sm:$0xf]
      %v513 = vld [vmem:[%s509 + $0xc] sm:$0xf]
      %v514 = vld [vmem:[%s509 + $0x10] sm:$0xf]
      %v517 = vunpack.c.l.b16 %v507
      %v518 = vunpack.c.l.b16 %v508
      %v519 = vpack.c.b16 %v518, %v517
      %v520 = vrot.slane %v519, 3
      %v526 = vunpack.c.l.b16 %v510
      %v527 = vunpack.c.l.b16 %v511
      %v528 = vunpack.c.l.b16 %v512
      %v529 = vunpack.c.l.b16 %v513
      %v530 = vunpack.c.l.b16 %v514
      %v531 = vpack.c.b16 %v527, %v526
      %v532 = vpack.c.b16 %v529, %v528
      %v533 = vpack.c.b16 %v530, %v530
      %v537 = vsel %vm345, %v520, 0
      %v540 = vsel %vm349, %v533, 0
      %542 = vmatprep.subr.bf16.mxu0 0
      %543 = vmatpush1.bf16.msra.mxu0 %v531
      %544 = vmatprep.subr.bf16.mxu0 0
      %545 = vmatpush1.bf16.msra.mxu0 %v532
      %546 = vmatprep.subr.bf16.mxu0 0
      %547 = vmatpush1.bf16.msra.mxu0 %v540
      %548 = vmatprep.subr.bf16.mxu0 0
      %549 = vmatpush1.bf16.msra.mxu0 0
      %550 = vmatprep.subr.bf16.mxu0 0
      %551 = vmatpush1.bf16.msra.mxu0 0
      %552 = vmatprep.subr.bf16.mxu0 0
      %553 = vmatpush1.bf16.msra.mxu0 0
      %554 = vmatprep.subr.bf16.mxu0 0
      %555 = vmatpush1.bf16.msra.mxu0 0
      %556 = vmatprep.subr.bf16.mxu0 0
      %557 = vmatpush1.bf16.msra.mxu0 0
      %558 = vmatprep.subr.bf16.mxu0 0
      %559 = vmatpush1.bf16.msra.mxu0 0
      %560 = vmatprep.subr.bf16.mxu0 0
      %561 = vmatpush1.bf16.msra.mxu0 0
      %562 = vmatprep.subr.bf16.mxu0 0
      %563 = vmatpush1.bf16.msra.mxu0 0
      %564 = vmatprep.subr.bf16.mxu0 0
      %565 = vmatpush1.bf16.msra.mxu0 0
      %566 = vmatprep.subr.bf16.mxu0 0
      %567 = vmatpush1.bf16.msra.mxu0 0
      %568 = vmatprep.subr.bf16.mxu0 0
      %569 = vmatpush1.bf16.msra.mxu0 0
      %570 = vmatprep.subr.bf16.mxu0 0
      %571 = vmatpush1.bf16.msra.mxu0 0
      %572 = vmatprep.subr.bf16.mxu0 0
      %573 = vmatpush1.bf16.msra.mxu0 0
      %574 = vmatprep.mubr.bf16.mxu0 0
      %575 = vmatmul.mubr.bf16.gmra.mrb[0].mxu0 %v537
      %v576 = vpop.f32.mrb[0].mxu0
      %v577 = vadd.f32 0.0, %v576
      %v578 = vpop.f32.mrb[0].mxu0
      %v579 = vpop.f32.mrb[0].mxu0
      %v580 = vadd.f32 0.0, %v579
      %v581 = vpop.f32.mrb[0].mxu0
      %582 = vdwg.mxu0
      %s583 = scalar_lea.vmem %s4, 32
      %v584 = vld [vmem:[%s583] sm:$0xff]
      %v585 = vld [vmem:[%s583 + $0x8] sm:$0x1]
      %vm586 = vcmp.gt.f32.partialorder %v584, 0.5
      %vm587 = vcmp.gt.f32.partialorder %v585, 0.5
      %v588 = vsel %vm586, 1, 0
      %v589 = vsel %vm587, 1, 0
      %590 = vset.pattern.permute.xlu0 0
      %591 = vperm.xlu0 %590, %v588
      %v592 = vpop.permute.xlu0 %591
      %593 = vset.pattern.permute.xlu0 0
      %594 = vperm.xlu0 %593, %v589
      %v595 = vpop.permute.xlu0 %594
      %vm596 = vcmp.eq.s32.totalorder %v592, 1
      %vm597 = vcmp.eq.s32.totalorder %v595, 1
      %v598 = vsel %vm596, %v577, 0.0
      %v599 = vsel %vm597, %v580, 0.0
      %v600 = vadd.f32 %v505, %v598
      %v601 = vadd.f32 %v506, %v599
      %s602 = scalar_lea.vmem %s1, 60
      %v603 = vld [vmem:[%s602] sm:$0xf]
      %v604 = vld [vmem:[%s602 + $0x4] sm:$0xf]
      %v605 = vld [vmem:[%s602 + $0x8] sm:$0xf]
      %v606 = vld [vmem:[%s602 + $0xc] sm:$0xf]
      %v607 = vld [vmem:[%s602 + $0x10] sm:$0xf]
      %v609 = vshrl.u32 %v519, 16
      %v611 = vrot.slane %v609, 3
      %v612 = vshll.u32 %v519, 16
      %v614 = vrot.slane %v612, 4
      %v615 = vor.u32 %v611, %v614
      %v621 = vunpack.c.l.b16 %v603
      %v622 = vunpack.c.l.b16 %v604
      %v623 = vunpack.c.l.b16 %v605
      %v624 = vunpack.c.l.b16 %v606
      %v625 = vunpack.c.l.b16 %v607
      %v626 = vpack.c.b16 %v622, %v621
      %v627 = vpack.c.b16 %v624, %v623
      %v628 = vpack.c.b16 %v625, %v625
      %v632 = vsel %vm345, %v615, 0
      %v635 = vsel %vm349, %v628, 0
      %637 = vmatprep.subr.bf16.mxu0 0
      %638 = vmatpush1.bf16.msra.mxu0 %v626
      %639 = vmatprep.subr.bf16.mxu0 0
      %640 = vmatpush1.bf16.msra.mxu0 %v627
      %641 = vmatprep.subr.bf16.mxu0 0
      %642 = vmatpush1.bf16.msra.mxu0 %v635
      %643 = vmatprep.subr.bf16.mxu0 0
      %644 = vmatpush1.bf16.msra.mxu0 0
      %645 = vmatprep.subr.bf16.mxu0 0
      %646 = vmatpush1.bf16.msra.mxu0 0
      %647 = vmatprep.subr.bf16.mxu0 0
      %648 = vmatpush1.bf16.msra.mxu0 0
      %649 = vmatprep.subr.bf16.mxu0 0
      %650 = vmatpush1.bf16.msra.mxu0 0
      %651 = vmatprep.subr.bf16.mxu0 0
      %652 = vmatpush1.bf16.msra.mxu0 0
      %653 = vmatprep.subr.bf16.mxu0 0
      %654 = vmatpush1.bf16.msra.mxu0 0
      %655 = vmatprep.subr.bf16.mxu0 0
      %656 = vmatpush1.bf16.msra.mxu0 0
      %657 = vmatprep.subr.bf16.mxu0 0
      %658 = vmatpush1.bf16.msra.mxu0 0
      %659 = vmatprep.subr.bf16.mxu0 0
      %660 = vmatpush1.bf16.msra.mxu0 0
      %661 = vmatprep.subr.bf16.mxu0 0
      %662 = vmatpush1.bf16.msra.mxu0 0
      %663 = vmatprep.subr.bf16.mxu0 0
      %664 = vmatpush1.bf16.msra.mxu0 0
      %665 = vmatprep.subr.bf16.mxu0 0
      %666 = vmatpush1.bf16.msra.mxu0 0
      %667 = vmatprep.subr.bf16.mxu0 0
      %668 = vmatpush1.bf16.msra.mxu0 0
      %669 = vmatprep.mubr.bf16.mxu0 0
      %670 = vmatmul.mubr.bf16.gmra.mrb[0].mxu0 %v632
      %v671 = vpop.f32.mrb[0].mxu0
      %v672 = vadd.f32 0.0, %v671
      %v673 = vpop.f32.mrb[0].mxu0
      %v674 = vpop.f32.mrb[0].mxu0
      %v675 = vadd.f32 0.0, %v674
      %v676 = vpop.f32.mrb[0].mxu0
      %677 = vdwg.mxu0
      %s678 = scalar_lea.vmem %s4, 48
      %v679 = vld [vmem:[%s678] sm:$0xff]
      %v680 = vld [vmem:[%s678 + $0x8] sm:$0x1]
      %vm681 = vcmp.gt.f32.partialorder %v679, 0.5
      %vm682 = vcmp.gt.f32.partialorder %v680, 0.5
      %v683 = vsel %vm681, 1, 0
      %v684 = vsel %vm682, 1, 0
      %685 = vset.pattern.permute.xlu0 0
      %686 = vperm.xlu0 %685, %v683
      %v687 = vpop.permute.xlu0 %686
      %688 = vset.pattern.permute.xlu0 0
      %689 = vperm.xlu0 %688, %v684
      %v690 = vpop.permute.xlu0 %689
      %vm691 = vcmp.eq.s32.totalorder %v687, 1
      %vm692 = vcmp.eq.s32.totalorder %v690, 1
      %v693 = vsel %vm691, %v672, 0.0
      %v694 = vsel %vm692, %v675, 0.0
      %v695 = vadd.f32 %v600, %v693
      %v696 = vadd.f32 %v601, %v694
      %v697 = vld [vmem:[#allocation2 + $0x4] sm:$0xf]
      %v698 = vld [vmem:[#allocation2 + $0x8] sm:$0x1]
      %s699 = scalar_lea.vmem %s1, 80
      %v700 = vld [vmem:[%s699] sm:$0xf]
      %v701 = vld [vmem:[%s699 + $0x4] sm:$0xf]
      %v702 = vld [vmem:[%s699 + $0x8] sm:$0xf]
      %v703 = vld [vmem:[%s699 + $0xc] sm:$0xf]
      %v704 = vld [vmem:[%s699 + $0x10] sm:$0xf]
      %v707 = vunpack.c.l.b16 %v697
      %v708 = vunpack.c.l.b16 %v698
      %v709 = vpack.c.b16 %v708, %v707
      %v715 = vunpack.c.l.b16 %v700
      %v716 = vunpack.c.l.b16 %v701
      %v717 = vunpack.c.l.b16 %v702
      %v718 = vunpack.c.l.b16 %v703
      %v719 = vunpack.c.l.b16 %v704
      %v720 = vpack.c.b16 %v716, %v715
      %v721 = vpack.c.b16 %v718, %v717
      %v722 = vpack.c.b16 %v719, %v719
      %v726 = vsel %vm345, %v709, 0
      %v729 = vsel %vm349, %v722, 0
      %731 = vmatprep.subr.bf16.mxu0 0
      %732 = vmatpush1.bf16.msra.mxu0 %v720
      %733 = vmatprep.subr.bf16.mxu0 0
      %734 = vmatpush1.bf16.msra.mxu0 %v721
      %735 = vmatprep.subr.bf16.mxu0 0
      %736 = vmatpush1.bf16.msra.mxu0 %v729
      %737 = vmatprep.subr.bf16.mxu0 0
      %738 = vmatpush1.bf16.msra.mxu0 0
      %739 = vmatprep.subr.bf16.mxu0 0
      %740 = vmatpush1.bf16.msra.mxu0 0
      %741 = vmatprep.subr.bf16.mxu0 0
      %742 = vmatpush1.bf16.msra.mxu0 0
      %743 = vmatprep.subr.bf16.mxu0 0
      %744 = vmatpush1.bf16.msra.mxu0 0
      %745 = vmatprep.subr.bf16.mxu0 0
      %746 = vmatpush1.bf16.msra.mxu0 0
      %747 = vmatprep.subr.bf16.mxu0 0
      %748 = vmatpush1.bf16.msra.mxu0 0
      %749 = vmatprep.subr.bf16.mxu0 0
      %750 = vmatpush1.bf16.msra.mxu0 0
      %751 = vmatprep.subr.bf16.mxu0 0
      %752 = vmatpush1.bf16.msra.mxu0 0
      %753 = vmatprep.subr.bf16.mxu0 0
      %754 = vmatpush1.bf16.msra.mxu0 0
      %755 = vmatprep.subr.bf16.mxu0 0
      %756 = vmatpush1.bf16.msra.mxu0 0
      %757 = vmatprep.subr.bf16.mxu0 0
      %758 = vmatpush1.bf16.msra.mxu0 0
      %759 = vmatprep.subr.bf16.mxu0 0
      %760 = vmatpush1.bf16.msra.mxu0 0
      %761 = vmatprep.subr.bf16.mxu0 0
      %762 = vmatpush1.bf16.msra.mxu0 0
      %763 = vmatprep.mubr.bf16.mxu0 0
      %764 = vmatmul.mubr.bf16.gmra.mrb[0].mxu0 %v726
      %v765 = vpop.f32.mrb[0].mxu0
      %v766 = vadd.f32 0.0, %v765
      %v767 = vpop.f32.mrb[0].mxu0
      %v768 = vpop.f32.mrb[0].mxu0
      %v769 = vadd.f32 0.0, %v768
      %v770 = vpop.f32.mrb[0].mxu0
      %771 = vdwg.mxu0
      %s772 = scalar_lea.vmem %s4, 64
      %v773 = vld [vmem:[%s772] sm:$0xff]
      %v774 = vld [vmem:[%s772 + $0x8] sm:$0x1]
      %vm775 = vcmp.gt.f32.partialorder %v773, 0.5
      %vm776 = vcmp.gt.f32.partialorder %v774, 0.5
      %v777 = vsel %vm775, 1, 0
      %v778 = vsel %vm776, 1, 0
      %779 = vset.pattern.permute.xlu0 0
      %780 = vperm.xlu0 %779, %v777
      %v781 = vpop.permute.xlu0 %780
      %782 = vset.pattern.permute.xlu0 0
      %783 = vperm.xlu0 %782, %v778
      %v784 = vpop.permute.xlu0 %783
      %vm785 = vcmp.eq.s32.totalorder %v781, 1
      %vm786 = vcmp.eq.s32.totalorder %v784, 1
      %v787 = vsel %vm785, %v766, 0.0
      %v788 = vsel %vm786, %v769, 0.0
      %v789 = vadd.f32 %v695, %v787
      %v790 = vadd.f32 %v696, %v788
      %s791 = scalar_lea.vmem %s1, 100
      %v792 = vld [vmem:[%s791] sm:$0xf]
      %v793 = vld [vmem:[%s791 + $0x4] sm:$0xf]
      %v794 = vld [vmem:[%s791 + $0x8] sm:$0xf]
      %v795 = vld [vmem:[%s791 + $0xc] sm:$0xf]
      %v796 = vld [vmem:[%s791 + $0x10] sm:$0xf]
      %v797 = vshrl.u32 %v709, 16
      %v799 = vshll.u32 %v709, 16
      %v801 = vrot.slane %v799, 1
      %v802 = vor.u32 %v797, %v801
      %v808 = vunpack.c.l.b16 %v792
      %v809 = vunpack.c.l.b16 %v793
      %v810 = vunpack.c.l.b16 %v794
      %v811 = vunpack.c.l.b16 %v795
      %v812 = vunpack.c.l.b16 %v796
      %v813 = vpack.c.b16 %v809, %v808
      %v814 = vpack.c.b16 %v811, %v810
      %v815 = vpack.c.b16 %v812, %v812
      %v819 = vsel %vm345, %v802, 0
      %v822 = vsel %vm349, %v815, 0
      %824 = vmatprep.subr.bf16.mxu0 0
      %825 = vmatpush1.bf16.msra.mxu0 %v813
      %826 = vmatprep.subr.bf16.mxu0 0
      %827 = vmatpush1.bf16.msra.mxu0 %v814
      %828 = vmatprep.subr.bf16.mxu0 0
      %829 = vmatpush1.bf16.msra.mxu0 %v822
      %830 = vmatprep.subr.bf16.mxu0 0
      %831 = vmatpush1.bf16.msra.mxu0 0
      %832 = vmatprep.subr.bf16.mxu0 0
      %833 = vmatpush1.bf16.msra.mxu0 0
      %834 = vmatprep.subr.bf16.mxu0 0
      %835 = vmatpush1.bf16.msra.mxu0 0
      %836 = vmatprep.subr.bf16.mxu0 0
      %837 = vmatpush1.bf16.msra.mxu0 0
      %838 = vmatprep.subr.bf16.mxu0 0
      %839 = vmatpush1.bf16.msra.mxu0 0
      %840 = vmatprep.subr.bf16.mxu0 0
      %841 = vmatpush1.bf16.msra.mxu0 0
      %842 = vmatprep.subr.bf16.mxu0 0
      %843 = vmatpush1.bf16.msra.mxu0 0
      %844 = vmatprep.subr.bf16.mxu0 0
      %845 = vmatpush1.bf16.msra.mxu0 0
      %846 = vmatprep.subr.bf16.mxu0 0
      %847 = vmatpush1.bf16.msra.mxu0 0
      %848 = vmatprep.subr.bf16.mxu0 0
      %849 = vmatpush1.bf16.msra.mxu0 0
      %850 = vmatprep.subr.bf16.mxu0 0
      %851 = vmatpush1.bf16.msra.mxu0 0
      %852 = vmatprep.subr.bf16.mxu0 0
      %853 = vmatpush1.bf16.msra.mxu0 0
      %854 = vmatprep.subr.bf16.mxu0 0
      %855 = vmatpush1.bf16.msra.mxu0 0
      %856 = vmatprep.mubr.bf16.mxu0 0
      %857 = vmatmul.mubr.bf16.gmra.mrb[0].mxu0 %v819
      %v858 = vpop.f32.mrb[0].mxu0
      %v859 = vadd.f32 0.0, %v858
      %v860 = vpop.f32.mrb[0].mxu0
      %v861 = vpop.f32.mrb[0].mxu0
      %v862 = vadd.f32 0.0, %v861
      %v863 = vpop.f32.mrb[0].mxu0
      %864 = vdwg.mxu0
      %s865 = scalar_lea.vmem %s4, 80
      %v866 = vld [vmem:[%s865] sm:$0xff]
      %v867 = vld [vmem:[%s865 + $0x8] sm:$0x1]
      %vm868 = vcmp.gt.f32.partialorder %v866, 0.5
      %vm869 = vcmp.gt.f32.partialorder %v867, 0.5
      %v870 = vsel %vm868, 1, 0
      %v871 = vsel %vm869, 1, 0
      %872 = vset.pattern.permute.xlu0 0
      %873 = vperm.xlu0 %872, %v870
      %v874 = vpop.permute.xlu0 %873
      %875 = vset.pattern.permute.xlu0 0
      %876 = vperm.xlu0 %875, %v871
      %v877 = vpop.permute.xlu0 %876
      %vm878 = vcmp.eq.s32.totalorder %v874, 1
      %vm879 = vcmp.eq.s32.totalorder %v877, 1
      %v880 = vsel %vm878, %v859, 0.0
      %v881 = vsel %vm879, %v862, 0.0
      %v882 = vadd.f32 %v789, %v880
      %v883 = vadd.f32 %v790, %v881
      %v884 = vld [vmem:[#allocation2 + $0x4] sm:$0xe]
      %v885 = vld [vmem:[#allocation2 + $0x8] sm:$0x3]
      %s886 = scalar_lea.vmem %s1, 120
      %v887 = vld [vmem:[%s886] sm:$0xf]
      %v888 = vld [vmem:[%s886 + $0x4] sm:$0xf]
      %v889 = vld [vmem:[%s886 + $0x8] sm:$0xf]
      %v890 = vld [vmem:[%s886 + $0xc] sm:$0xf]
      %v891 = vld [vmem:[%s886 + $0x10] sm:$0xf]
      %v894 = vunpack.c.l.b16 %v884
      %v895 = vunpack.c.l.b16 %v885
      %v896 = vpack.c.b16 %v895, %v894
      %v897 = vrot.slane %v896, 1
      %v903 = vunpack.c.l.b16 %v887
      %v904 = vunpack.c.l.b16 %v888
      %v905 = vunpack.c.l.b16 %v889
      %v906 = vunpack.c.l.b16 %v890
      %v907 = vunpack.c.l.b16 %v891
      %v908 = vpack.c.b16 %v904, %v903
      %v909 = vpack.c.b16 %v906, %v905
      %v910 = vpack.c.b16 %v907, %v907
      %v914 = vsel %vm345, %v897, 0
      %v917 = vsel %vm349, %v910, 0
      %919 = vmatprep.subr.bf16.mxu0 0
      %920 = vmatpush1.bf16.msra.mxu0 %v908
      %921 = vmatprep.subr.bf16.mxu0 0
      %922 = vmatpush1.bf16.msra.mxu0 %v909
      %923 = vmatprep.subr.bf16.mxu0 0
      %924 = vmatpush1.bf16.msra.mxu0 %v917
      %925 = vmatprep.subr.bf16.mxu0 0
      %926 = vmatpush1.bf16.msra.mxu0 0
      %927 = vmatprep.subr.bf16.mxu0 0
      %928 = vmatpush1.bf16.msra.mxu0 0
      %929 = vmatprep.subr.bf16.mxu0 0
      %930 = vmatpush1.bf16.msra.mxu0 0
      %931 = vmatprep.subr.bf16.mxu0 0
      %932 = vmatpush1.bf16.msra.mxu0 0
      %933 = vmatprep.subr.bf16.mxu0 0
      %934 = vmatpush1.bf16.msra.mxu0 0
      %935 = vmatprep.subr.bf16.mxu0 0
      %936 = vmatpush1.bf16.msra.mxu0 0
      %937 = vmatprep.subr.bf16.mxu0 0
      %938 = vmatpush1.bf16.msra.mxu0 0
      %939 = vmatprep.subr.bf16.mxu0 0
      %940 = vmatpush1.bf16.msra.mxu0 0
      %941 = vmatprep.subr.bf16.mxu0 0
      %942 = vmatpush1.bf16.msra.mxu0 0
      %943 = vmatprep.subr.bf16.mxu0 0
      %944 = vmatpush1.bf16.msra.mxu0 0
      %945 = vmatprep.subr.bf16.mxu0 0
      %946 = vmatpush1.bf16.msra.mxu0 0
      %947 = vmatprep.subr.bf16.mxu0 0
      %948 = vmatpush1.bf16.msra.mxu0 0
      %949 = vmatprep.subr.bf16.mxu0 0
      %950 = vmatpush1.bf16.msra.mxu0 0
      %951 = vmatprep.mubr.bf16.mxu0 0
      %952 = vmatmul.mubr.bf16.gmra.mrb[0].mxu0 %v914
      %v953 = vpop.f32.mrb[0].mxu0
      %v954 = vadd.f32 0.0, %v953
      %v955 = vpop.f32.mrb[0].mxu0
      %v956 = vpop.f32.mrb[0].mxu0
      %v957 = vadd.f32 0.0, %v956
      %v958 = vpop.f32.mrb[0].mxu0
      %959 = vdwg.mxu0
      %s960 = scalar_lea.vmem %s4, 96
      %v961 = vld [vmem:[%s960] sm:$0xff]
      %v962 = vld [vmem:[%s960 + $0x8] sm:$0x1]
      %vm963 = vcmp.gt.f32.partialorder %v961, 0.5
      %vm964 = vcmp.gt.f32.partialorder %v962, 0.5
      %v965 = vsel %vm963, 1, 0
      %v966 = vsel %vm964, 1, 0
      %967 = vset.pattern.permute.xlu0 0
      %968 = vperm.xlu0 %967, %v965
      %v969 = vpop.permute.xlu0 %968
      %970 = vset.pattern.permute.xlu0 0
      %971 = vperm.xlu0 %970, %v966
      %v972 = vpop.permute.xlu0 %971
      %vm973 = vcmp.eq.s32.totalorder %v969, 1
      %vm974 = vcmp.eq.s32.totalorder %v972, 1
      %v975 = vsel %vm973, %v954, 0.0
      %v976 = vsel %vm974, %v957, 0.0
      %v977 = vadd.f32 %v882, %v975
      %v978 = vadd.f32 %v883, %v976
      %s979 = scalar_lea.vmem %s1, 140
      %v980 = vld [vmem:[%s979] sm:$0xf]
      %v981 = vld [vmem:[%s979 + $0x4] sm:$0xf]
      %v982 = vld [vmem:[%s979 + $0x8] sm:$0xf]
      %v983 = vld [vmem:[%s979 + $0xc] sm:$0xf]
      %v984 = vld [vmem:[%s979 + $0x10] sm:$0xf]
      %v986 = vshrl.u32 %v896, 16
      %v988 = vrot.slane %v986, 1
      %v989 = vshll.u32 %v896, 16
      %v991 = vrot.slane %v989, 2
      %v992 = vor.u32 %v988, %v991
      %v998 = vunpack.c.l.b16 %v980
      %v999 = vunpack.c.l.b16 %v981
      %v1000 = vunpack.c.l.b16 %v982
      %v1001 = vunpack.c.l.b16 %v983
      %v1002 = vunpack.c.l.b16 %v984
      %v1003 = vpack.c.b16 %v999, %v998
      %v1004 = vpack.c.b16 %v1001, %v1000
      %v1005 = vpack.c.b16 %v1002, %v1002
      %v1009 = vsel %vm345, %v992, 0
      %v1012 = vsel %vm349, %v1005, 0
      %1014 = vmatprep.subr.bf16.mxu0 0
      %1015 = vmatpush1.bf16.msra.mxu0 %v1003
      %1016 = vmatprep.subr.bf16.mxu0 0
      %1017 = vmatpush1.bf16.msra.mxu0 %v1004
      %1018 = vmatprep.subr.bf16.mxu0 0
      %1019 = vmatpush1.bf16.msra.mxu0 %v1012
      %1020 = vmatprep.subr.bf16.mxu0 0
      %1021 = vmatpush1.bf16.msra.mxu0 0
      %1022 = vmatprep.subr.bf16.mxu0 0
      %1023 = vmatpush1.bf16.msra.mxu0 0
      %1024 = vmatprep.subr.bf16.mxu0 0
      %1025 = vmatpush1.bf16.msra.mxu0 0
      %1026 = vmatprep.subr.bf16.mxu0 0
      %1027 = vmatpush1.bf16.msra.mxu0 0
      %1028 = vmatprep.subr.bf16.mxu0 0
      %1029 = vmatpush1.bf16.msra.mxu0 0
      %1030 = vmatprep.subr.bf16.mxu0 0
      %1031 = vmatpush1.bf16.msra.mxu0 0
      %1032 = vmatprep.subr.bf16.mxu0 0
      %1033 = vmatpush1.bf16.msra.mxu0 0
      %1034 = vmatprep.subr.bf16.mxu0 0
      %1035 = vmatpush1.bf16.msra.mxu0 0
      %1036 = vmatprep.subr.bf16.mxu0 0
      %1037 = vmatpush1.bf16.msra.mxu0 0
      %1038 = vmatprep.subr.bf16.mxu0 0
      %1039 = vmatpush1.bf16.msra.mxu0 0
      %1040 = vmatprep.subr.bf16.mxu0 0
      %1041 = vmatpush1.bf16.msra.mxu0 0
      %1042 = vmatprep.subr.bf16.mxu0 0
      %1043 = vmatpush1.bf16.msra.mxu0 0
      %1044 = vmatprep.subr.bf16.mxu0 0
      %1045 = vmatpush1.bf16.msra.mxu0 0
      %1046 = vmatprep.mubr.bf16.mxu0 0
      %1047 = vmatmul.mubr.bf16.gmra.mrb[0].mxu0 %v1009
      %v1048 = vpop.f32.mrb[0].mxu0
      %v1049 = vadd.f32 0.0, %v1048
      %v1050 = vpop.f32.mrb[0].mxu0
      %v1051 = vpop.f32.mrb[0].mxu0
      %v1052 = vadd.f32 0.0, %v1051
      %v1053 = vpop.f32.mrb[0].mxu0
      %1054 = vdwg.mxu0
      %s1055 = scalar_lea.vmem %s4, 112
      %v1056 = vld [vmem:[%s1055] sm:$0xff]
      %v1057 = vld [vmem:[%s1055 + $0x8] sm:$0x1]
      %vm1058 = vcmp.gt.f32.partialorder %v1056, 0.5
      %vm1059 = vcmp.gt.f32.partialorder %v1057, 0.5
      %v1060 = vsel %vm1058, 1, 0
      %v1061 = vsel %vm1059, 1, 0
      %1062 = vset.pattern.permute.xlu0 0
      %1063 = vperm.xlu0 %1062, %v1060
      %v1064 = vpop.permute.xlu0 %1063
      %1065 = vset.pattern.permute.xlu0 0
      %1066 = vperm.xlu0 %1065, %v1061
      %v1067 = vpop.permute.xlu0 %1066
      %vm1068 = vcmp.eq.s32.totalorder %v1064, 1
      %vm1069 = vcmp.eq.s32.totalorder %v1067, 1
      %v1070 = vsel %vm1068, %v1049, 0.0
      %v1071 = vsel %vm1069, %v1052, 0.0
      %v1072 = vadd.f32 %v977, %v1070
      %v1073 = vadd.f32 %v978, %v1071
      %v1074 = vld [vmem:[#allocation2 + $0x4] sm:$0xc]
      %v1075 = vld [vmem:[#allocation2 + $0x8] sm:$0x7]
      %s1076 = scalar_lea.vmem %s1, 160
      %v1077 = vld [vmem:[%s1076] sm:$0xf]
      %v1078 = vld [vmem:[%s1076 + $0x4] sm:$0xf]
      %v1079 = vld [vmem:[%s1076 + $0x8] sm:$0xf]
      %v1080 = vld [vmem:[%s1076 + $0xc] sm:$0xf]
      %v1081 = vld [vmem:[%s1076 + $0x10] sm:$0xf]
      %v1084 = vunpack.c.l.b16 %v1074
      %v1085 = vunpack.c.l.b16 %v1075
      %v1086 = vpack.c.b16 %v1085, %v1084
      %v1087 = vrot.slane %v1086, 2
      %v1093 = vunpack.c.l.b16 %v1077
      %v1094 = vunpack.c.l.b16 %v1078
      %v1095 = vunpack.c.l.b16 %v1079
      %v1096 = vunpack.c.l.b16 %v1080
      %v1097 = vunpack.c.l.b16 %v1081
      %v1098 = vpack.c.b16 %v1094, %v1093
      %v1099 = vpack.c.b16 %v1096, %v1095
      %v1100 = vpack.c.b16 %v1097, %v1097
      %v1104 = vsel %vm345, %v1087, 0
      %v1107 = vsel %vm349, %v1100, 0
      %1109 = vmatprep.subr.bf16.mxu0 0
      %1110 = vmatpush1.bf16.msra.mxu0 %v1098
      %1111 = vmatprep.subr.bf16.mxu0 0
      %1112 = vmatpush1.bf16.msra.mxu0 %v1099
      %1113 = vmatprep.subr.bf16.mxu0 0
      %1114 = vmatpush1.bf16.msra.mxu0 %v1107
      %1115 = vmatprep.subr.bf16.mxu0 0
      %1116 = vmatpush1.bf16.msra.mxu0 0
      %1117 = vmatprep.subr.bf16.mxu0 0
      %1118 = vmatpush1.bf16.msra.mxu0 0
      %1119 = vmatprep.subr.bf16.mxu0 0
      %1120 = vmatpush1.bf16.msra.mxu0 0
      %1121 = vmatprep.subr.bf16.mxu0 0
      %1122 = vmatpush1.bf16.msra.mxu0 0
      %1123 = vmatprep.subr.bf16.mxu0 0
      %1124 = vmatpush1.bf16.msra.mxu0 0
      %1125 = vmatprep.subr.bf16.mxu0 0
      %1126 = vmatpush1.bf16.msra.mxu0 0
      %1127 = vmatprep.subr.bf16.mxu0 0
      %1128 = vmatpush1.bf16.msra.mxu0 0
      %1129 = vmatprep.subr.bf16.mxu0 0
      %1130 = vmatpush1.bf16.msra.mxu0 0
      %1131 = vmatprep.subr.bf16.mxu0 0
      %1132 = vmatpush1.bf16.msra.mxu0 0
      %1133 = vmatprep.subr.bf16.mxu0 0
      %1134 = vmatpush1.bf16.msra.mxu0 0
      %1135 = vmatprep.subr.bf16.mxu0 0
      %1136 = vmatpush1.bf16.msra.mxu0 0
      %1137 = vmatprep.subr.bf16.mxu0 0
      %1138 = vmatpush1.bf16.msra.mxu0 0
      %1139 = vmatprep.subr.bf16.mxu0 0
      %1140 = vmatpush1.bf16.msra.mxu0 0
      %1141 = vmatprep.mubr.bf16.mxu0 0
      %1142 = vmatmul.mubr.bf16.gmra.mrb[0].mxu0 %v1104
      %v1143 = vpop.f32.mrb[0].mxu0
      %v1144 = vadd.f32 0.0, %v1143
      %v1145 = vpop.f32.mrb[0].mxu0
      %v1146 = vpop.f32.mrb[0].mxu0
      %v1147 = vadd.f32 0.0, %v1146
      %v1148 = vpop.f32.mrb[0].mxu0
      %1149 = vdwg.mxu0
      %s1150 = scalar_lea.vmem %s4, 128
      %v1151 = vld [vmem:[%s1150] sm:$0xff]
      %v1152 = vld [vmem:[%s1150 + $0x8] sm:$0x1]
      %vm1153 = vcmp.gt.f32.partialorder %v1151, 0.5
      %vm1154 = vcmp.gt.f32.partialorder %v1152, 0.5
      %v1155 = vsel %vm1153, 1, 0
      %v1156 = vsel %vm1154, 1, 0
      %1157 = vset.pattern.permute.xlu0 0
      %1158 = vperm.xlu0 %1157, %v1155
      %v1159 = vpop.permute.xlu0 %1158
      %1160 = vset.pattern.permute.xlu0 0
      %1161 = vperm.xlu0 %1160, %v1156
      %v1162 = vpop.permute.xlu0 %1161
      %vm1163 = vcmp.eq.s32.totalorder %v1159, 1
      %vm1164 = vcmp.eq.s32.totalorder %v1162, 1
      %v1165 = vsel %vm1163, %v1144, 0.0
      %v1166 = vsel %vm1164, %v1147, 0.0
      %v1167 = vadd.f32 %v1072, %v1165
      %v1168 = vadd.f32 %v1073, %v1166
      %v1169 = vpack.c.bf16 %v1168, %v1167
      %v1171 = vunpack.c.l.b16 %v1169
      %v1172 = vunpack.c.h.b16 %v1169
      %v1173 = vpack.c.b16 %v1171, %v1171
      %v1174 = vpack.c.b16 %v1172, %v1172
      %vm1177 = vcmask 60416
      %1178 = vst.msk [vmem:[%s258] sm:$0xf] %vm1177, %v1173
      %vm1179 = vcmask 57344
      %vm1180 = vmand %vm1179, %vm312
      %v1181 = vld [vmem:[%s258 + $0x4] sm:$0x1]
      %v1182 = vsel %vm1180, %v1174, %v1181
      %1183 = vst [vmem:[%s258 + $0x4] sm:$0x1] %v1182
      %v1184 = vunpack.c.l.bf16 %v1169
      %v1185 = vunpack.c.h.bf16 %v1169
      %vm1186 = vcmask 64512
      %v1187 = vsel %vm1186, %v1184, 0.0
      %vm1188 = vcmask 57344
      %v1189 = vsel %vm1188, %v1185, 0.0
      %v1190 = vadd.f32 %v1187, %v1189
      %v1191 = vrot.slane %v1190, 4
      %v1192 = vadd.f32 %v1190, %v1191
      %v1193 = vrot.slane %v1192, 2
      %v1194 = vadd.f32 %v1192, %v1193
      %v1195 = vrot.slane %v1194, 1
      %v1196 = vadd.f32 %v1194, %v1195
      %v1197 = vmul.f32 %v1184, %v1184
      %v1198 = vmul.f32 %v1185, %v1185
      %v1199 = vsel %vm1186, %v1197, 0.0
      %v1200 = vsel %vm1188, %v1198, 0.0
      %v1201 = vadd.f32 %v1199, %v1200
      %v1202 = vrot.slane %v1201, 4
      %v1203 = vadd.f32 %v1201, %v1202
      %v1204 = vrot.slane %v1203, 2
      %v1205 = vadd.f32 %v1203, %v1204
      %v1206 = vrot.slane %v1205, 1
      %v1207 = vadd.f32 %v1205, %v1206
      %vm1208 = vcmask 1040384
      %v1209 = vsel %vm1208, %v1196, %v1207
      %vm1210 = vcmask 58368
      %1211 = vst.msk [vmem:[%s262] sm:$0x3] %vm1210, %v1209
      %p1212 = scmp.lt.s32.totalorder %s18, 1
      %s1213 = scalar_select %p1212, %s18, 1
      %s1214 = smul.addr %s1213, 2
      %s1215 = smul.addr %s1214, 4
      %s1216 = scalar_lea.vmem %s5, %s1215
      %p1217 = scmp.lt.s32.totalorder %s18, 1
      %s1218 = scalar_select %p1217, %s18, 1
      %s1219 = smul.addr %s1218, 2
      %s1220 = scalar_lea.vmem %s6, %s1219
      // Predicated region
      $region45: #{densenet_forward.14} parent=39 // pred_check
        %p1221 = pneg %p146
      $region46: #{densenet_forward.14} parent=39 // pred_check_branch
        %1223 = sbr.rel (%p1221) target = $region48
      $region47: #{densenet_forward.14} parent=39 // pred_region
        _
      $region48: #{densenet_forward.14} parent=39 // pred_fallthru
        _
      // Predicated region
      $region49: #{densenet_forward.14} parent=39 // pred_check
        %p1224 = pneg %p172
      $region50: #{densenet_forward.14} parent=39 // pred_check_branch
        %1226 = sbr.rel (%p1224) target = $region52
      $region51: #{densenet_forward.14} parent=39 // pred_region
        _
      $region52: #{densenet_forward.14} parent=39 // pred_fallthru
        _
    $region40: #{densenet_forward.14} parent=5 // pred_fallthru
      _
    %p1227 = scmp.le.s32.totalorder 2, %s13
    // Predicated region
    $region53: #{densenet_forward.14} parent=5 // pred_check
      %p1228 = pneg %p1227
    $region54: #{densenet_forward.14} parent=5 // pred_check_branch
      %1230 = sbr.rel (%p1228) target = $region56
    $region55: #{densenet_forward.14} parent=5 // pred_region
      %s1231 = ssub.s32 %s13, 2
      // Predicated region
      $region57: #{densenet_forward.14} parent=55 // pred_check
        %p1232 = pneg %p152
      $region58: #{densenet_forward.14} parent=55 // pred_check_branch
        %1234 = sbr.rel (%p1232) target = $region60
      $region59: #{densenet_forward.14} parent=55 // pred_region
        %p1235 = scmp.lt.s32.totalorder %s19, 1
        %s1236 = scalar_select %p1235, %s19, 1
        %s1237 = smul.addr %s1236, 2
        %s1238 = smul.addr %s1237, 4
        %s1239 = scalar_lea.vmem %s5, %s1238
      $region60: #{densenet_forward.14} parent=55 // pred_fallthru
        _
      // Predicated region
      $region61: #{densenet_forward.14} parent=55 // pred_check
        %p1240 = pneg %p178
      $region62: #{densenet_forward.14} parent=55 // pred_check_branch
        %1242 = sbr.rel (%p1240) target = $region64
      $region63: #{densenet_forward.14} parent=55 // pred_region
        %p1243 = scmp.lt.s32.totalorder %s19, 1
        %s1244 = scalar_select %p1243, %s19, 1
        %s1245 = smul.addr %s1244, 2
        %s1246 = scalar_lea.vmem %s6, %s1245
      $region64: #{densenet_forward.14} parent=55 // pred_fallthru
        _
    $region56: #{densenet_forward.14} parent=5 // pred_fallthru
      _
  $region6: #{densenet_forward.14} parent=0 // loop_footer
    %s17 = sadd.s32 1, %s13
  $region7: #{densenet_forward.14} parent=0 // loop_footer_branch
    %12 = sbr.rel target = $region3
  $region8: #{densenet_forward.14} parent=0 // loop_exit
    _

// kernel: densenet_forward.15
$region0: #{densenet_forward.15}
  #allocation0 [shape = 'u32[]', space=smem, size = 0x4, offset = 0x4, fixed_abs, tag = 'smem constant byte address 0x4 - core index']
  #allocation1 [shape = 'u32[144,128]{1,0:T(1,128)}', space=vmem, size = 0x12000, scoped, tag = 'internal scratch']
  #allocation2 [shape = 'bf16[21,48]{1,0:T(8,128)(2,1)}', space=vmem, size = 0x1800, scoped, tag = 'scratch operand']
  %s0 = inlined_call_operand.vmem [shape: bf16[2,9,48], index: 0, kind: input, shape index: {}]
  %s1 = inlined_call_operand.vmem [shape: bf16[9,48,8], index: 1, kind: input, shape index: {}]
  %s2 = inlined_call_operand.vmem [shape: f32[1,48], index: 2, kind: input, shape index: {}]
  %s3 = inlined_call_operand.vmem [shape: f32[1,48], index: 3, kind: input, shape index: {}]
  %s4 = inlined_call_operand.vmem [shape: f32[9,9,1], index: 4, kind: input, shape index: {}]
  %s5 = inlined_call_operand.vmem [shape: bf16[2,9,8], index: 5, kind: output, shape index: {0}]
  %s6 = inlined_call_operand.vmem [shape: f32[2,2,8], index: 6, kind: output, shape index: {1}]
  %7 = xla_tuple %s5, %s6
  %s8 = sld [smem:[#allocation0]]
  $region65: #{densenet_forward.15} parent=0
    _
  %s10 = ssub.s32 1, %s8
  %s11 = scalar_select 0, %s10, %s8
  loop: start=0, step=1, limit=4
  $region2: #{densenet_forward.15} parent=0 // loop_pre_header
    _
  $region3: #{densenet_forward.15} parent=0 // loop_header
    %s13 = sphi 0, %s17
    %p14 = scmp.ge.s32.totalorder %s13, 4
    %s23 = sphi 0, %s25
    %s26 = sphi 0, %s23
    %s27 = sphi 0, %s26
    %s43 = sphi 0, %s27
    %s47 = sphi 0, %s47
    %s49 = sphi 0, %s47
    %s50 = sphi 0, %s49
    %s64 = sphi 0, %s50
    %s68 = sphi 0, %s68
    %s70 = sphi 0, %s68
    %s71 = sphi 0, %s70
    %s85 = sphi 0, %s71
    %s89 = sphi 0, %s89
    %s91 = sphi 0, %s89
    %s92 = sphi 0, %s91
    %s106 = sphi 0, %s92
    %s110 = sphi 0, %s110
    %s112 = sphi 0, %s110
    %s113 = sphi 0, %s112
    %s127 = sphi 0, %s113
    %s133 = sphi 0, %s135
    %s136 = sphi 0, %s133
    %s137 = sphi 0, %s136
    %s153 = sphi 0, %s137
    %s159 = sphi 0, %s161
    %s162 = sphi 0, %s159
    %s163 = sphi 0, %s162
    %s179 = sphi 0, %s163
  $region4: #{densenet_forward.15} parent=0 // loop_header_branch
    %16 = sbr.rel (%p14) target = $region8
  $region5: #{densenet_forward.15} parent=0 // loop_body
    %s18 = ssub.s32 %s13, 1
    %s19 = ssub.s32 %s13, 2
    %s20 = sadd.s32 %s13, 1
    %s21 = ssub.s32 %s13, %s20
    %p22 = scmp.eq.s32.totalorder %s21, 0
    %s24 = sadd.s32 %s23, 1
    %s25 = scalar_select %p22, %s23, %s24
    %p28 = pneg %p22
    %p29 = scmp.eq.s32.totalorder %s13, 1
    %p30 = por %p28, %p29
    %p31 = scmp.ne.s32.totalorder %s23, %s26
    %p32 = scmp.eq.s32.totalorder %s13, 0
    %p33 = por %p31, %p32
    %p34 = scmp.ne.s32.totalorder %s23, %s26
    %p35 = scmp.eq.s32.totalorder %s18, 1
    %p36 = por %p34, %p35
    %p37 = scmp.ne.s32.totalorder %s26, %s27
    %p38 = scmp.eq.s32.totalorder %s18, 0
    %p39 = por %p37, %p38
    %p40 = scmp.ne.s32.totalorder %s26, %s27
    %p41 = scmp.eq.s32.totalorder %s19, 1
    %p42 = por %p40, %p41
    %p44 = scmp.ne.s32.totalorder %s27, %s43
    %p45 = scmp.eq.s32.totalorder %s19, 0
    %p46 = por %p44, %p45
    %s48 = sadd.s32 %s47, 1
    %p51 = scmp.eq.s32.totalorder %s13, 1
    %p52 = scmp.ne.s32.totalorder %s47, %s49
    %p53 = scmp.eq.s32.totalorder %s13, 0
    %p54 = por %p52, %p53
    %p55 = scmp.ne.s32.totalorder %s47, %s49
    %p56 = scmp.eq.s32.totalorder %s18, 1
    %p57 = por %p55, %p56
    %p58 = scmp.ne.s32.totalorder %s49, %s50
    %p59 = scmp.eq.s32.totalorder %s18, 0
    %p60 = por %p58, %p59
    %p61 = scmp.ne.s32.totalorder %s49, %s50
    %p62 = scmp.eq.s32.totalorder %s19, 1
    %p63 = por %p61, %p62
    %p65 = scmp.ne.s32.totalorder %s50, %s64
    %p66 = scmp.eq.s32.totalorder %s19, 0
    %p67 = por %p65, %p66
    %s69 = sadd.s32 %s68, 1
    %p72 = scmp.eq.s32.totalorder %s13, 1
    %p73 = scmp.ne.s32.totalorder %s68, %s70
    %p74 = scmp.eq.s32.totalorder %s13, 0
    %p75 = por %p73, %p74
    %p76 = scmp.ne.s32.totalorder %s68, %s70
    %p77 = scmp.eq.s32.totalorder %s18, 1
    %p78 = por %p76, %p77
    %p79 = scmp.ne.s32.totalorder %s70, %s71
    %p80 = scmp.eq.s32.totalorder %s18, 0
    %p81 = por %p79, %p80
    %p82 = scmp.ne.s32.totalorder %s70, %s71
    %p83 = scmp.eq.s32.totalorder %s19, 1
    %p84 = por %p82, %p83
    %p86 = scmp.ne.s32.totalorder %s71, %s85
    %p87 = scmp.eq.s32.totalorder %s19, 0
    %p88 = por %p86, %p87
    %s90 = sadd.s32 %s89, 1
    %p93 = scmp.eq.s32.totalorder %s13, 1
    %p94 = scmp.ne.s32.totalorder %s89, %s91
    %p95 = scmp.eq.s32.totalorder %s13, 0
    %p96 = por %p94, %p95
    %p97 = scmp.ne.s32.totalorder %s89, %s91
    %p98 = scmp.eq.s32.totalorder %s18, 1
    %p99 = por %p97, %p98
    %p100 = scmp.ne.s32.totalorder %s91, %s92
    %p101 = scmp.eq.s32.totalorder %s18, 0
    %p102 = por %p100, %p101
    %p103 = scmp.ne.s32.totalorder %s91, %s92
    %p104 = scmp.eq.s32.totalorder %s19, 1
    %p105 = por %p103, %p104
    %p107 = scmp.ne.s32.totalorder %s92, %s106
    %p108 = scmp.eq.s32.totalorder %s19, 0
    %p109 = por %p107, %p108
    %s111 = sadd.s32 %s110, 1
    %p114 = scmp.eq.s32.totalorder %s13, 1
    %p115 = scmp.ne.s32.totalorder %s110, %s112
    %p116 = scmp.eq.s32.totalorder %s13, 0
    %p117 = por %p115, %p116
    %p118 = scmp.ne.s32.totalorder %s110, %s112
    %p119 = scmp.eq.s32.totalorder %s18, 1
    %p120 = por %p118, %p119
    %p121 = scmp.ne.s32.totalorder %s112, %s113
    %p122 = scmp.eq.s32.totalorder %s18, 0
    %p123 = por %p121, %p122
    %p124 = scmp.ne.s32.totalorder %s112, %s113
    %p125 = scmp.eq.s32.totalorder %s19, 1
    %p126 = por %p124, %p125
    %p128 = scmp.ne.s32.totalorder %s113, %s127
    %p129 = scmp.eq.s32.totalorder %s19, 0
    %p130 = por %p128, %p129
    %s131 = ssub.s32 %s13, %s20
    %p132 = scmp.eq.s32.totalorder %s131, 0
    %s134 = sadd.s32 %s133, 1
    %s135 = scalar_select %p132, %s133, %s134
    %p138 = pneg %p132
    %p139 = scmp.eq.s32.totalorder %s13, 1
    %p140 = por %p138, %p139
    %p141 = scmp.ne.s32.totalorder %s133, %s136
    %p142 = scmp.eq.s32.totalorder %s13, 0
    %p143 = por %p141, %p142
    %p144 = scmp.ne.s32.totalorder %s133, %s136
    %p145 = scmp.eq.s32.totalorder %s18, 1
    %p146 = por %p144, %p145
    %p147 = scmp.ne.s32.totalorder %s136, %s137
    %p148 = scmp.eq.s32.totalorder %s18, 0
    %p149 = por %p147, %p148
    %p150 = scmp.ne.s32.totalorder %s136, %s137
    %p151 = scmp.eq.s32.totalorder %s19, 1
    %p152 = por %p150, %p151
    %p154 = scmp.ne.s32.totalorder %s137, %s153
    %p155 = scmp.eq.s32.totalorder %s19, 0
    %p156 = por %p154, %p155
    %s157 = ssub.s32 %s13, %s20
    %p158 = scmp.eq.s32.totalorder %s157, 0
    %s160 = sadd.s32 %s159, 1
    %s161 = scalar_select %p158, %s159, %s160
    %p164 = pneg %p158
    %p165 = scmp.eq.s32.totalorder %s13, 1
    %p166 = por %p164, %p165
    %p167 = scmp.ne.s32.totalorder %s159, %s162
    %p168 = scmp.eq.s32.totalorder %s13, 0
    %p169 = por %p167, %p168
    %p170 = scmp.ne.s32.totalorder %s159, %s162
    %p171 = scmp.eq.s32.totalorder %s18, 1
    %p172 = por %p170, %p171
    %p173 = scmp.ne.s32.totalorder %s162, %s163
    %p174 = scmp.eq.s32.totalorder %s18, 0
    %p175 = por %p173, %p174
    %p176 = scmp.ne.s32.totalorder %s162, %s163
    %p177 = scmp.eq.s32.totalorder %s19, 1
    %p178 = por %p176, %p177
    %p180 = scmp.ne.s32.totalorder %s163, %s179
    %p181 = scmp.eq.s32.totalorder %s19, 0
    %p182 = por %p180, %p181
    %p183 = scmp.le.s32.totalorder 1, %s13
    %p184 = scmp.lt.s32.totalorder %s13, 3
    %p185 = pnand %p183, %p184
    %p186 = pneg %p185
    // Predicated region
    $region9: #{densenet_forward.15} parent=5 // pred_check
      _
    $region10: #{densenet_forward.15} parent=5 // pred_check_branch
      %188 = sbr.rel (%p185) target = $region12
    $region11: #{densenet_forward.15} parent=5 // pred_region
      %s189 = ssub.s32 %s13, 1
      // Predicated region
      $region13: #{densenet_forward.15} parent=11 // pred_check
        %p190 = pneg %p60
      $region14: #{densenet_forward.15} parent=11 // pred_check_branch
        %192 = sbr.rel (%p190) target = $region16
      $region15: #{densenet_forward.15} parent=11 // pred_region
        _
      $region16: #{densenet_forward.15} parent=11 // pred_fallthru
        _
      // Predicated region
      $region17: #{densenet_forward.15} parent=11 // pred_check
        %p193 = pneg %p81
      $region18: #{densenet_forward.15} parent=11 // pred_check_branch
        %195 = sbr.rel (%p193) target = $region20
      $region19: #{densenet_forward.15} parent=11 // pred_region
        _
      $region20: #{densenet_forward.15} parent=11 // pred_fallthru
        _
      // Predicated region
      $region21: #{densenet_forward.15} parent=11 // pred_check
        %p196 = pneg %p102
      $region22: #{densenet_forward.15} parent=11 // pred_check_branch
        %198 = sbr.rel (%p196) target = $region24
      $region23: #{densenet_forward.15} parent=11 // pred_region
        _
      $region24: #{densenet_forward.15} parent=11 // pred_fallthru
        _
      // Predicated region
      $region25: #{densenet_forward.15} parent=11 // pred_check
        %p199 = pneg %p123
      $region26: #{densenet_forward.15} parent=11 // pred_check_branch
        %201 = sbr.rel (%p199) target = $region28
      $region27: #{densenet_forward.15} parent=11 // pred_region
        _
      $region28: #{densenet_forward.15} parent=11 // pred_fallthru
        _
    $region12: #{densenet_forward.15} parent=5 // pred_fallthru
      _
    %p202 = scmp.lt.s32.totalorder %s13, 2
    // Predicated region
    $region29: #{densenet_forward.15} parent=5 // pred_check
      %p203 = pneg %p202
    $region30: #{densenet_forward.15} parent=5 // pred_check_branch
      %205 = sbr.rel (%p203) target = $region32
    $region31: #{densenet_forward.15} parent=5 // pred_region
      // Predicated region
      $region33: #{densenet_forward.15} parent=31 // pred_check
        %p206 = pneg %p33
      $region34: #{densenet_forward.15} parent=31 // pred_check_branch
        %208 = sbr.rel (%p206) target = $region36
      $region35: #{densenet_forward.15} parent=31 // pred_region
        %p209 = scmp.lt.s32.totalorder %s13, 1
        %s210 = scalar_select %p209, %s13, 1
        %s211 = smul.addr %s210, 2
        %s212 = smul.addr %s211, 4
        %s213 = scalar_lea.vmem %s0, %s212
      $region36: #{densenet_forward.15} parent=31 // pred_fallthru
        _
    $region32: #{densenet_forward.15} parent=5 // pred_fallthru
      _
    %p214 = scmp.le.s32.totalorder 1, %s13
    %p215 = scmp.lt.s32.totalorder %s13, 3
    %p216 = pnand %p214, %p215
    %p217 = pneg %p216
    // Predicated region
    $region37: #{densenet_forward.15} parent=5 // pred_check
      _
    $region38: #{densenet_forward.15} parent=5 // pred_check_branch
      %219 = sbr.rel (%p216) target = $region40
    $region39: #{densenet_forward.15} parent=5 // pred_region
      %s220 = ssub.s32 %s13, 1
      %p221 = scmp.lt.s32.totalorder %s18, 1
      %s222 = scalar_select %p221, %s18, 1
      %s223 = smul.addr %s222, 2
      %s224 = smul.addr %s223, 4
      %s225 = scalar_lea.vmem %s0, %s224
      %p226 = pneg %p39
      %p227 = pneg %p36
      %p228 = pneg %p60
      %p229 = pneg %p57
      %p230 = pneg %p81
      %p231 = pneg %p78
      %p232 = pneg %p102
      %p233 = pneg %p99
      %p234 = pneg %p123
      %p235 = pneg %p120
      %p236 = pneg %p149
      %p237 = pneg %p146
      %p238 = scmp.lt.s32.totalorder %s18, 1
      %s239 = scalar_select %p238, %s18, 1
      %s240 = smul.addr %s239, 2
      %s241 = smul.addr %s240, 4
      %s242 = scalar_lea.vmem %s5, %s241
      %p243 = pneg %p175
      %p244 = pneg %p172
      %p245 = scmp.lt.s32.totalorder %s18, 1
      %s246 = scalar_select %p245, %s18, 1
      %s247 = smul.addr %s246, 2
      %s248 = scalar_lea.vmem %s6, %s247
      %p249 = scmp.lt.s32.totalorder %s18, 1
      %s250 = scalar_select %p249, %s18, 1
      %s251 = smul.addr %s250, 2
      %s252 = smul.addr %s251, 4
      %s253 = scalar_lea.vmem %s0, %s252
      %p254 = scmp.lt.s32.totalorder %s18, 1
      %s255 = scalar_select %p254, %s18, 1
      %s256 = smul.addr %s255, 2
      %s257 = smul.addr %s256, 4
      %s258 = scalar_lea.vmem %s5, %s257
      %p259 = scmp.lt.s32.totalorder %s18, 1
      %s260 = scalar_select %p259, %s18, 1
      %s261 = smul.addr %s260, 2
      %s262 = scalar_lea.vmem %s6, %s261
      %p264 = scmp.eq.s32.totalorder %s18, 0
      // Predicated region
      $region41: #{densenet_forward.15} parent=39 // pred_check
        %p265 = pneg %p264
      $region42: #{densenet_forward.15} parent=39 // pred_check_branch
        %267 = sbr.rel (%p265) target = $region44
      $region43: #{densenet_forward.15} parent=39 // pred_region
        %vm268 = vcmask 388096
        %269 = vst.msk [vmem:[#allocation2] sm:$0xf] %vm268, 0
        %270 = vst.msk [vmem:[#allocation2 + $0x4] sm:$0xf] %vm268, 0
        %vm271 = vcmask 387072
        %vm272 = vsmask.f32 2304
        %vm273 = vmand %vm271, %vm272
        %v274 = vld [vmem:[#allocation2 + $0x8] sm:$0x7]
        %v275 = vsel %vm273, 0, %v274
        %276 = vst [vmem:[#allocation2 + $0x8] sm:$0x7] %v275
      $region44: #{densenet_forward.15} parent=39 // pred_fallthru
        _
      %v277 = vld [vmem:[%s253] sm:$0xf]
      %v278 = vld [vmem:[%s253 + $0x4] sm:$0x1]
      %v279 = vunpack.c.l.bf16 %v277
      %v280 = vunpack.c.l.bf16 %v278
      %v281 = vld [vmem:[%s2] sm:$0x1]
      %v283 = vlaneseq
      %v284 = vshrl.u32 %v283, 7
      %v285 = vsub.s32 0, %v284
      %v286 = vrot.slane %v281, %v285
      %v288 = vmul.f32 %v279, %v286
      %v289 = vmul.f32 %v280, %v286
      %v290 = vld [vmem:[%s3] sm:$0x1]
      %v292 = vlaneseq
      %v293 = vshrl.u32 %v292, 7
      %v294 = vsub.s32 0, %v293
      %v295 = vrot.slane %v290, %v294
      %v297 = vadd.f32 %v288, %v295
      %v298 = vadd.f32 %v289, %v295
      %v299 = vmax.f32 %v297, 0.0
      %v300 = vmax.f32 %v298, 0.0
      %v301 = vpack.c.bf16 %v300, %v299
      %v303 = vunpack.c.l.b16 %v301
      %v304 = vunpack.c.h.b16 %v301
      %v305 = vpack.c.b16 %v303, %v303
      %v306 = vpack.c.b16 %v304, %v304
      %vm309 = vcmask 388096
      %310 = vst.msk [vmem:[#allocation2 + $0x4] sm:$0xf] %vm309, %v305
      %vm311 = vcmask 385024
      %vm312 = vsmask.f32 256
      %vm313 = vmand %vm311, %vm312
      %v314 = vld [vmem:[#allocation2 + $0x8] sm:$0x1]
      %v315 = vsel %vm313, %v306, %v314
      %316 = vst [vmem:[#allocation2 + $0x8] sm:$0x1] %v315
      %v317 = vld [vmem:[#allocation2] sm:$0xc]
      %v318 = vld [vmem:[#allocation2 + $0x4] sm:$0x7]
      %v319 = vld [vmem:[%s1] sm:$0xf]
      %v320 = vld [vmem:[%s1 + $0x4] sm:$0xf]
      %v321 = vld [vmem:[%s1 + $0x8] sm:$0xf]
      %v322 = vld [vmem:[%s1 + $0xc] sm:$0xf]
      %v323 = vld [vmem:[%s1 + $0x10] sm:$0xf]
      %v324 = vld [vmem:[%s1 + $0x14] sm:$0xf]
      %v327 = vunpack.c.l.b16 %v317
      %v328 = vunpack.c.l.b16 %v318
      %v329 = vpack.c.b16 %v328, %v327
      %v330 = vrot.slane %v329, 2
      %v337 = vunpack.c.l.b16 %v319
      %v338 = vunpack.c.l.b16 %v320
      %v339 = vunpack.c.l.b16 %v321
      %v340 = vunpack.c.l.b16 %v322
      %v341 = vunpack.c.l.b16 %v323
      %v342 = vunpack.c.l.b16 %v324
      %v343 = vpack.c.b16 %v338, %v337
      %v344 = vpack.c.b16 %v340, %v339
      %v345 = vpack.c.b16 %v342, %v341
      %vm349 = vcmask 392192
      %v351 = vsel %vm349, %v330, 0
      %353 = vmatprep.subr.bf16.mxu0 0
      %354 = vmatpush1.bf16.msra.mxu0 %v343
      %355 = vmatprep.subr.bf16.mxu0 0
      %356 = vmatpush1.bf16.msra.mxu0 %v344
      %357 = vmatprep.subr.bf16.mxu0 0
      %358 = vmatpush1.bf16.msra.mxu0 %v345
      %359 = vmatprep.subr.bf16.mxu0 0
      %360 = vmatpush1.bf16.msra.mxu0 0
      %361 = vmatprep.subr.bf16.mxu0 0
      %362 = vmatpush1.bf16.msra.mxu0 0
      %363 = vmatprep.subr.bf16.mxu0 0
      %364 = vmatpush1.bf16.msra.mxu0 0
      %365 = vmatprep.subr.bf16.mxu0 0
      %366 = vmatpush1.bf16.msra.mxu0 0
      %367 = vmatprep.subr.bf16.mxu0 0
      %368 = vmatpush1.bf16.msra.mxu0 0
      %369 = vmatprep.subr.bf16.mxu0 0
      %370 = vmatpush1.bf16.msra.mxu0 0
      %371 = vmatprep.subr.bf16.mxu0 0
      %372 = vmatpush1.bf16.msra.mxu0 0
      %373 = vmatprep.subr.bf16.mxu0 0
      %374 = vmatpush1.bf16.msra.mxu0 0
      %375 = vmatprep.subr.bf16.mxu0 0
      %376 = vmatpush1.bf16.msra.mxu0 0
      %377 = vmatprep.subr.bf16.mxu0 0
      %378 = vmatpush1.bf16.msra.mxu0 0
      %379 = vmatprep.subr.bf16.mxu0 0
      %380 = vmatpush1.bf16.msra.mxu0 0
      %381 = vmatprep.subr.bf16.mxu0 0
      %382 = vmatpush1.bf16.msra.mxu0 0
      %383 = vmatprep.subr.bf16.mxu0 0
      %384 = vmatpush1.bf16.msra.mxu0 0
      %385 = vmatprep.mubr.bf16.mxu0 0
      %386 = vmatmul.mubr.bf16.gmra.mrb[0].mxu0 %v351
      %v387 = vpop.f32.mrb[0].mxu0
      %v388 = vadd.f32 0.0, %v387
      %v389 = vpop.f32.mrb[0].mxu0
      %v390 = vpop.f32.mrb[0].mxu0
      %v391 = vadd.f32 0.0, %v390
      %v392 = vpop.f32.mrb[0].mxu0
      %393 = vdwg.mxu0
      %v394 = vld [vmem:[%s4] sm:$0xff]
      %v395 = vld [vmem:[%s4 + $0x8] sm:$0x1]
      %vm396 = vcmp.gt.f32.partialorder %v394, 0.5
      %vm397 = vcmp.gt.f32.partialorder %v395, 0.5
      %v398 = vsel %vm396, 1, 0
      %v399 = vsel %vm397, 1, 0
      %400 = vset.pattern.permute.xlu0 0
      %401 = vperm.xlu0 %400, %v398
      %v402 = vpop.permute.xlu0 %401
      %403 = vset.pattern.permute.xlu0 0
      %404 = vperm.xlu0 %403, %v399
      %v405 = vpop.permute.xlu0 %404
      %vm406 = vcmp.eq.s32.totalorder %v402, 1
      %vm407 = vcmp.eq.s32.totalorder %v405, 1
      %v408 = vsel %vm406, %v388, 0.0
      %v409 = vsel %vm407, %v391, 0.0
      %v410 = vadd.f32 %v408, 0.0
      %v411 = vadd.f32 %v409, 0.0
      %s412 = scalar_lea.vmem %s1, 24
      %v413 = vld [vmem:[%s412] sm:$0xf]
      %v414 = vld [vmem:[%s412 + $0x4] sm:$0xf]
      %v415 = vld [vmem:[%s412 + $0x8] sm:$0xf]
      %v416 = vld [vmem:[%s412 + $0xc] sm:$0xf]
      %v417 = vld [vmem:[%s412 + $0x10] sm:$0xf]
      %v418 = vld [vmem:[%s412 + $0x14] sm:$0xf]
      %v420 = vshrl.u32 %v329, 16
      %v422 = vrot.slane %v420, 2
      %v423 = vshll.u32 %v329, 16
      %v425 = vrot.slane %v423, 3
      %v426 = vor.u32 %v422, %v425
      %v433 = vunpack.c.l.b16 %v413
      %v434 = vunpack.c.l.b16 %v414
      %v435 = vunpack.c.l.b16 %v415
      %v436 = vunpack.c.l.b16 %v416
      %v437 = vunpack.c.l.b16 %v417
      %v438 = vunpack.c.l.b16 %v418
      %v439 = vpack.c.b16 %v434, %v433
      %v440 = vpack.c.b16 %v436, %v435
      %v441 = vpack.c.b16 %v438, %v437
      %v446 = vsel %vm349, %v426, 0
      %448 = vmatprep.subr.bf16.mxu0 0
      %449 = vmatpush1.bf16.msra.mxu0 %v439
      %450 = vmatprep.subr.bf16.mxu0 0
      %451 = vmatpush1.bf16.msra.mxu0 %v440
      %452 = vmatprep.subr.bf16.mxu0 0
      %453 = vmatpush1.bf16.msra.mxu0 %v441
      %454 = vmatprep.subr.bf16.mxu0 0
      %455 = vmatpush1.bf16.msra.mxu0 0
      %456 = vmatprep.subr.bf16.mxu0 0
      %457 = vmatpush1.bf16.msra.mxu0 0
      %458 = vmatprep.subr.bf16.mxu0 0
      %459 = vmatpush1.bf16.msra.mxu0 0
      %460 = vmatprep.subr.bf16.mxu0 0
      %461 = vmatpush1.bf16.msra.mxu0 0
      %462 = vmatprep.subr.bf16.mxu0 0
      %463 = vmatpush1.bf16.msra.mxu0 0
      %464 = vmatprep.subr.bf16.mxu0 0
      %465 = vmatpush1.bf16.msra.mxu0 0
      %466 = vmatprep.subr.bf16.mxu0 0
      %467 = vmatpush1.bf16.msra.mxu0 0
      %468 = vmatprep.subr.bf16.mxu0 0
      %469 = vmatpush1.bf16.msra.mxu0 0
      %470 = vmatprep.subr.bf16.mxu0 0
      %471 = vmatpush1.bf16.msra.mxu0 0
      %472 = vmatprep.subr.bf16.mxu0 0
      %473 = vmatpush1.bf16.msra.mxu0 0
      %474 = vmatprep.subr.bf16.mxu0 0
      %475 = vmatpush1.bf16.msra.mxu0 0
      %476 = vmatprep.subr.bf16.mxu0 0
      %477 = vmatpush1.bf16.msra.mxu0 0
      %478 = vmatprep.subr.bf16.mxu0 0
      %479 = vmatpush1.bf16.msra.mxu0 0
      %480 = vmatprep.mubr.bf16.mxu0 0
      %481 = vmatmul.mubr.bf16.gmra.mrb[0].mxu0 %v446
      %v482 = vpop.f32.mrb[0].mxu0
      %v483 = vadd.f32 0.0, %v482
      %v484 = vpop.f32.mrb[0].mxu0
      %v485 = vpop.f32.mrb[0].mxu0
      %v486 = vadd.f32 0.0, %v485
      %v487 = vpop.f32.mrb[0].mxu0
      %488 = vdwg.mxu0
      %s489 = scalar_lea.vmem %s4, 16
      %v490 = vld [vmem:[%s489] sm:$0xff]
      %v491 = vld [vmem:[%s489 + $0x8] sm:$0x1]
      %vm492 = vcmp.gt.f32.partialorder %v490, 0.5
      %vm493 = vcmp.gt.f32.partialorder %v491, 0.5
      %v494 = vsel %vm492, 1, 0
      %v495 = vsel %vm493, 1, 0
      %496 = vset.pattern.permute.xlu0 0
      %497 = vperm.xlu0 %496, %v494
      %v498 = vpop.permute.xlu0 %497
      %499 = vset.pattern.permute.xlu0 0
      %500 = vperm.xlu0 %499, %v495
      %v501 = vpop.permute.xlu0 %500
      %vm502 = vcmp.eq.s32.totalorder %v498, 1
      %vm503 = vcmp.eq.s32.totalorder %v501, 1
      %v504 = vsel %vm502, %v483, 0.0
      %v505 = vsel %vm503, %v486, 0.0
      %v506 = vadd.f32 %v410, %v504
      %v507 = vadd.f32 %v411, %v505
      %v508 = vld [vmem:[#allocation2] sm:$0x8]
      %v509 = vld [vmem:[#allocation2 + $0x4] sm:$0xf]
      %s510 = scalar_lea.vmem %s1, 48
      %v511 = vld [vmem:[%s510] sm:$0xf]
      %v512 = vld [vmem:[%s510 + $0x4] sm:$0xf]
      %v513 = vld [vmem:[%s510 + $0x8] sm:$0xf]
      %v514 = vld [vmem:[%s510 + $0xc] sm:$0xf]
      %v515 = vld [vmem:[%s510 + $0x10] sm:$0xf]
      %v516 = vld [vmem:[%s510 + $0x14] sm:$0xf]
      %v519 = vunpack.c.l.b16 %v508
      %v520 = vunpack.c.l.b16 %v509
      %v521 = vpack.c.b16 %v520, %v519
      %v522 = vrot.slane %v521, 3
      %v529 = vunpack.c.l.b16 %v511
      %v530 = vunpack.c.l.b16 %v512
      %v531 = vunpack.c.l.b16 %v513
      %v532 = vunpack.c.l.b16 %v514
      %v533 = vunpack.c.l.b16 %v515
      %v534 = vunpack.c.l.b16 %v516
      %v535 = vpack.c.b16 %v530, %v529
      %v536 = vpack.c.b16 %v532, %v531
      %v537 = vpack.c.b16 %v534, %v533
      %v542 = vsel %vm349, %v522, 0
      %544 = vmatprep.subr.bf16.mxu0 0
      %545 = vmatpush1.bf16.msra.mxu0 %v535
      %546 = vmatprep.subr.bf16.mxu0 0
      %547 = vmatpush1.bf16.msra.mxu0 %v536
      %548 = vmatprep.subr.bf16.mxu0 0
      %549 = vmatpush1.bf16.msra.mxu0 %v537
      %550 = vmatprep.subr.bf16.mxu0 0
      %551 = vmatpush1.bf16.msra.mxu0 0
      %552 = vmatprep.subr.bf16.mxu0 0
      %553 = vmatpush1.bf16.msra.mxu0 0
      %554 = vmatprep.subr.bf16.mxu0 0
      %555 = vmatpush1.bf16.msra.mxu0 0
      %556 = vmatprep.subr.bf16.mxu0 0
      %557 = vmatpush1.bf16.msra.mxu0 0
      %558 = vmatprep.subr.bf16.mxu0 0
      %559 = vmatpush1.bf16.msra.mxu0 0
      %560 = vmatprep.subr.bf16.mxu0 0
      %561 = vmatpush1.bf16.msra.mxu0 0
      %562 = vmatprep.subr.bf16.mxu0 0
      %563 = vmatpush1.bf16.msra.mxu0 0
      %564 = vmatprep.subr.bf16.mxu0 0
      %565 = vmatpush1.bf16.msra.mxu0 0
      %566 = vmatprep.subr.bf16.mxu0 0
      %567 = vmatpush1.bf16.msra.mxu0 0
      %568 = vmatprep.subr.bf16.mxu0 0
      %569 = vmatpush1.bf16.msra.mxu0 0
      %570 = vmatprep.subr.bf16.mxu0 0
      %571 = vmatpush1.bf16.msra.mxu0 0
      %572 = vmatprep.subr.bf16.mxu0 0
      %573 = vmatpush1.bf16.msra.mxu0 0
      %574 = vmatprep.subr.bf16.mxu0 0
      %575 = vmatpush1.bf16.msra.mxu0 0
      %576 = vmatprep.mubr.bf16.mxu0 0
      %577 = vmatmul.mubr.bf16.gmra.mrb[0].mxu0 %v542
      %v578 = vpop.f32.mrb[0].mxu0
      %v579 = vadd.f32 0.0, %v578
      %v580 = vpop.f32.mrb[0].mxu0
      %v581 = vpop.f32.mrb[0].mxu0
      %v582 = vadd.f32 0.0, %v581
      %v583 = vpop.f32.mrb[0].mxu0
      %584 = vdwg.mxu0
      %s585 = scalar_lea.vmem %s4, 32
      %v586 = vld [vmem:[%s585] sm:$0xff]
      %v587 = vld [vmem:[%s585 + $0x8] sm:$0x1]
      %vm588 = vcmp.gt.f32.partialorder %v586, 0.5
      %vm589 = vcmp.gt.f32.partialorder %v587, 0.5
      %v590 = vsel %vm588, 1, 0
      %v591 = vsel %vm589, 1, 0
      %592 = vset.pattern.permute.xlu0 0
      %593 = vperm.xlu0 %592, %v590
      %v594 = vpop.permute.xlu0 %593
      %595 = vset.pattern.permute.xlu0 0
      %596 = vperm.xlu0 %595, %v591
      %v597 = vpop.permute.xlu0 %596
      %vm598 = vcmp.eq.s32.totalorder %v594, 1
      %vm599 = vcmp.eq.s32.totalorder %v597, 1
      %v600 = vsel %vm598, %v579, 0.0
      %v601 = vsel %vm599, %v582, 0.0
      %v602 = vadd.f32 %v506, %v600
      %v603 = vadd.f32 %v507, %v601
      %s604 = scalar_lea.vmem %s1, 72
      %v605 = vld [vmem:[%s604] sm:$0xf]
      %v606 = vld [vmem:[%s604 + $0x4] sm:$0xf]
      %v607 = vld [vmem:[%s604 + $0x8] sm:$0xf]
      %v608 = vld [vmem:[%s604 + $0xc] sm:$0xf]
      %v609 = vld [vmem:[%s604 + $0x10] sm:$0xf]
      %v610 = vld [vmem:[%s604 + $0x14] sm:$0xf]
      %v612 = vshrl.u32 %v521, 16
      %v614 = vrot.slane %v612, 3
      %v615 = vshll.u32 %v521, 16
      %v617 = vrot.slane %v615, 4
      %v618 = vor.u32 %v614, %v617
      %v625 = vunpack.c.l.b16 %v605
      %v626 = vunpack.c.l.b16 %v606
      %v627 = vunpack.c.l.b16 %v607
      %v628 = vunpack.c.l.b16 %v608
      %v629 = vunpack.c.l.b16 %v609
      %v630 = vunpack.c.l.b16 %v610
      %v631 = vpack.c.b16 %v626, %v625
      %v632 = vpack.c.b16 %v628, %v627
      %v633 = vpack.c.b16 %v630, %v629
      %v638 = vsel %vm349, %v618, 0
      %640 = vmatprep.subr.bf16.mxu0 0
      %641 = vmatpush1.bf16.msra.mxu0 %v631
      %642 = vmatprep.subr.bf16.mxu0 0
      %643 = vmatpush1.bf16.msra.mxu0 %v632
      %644 = vmatprep.subr.bf16.mxu0 0
      %645 = vmatpush1.bf16.msra.mxu0 %v633
      %646 = vmatprep.subr.bf16.mxu0 0
      %647 = vmatpush1.bf16.msra.mxu0 0
      %648 = vmatprep.subr.bf16.mxu0 0
      %649 = vmatpush1.bf16.msra.mxu0 0
      %650 = vmatprep.subr.bf16.mxu0 0
      %651 = vmatpush1.bf16.msra.mxu0 0
      %652 = vmatprep.subr.bf16.mxu0 0
      %653 = vmatpush1.bf16.msra.mxu0 0
      %654 = vmatprep.subr.bf16.mxu0 0
      %655 = vmatpush1.bf16.msra.mxu0 0
      %656 = vmatprep.subr.bf16.mxu0 0
      %657 = vmatpush1.bf16.msra.mxu0 0
      %658 = vmatprep.subr.bf16.mxu0 0
      %659 = vmatpush1.bf16.msra.mxu0 0
      %660 = vmatprep.subr.bf16.mxu0 0
      %661 = vmatpush1.bf16.msra.mxu0 0
      %662 = vmatprep.subr.bf16.mxu0 0
      %663 = vmatpush1.bf16.msra.mxu0 0
      %664 = vmatprep.subr.bf16.mxu0 0
      %665 = vmatpush1.bf16.msra.mxu0 0
      %666 = vmatprep.subr.bf16.mxu0 0
      %667 = vmatpush1.bf16.msra.mxu0 0
      %668 = vmatprep.subr.bf16.mxu0 0
      %669 = vmatpush1.bf16.msra.mxu0 0
      %670 = vmatprep.subr.bf16.mxu0 0
      %671 = vmatpush1.bf16.msra.mxu0 0
      %672 = vmatprep.mubr.bf16.mxu0 0
      %673 = vmatmul.mubr.bf16.gmra.mrb[0].mxu0 %v638
      %v674 = vpop.f32.mrb[0].mxu0
      %v675 = vadd.f32 0.0, %v674
      %v676 = vpop.f32.mrb[0].mxu0
      %v677 = vpop.f32.mrb[0].mxu0
      %v678 = vadd.f32 0.0, %v677
      %v679 = vpop.f32.mrb[0].mxu0
      %680 = vdwg.mxu0
      %s681 = scalar_lea.vmem %s4, 48
      %v682 = vld [vmem:[%s681] sm:$0xff]
      %v683 = vld [vmem:[%s681 + $0x8] sm:$0x1]
      %vm684 = vcmp.gt.f32.partialorder %v682, 0.5
      %vm685 = vcmp.gt.f32.partialorder %v683, 0.5
      %v686 = vsel %vm684, 1, 0
      %v687 = vsel %vm685, 1, 0
      %688 = vset.pattern.permute.xlu0 0
      %689 = vperm.xlu0 %688, %v686
      %v690 = vpop.permute.xlu0 %689
      %691 = vset.pattern.permute.xlu0 0
      %692 = vperm.xlu0 %691, %v687
      %v693 = vpop.permute.xlu0 %692
      %vm694 = vcmp.eq.s32.totalorder %v690, 1
      %vm695 = vcmp.eq.s32.totalorder %v693, 1
      %v696 = vsel %vm694, %v675, 0.0
      %v697 = vsel %vm695, %v678, 0.0
      %v698 = vadd.f32 %v602, %v696
      %v699 = vadd.f32 %v603, %v697
      %v700 = vld [vmem:[#allocation2 + $0x4] sm:$0xf]
      %v701 = vld [vmem:[#allocation2 + $0x8] sm:$0x1]
      %s702 = scalar_lea.vmem %s1, 96
      %v703 = vld [vmem:[%s702] sm:$0xf]
      %v704 = vld [vmem:[%s702 + $0x4] sm:$0xf]
      %v705 = vld [vmem:[%s702 + $0x8] sm:$0xf]
      %v706 = vld [vmem:[%s702 + $0xc] sm:$0xf]
      %v707 = vld [vmem:[%s702 + $0x10] sm:$0xf]
      %v708 = vld [vmem:[%s702 + $0x14] sm:$0xf]
      %v711 = vunpack.c.l.b16 %v700
      %v712 = vunpack.c.l.b16 %v701
      %v713 = vpack.c.b16 %v712, %v711
      %v720 = vunpack.c.l.b16 %v703
      %v721 = vunpack.c.l.b16 %v704
      %v722 = vunpack.c.l.b16 %v705
      %v723 = vunpack.c.l.b16 %v706
      %v724 = vunpack.c.l.b16 %v707
      %v725 = vunpack.c.l.b16 %v708
      %v726 = vpack.c.b16 %v721, %v720
      %v727 = vpack.c.b16 %v723, %v722
      %v728 = vpack.c.b16 %v725, %v724
      %v733 = vsel %vm349, %v713, 0
      %735 = vmatprep.subr.bf16.mxu0 0
      %736 = vmatpush1.bf16.msra.mxu0 %v726
      %737 = vmatprep.subr.bf16.mxu0 0
      %738 = vmatpush1.bf16.msra.mxu0 %v727
      %739 = vmatprep.subr.bf16.mxu0 0
      %740 = vmatpush1.bf16.msra.mxu0 %v728
      %741 = vmatprep.subr.bf16.mxu0 0
      %742 = vmatpush1.bf16.msra.mxu0 0
      %743 = vmatprep.subr.bf16.mxu0 0
      %744 = vmatpush1.bf16.msra.mxu0 0
      %745 = vmatprep.subr.bf16.mxu0 0
      %746 = vmatpush1.bf16.msra.mxu0 0
      %747 = vmatprep.subr.bf16.mxu0 0
      %748 = vmatpush1.bf16.msra.mxu0 0
      %749 = vmatprep.subr.bf16.mxu0 0
      %750 = vmatpush1.bf16.msra.mxu0 0
      %751 = vmatprep.subr.bf16.mxu0 0
      %752 = vmatpush1.bf16.msra.mxu0 0
      %753 = vmatprep.subr.bf16.mxu0 0
      %754 = vmatpush1.bf16.msra.mxu0 0
      %755 = vmatprep.subr.bf16.mxu0 0
      %756 = vmatpush1.bf16.msra.mxu0 0
      %757 = vmatprep.subr.bf16.mxu0 0
      %758 = vmatpush1.bf16.msra.mxu0 0
      %759 = vmatprep.subr.bf16.mxu0 0
      %760 = vmatpush1.bf16.msra.mxu0 0
      %761 = vmatprep.subr.bf16.mxu0 0
      %762 = vmatpush1.bf16.msra.mxu0 0
      %763 = vmatprep.subr.bf16.mxu0 0
      %764 = vmatpush1.bf16.msra.mxu0 0
      %765 = vmatprep.subr.bf16.mxu0 0
      %766 = vmatpush1.bf16.msra.mxu0 0
      %767 = vmatprep.mubr.bf16.mxu0 0
      %768 = vmatmul.mubr.bf16.gmra.mrb[0].mxu0 %v733
      %v769 = vpop.f32.mrb[0].mxu0
      %v770 = vadd.f32 0.0, %v769
      %v771 = vpop.f32.mrb[0].mxu0
      %v772 = vpop.f32.mrb[0].mxu0
      %v773 = vadd.f32 0.0, %v772
      %v774 = vpop.f32.mrb[0].mxu0
      %775 = vdwg.mxu0
      %s776 = scalar_lea.vmem %s4, 64
      %v777 = vld [vmem:[%s776] sm:$0xff]
      %v778 = vld [vmem:[%s776 + $0x8] sm:$0x1]
      %vm779 = vcmp.gt.f32.partialorder %v777, 0.5
      %vm780 = vcmp.gt.f32.partialorder %v778, 0.5
      %v781 = vsel %vm779, 1, 0
      %v782 = vsel %vm780, 1, 0
      %783 = vset.pattern.permute.xlu0 0
      %784 = vperm.xlu0 %783, %v781
      %v785 = vpop.permute.xlu0 %784
      %786 = vset.pattern.permute.xlu0 0
      %787 = vperm.xlu0 %786, %v782
      %v788 = vpop.permute.xlu0 %787
      %vm789 = vcmp.eq.s32.totalorder %v785, 1
      %vm790 = vcmp.eq.s32.totalorder %v788, 1
      %v791 = vsel %vm789, %v770, 0.0
      %v792 = vsel %vm790, %v773, 0.0
      %v793 = vadd.f32 %v698, %v791
      %v794 = vadd.f32 %v699, %v792
      %s795 = scalar_lea.vmem %s1, 120
      %v796 = vld [vmem:[%s795] sm:$0xf]
      %v797 = vld [vmem:[%s795 + $0x4] sm:$0xf]
      %v798 = vld [vmem:[%s795 + $0x8] sm:$0xf]
      %v799 = vld [vmem:[%s795 + $0xc] sm:$0xf]
      %v800 = vld [vmem:[%s795 + $0x10] sm:$0xf]
      %v801 = vld [vmem:[%s795 + $0x14] sm:$0xf]
      %v802 = vshrl.u32 %v713, 16
      %v804 = vshll.u32 %v713, 16
      %v806 = vrot.slane %v804, 1
      %v807 = vor.u32 %v802, %v806
      %v814 = vunpack.c.l.b16 %v796
      %v815 = vunpack.c.l.b16 %v797
      %v816 = vunpack.c.l.b16 %v798
      %v817 = vunpack.c.l.b16 %v799
      %v818 = vunpack.c.l.b16 %v800
      %v819 = vunpack.c.l.b16 %v801
      %v820 = vpack.c.b16 %v815, %v814
      %v821 = vpack.c.b16 %v817, %v816
      %v822 = vpack.c.b16 %v819, %v818
      %v827 = vsel %vm349, %v807, 0
      %829 = vmatprep.subr.bf16.mxu0 0
      %830 = vmatpush1.bf16.msra.mxu0 %v820
      %831 = vmatprep.subr.bf16.mxu0 0
      %832 = vmatpush1.bf16.msra.mxu0 %v821
      %833 = vmatprep.subr.bf16.mxu0 0
      %834 = vmatpush1.bf16.msra.mxu0 %v822
      %835 = vmatprep.subr.bf16.mxu0 0
      %836 = vmatpush1.bf16.msra.mxu0 0
      %837 = vmatprep.subr.bf16.mxu0 0
      %838 = vmatpush1.bf16.msra.mxu0 0
      %839 = vmatprep.subr.bf16.mxu0 0
      %840 = vmatpush1.bf16.msra.mxu0 0
      %841 = vmatprep.subr.bf16.mxu0 0
      %842 = vmatpush1.bf16.msra.mxu0 0
      %843 = vmatprep.subr.bf16.mxu0 0
      %844 = vmatpush1.bf16.msra.mxu0 0
      %845 = vmatprep.subr.bf16.mxu0 0
      %846 = vmatpush1.bf16.msra.mxu0 0
      %847 = vmatprep.subr.bf16.mxu0 0
      %848 = vmatpush1.bf16.msra.mxu0 0
      %849 = vmatprep.subr.bf16.mxu0 0
      %850 = vmatpush1.bf16.msra.mxu0 0
      %851 = vmatprep.subr.bf16.mxu0 0
      %852 = vmatpush1.bf16.msra.mxu0 0
      %853 = vmatprep.subr.bf16.mxu0 0
      %854 = vmatpush1.bf16.msra.mxu0 0
      %855 = vmatprep.subr.bf16.mxu0 0
      %856 = vmatpush1.bf16.msra.mxu0 0
      %857 = vmatprep.subr.bf16.mxu0 0
      %858 = vmatpush1.bf16.msra.mxu0 0
      %859 = vmatprep.subr.bf16.mxu0 0
      %860 = vmatpush1.bf16.msra.mxu0 0
      %861 = vmatprep.mubr.bf16.mxu0 0
      %862 = vmatmul.mubr.bf16.gmra.mrb[0].mxu0 %v827
      %v863 = vpop.f32.mrb[0].mxu0
      %v864 = vadd.f32 0.0, %v863
      %v865 = vpop.f32.mrb[0].mxu0
      %v866 = vpop.f32.mrb[0].mxu0
      %v867 = vadd.f32 0.0, %v866
      %v868 = vpop.f32.mrb[0].mxu0
      %869 = vdwg.mxu0
      %s870 = scalar_lea.vmem %s4, 80
      %v871 = vld [vmem:[%s870] sm:$0xff]
      %v872 = vld [vmem:[%s870 + $0x8] sm:$0x1]
      %vm873 = vcmp.gt.f32.partialorder %v871, 0.5
      %vm874 = vcmp.gt.f32.partialorder %v872, 0.5
      %v875 = vsel %vm873, 1, 0
      %v876 = vsel %vm874, 1, 0
      %877 = vset.pattern.permute.xlu0 0
      %878 = vperm.xlu0 %877, %v875
      %v879 = vpop.permute.xlu0 %878
      %880 = vset.pattern.permute.xlu0 0
      %881 = vperm.xlu0 %880, %v876
      %v882 = vpop.permute.xlu0 %881
      %vm883 = vcmp.eq.s32.totalorder %v879, 1
      %vm884 = vcmp.eq.s32.totalorder %v882, 1
      %v885 = vsel %vm883, %v864, 0.0
      %v886 = vsel %vm884, %v867, 0.0
      %v887 = vadd.f32 %v793, %v885
      %v888 = vadd.f32 %v794, %v886
      %v889 = vld [vmem:[#allocation2 + $0x4] sm:$0xe]
      %v890 = vld [vmem:[#allocation2 + $0x8] sm:$0x3]
      %s891 = scalar_lea.vmem %s1, 144
      %v892 = vld [vmem:[%s891] sm:$0xf]
      %v893 = vld [vmem:[%s891 + $0x4] sm:$0xf]
      %v894 = vld [vmem:[%s891 + $0x8] sm:$0xf]
      %v895 = vld [vmem:[%s891 + $0xc] sm:$0xf]
      %v896 = vld [vmem:[%s891 + $0x10] sm:$0xf]
      %v897 = vld [vmem:[%s891 + $0x14] sm:$0xf]
      %v900 = vunpack.c.l.b16 %v889
      %v901 = vunpack.c.l.b16 %v890
      %v902 = vpack.c.b16 %v901, %v900
      %v903 = vrot.slane %v902, 1
      %v910 = vunpack.c.l.b16 %v892
      %v911 = vunpack.c.l.b16 %v893
      %v912 = vunpack.c.l.b16 %v894
      %v913 = vunpack.c.l.b16 %v895
      %v914 = vunpack.c.l.b16 %v896
      %v915 = vunpack.c.l.b16 %v897
      %v916 = vpack.c.b16 %v911, %v910
      %v917 = vpack.c.b16 %v913, %v912
      %v918 = vpack.c.b16 %v915, %v914
      %v923 = vsel %vm349, %v903, 0
      %925 = vmatprep.subr.bf16.mxu0 0
      %926 = vmatpush1.bf16.msra.mxu0 %v916
      %927 = vmatprep.subr.bf16.mxu0 0
      %928 = vmatpush1.bf16.msra.mxu0 %v917
      %929 = vmatprep.subr.bf16.mxu0 0
      %930 = vmatpush1.bf16.msra.mxu0 %v918
      %931 = vmatprep.subr.bf16.mxu0 0
      %932 = vmatpush1.bf16.msra.mxu0 0
      %933 = vmatprep.subr.bf16.mxu0 0
      %934 = vmatpush1.bf16.msra.mxu0 0
      %935 = vmatprep.subr.bf16.mxu0 0
      %936 = vmatpush1.bf16.msra.mxu0 0
      %937 = vmatprep.subr.bf16.mxu0 0
      %938 = vmatpush1.bf16.msra.mxu0 0
      %939 = vmatprep.subr.bf16.mxu0 0
      %940 = vmatpush1.bf16.msra.mxu0 0
      %941 = vmatprep.subr.bf16.mxu0 0
      %942 = vmatpush1.bf16.msra.mxu0 0
      %943 = vmatprep.subr.bf16.mxu0 0
      %944 = vmatpush1.bf16.msra.mxu0 0
      %945 = vmatprep.subr.bf16.mxu0 0
      %946 = vmatpush1.bf16.msra.mxu0 0
      %947 = vmatprep.subr.bf16.mxu0 0
      %948 = vmatpush1.bf16.msra.mxu0 0
      %949 = vmatprep.subr.bf16.mxu0 0
      %950 = vmatpush1.bf16.msra.mxu0 0
      %951 = vmatprep.subr.bf16.mxu0 0
      %952 = vmatpush1.bf16.msra.mxu0 0
      %953 = vmatprep.subr.bf16.mxu0 0
      %954 = vmatpush1.bf16.msra.mxu0 0
      %955 = vmatprep.subr.bf16.mxu0 0
      %956 = vmatpush1.bf16.msra.mxu0 0
      %957 = vmatprep.mubr.bf16.mxu0 0
      %958 = vmatmul.mubr.bf16.gmra.mrb[0].mxu0 %v923
      %v959 = vpop.f32.mrb[0].mxu0
      %v960 = vadd.f32 0.0, %v959
      %v961 = vpop.f32.mrb[0].mxu0
      %v962 = vpop.f32.mrb[0].mxu0
      %v963 = vadd.f32 0.0, %v962
      %v964 = vpop.f32.mrb[0].mxu0
      %965 = vdwg.mxu0
      %s966 = scalar_lea.vmem %s4, 96
      %v967 = vld [vmem:[%s966] sm:$0xff]
      %v968 = vld [vmem:[%s966 + $0x8] sm:$0x1]
      %vm969 = vcmp.gt.f32.partialorder %v967, 0.5
      %vm970 = vcmp.gt.f32.partialorder %v968, 0.5
      %v971 = vsel %vm969, 1, 0
      %v972 = vsel %vm970, 1, 0
      %973 = vset.pattern.permute.xlu0 0
      %974 = vperm.xlu0 %973, %v971
      %v975 = vpop.permute.xlu0 %974
      %976 = vset.pattern.permute.xlu0 0
      %977 = vperm.xlu0 %976, %v972
      %v978 = vpop.permute.xlu0 %977
      %vm979 = vcmp.eq.s32.totalorder %v975, 1
      %vm980 = vcmp.eq.s32.totalorder %v978, 1
      %v981 = vsel %vm979, %v960, 0.0
      %v982 = vsel %vm980, %v963, 0.0
      %v983 = vadd.f32 %v887, %v981
      %v984 = vadd.f32 %v888, %v982
      %s985 = scalar_lea.vmem %s1, 168
      %v986 = vld [vmem:[%s985] sm:$0xf]
      %v987 = vld [vmem:[%s985 + $0x4] sm:$0xf]
      %v988 = vld [vmem:[%s985 + $0x8] sm:$0xf]
      %v989 = vld [vmem:[%s985 + $0xc] sm:$0xf]
      %v990 = vld [vmem:[%s985 + $0x10] sm:$0xf]
      %v991 = vld [vmem:[%s985 + $0x14] sm:$0xf]
      %v993 = vshrl.u32 %v902, 16
      %v995 = vrot.slane %v993, 1
      %v996 = vshll.u32 %v902, 16
      %v998 = vrot.slane %v996, 2
      %v999 = vor.u32 %v995, %v998
      %v1006 = vunpack.c.l.b16 %v986
      %v1007 = vunpack.c.l.b16 %v987
      %v1008 = vunpack.c.l.b16 %v988
      %v1009 = vunpack.c.l.b16 %v989
      %v1010 = vunpack.c.l.b16 %v990
      %v1011 = vunpack.c.l.b16 %v991
      %v1012 = vpack.c.b16 %v1007, %v1006
      %v1013 = vpack.c.b16 %v1009, %v1008
      %v1014 = vpack.c.b16 %v1011, %v1010
      %v1019 = vsel %vm349, %v999, 0
      %1021 = vmatprep.subr.bf16.mxu0 0
      %1022 = vmatpush1.bf16.msra.mxu0 %v1012
      %1023 = vmatprep.subr.bf16.mxu0 0
      %1024 = vmatpush1.bf16.msra.mxu0 %v1013
      %1025 = vmatprep.subr.bf16.mxu0 0
      %1026 = vmatpush1.bf16.msra.mxu0 %v1014
      %1027 = vmatprep.subr.bf16.mxu0 0
      %1028 = vmatpush1.bf16.msra.mxu0 0
      %1029 = vmatprep.subr.bf16.mxu0 0
      %1030 = vmatpush1.bf16.msra.mxu0 0
      %1031 = vmatprep.subr.bf16.mxu0 0
      %1032 = vmatpush1.bf16.msra.mxu0 0
      %1033 = vmatprep.subr.bf16.mxu0 0
      %1034 = vmatpush1.bf16.msra.mxu0 0
      %1035 = vmatprep.subr.bf16.mxu0 0
      %1036 = vmatpush1.bf16.msra.mxu0 0
      %1037 = vmatprep.subr.bf16.mxu0 0
      %1038 = vmatpush1.bf16.msra.mxu0 0
      %1039 = vmatprep.subr.bf16.mxu0 0
      %1040 = vmatpush1.bf16.msra.mxu0 0
      %1041 = vmatprep.subr.bf16.mxu0 0
      %1042 = vmatpush1.bf16.msra.mxu0 0
      %1043 = vmatprep.subr.bf16.mxu0 0
      %1044 = vmatpush1.bf16.msra.mxu0 0
      %1045 = vmatprep.subr.bf16.mxu0 0
      %1046 = vmatpush1.bf16.msra.mxu0 0
      %1047 = vmatprep.subr.bf16.mxu0 0
      %1048 = vmatpush1.bf16.msra.mxu0 0
      %1049 = vmatprep.subr.bf16.mxu0 0
      %1050 = vmatpush1.bf16.msra.mxu0 0
      %1051 = vmatprep.subr.bf16.mxu0 0
      %1052 = vmatpush1.bf16.msra.mxu0 0
      %1053 = vmatprep.mubr.bf16.mxu0 0
      %1054 = vmatmul.mubr.bf16.gmra.mrb[0].mxu0 %v1019
      %v1055 = vpop.f32.mrb[0].mxu0
      %v1056 = vadd.f32 0.0, %v1055
      %v1057 = vpop.f32.mrb[0].mxu0
      %v1058 = vpop.f32.mrb[0].mxu0
      %v1059 = vadd.f32 0.0, %v1058
      %v1060 = vpop.f32.mrb[0].mxu0
      %1061 = vdwg.mxu0
      %s1062 = scalar_lea.vmem %s4, 112
      %v1063 = vld [vmem:[%s1062] sm:$0xff]
      %v1064 = vld [vmem:[%s1062 + $0x8] sm:$0x1]
      %vm1065 = vcmp.gt.f32.partialorder %v1063, 0.5
      %vm1066 = vcmp.gt.f32.partialorder %v1064, 0.5
      %v1067 = vsel %vm1065, 1, 0
      %v1068 = vsel %vm1066, 1, 0
      %1069 = vset.pattern.permute.xlu0 0
      %1070 = vperm.xlu0 %1069, %v1067
      %v1071 = vpop.permute.xlu0 %1070
      %1072 = vset.pattern.permute.xlu0 0
      %1073 = vperm.xlu0 %1072, %v1068
      %v1074 = vpop.permute.xlu0 %1073
      %vm1075 = vcmp.eq.s32.totalorder %v1071, 1
      %vm1076 = vcmp.eq.s32.totalorder %v1074, 1
      %v1077 = vsel %vm1075, %v1056, 0.0
      %v1078 = vsel %vm1076, %v1059, 0.0
      %v1079 = vadd.f32 %v983, %v1077
      %v1080 = vadd.f32 %v984, %v1078
      %v1081 = vld [vmem:[#allocation2 + $0x4] sm:$0xc]
      %v1082 = vld [vmem:[#allocation2 + $0x8] sm:$0x7]
      %s1083 = scalar_lea.vmem %s1, 192
      %v1084 = vld [vmem:[%s1083] sm:$0xf]
      %v1085 = vld [vmem:[%s1083 + $0x4] sm:$0xf]
      %v1086 = vld [vmem:[%s1083 + $0x8] sm:$0xf]
      %v1087 = vld [vmem:[%s1083 + $0xc] sm:$0xf]
      %v1088 = vld [vmem:[%s1083 + $0x10] sm:$0xf]
      %v1089 = vld [vmem:[%s1083 + $0x14] sm:$0xf]
      %v1092 = vunpack.c.l.b16 %v1081
      %v1093 = vunpack.c.l.b16 %v1082
      %v1094 = vpack.c.b16 %v1093, %v1092
      %v1095 = vrot.slane %v1094, 2
      %v1102 = vunpack.c.l.b16 %v1084
      %v1103 = vunpack.c.l.b16 %v1085
      %v1104 = vunpack.c.l.b16 %v1086
      %v1105 = vunpack.c.l.b16 %v1087
      %v1106 = vunpack.c.l.b16 %v1088
      %v1107 = vunpack.c.l.b16 %v1089
      %v1108 = vpack.c.b16 %v1103, %v1102
      %v1109 = vpack.c.b16 %v1105, %v1104
      %v1110 = vpack.c.b16 %v1107, %v1106
      %v1115 = vsel %vm349, %v1095, 0
      %1117 = vmatprep.subr.bf16.mxu0 0
      %1118 = vmatpush1.bf16.msra.mxu0 %v1108
      %1119 = vmatprep.subr.bf16.mxu0 0
      %1120 = vmatpush1.bf16.msra.mxu0 %v1109
      %1121 = vmatprep.subr.bf16.mxu0 0
      %1122 = vmatpush1.bf16.msra.mxu0 %v1110
      %1123 = vmatprep.subr.bf16.mxu0 0
      %1124 = vmatpush1.bf16.msra.mxu0 0
      %1125 = vmatprep.subr.bf16.mxu0 0
      %1126 = vmatpush1.bf16.msra.mxu0 0
      %1127 = vmatprep.subr.bf16.mxu0 0
      %1128 = vmatpush1.bf16.msra.mxu0 0
      %1129 = vmatprep.subr.bf16.mxu0 0
      %1130 = vmatpush1.bf16.msra.mxu0 0
      %1131 = vmatprep.subr.bf16.mxu0 0
      %1132 = vmatpush1.bf16.msra.mxu0 0
      %1133 = vmatprep.subr.bf16.mxu0 0
      %1134 = vmatpush1.bf16.msra.mxu0 0
      %1135 = vmatprep.subr.bf16.mxu0 0
      %1136 = vmatpush1.bf16.msra.mxu0 0
      %1137 = vmatprep.subr.bf16.mxu0 0
      %1138 = vmatpush1.bf16.msra.mxu0 0
      %1139 = vmatprep.subr.bf16.mxu0 0
      %1140 = vmatpush1.bf16.msra.mxu0 0
      %1141 = vmatprep.subr.bf16.mxu0 0
      %1142 = vmatpush1.bf16.msra.mxu0 0
      %1143 = vmatprep.subr.bf16.mxu0 0
      %1144 = vmatpush1.bf16.msra.mxu0 0
      %1145 = vmatprep.subr.bf16.mxu0 0
      %1146 = vmatpush1.bf16.msra.mxu0 0
      %1147 = vmatprep.subr.bf16.mxu0 0
      %1148 = vmatpush1.bf16.msra.mxu0 0
      %1149 = vmatprep.mubr.bf16.mxu0 0
      %1150 = vmatmul.mubr.bf16.gmra.mrb[0].mxu0 %v1115
      %v1151 = vpop.f32.mrb[0].mxu0
      %v1152 = vadd.f32 0.0, %v1151
      %v1153 = vpop.f32.mrb[0].mxu0
      %v1154 = vpop.f32.mrb[0].mxu0
      %v1155 = vadd.f32 0.0, %v1154
      %v1156 = vpop.f32.mrb[0].mxu0
      %1157 = vdwg.mxu0
      %s1158 = scalar_lea.vmem %s4, 128
      %v1159 = vld [vmem:[%s1158] sm:$0xff]
      %v1160 = vld [vmem:[%s1158 + $0x8] sm:$0x1]
      %vm1161 = vcmp.gt.f32.partialorder %v1159, 0.5
      %vm1162 = vcmp.gt.f32.partialorder %v1160, 0.5
      %v1163 = vsel %vm1161, 1, 0
      %v1164 = vsel %vm1162, 1, 0
      %1165 = vset.pattern.permute.xlu0 0
      %1166 = vperm.xlu0 %1165, %v1163
      %v1167 = vpop.permute.xlu0 %1166
      %1168 = vset.pattern.permute.xlu0 0
      %1169 = vperm.xlu0 %1168, %v1164
      %v1170 = vpop.permute.xlu0 %1169
      %vm1171 = vcmp.eq.s32.totalorder %v1167, 1
      %vm1172 = vcmp.eq.s32.totalorder %v1170, 1
      %v1173 = vsel %vm1171, %v1152, 0.0
      %v1174 = vsel %vm1172, %v1155, 0.0
      %v1175 = vadd.f32 %v1079, %v1173
      %v1176 = vadd.f32 %v1080, %v1174
      %v1177 = vpack.c.bf16 %v1176, %v1175
      %v1179 = vunpack.c.l.b16 %v1177
      %v1180 = vunpack.c.h.b16 %v1177
      %v1181 = vpack.c.b16 %v1179, %v1179
      %v1182 = vpack.c.b16 %v1180, %v1180
      %vm1185 = vcmask 60416
      %1186 = vst.msk [vmem:[%s258] sm:$0xf] %vm1185, %v1181
      %vm1187 = vcmask 57344
      %vm1188 = vmand %vm1187, %vm312
      %v1189 = vld [vmem:[%s258 + $0x4] sm:$0x1]
      %v1190 = vsel %vm1188, %v1182, %v1189
      %1191 = vst [vmem:[%s258 + $0x4] sm:$0x1] %v1190
      %v1192 = vunpack.c.l.bf16 %v1177
      %v1193 = vunpack.c.h.bf16 %v1177
      %vm1194 = vcmask 64512
      %v1195 = vsel %vm1194, %v1192, 0.0
      %vm1196 = vcmask 57344
      %v1197 = vsel %vm1196, %v1193, 0.0
      %v1198 = vadd.f32 %v1195, %v1197
      %v1199 = vrot.slane %v1198, 4
      %v1200 = vadd.f32 %v1198, %v1199
      %v1201 = vrot.slane %v1200, 2
      %v1202 = vadd.f32 %v1200, %v1201
      %v1203 = vrot.slane %v1202, 1
      %v1204 = vadd.f32 %v1202, %v1203
      %v1205 = vmul.f32 %v1192, %v1192
      %v1206 = vmul.f32 %v1193, %v1193
      %v1207 = vsel %vm1194, %v1205, 0.0
      %v1208 = vsel %vm1196, %v1206, 0.0
      %v1209 = vadd.f32 %v1207, %v1208
      %v1210 = vrot.slane %v1209, 4
      %v1211 = vadd.f32 %v1209, %v1210
      %v1212 = vrot.slane %v1211, 2
      %v1213 = vadd.f32 %v1211, %v1212
      %v1214 = vrot.slane %v1213, 1
      %v1215 = vadd.f32 %v1213, %v1214
      %vm1216 = vcmask 1040384
      %v1217 = vsel %vm1216, %v1204, %v1215
      %vm1218 = vcmask 58368
      %1219 = vst.msk [vmem:[%s262] sm:$0x3] %vm1218, %v1217
      %p1220 = scmp.lt.s32.totalorder %s18, 1
      %s1221 = scalar_select %p1220, %s18, 1
      %s1222 = smul.addr %s1221, 2
      %s1223 = smul.addr %s1222, 4
      %s1224 = scalar_lea.vmem %s5, %s1223
      %p1225 = scmp.lt.s32.totalorder %s18, 1
      %s1226 = scalar_select %p1225, %s18, 1
      %s1227 = smul.addr %s1226, 2
      %s1228 = scalar_lea.vmem %s6, %s1227
      // Predicated region
      $region45: #{densenet_forward.15} parent=39 // pred_check
        %p1229 = pneg %p146
      $region46: #{densenet_forward.15} parent=39 // pred_check_branch
        %1231 = sbr.rel (%p1229) target = $region48
      $region47: #{densenet_forward.15} parent=39 // pred_region
        _
      $region48: #{densenet_forward.15} parent=39 // pred_fallthru
        _
      // Predicated region
      $region49: #{densenet_forward.15} parent=39 // pred_check
        %p1232 = pneg %p172
      $region50: #{densenet_forward.15} parent=39 // pred_check_branch
        %1234 = sbr.rel (%p1232) target = $region52
      $region51: #{densenet_forward.15} parent=39 // pred_region
        _
      $region52: #{densenet_forward.15} parent=39 // pred_fallthru
        _
    $region40: #{densenet_forward.15} parent=5 // pred_fallthru
      _
    %p1235 = scmp.le.s32.totalorder 2, %s13
    // Predicated region
    $region53: #{densenet_forward.15} parent=5 // pred_check
      %p1236 = pneg %p1235
    $region54: #{densenet_forward.15} parent=5 // pred_check_branch
      %1238 = sbr.rel (%p1236) target = $region56
    $region55: #{densenet_forward.15} parent=5 // pred_region
      %s1239 = ssub.s32 %s13, 2
      // Predicated region
      $region57: #{densenet_forward.15} parent=55 // pred_check
        %p1240 = pneg %p152
      $region58: #{densenet_forward.15} parent=55 // pred_check_branch
        %1242 = sbr.rel (%p1240) target = $region60
      $region59: #{densenet_forward.15} parent=55 // pred_region
        %p1243 = scmp.lt.s32.totalorder %s19, 1
        %s1244 = scalar_select %p1243, %s19, 1
        %s1245 = smul.addr %s1244, 2
        %s1246 = smul.addr %s1245, 4
        %s1247 = scalar_lea.vmem %s5, %s1246
      $region60: #{densenet_forward.15} parent=55 // pred_fallthru
        _
      // Predicated region
      $region61: #{densenet_forward.15} parent=55 // pred_check
        %p1248 = pneg %p178
      $region62: #{densenet_forward.15} parent=55 // pred_check_branch
        %1250 = sbr.rel (%p1248) target = $region64
      $region63: #{densenet_forward.15} parent=55 // pred_region
        %p1251 = scmp.lt.s32.totalorder %s19, 1
        %s1252 = scalar_select %p1251, %s19, 1
        %s1253 = smul.addr %s1252, 2
        %s1254 = scalar_lea.vmem %s6, %s1253
      $region64: #{densenet_forward.15} parent=55 // pred_fallthru
        _
    $region56: #{densenet_forward.15} parent=5 // pred_fallthru
      _
  $region6: #{densenet_forward.15} parent=0 // loop_footer
    %s17 = sadd.s32 1, %s13
  $region7: #{densenet_forward.15} parent=0 // loop_footer_branch
    %12 = sbr.rel target = $region3
  $region8: #{densenet_forward.15} parent=0 // loop_exit
    _

// kernel: densenet_forward.16
$region0: #{densenet_forward.16}
  #allocation0 [shape = 'u32[]', space=smem, size = 0x4, offset = 0x4, fixed_abs, tag = 'smem constant byte address 0x4 - core index']
  #allocation1 [shape = 'u32[144,128]{1,0:T(1,128)}', space=vmem, size = 0x12000, scoped, tag = 'internal scratch']
  %s0 = inlined_call_operand.vmem [shape: bf16[24,56], index: 0, kind: input, shape index: {}]
  %s1 = inlined_call_operand.vmem [shape: f32[1,56], index: 1, kind: input, shape index: {}]
  %s2 = inlined_call_operand.vmem [shape: f32[1,56], index: 2, kind: input, shape index: {}]
  %s3 = inlined_call_operand.vmem [shape: f32[24,56], index: 3, kind: output, shape index: {}]
  %s4 = sld [smem:[#allocation0]]
  $region22: #{densenet_forward.16} parent=0
    _
  %s6 = ssub.s32 1, %s4
  %s7 = scalar_select 0, %s6, %s4
  // Predicated region
  $region2: #{densenet_forward.16} parent=0 // pred_check
    _
  $region3: #{densenet_forward.16} parent=0 // pred_check_branch
    %9 = sbr.rel (0) target = $region5
  $region4: #{densenet_forward.16} parent=0 // pred_region
    _
  $region5: #{densenet_forward.16} parent=0 // pred_fallthru
    _
  // Predicated region
  $region6: #{densenet_forward.16} parent=0 // pred_check
    _
  $region7: #{densenet_forward.16} parent=0 // pred_check_branch
    %11 = sbr.rel (0) target = $region9
  $region8: #{densenet_forward.16} parent=0 // pred_region
    _
  $region9: #{densenet_forward.16} parent=0 // pred_fallthru
    _
  // Predicated region
  $region10: #{densenet_forward.16} parent=0 // pred_check
    _
  $region11: #{densenet_forward.16} parent=0 // pred_check_branch
    %13 = sbr.rel (0) target = $region13
  $region12: #{densenet_forward.16} parent=0 // pred_region
    _
  $region13: #{densenet_forward.16} parent=0 // pred_fallthru
    _
  %v14 = vld [vmem:[%s0] sm:$0xf]
  %v15 = vld [vmem:[%s0 + $0x4] sm:$0xf]
  %v16 = vld [vmem:[%s0 + $0x8] sm:$0xf]
  %v17 = vunpack.c.l.bf16 %v14
  %v18 = vunpack.c.l.bf16 %v15
  %v19 = vunpack.c.l.bf16 %v16
  %v20 = vld [vmem:[%s1] sm:$0x1]
  %v22 = vlaneseq
  %v23 = vshrl.u32 %v22, 7
  %v24 = vsub.s32 0, %v23
  %v25 = vrot.slane %v20, %v24
  %v27 = vmul.f32 %v17, %v25
  %v28 = vmul.f32 %v18, %v25
  %v29 = vmul.f32 %v19, %v25
  %v30 = vld [vmem:[%s2] sm:$0x1]
  %v32 = vlaneseq
  %v33 = vshrl.u32 %v32, 7
  %v34 = vsub.s32 0, %v33
  %v35 = vrot.slane %v30, %v34
  %v37 = vadd.f32 %v27, %v35
  %v38 = vadd.f32 %v28, %v35
  %v39 = vadd.f32 %v29, %v35
  %v40 = vmax.f32 %v37, 0.0
  %v41 = vmax.f32 %v38, 0.0
  %v42 = vmax.f32 %v39, 0.0
  %vm43 = vcmask 457728
  %44 = vst.msk [vmem:[%s3] sm:$0xff] %vm43, %v40
  %45 = vst.msk [vmem:[%s3 + $0x8] sm:$0xff] %vm43, %v41
  %46 = vst.msk [vmem:[%s3 + $0x10] sm:$0xff] %vm43, %v42
  // Predicated region
  $region14: #{densenet_forward.16} parent=0 // pred_check
    _
  $region15: #{densenet_forward.16} parent=0 // pred_check_branch
    %48 = sbr.rel (0) target = $region17
  $region16: #{densenet_forward.16} parent=0 // pred_region
    _
  $region17: #{densenet_forward.16} parent=0 // pred_fallthru
    _
  // Predicated region
  $region18: #{densenet_forward.16} parent=0 // pred_check
    _
  $region19: #{densenet_forward.16} parent=0 // pred_check_branch
    %50 = sbr.rel (0) target = $region21
  $region20: #{densenet_forward.16} parent=0 // pred_region
    _
  $region21: #{densenet_forward.16} parent=0 // pred_fallthru
    _

// kernel: densenet_forward.17
$region0: #{densenet_forward.17}
  #allocation0 [shape = 'u32[]', space=smem, size = 0x4, offset = 0x4, fixed_abs, tag = 'smem constant byte address 0x4 - core index']
  #allocation1 [shape = 'u32[144,128]{1,0:T(1,128)}', space=vmem, size = 0x12000, scoped, tag = 'internal scratch']
  %s0 = inlined_call_operand.vmem [shape: bf16[8,128], index: 0, kind: input, shape index: {}]
  %s1 = inlined_call_operand.vmem [shape: bf16[128,128], index: 1, kind: input, shape index: {}]
  %s2 = inlined_call_operand.vmem [shape: f32[1,128], index: 2, kind: input, shape index: {}]
  %s3 = inlined_call_operand.vmem [shape: f32[8,128], index: 3, kind: output, shape index: {}]
  %s4 = sld [smem:[#allocation0]]
  $region30: #{densenet_forward.17} parent=0
    _
  %s6 = ssub.s32 1, %s4
  %s7 = scalar_select 0, %s6, %s4
  // Predicated region
  $region2: #{densenet_forward.17} parent=0 // pred_check
    _
  $region3: #{densenet_forward.17} parent=0 // pred_check_branch
    %9 = sbr.rel (0) target = $region5
  $region4: #{densenet_forward.17} parent=0 // pred_region
    _
  $region5: #{densenet_forward.17} parent=0 // pred_fallthru
    _
  // Predicated region
  $region6: #{densenet_forward.17} parent=0 // pred_check
    _
  $region7: #{densenet_forward.17} parent=0 // pred_check_branch
    %11 = sbr.rel (0) target = $region9
  $region8: #{densenet_forward.17} parent=0 // pred_region
    _
  $region9: #{densenet_forward.17} parent=0 // pred_fallthru
    _
  // Predicated region
  $region10: #{densenet_forward.17} parent=0 // pred_check
    _
  $region11: #{densenet_forward.17} parent=0 // pred_check_branch
    %13 = sbr.rel (0) target = $region13
  $region12: #{densenet_forward.17} parent=0 // pred_region
    _
  $region13: #{densenet_forward.17} parent=0 // pred_fallthru
    _
  %p15 = scmp.eq.s32.totalorder 0, 0
  // Predicated region
  $region14: #{densenet_forward.17} parent=0 // pred_check
    %p16 = pneg %p15
  $region15: #{densenet_forward.17} parent=0 // pred_check_branch
    %18 = sbr.rel (%p16) target = $region17
  $region16: #{densenet_forward.17} parent=0 // pred_region
    %19 = vst [vmem:[%s3] sm:$0xff] 0.0
  $region17: #{densenet_forward.17} parent=0 // pred_fallthru
    _
  %v20 = vld [vmem:[%s0] sm:$0xf]
  %v21 = vld [vmem:[%s3] sm:$0xff]
  %v22 = vld [vmem:[%s1] sm:$0xf]
  %v23 = vld [vmem:[%s1 + $0x4] sm:$0xf]
  %v24 = vld [vmem:[%s1 + $0x8] sm:$0xf]
  %v25 = vld [vmem:[%s1 + $0xc] sm:$0xf]
  %v26 = vld [vmem:[%s1 + $0x10] sm:$0xf]
  %v27 = vld [vmem:[%s1 + $0x14] sm:$0xf]
  %v28 = vld [vmem:[%s1 + $0x18] sm:$0xf]
  %v29 = vld [vmem:[%s1 + $0x1c] sm:$0xf]
  %v30 = vld [vmem:[%s1 + $0x20] sm:$0xf]
  %v31 = vld [vmem:[%s1 + $0x24] sm:$0xf]
  %v32 = vld [vmem:[%s1 + $0x28] sm:$0xf]
  %v33 = vld [vmem:[%s1 + $0x2c] sm:$0xf]
  %v34 = vld [vmem:[%s1 + $0x30] sm:$0xf]
  %v35 = vld [vmem:[%s1 + $0x34] sm:$0xf]
  %v36 = vld [vmem:[%s1 + $0x38] sm:$0xf]
  %v37 = vld [vmem:[%s1 + $0x3c] sm:$0xf]
  %v54 = vunpack.c.l.b16 %v22
  %v55 = vunpack.c.l.b16 %v23
  %v56 = vunpack.c.l.b16 %v24
  %v57 = vunpack.c.l.b16 %v25
  %v58 = vunpack.c.l.b16 %v26
  %v59 = vunpack.c.l.b16 %v27
  %v60 = vunpack.c.l.b16 %v28
  %v61 = vunpack.c.l.b16 %v29
  %v62 = vunpack.c.l.b16 %v30
  %v63 = vunpack.c.l.b16 %v31
  %v64 = vunpack.c.l.b16 %v32
  %v65 = vunpack.c.l.b16 %v33
  %v66 = vunpack.c.l.b16 %v34
  %v67 = vunpack.c.l.b16 %v35
  %v68 = vunpack.c.l.b16 %v36
  %v69 = vunpack.c.l.b16 %v37
  %v70 = vpack.c.b16 %v55, %v54
  %v71 = vpack.c.b16 %v57, %v56
  %v72 = vpack.c.b16 %v59, %v58
  %v73 = vpack.c.b16 %v61, %v60
  %v74 = vpack.c.b16 %v63, %v62
  %v75 = vpack.c.b16 %v65, %v64
  %v76 = vpack.c.b16 %v67, %v66
  %v77 = vpack.c.b16 %v69, %v68
  %86 = vmatprep.subr.bf16.mxu0 0
  %87 = vmatpush1.bf16.msra.mxu0 %v70
  %88 = vmatprep.subr.bf16.mxu0 0
  %89 = vmatpush1.bf16.msra.mxu0 %v71
  %90 = vmatprep.subr.bf16.mxu0 0
  %91 = vmatpush1.bf16.msra.mxu0 %v72
  %92 = vmatprep.subr.bf16.mxu0 0
  %93 = vmatpush1.bf16.msra.mxu0 %v73
  %94 = vmatprep.subr.bf16.mxu0 0
  %95 = vmatpush1.bf16.msra.mxu0 %v74
  %96 = vmatprep.subr.bf16.mxu0 0
  %97 = vmatpush1.bf16.msra.mxu0 %v75
  %98 = vmatprep.subr.bf16.mxu0 0
  %99 = vmatpush1.bf16.msra.mxu0 %v76
  %100 = vmatprep.subr.bf16.mxu0 0
  %101 = vmatpush1.bf16.msra.mxu0 %v77
  %102 = vmatprep.subr.bf16.mxu0 0
  %103 = vmatpush1.bf16.msra.mxu0 0
  %104 = vmatprep.subr.bf16.mxu0 0
  %105 = vmatpush1.bf16.msra.mxu0 0
  %106 = vmatprep.subr.bf16.mxu0 0
  %107 = vmatpush1.bf16.msra.mxu0 0
  %108 = vmatprep.subr.bf16.mxu0 0
  %109 = vmatpush1.bf16.msra.mxu0 0
  %110 = vmatprep.subr.bf16.mxu0 0
  %111 = vmatpush1.bf16.msra.mxu0 0
  %112 = vmatprep.subr.bf16.mxu0 0
  %113 = vmatpush1.bf16.msra.mxu0 0
  %114 = vmatprep.subr.bf16.mxu0 0
  %115 = vmatpush1.bf16.msra.mxu0 0
  %116 = vmatprep.subr.bf16.mxu0 0
  %117 = vmatpush1.bf16.msra.mxu0 0
  %118 = vmatprep.mubr.bf16.mxu0 0
  %119 = vmatmul.mubr.bf16.gmra.mrb[0].mxu0 %v20
  %v120 = vpop.f32.mrb[0].mxu0
  %v121 = vadd.f32 0.0, %v120
  %v122 = vpop.f32.mrb[0].mxu0
  %v123 = vpop.f32.mrb[0].mxu0
  %v124 = vpop.f32.mrb[0].mxu0
  %125 = vdwg.mxu0
  %v126 = vadd.f32 %v21, %v121
  %127 = vst [vmem:[%s3] sm:$0xff] %v126
  // Predicated region
  $region18: #{densenet_forward.17} parent=0 // pred_check
    %p128 = pneg %p15
  $region19: #{densenet_forward.17} parent=0 // pred_check_branch
    %130 = sbr.rel (%p128) target = $region21
  $region20: #{densenet_forward.17} parent=0 // pred_region
    %v131 = vld [vmem:[%s3] sm:$0xff]
    %v132 = vld [vmem:[%s2] sm:$0x1]
    %v134 = vlaneseq
    %v135 = vshrl.u32 %v134, 7
    %v136 = vsub.s32 0, %v135
    %v137 = vrot.slane %v132, %v136
    %v139 = vadd.f32 %v131, %v137
    %140 = vst [vmem:[%s3] sm:$0xff] %v139
  $region21: #{densenet_forward.17} parent=0 // pred_fallthru
    _
  // Predicated region
  $region22: #{densenet_forward.17} parent=0 // pred_check
    _
  $region23: #{densenet_forward.17} parent=0 // pred_check_branch
    %142 = sbr.rel (0) target = $region25
  $region24: #{densenet_forward.17} parent=0 // pred_region
    _
  $region25: #{densenet_forward.17} parent=0 // pred_fallthru
    _
  // Predicated region
  $region26: #{densenet_forward.17} parent=0 // pred_check
    _
  $region27: #{densenet_forward.17} parent=0 // pred_check_branch
    %144 = sbr.rel (0) target = $region29
  $region28: #{densenet_forward.17} parent=0 // pred_region
    _
  $region29: #{densenet_forward.17} parent=0 // pred_fallthru
    _

</llo_original>
